<compile_context>
chip_gen: v5e
topology: v5e:2x2
jax: 0.10.0
libtpu: 0.0.40
codegen_flags: <defaults>
</compile_context>

<pallas_src>
import jax
import jax.numpy as jnp
from jax import lax
from jax.experimental import pallas as pl
from jax.experimental.pallas import tpu as pltpu

# Geometry fixed by the module: fc.in_features = 32*7*7 -> 28x28 input, two 2x2 pools.
H1 = W1 = 28
H2 = W2 = 14
H3 = W3 = 7
C1 = 16
C2 = 32
NCLS = 10
L1 = H1 * W1          # 784
L2 = H2 * W2          # 196
L3 = H3 * W3          # 49
BATCH = 8             # images per grid step (fills MXU rows; VMEM ~10 MB total)
OUTP = 128            # classes padded to a lane-dense 128-wide output block


# --------------------------------- kernel ---------------------------------- #

def _cnn_kernel(x_ref, w1_ref, b1_ref, mask1_ref, sel1_ref,
                w2_ref, b2_ref, mask2_ref, fw_ref, fcb_ref, out_ref):
    B = BATCH

    # ---- conv1 (1->16, 3x3, pad 1) as ONE block-diagonal f32 MXU matmul ------
    x = x_ref[...]                                            # (B, 784) f32
    zpad1 = jnp.zeros((B, W1 + 1), jnp.float32)
    a1 = jnp.concatenate([zpad1, x, zpad1], axis=1)           # (B, 842) height-padded flat
    mask1 = mask1_ref[...]                                    # (2, 784)
    taps1 = []
    for t in range(9):
        kh, kw = t // 3, t % 3
        q0 = kh * W1 + kw
        tap = a1[:, q0:q0 + L1]                               # (B, 784)
        if kw == 0:
            tap = tap * mask1[0:1, :]                         # left tap invalid at col 0
        elif kw == 2:
            tap = tap * mask1[1:2, :]                         # right tap invalid at col W-1
        taps1.append(tap)
    x1 = jnp.concatenate(taps1, axis=0)                       # (72, 784), rows (tap, b)
    c1 = jnp.dot(w1_ref[...], x1,
                 preferred_element_type=jnp.float32)          # (128, 784), rows (b, ci)
    c1 = jnp.maximum(c1 + b1_ref[...], 0.0)

    # ---- maxpool 2x2 (28->14): shifted maxes + hoisted 0/1 compaction matmul -
    v1 = jnp.maximum(c1[:, : L1 - W1], c1[:, W1:])            # rows (r, r+1)
    m1 = jnp.maximum(v1[:, : L1 - W1 - 1], v1[:, 1:])         # cols (c, c+1) -> (128, 755)
    p1 = jnp.dot(m1, sel1_ref[...],
                 preferred_element_type=jnp.float32)          # (128, 196) f32

    # ---- conv2 (16->32, 3x3, pad 1) as ONE block-diagonal bf16 MXU matmul ----
    zpad2 = jnp.zeros((B * C1, W2 + 1), jnp.float32)
    a2 = jnp.concatenate([zpad2, p1, zpad2], axis=1)          # (128, 226)
    mask2 = mask2_ref[...]                                    # (2, 196)
    taps2 = []
    for t in range(9):
        kh, kw = t // 3, t % 3
        q0 = kh * W2 + kw
        tap = a2[:, q0:q0 + L2]                               # (128, 196)
        if kw == 0:
            tap = tap * mask2[0:1, :]
        elif kw == 2:
            tap = tap * mask2[1:2, :]
        taps2.append(tap.astype(jnp.bfloat16))                # cast per tap (half the concat bytes)
    x2 = jnp.concatenate(taps2, axis=0)                       # (1152, 196) bf16, rows (tap, b, ci)
    c2 = jnp.dot(w2_ref[...], x2,
                 preferred_element_type=jnp.float32)          # (256, 196) f32, rows (co, b)
    c2 = jnp.maximum(c2 + b2_ref[...], 0.0)

    # ---- maxpool 2x2 (14->7): shifted maxes only; the 0/1 compaction is
    #      folded into the fc weights on the host ------------------------------
    v2 = jnp.maximum(c2[:, : L2 - W2], c2[:, W2:])
    m2 = jnp.maximum(v2[:, : L2 - W2 - 1], v2[:, 1:])         # (256, 181) f32

    # ---- fc (32*7*7 -> 10): batched-over-channel f32 MXU matmul --------------
    # rows of m2 are (co, b); regroup to (32, B, 181) with cheap leading-dim concat
    m2_3d = jnp.concatenate(
        [m2[None, c * B:(c + 1) * B, :] for c in range(C2)], axis=0)   # (32, B, 181)
    part = lax.dot_general(m2_3d, fw_ref[...],
                           dimension_numbers=(((2,), (1,)), ((0,), (0,))),
                           preferred_element_type=jnp.float32)          # (32, B, 128)
    logits = jnp.sum(part, axis=0) + fcb_ref[...]                       # (B, 128) lane-dense
    out_ref[...] = logits


# ------------------------------- host wrappers ------------------------------ #

def prepare_params(params, batch=BATCH):
    """One-time host-side weight / constant layout prep (outside the hot path)."""
    eye = jnp.eye(batch, dtype=jnp.float32)

    # conv1: block-diagonal (B*16, 9*B), rows (b, c), cols (t, b'); t = kh*3+kw
    w1 = params["conv1_w"].reshape(C1, 9).astype(jnp.float32)                 # [c, t]
    w1_big = jnp.einsum("xy,ct->xcty", eye, w1).reshape(batch * C1, 9 * batch)
    b1t = jnp.tile(params["conv1_b"].astype(jnp.float32), batch).reshape(batch * C1, 1)

    # conv2: block-diagonal (B*32, 9*B*16), rows (co, b), cols (t, b', ci); bf16
    w2 = params["conv2_w"].transpose(2, 3, 1, 0).reshape(9, C1, C2).astype(jnp.float32)  # [t, ci, co]
    w2_big = jnp.einsum("xy,tio->oxtyi", eye, w2).reshape(batch * C2, 9 * batch * C1)
    w2_big = w2_big.astype(jnp.bfloat16)
    b2t = jnp.repeat(params["conv2_b"].astype(jnp.float32), batch).reshape(batch * C2, 1)

    # pool1 0/1 lane-compaction matrix (755, 196): col j selects 2*(j//14)*28 + 2*(j%14)
    p = jnp.arange(L1 - W1 - 1)[:, None]
    j = jnp.arange(L2)[None, :]
    sel1 = (p == 2 * (j // W2) * W1 + 2 * (j % W2)).astype(jnp.float32)

    # pool2 compaction folded into the fc weight: fw[c, k, o] (classes padded to 128)
    k = jnp.arange(L2 - W2 - 1)[:, None]
    j2 = jnp.arange(L3)[None, :]
    sel2 = (k == 2 * (j2 // W3) * W2 + 2 * (j2 % W3)).astype(jnp.float32)      # (181, 49)
    fc3 = params["fc_w"].reshape(NCLS, C2, L3).astype(jnp.float32)             # [o, c, j]
    fw = jnp.einsum("ocj,kj->cko", fc3, sel2)                                  # (32, 181, 10)
    fw = jnp.pad(fw, ((0, 0), (0, 0), (0, OUTP - NCLS)))                       # (32, 181, 128)
    fcb = jnp.pad(params["fc_b"].astype(jnp.float32), (0, OUTP - NCLS)).reshape(1, OUTP)

    # column-wrap masks for 3x3 taps (row 0: left tap, row 1: right tap)
    col1 = jnp.arange(L1) % W1
    mask1 = jnp.stack([(col1 != 0), (col1 != W1 - 1)]).astype(jnp.float32)     # (2, 784)
    col2 = jnp.arange(L2) % W2
    mask2 = jnp.stack([(col2 != 0), (col2 != W2 - 1)]).astype(jnp.float32)     # (2, 196)

    return {"w1_big": w1_big, "b1t": b1t, "mask1": mask1, "sel1": sel1,
            "w2_big": w2_big, "b2t": b2t, "mask2": mask2, "fw": fw, "fcb": fcb}


def cnn_forward_pallas(prepped, x):
    N = x.shape[0]
    NP = ((N + BATCH - 1) // BATCH) * BATCH
    x2d = x.reshape(N, L1)
    if NP != N:
        x2d = jnp.pad(x2d, ((0, NP - N), (0, 0)))

    out = pl.pallas_call(
        _cnn_kernel,
        out_shape=jax.ShapeDtypeStruct((NP, OUTP), jnp.float32),
        grid=(NP // BATCH,),
        in_specs=[
            pl.BlockSpec((BATCH, L1), lambda i: (i, 0)),
            pl.BlockSpec((BATCH * C1, 9 * BATCH), lambda i: (0, 0)),
            pl.BlockSpec((BATCH * C1, 1), lambda i: (0, 0)),
            pl.BlockSpec((2, L1), lambda i: (0, 0)),
            pl.BlockSpec((L1 - W1 - 1, L2), lambda i: (0, 0)),
            pl.BlockSpec((BATCH * C2, 9 * BATCH * C1), lambda i: (0, 0)),
            pl.BlockSpec((BATCH * C2, 1), lambda i: (0, 0)),
            pl.BlockSpec((2, L2), lambda i: (0, 0)),
            pl.BlockSpec((C2, L2 - W2 - 1, OUTP), lambda i: (0, 0, 0)),
            pl.BlockSpec((1, OUTP), lambda i: (0, 0)),
        ],
        out_specs=pl.BlockSpec((BATCH, OUTP), lambda i: (i, 0)),
        compiler_params=pltpu.CompilerParams(
            dimension_semantics=("parallel",)),
    )(x2d, prepped["w1_big"], prepped["b1t"], prepped["mask1"], prepped["sel1"],
      prepped["w2_big"], prepped["b2t"], prepped["mask2"],
      prepped["fw"], prepped["fcb"])
    return out[:N, :NCLS]


cnn_forward = jax.jit(cnn_forward_pallas)


def init_params(key):
    ks = jax.random.split(key, 6)
    return {
        "conv1_w": 0.1 * jax.random.normal(ks[0], (C1, 1, 3, 3), jnp.float32),
        "conv1_b": 0.1 * jax.random.normal(ks[1], (C1,), jnp.float32),
        "conv2_w": 0.1 * jax.random.normal(ks[2], (C2, C1, 3, 3), jnp.float32),
        "conv2_b": 0.1 * jax.random.normal(ks[3], (C2,), jnp.float32),
        "fc_w": 0.05 * jax.random.normal(ks[4], (NCLS, C2 * H3 * W3), jnp.float32),
        "fc_b": 0.05 * jax.random.normal(ks[5], (NCLS,), jnp.float32),
    }


def reference_forward(params, x):
    """Plain-JAX reference (PyTorch semantics) for the correctness check."""
    y = lax.conv_general_dilated(x, params["conv1_w"], (1, 1), ((1, 1), (1, 1)),
                                 dimension_numbers=("NCHW", "OIHW", "NCHW"))
    y = jnp.maximum(y + params["conv1_b"][None, :, None, None], 0.0)
    y = lax.reduce_window(y, -jnp.inf, lax.max, (1, 1, 2, 2), (1, 1, 2, 2), "VALID")
    y = lax.conv_general_dilated(y, params["conv2_w"], (1, 1), ((1, 1), (1, 1)),
                                 dimension_numbers=("NCHW", "OIHW", "NCHW"))
    y = jnp.maximum(y + params["conv2_b"][None, :, None, None], 0.0)
    y = lax.reduce_window(y, -jnp.inf, lax.max, (1, 1, 2, 2), (1, 1, 2, 2), "VALID")
    # TODO(synk): the PyTorch forward applies fc directly to (N,32,7,7), which would
    # raise a shape error; we insert the implied flatten (contiguous C,H,W order).
    y = y.reshape(y.shape[0], -1)
    return y @ params["fc_w"].T + params["fc_b"]


if __name__ == "__main__":
    key = jax.random.PRNGKey(0)
    pkey, xkey = jax.random.split(key)
    params = init_params(pkey)
    prepped = prepare_params(params)
    # Spatial size 28 is implied by fc.in_features = 32 * 7 * 7 (two 2x2 pools).
    x = jax.random.normal(xkey, (2, 1, 28, 28), jnp.float32)

    out = jax.block_until_ready(cnn_forward(prepped, x))
    assert out.shape == (2, NCLS), out.shape

    ref = reference_forward(params, x)
    max_err = float(jnp.max(jnp.abs(out - ref)))
    assert jnp.allclose(out, ref, atol=3e-2, rtol=3e-2), max_err

    print("KERNEL_OK")
</pallas_src>

<mosaic_0001>
module attributes {stable_mosaic.version = 11 : i64} {
  func.func @_cnn_kernel(%arg0: i32, %arg1: memref<8x784xf32, #tpu.memory_space<vmem>>, %arg2: memref<128x72xf32, #tpu.memory_space<vmem>>, %arg3: memref<128x1xf32, #tpu.memory_space<vmem>>, %arg4: memref<2x784xf32, #tpu.memory_space<vmem>>, %arg5: memref<755x196xf32, #tpu.memory_space<vmem>>, %arg6: memref<256x1152xbf16, #tpu.memory_space<vmem>>, %arg7: memref<256x1xf32, #tpu.memory_space<vmem>>, %arg8: memref<2x196xf32, #tpu.memory_space<vmem>>, %arg9: memref<32x181x128xf32, #tpu.memory_space<vmem>>, %arg10: memref<1x128xf32, #tpu.memory_space<vmem>>, %arg11: memref<8x128xf32, #tpu.memory_space<vmem>>) attributes {dimension_semantics = [#tpu.dimension_semantics<parallel>], iteration_bounds = array<i64: 1>, scalar_prefetch = 0 : i64, scratch_operands = 0 : i64, tpu.core_type = #tpu.core_type<tc>, window_params = [{transform_indices = @transform_0, window_bounds = array<i64: 8, 784>}, {pipeline_mode = #tpu.pipeline_mode<synchronous>, transform_indices = @transform_1, window_bounds = array<i64: 128, 72>}, {pipeline_mode = #tpu.pipeline_mode<synchronous>, transform_indices = @transform_2, window_bounds = array<i64: 128, 1>}, {pipeline_mode = #tpu.pipeline_mode<synchronous>, transform_indices = @transform_3, window_bounds = array<i64: 2, 784>}, {pipeline_mode = #tpu.pipeline_mode<synchronous>, transform_indices = @transform_4, window_bounds = array<i64: 755, 196>}, {pipeline_mode = #tpu.pipeline_mode<synchronous>, transform_indices = @transform_5, window_bounds = array<i64: 256, 1152>}, {pipeline_mode = #tpu.pipeline_mode<synchronous>, transform_indices = @transform_6, window_bounds = array<i64: 256, 1>}, {pipeline_mode = #tpu.pipeline_mode<synchronous>, transform_indices = @transform_7, window_bounds = array<i64: 2, 196>}, {pipeline_mode = #tpu.pipeline_mode<synchronous>, transform_indices = @transform_8, window_bounds = array<i64: 32, 181, 128>}, {pipeline_mode = #tpu.pipeline_mode<synchronous>, transform_indices = @transform_9, window_bounds = array<i64: 1, 128>}, {transform_indices = @transform_10, window_bounds = array<i64: 8, 128>}]} {
    %c0 = arith.constant 0 : index
    %c0_0 = arith.constant 0 : index
    %0 = vector.load %arg1[%c0, %c0_0] : memref<8x784xf32, #tpu.memory_space<vmem>>, vector<8x784xf32>
    %cst = arith.constant 0.000000e+00 : f32
    %1 = vector.broadcast %cst : f32 to vector<8x29xf32>
    %2 = tpu.concatenate %1, %0, %1 in 1 : vector<8x29xf32>, vector<8x784xf32>, vector<8x29xf32> -> vector<8x842xf32>
    %c0_1 = arith.constant 0 : index
    %c0_2 = arith.constant 0 : index
    %3 = vector.load %arg4[%c0_1, %c0_2] : memref<2x784xf32, #tpu.memory_space<vmem>>, vector<2x784xf32>
    %4 = vector.extract_strided_slice %2 {offsets = [0, 0], sizes = [8, 784], strides = [1, 1]} : vector<8x842xf32> to vector<8x784xf32>
    %5 = vector.extract_strided_slice %3 {offsets = [0, 0], sizes = [1, 784], strides = [1, 1]} : vector<2x784xf32> to vector<1x784xf32>
    %6 = vector.broadcast %5 : vector<1x784xf32> to vector<8x784xf32>
    %7 = arith.mulf %4, %6 : vector<8x784xf32>
    %8 = vector.extract_strided_slice %2 {offsets = [0, 1], sizes = [8, 784], strides = [1, 1]} : vector<8x842xf32> to vector<8x784xf32>
    %9 = vector.extract_strided_slice %2 {offsets = [0, 2], sizes = [8, 784], strides = [1, 1]} : vector<8x842xf32> to vector<8x784xf32>
    %10 = vector.extract_strided_slice %3 {offsets = [1, 0], sizes = [1, 784], strides = [1, 1]} : vector<2x784xf32> to vector<1x784xf32>
    %11 = vector.broadcast %10 : vector<1x784xf32> to vector<8x784xf32>
    %12 = arith.mulf %9, %11 : vector<8x784xf32>
    %13 = vector.extract_strided_slice %2 {offsets = [0, 28], sizes = [8, 784], strides = [1, 1]} : vector<8x842xf32> to vector<8x784xf32>
    %14 = vector.extract_strided_slice %3 {offsets = [0, 0], sizes = [1, 784], strides = [1, 1]} : vector<2x784xf32> to vector<1x784xf32>
    %15 = vector.broadcast %14 : vector<1x784xf32> to vector<8x784xf32>
    %16 = arith.mulf %13, %15 : vector<8x784xf32>
    %17 = vector.extract_strided_slice %2 {offsets = [0, 29], sizes = [8, 784], strides = [1, 1]} : vector<8x842xf32> to vector<8x784xf32>
    %18 = vector.extract_strided_slice %2 {offsets = [0, 30], sizes = [8, 784], strides = [1, 1]} : vector<8x842xf32> to vector<8x784xf32>
    %19 = vector.extract_strided_slice %3 {offsets = [1, 0], sizes = [1, 784], strides = [1, 1]} : vector<2x784xf32> to vector<1x784xf32>
    %20 = vector.broadcast %19 : vector<1x784xf32> to vector<8x784xf32>
    %21 = arith.mulf %18, %20 : vector<8x784xf32>
    %22 = vector.extract_strided_slice %2 {offsets = [0, 56], sizes = [8, 784], strides = [1, 1]} : vector<8x842xf32> to vector<8x784xf32>
    %23 = vector.extract_strided_slice %3 {offsets = [0, 0], sizes = [1, 784], strides = [1, 1]} : vector<2x784xf32> to vector<1x784xf32>
    %24 = vector.broadcast %23 : vector<1x784xf32> to vector<8x784xf32>
    %25 = arith.mulf %22, %24 : vector<8x784xf32>
    %26 = vector.extract_strided_slice %2 {offsets = [0, 57], sizes = [8, 784], strides = [1, 1]} : vector<8x842xf32> to vector<8x784xf32>
    %27 = vector.extract_strided_slice %2 {offsets = [0, 58], sizes = [8, 784], strides = [1, 1]} : vector<8x842xf32> to vector<8x784xf32>
    %28 = vector.extract_strided_slice %3 {offsets = [1, 0], sizes = [1, 784], strides = [1, 1]} : vector<2x784xf32> to vector<1x784xf32>
    %29 = vector.broadcast %28 : vector<1x784xf32> to vector<8x784xf32>
    %30 = arith.mulf %27, %29 : vector<8x784xf32>
    %31 = tpu.concatenate %7, %8, %12, %16, %17, %21, %25, %26, %30 in 0 : vector<8x784xf32>, vector<8x784xf32>, vector<8x784xf32>, vector<8x784xf32>, vector<8x784xf32>, vector<8x784xf32>, vector<8x784xf32>, vector<8x784xf32>, vector<8x784xf32> -> vector<72x784xf32>
    %c0_3 = arith.constant 0 : index
    %c0_4 = arith.constant 0 : index
    %32 = vector.load %arg2[%c0_3, %c0_4] : memref<128x72xf32, #tpu.memory_space<vmem>>, vector<128x72xf32>
    %cst_5 = arith.constant dense<0.000000e+00> : vector<128x784xf32>
    %33 = tpu.matmul %32, %31, %cst_5 {dimension_numbers = #tpu.dot_dimension_numbers<[1], [0], [0], [1], [0, 0, 1, 1], [], []>} : vector<128x72xf32>, vector<72x784xf32>, vector<128x784xf32> -> vector<128x784xf32>
    %c0_6 = arith.constant 0 : index
    %c0_7 = arith.constant 0 : index
    %34 = vector.load %arg3[%c0_6, %c0_7] : memref<128x1xf32, #tpu.memory_space<vmem>>, vector<128x1xf32>
    %35 = vector.broadcast %34 : vector<128x1xf32> to vector<128x784xf32>
    %36 = arith.addf %33, %35 : vector<128x784xf32>
    %cst_8 = arith.constant 0.000000e+00 : f32
    %37 = vector.broadcast %cst_8 : f32 to vector<128x784xf32>
    %38 = arith.maximumf %36, %37 : vector<128x784xf32>
    %39 = vector.extract_strided_slice %38 {offsets = [0, 0], sizes = [128, 756], strides = [1, 1]} : vector<128x784xf32> to vector<128x756xf32>
    %40 = vector.extract_strided_slice %38 {offsets = [0, 28], sizes = [128, 756], strides = [1, 1]} : vector<128x784xf32> to vector<128x756xf32>
    %41 = arith.maximumf %39, %40 : vector<128x756xf32>
    %42 = vector.extract_strided_slice %41 {offsets = [0, 0], sizes = [128, 755], strides = [1, 1]} : vector<128x756xf32> to vector<128x755xf32>
    %43 = vector.extract_strided_slice %41 {offsets = [0, 1], sizes = [128, 755], strides = [1, 1]} : vector<128x756xf32> to vector<128x755xf32>
    %44 = arith.maximumf %42, %43 : vector<128x755xf32>
    %c0_9 = arith.constant 0 : index
    %c0_10 = arith.constant 0 : index
    %45 = vector.load %arg5[%c0_9, %c0_10] : memref<755x196xf32, #tpu.memory_space<vmem>>, vector<755x196xf32>
    %cst_11 = arith.constant dense<0.000000e+00> : vector<128x196xf32>
    %46 = tpu.matmul %44, %45, %cst_11 {dimension_numbers = #tpu.dot_dimension_numbers<[1], [0], [0], [1], [0, 0, 1, 1], [], []>} : vector<128x755xf32>, vector<755x196xf32>, vector<128x196xf32> -> vector<128x196xf32>
    %cst_12 = arith.constant 0.000000e+00 : f32
    %47 = vector.broadcast %cst_12 : f32 to vector<128x15xf32>
    %48 = tpu.concatenate %47, %46, %47 in 1 : vector<128x15xf32>, vector<128x196xf32>, vector<128x15xf32> -> vector<128x226xf32>
    %c0_13 = arith.constant 0 : index
    %c0_14 = arith.constant 0 : index
    %49 = vector.load %arg8[%c0_13, %c0_14] : memref<2x196xf32, #tpu.memory_space<vmem>>, vector<2x196xf32>
    %50 = vector.extract_strided_slice %48 {offsets = [0, 0], sizes = [128, 196], strides = [1, 1]} : vector<128x226xf32> to vector<128x196xf32>
    %51 = vector.extract_strided_slice %49 {offsets = [0, 0], sizes = [1, 196], strides = [1, 1]} : vector<2x196xf32> to vector<1x196xf32>
    %52 = vector.broadcast %51 : vector<1x196xf32> to vector<128x196xf32>
    %53 = arith.mulf %50, %52 : vector<128x196xf32>
    %54 = arith.truncf %53 : vector<128x196xf32> to vector<128x196xbf16>
    %55 = vector.extract_strided_slice %48 {offsets = [0, 1], sizes = [128, 196], strides = [1, 1]} : vector<128x226xf32> to vector<128x196xf32>
    %56 = arith.truncf %55 : vector<128x196xf32> to vector<128x196xbf16>
    %57 = vector.extract_strided_slice %48 {offsets = [0, 2], sizes = [128, 196], strides = [1, 1]} : vector<128x226xf32> to vector<128x196xf32>
    %58 = vector.extract_strided_slice %49 {offsets = [1, 0], sizes = [1, 196], strides = [1, 1]} : vector<2x196xf32> to vector<1x196xf32>
    %59 = vector.broadcast %58 : vector<1x196xf32> to vector<128x196xf32>
    %60 = arith.mulf %57, %59 : vector<128x196xf32>
    %61 = arith.truncf %60 : vector<128x196xf32> to vector<128x196xbf16>
    %62 = vector.extract_strided_slice %48 {offsets = [0, 14], sizes = [128, 196], strides = [1, 1]} : vector<128x226xf32> to vector<128x196xf32>
    %63 = vector.extract_strided_slice %49 {offsets = [0, 0], sizes = [1, 196], strides = [1, 1]} : vector<2x196xf32> to vector<1x196xf32>
    %64 = vector.broadcast %63 : vector<1x196xf32> to vector<128x196xf32>
    %65 = arith.mulf %62, %64 : vector<128x196xf32>
    %66 = arith.truncf %65 : vector<128x196xf32> to vector<128x196xbf16>
    %67 = vector.extract_strided_slice %48 {offsets = [0, 15], sizes = [128, 196], strides = [1, 1]} : vector<128x226xf32> to vector<128x196xf32>
    %68 = arith.truncf %67 : vector<128x196xf32> to vector<128x196xbf16>
    %69 = vector.extract_strided_slice %48 {offsets = [0, 16], sizes = [128, 196], strides = [1, 1]} : vector<128x226xf32> to vector<128x196xf32>
    %70 = vector.extract_strided_slice %49 {offsets = [1, 0], sizes = [1, 196], strides = [1, 1]} : vector<2x196xf32> to vector<1x196xf32>
    %71 = vector.broadcast %70 : vector<1x196xf32> to vector<128x196xf32>
    %72 = arith.mulf %69, %71 : vector<128x196xf32>
    %73 = arith.truncf %72 : vector<128x196xf32> to vector<128x196xbf16>
    %74 = vector.extract_strided_slice %48 {offsets = [0, 28], sizes = [128, 196], strides = [1, 1]} : vector<128x226xf32> to vector<128x196xf32>
    %75 = vector.extract_strided_slice %49 {offsets = [0, 0], sizes = [1, 196], strides = [1, 1]} : vector<2x196xf32> to vector<1x196xf32>
    %76 = vector.broadcast %75 : vector<1x196xf32> to vector<128x196xf32>
    %77 = arith.mulf %74, %76 : vector<128x196xf32>
    %78 = arith.truncf %77 : vector<128x196xf32> to vector<128x196xbf16>
    %79 = vector.extract_strided_slice %48 {offsets = [0, 29], sizes = [128, 196], strides = [1, 1]} : vector<128x226xf32> to vector<128x196xf32>
    %80 = arith.truncf %79 : vector<128x196xf32> to vector<128x196xbf16>
    %81 = vector.extract_strided_slice %48 {offsets = [0, 30], sizes = [128, 196], strides = [1, 1]} : vector<128x226xf32> to vector<128x196xf32>
    %82 = vector.extract_strided_slice %49 {offsets = [1, 0], sizes = [1, 196], strides = [1, 1]} : vector<2x196xf32> to vector<1x196xf32>
    %83 = vector.broadcast %82 : vector<1x196xf32> to vector<128x196xf32>
    %84 = arith.mulf %81, %83 : vector<128x196xf32>
    %85 = arith.truncf %84 : vector<128x196xf32> to vector<128x196xbf16>
    %86 = tpu.concatenate %54, %56, %61, %66, %68, %73, %78, %80, %85 in 0 : vector<128x196xbf16>, vector<128x196xbf16>, vector<128x196xbf16>, vector<128x196xbf16>, vector<128x196xbf16>, vector<128x196xbf16>, vector<128x196xbf16>, vector<128x196xbf16>, vector<128x196xbf16> -> vector<1152x196xbf16>
    %c0_15 = arith.constant 0 : index
    %c0_16 = arith.constant 0 : index
    %87 = vector.load %arg6[%c0_15, %c0_16] : memref<256x1152xbf16, #tpu.memory_space<vmem>>, vector<256x1152xbf16>
    %cst_17 = arith.constant dense<0.000000e+00> : vector<256x196xf32>
    %88 = tpu.matmul %87, %86, %cst_17 {dimension_numbers = #tpu.dot_dimension_numbers<[1], [0], [0], [1], [0, 0, 1, 1], [], []>} : vector<256x1152xbf16>, vector<1152x196xbf16>, vector<256x196xf32> -> vector<256x196xf32>
    %c0_18 = arith.constant 0 : index
    %c0_19 = arith.constant 0 : index
    %89 = vector.load %arg7[%c0_18, %c0_19] : memref<256x1xf32, #tpu.memory_space<vmem>>, vector<256x1xf32>
    %90 = vector.broadcast %89 : vector<256x1xf32> to vector<256x196xf32>
    %91 = arith.addf %88, %90 : vector<256x196xf32>
    %cst_20 = arith.constant 0.000000e+00 : f32
    %92 = vector.broadcast %cst_20 : f32 to vector<256x196xf32>
    %93 = arith.maximumf %91, %92 : vector<256x196xf32>
    %94 = vector.extract_strided_slice %93 {offsets = [0, 0], sizes = [256, 182], strides = [1, 1]} : vector<256x196xf32> to vector<256x182xf32>
    %95 = vector.extract_strided_slice %93 {offsets = [0, 14], sizes = [256, 182], strides = [1, 1]} : vector<256x196xf32> to vector<256x182xf32>
    %96 = arith.maximumf %94, %95 : vector<256x182xf32>
    %97 = vector.extract_strided_slice %96 {offsets = [0, 0], sizes = [256, 181], strides = [1, 1]} : vector<256x182xf32> to vector<256x181xf32>
    %98 = vector.extract_strided_slice %96 {offsets = [0, 1], sizes = [256, 181], strides = [1, 1]} : vector<256x182xf32> to vector<256x181xf32>
    %99 = arith.maximumf %97, %98 : vector<256x181xf32>
    %100 = vector.extract_strided_slice %99 {offsets = [0, 0], sizes = [8, 181], strides = [1, 1]} : vector<256x181xf32> to vector<8x181xf32>
    %101 = vector.shape_cast %100 : vector<8x181xf32> to vector<1x8x181xf32>
    %102 = vector.extract_strided_slice %99 {offsets = [8, 0], sizes = [8, 181], strides = [1, 1]} : vector<256x181xf32> to vector<8x181xf32>
    %103 = vector.shape_cast %102 : vector<8x181xf32> to vector<1x8x181xf32>
    %104 = vector.extract_strided_slice %99 {offsets = [16, 0], sizes = [8, 181], strides = [1, 1]} : vector<256x181xf32> to vector<8x181xf32>
    %105 = vector.shape_cast %104 : vector<8x181xf32> to vector<1x8x181xf32>
    %106 = vector.extract_strided_slice %99 {offsets = [24, 0], sizes = [8, 181], strides = [1, 1]} : vector<256x181xf32> to vector<8x181xf32>
    %107 = vector.shape_cast %106 : vector<8x181xf32> to vector<1x8x181xf32>
    %108 = vector.extract_strided_slice %99 {offsets = [32, 0], sizes = [8, 181], strides = [1, 1]} : vector<256x181xf32> to vector<8x181xf32>
    %109 = vector.shape_cast %108 : vector<8x181xf32> to vector<1x8x181xf32>
    %110 = vector.extract_strided_slice %99 {offsets = [40, 0], sizes = [8, 181], strides = [1, 1]} : vector<256x181xf32> to vector<8x181xf32>
    %111 = vector.shape_cast %110 : vector<8x181xf32> to vector<1x8x181xf32>
    %112 = vector.extract_strided_slice %99 {offsets = [48, 0], sizes = [8, 181], strides = [1, 1]} : vector<256x181xf32> to vector<8x181xf32>
    %113 = vector.shape_cast %112 : vector<8x181xf32> to vector<1x8x181xf32>
    %114 = vector.extract_strided_slice %99 {offsets = [56, 0], sizes = [8, 181], strides = [1, 1]} : vector<256x181xf32> to vector<8x181xf32>
    %115 = vector.shape_cast %114 : vector<8x181xf32> to vector<1x8x181xf32>
    %116 = vector.extract_strided_slice %99 {offsets = [64, 0], sizes = [8, 181], strides = [1, 1]} : vector<256x181xf32> to vector<8x181xf32>
    %117 = vector.shape_cast %116 : vector<8x181xf32> to vector<1x8x181xf32>
    %118 = vector.extract_strided_slice %99 {offsets = [72, 0], sizes = [8, 181], strides = [1, 1]} : vector<256x181xf32> to vector<8x181xf32>
    %119 = vector.shape_cast %118 : vector<8x181xf32> to vector<1x8x181xf32>
    %120 = vector.extract_strided_slice %99 {offsets = [80, 0], sizes = [8, 181], strides = [1, 1]} : vector<256x181xf32> to vector<8x181xf32>
    %121 = vector.shape_cast %120 : vector<8x181xf32> to vector<1x8x181xf32>
    %122 = vector.extract_strided_slice %99 {offsets = [88, 0], sizes = [8, 181], strides = [1, 1]} : vector<256x181xf32> to vector<8x181xf32>
    %123 = vector.shape_cast %122 : vector<8x181xf32> to vector<1x8x181xf32>
    %124 = vector.extract_strided_slice %99 {offsets = [96, 0], sizes = [8, 181], strides = [1, 1]} : vector<256x181xf32> to vector<8x181xf32>
    %125 = vector.shape_cast %124 : vector<8x181xf32> to vector<1x8x181xf32>
    %126 = vector.extract_strided_slice %99 {offsets = [104, 0], sizes = [8, 181], strides = [1, 1]} : vector<256x181xf32> to vector<8x181xf32>
    %127 = vector.shape_cast %126 : vector<8x181xf32> to vector<1x8x181xf32>
    %128 = vector.extract_strided_slice %99 {offsets = [112, 0], sizes = [8, 181], strides = [1, 1]} : vector<256x181xf32> to vector<8x181xf32>
    %129 = vector.shape_cast %128 : vector<8x181xf32> to vector<1x8x181xf32>
    %130 = vector.extract_strided_slice %99 {offsets = [120, 0], sizes = [8, 181], strides = [1, 1]} : vector<256x181xf32> to vector<8x181xf32>
    %131 = vector.shape_cast %130 : vector<8x181xf32> to vector<1x8x181xf32>
    %132 = vector.extract_strided_slice %99 {offsets = [128, 0], sizes = [8, 181], strides = [1, 1]} : vector<256x181xf32> to vector<8x181xf32>
    %133 = vector.shape_cast %132 : vector<8x181xf32> to vector<1x8x181xf32>
    %134 = vector.extract_strided_slice %99 {offsets = [136, 0], sizes = [8, 181], strides = [1, 1]} : vector<256x181xf32> to vector<8x181xf32>
    %135 = vector.shape_cast %134 : vector<8x181xf32> to vector<1x8x181xf32>
    %136 = vector.extract_strided_slice %99 {offsets = [144, 0], sizes = [8, 181], strides = [1, 1]} : vector<256x181xf32> to vector<8x181xf32>
    %137 = vector.shape_cast %136 : vector<8x181xf32> to vector<1x8x181xf32>
    %138 = vector.extract_strided_slice %99 {offsets = [152, 0], sizes = [8, 181], strides = [1, 1]} : vector<256x181xf32> to vector<8x181xf32>
    %139 = vector.shape_cast %138 : vector<8x181xf32> to vector<1x8x181xf32>
    %140 = vector.extract_strided_slice %99 {offsets = [160, 0], sizes = [8, 181], strides = [1, 1]} : vector<256x181xf32> to vector<8x181xf32>
    %141 = vector.shape_cast %140 : vector<8x181xf32> to vector<1x8x181xf32>
    %142 = vector.extract_strided_slice %99 {offsets = [168, 0], sizes = [8, 181], strides = [1, 1]} : vector<256x181xf32> to vector<8x181xf32>
    %143 = vector.shape_cast %142 : vector<8x181xf32> to vector<1x8x181xf32>
    %144 = vector.extract_strided_slice %99 {offsets = [176, 0], sizes = [8, 181], strides = [1, 1]} : vector<256x181xf32> to vector<8x181xf32>
    %145 = vector.shape_cast %144 : vector<8x181xf32> to vector<1x8x181xf32>
    %146 = vector.extract_strided_slice %99 {offsets = [184, 0], sizes = [8, 181], strides = [1, 1]} : vector<256x181xf32> to vector<8x181xf32>
    %147 = vector.shape_cast %146 : vector<8x181xf32> to vector<1x8x181xf32>
    %148 = vector.extract_strided_slice %99 {offsets = [192, 0], sizes = [8, 181], strides = [1, 1]} : vector<256x181xf32> to vector<8x181xf32>
    %149 = vector.shape_cast %148 : vector<8x181xf32> to vector<1x8x181xf32>
    %150 = vector.extract_strided_slice %99 {offsets = [200, 0], sizes = [8, 181], strides = [1, 1]} : vector<256x181xf32> to vector<8x181xf32>
    %151 = vector.shape_cast %150 : vector<8x181xf32> to vector<1x8x181xf32>
    %152 = vector.extract_strided_slice %99 {offsets = [208, 0], sizes = [8, 181], strides = [1, 1]} : vector<256x181xf32> to vector<8x181xf32>
    %153 = vector.shape_cast %152 : vector<8x181xf32> to vector<1x8x181xf32>
    %154 = vector.extract_strided_slice %99 {offsets = [216, 0], sizes = [8, 181], strides = [1, 1]} : vector<256x181xf32> to vector<8x181xf32>
    %155 = vector.shape_cast %154 : vector<8x181xf32> to vector<1x8x181xf32>
    %156 = vector.extract_strided_slice %99 {offsets = [224, 0], sizes = [8, 181], strides = [1, 1]} : vector<256x181xf32> to vector<8x181xf32>
    %157 = vector.shape_cast %156 : vector<8x181xf32> to vector<1x8x181xf32>
    %158 = vector.extract_strided_slice %99 {offsets = [232, 0], sizes = [8, 181], strides = [1, 1]} : vector<256x181xf32> to vector<8x181xf32>
    %159 = vector.shape_cast %158 : vector<8x181xf32> to vector<1x8x181xf32>
    %160 = vector.extract_strided_slice %99 {offsets = [240, 0], sizes = [8, 181], strides = [1, 1]} : vector<256x181xf32> to vector<8x181xf32>
    %161 = vector.shape_cast %160 : vector<8x181xf32> to vector<1x8x181xf32>
    %162 = vector.extract_strided_slice %99 {offsets = [248, 0], sizes = [8, 181], strides = [1, 1]} : vector<256x181xf32> to vector<8x181xf32>
    %163 = vector.shape_cast %162 : vector<8x181xf32> to vector<1x8x181xf32>
    %164 = tpu.concatenate %101, %103, %105, %107, %109, %111, %113, %115, %117, %119, %121, %123, %125, %127, %129, %131 in 0 : vector<1x8x181xf32>, vector<1x8x181xf32>, vector<1x8x181xf32>, vector<1x8x181xf32>, vector<1x8x181xf32>, vector<1x8x181xf32>, vector<1x8x181xf32>, vector<1x8x181xf32>, vector<1x8x181xf32>, vector<1x8x181xf32>, vector<1x8x181xf32>, vector<1x8x181xf32>, vector<1x8x181xf32>, vector<1x8x181xf32>, vector<1x8x181xf32>, vector<1x8x181xf32> -> vector<16x8x181xf32>
    %165 = tpu.concatenate %133, %135, %137, %139, %141, %143, %145, %147, %149, %151, %153, %155, %157, %159, %161, %163 in 0 : vector<1x8x181xf32>, vector<1x8x181xf32>, vector<1x8x181xf32>, vector<1x8x181xf32>, vector<1x8x181xf32>, vector<1x8x181xf32>, vector<1x8x181xf32>, vector<1x8x181xf32>, vector<1x8x181xf32>, vector<1x8x181xf32>, vector<1x8x181xf32>, vector<1x8x181xf32>, vector<1x8x181xf32>, vector<1x8x181xf32>, vector<1x8x181xf32>, vector<1x8x181xf32> -> vector<16x8x181xf32>
    %166 = tpu.concatenate %164, %165 in 0 : vector<16x8x181xf32>, vector<16x8x181xf32> -> vector<32x8x181xf32>
    %c0_21 = arith.constant 0 : index
    %c0_22 = arith.constant 0 : index
    %c0_23 = arith.constant 0 : index
    %167 = vector.load %arg9[%c0_21, %c0_22, %c0_23] : memref<32x181x128xf32, #tpu.memory_space<vmem>>, vector<32x181x128xf32>
    %cst_24 = arith.constant dense<0.000000e+00> : vector<32x8x128xf32>
    %168 = tpu.matmul %166, %167, %cst_24 {dimension_numbers = #tpu.dot_dimension_numbers<[2], [1], [1], [2], [0, 0, 0, 1, 1, 2], [0], [0]>} : vector<32x8x181xf32>, vector<32x181x128xf32>, vector<32x8x128xf32> -> vector<32x8x128xf32>
    %cst_25 = arith.constant dense<0.000000e+00> : vector<8x128xf32>
    %169 = vector.multi_reduction <add>, %168, %cst_25 [0] : vector<32x8x128xf32> to vector<8x128xf32>
    %c0_26 = arith.constant 0 : index
    %c0_27 = arith.constant 0 : index
    %170 = vector.load %arg10[%c0_26, %c0_27] : memref<1x128xf32, #tpu.memory_space<vmem>>, vector<1x128xf32>
    %171 = vector.broadcast %170 : vector<1x128xf32> to vector<8x128xf32>
    %172 = arith.addf %169, %171 : vector<8x128xf32>
    %c0_28 = arith.constant 0 : index
    %c0_29 = arith.constant 0 : index
    %173 = vector.load %arg11[%c0_28, %c0_29] : memref<8x128xf32, #tpu.memory_space<vmem>>, vector<8x128xf32>
    tpu.vector_store %arg11[%c0_28, %c0_29], %172 {strides = array<i32>} : memref<8x128xf32, #tpu.memory_space<vmem>>, vector<8x128xf32>,
    return
  }
  func.func @transform_0(%arg0: i32) -> (i32, i32) {
    %c0_i32 = arith.constant 0 : i32
    %c0_i32_0 = arith.constant 0 : i32
    return %arg0, %c0_i32 : i32, i32
  }
  func.func @transform_1(%arg0: i32) -> (i32, i32) {
    %c0_i32 = arith.constant 0 : i32
    %c0_i32_0 = arith.constant 0 : i32
    %c0_i32_1 = arith.constant 0 : i32
    return %c0_i32, %c0_i32_0 : i32, i32
  }
  func.func @transform_2(%arg0: i32) -> (i32, i32) {
    %c0_i32 = arith.constant 0 : i32
    %c0_i32_0 = arith.constant 0 : i32
    %c0_i32_1 = arith.constant 0 : i32
    return %c0_i32, %c0_i32_0 : i32, i32
  }
  func.func @transform_3(%arg0: i32) -> (i32, i32) {
    %c0_i32 = arith.constant 0 : i32
    %c0_i32_0 = arith.constant 0 : i32
    %c0_i32_1 = arith.constant 0 : i32
    return %c0_i32, %c0_i32_0 : i32, i32
  }
  func.func @transform_4(%arg0: i32) -> (i32, i32) {
    %c0_i32 = arith.constant 0 : i32
    %c0_i32_0 = arith.constant 0 : i32
    %c0_i32_1 = arith.constant 0 : i32
    return %c0_i32, %c0_i32_0 : i32, i32
  }
  func.func @transform_5(%arg0: i32) -> (i32, i32) {
    %c0_i32 = arith.constant 0 : i32
    %c0_i32_0 = arith.constant 0 : i32
    %c0_i32_1 = arith.constant 0 : i32
    return %c0_i32, %c0_i32_0 : i32, i32
  }
  func.func @transform_6(%arg0: i32) -> (i32, i32) {
    %c0_i32 = arith.constant 0 : i32
    %c0_i32_0 = arith.constant 0 : i32
    %c0_i32_1 = arith.constant 0 : i32
    return %c0_i32, %c0_i32_0 : i32, i32
  }
  func.func @transform_7(%arg0: i32) -> (i32, i32) {
    %c0_i32 = arith.constant 0 : i32
    %c0_i32_0 = arith.constant 0 : i32
    %c0_i32_1 = arith.constant 0 : i32
    return %c0_i32, %c0_i32_0 : i32, i32
  }
  func.func @transform_8(%arg0: i32) -> (i32, i32, i32) {
    %c0_i32 = arith.constant 0 : i32
    %c0_i32_0 = arith.constant 0 : i32
    %c0_i32_1 = arith.constant 0 : i32
    %c0_i32_2 = arith.constant 0 : i32
    return %c0_i32, %c0_i32_0, %c0_i32_1 : i32, i32, i32
  }
  func.func @transform_9(%arg0: i32) -> (i32, i32) {
    %c0_i32 = arith.constant 0 : i32
    %c0_i32_0 = arith.constant 0 : i32
    %c0_i32_1 = arith.constant 0 : i32
    return %c0_i32, %c0_i32_0 : i32, i32
  }
  func.func @transform_10(%arg0: i32) -> (i32, i32) {
    %c0_i32 = arith.constant 0 : i32
    %c0_i32_0 = arith.constant 0 : i32
    return %arg0, %c0_i32 : i32, i32
  }
}

</mosaic_0001>

<llo_original>
// kernel: cnn_forward_pallas.1
$region0: #{cnn_forward_pallas.1}
  #allocation0 [shape = 'u32[]', space=smem, size = 0x4, offset = 0x4, fixed_abs, tag = 'smem constant byte address 0x4 - core index']
  #allocation1 [shape = 'u32[72,128]{1,0:T(1,128)}', space=vmem, size = 0x9000, scoped, tag = 'internal scratch']
  %s0 = inlined_call_operand.vmem [shape: f32[8,784], index: 0, kind: input, shape index: {}]
  %s1 = inlined_call_operand.vmem [shape: f32[128,72], index: 1, kind: input, shape index: {}]
  %s2 = inlined_call_operand.vmem [shape: f32[128,1], index: 2, kind: input, shape index: {}]
  %s3 = inlined_call_operand.vmem [shape: f32[2,784], index: 3, kind: input, shape index: {}]
  %s4 = inlined_call_operand.vmem [shape: f32[755,196], index: 4, kind: input, shape index: {}]
  %s5 = inlined_call_operand.vmem [shape: bf16[256,1152], index: 5, kind: input, shape index: {}]
  %s6 = inlined_call_operand.vmem [shape: f32[256,1], index: 6, kind: input, shape index: {}]
  %s7 = inlined_call_operand.vmem [shape: f32[2,196], index: 7, kind: input, shape index: {}]
  %s8 = inlined_call_operand.vmem [shape: f32[32,181,128], index: 8, kind: input, shape index: {}]
  %s9 = inlined_call_operand.vmem [shape: f32[1,128], index: 9, kind: input, shape index: {}]
  %s10 = inlined_call_operand.vmem [shape: f32[8,128], index: 10, kind: output, shape index: {}]
  %s11 = sld [smem:[#allocation0]]
  $region50: #{cnn_forward_pallas.1} parent=0
    _
  %s13 = ssub.s32 1, %s11
  %s14 = scalar_select 0, %s13, %s11
  // Predicated region
  $region2: #{cnn_forward_pallas.1} parent=0 // pred_check
    _
  $region3: #{cnn_forward_pallas.1} parent=0 // pred_check_branch
    %16 = sbr.rel (0) target = $region5
  $region4: #{cnn_forward_pallas.1} parent=0 // pred_region
    _
  $region5: #{cnn_forward_pallas.1} parent=0 // pred_fallthru
    _
  // Predicated region
  $region6: #{cnn_forward_pallas.1} parent=0 // pred_check
    _
  $region7: #{cnn_forward_pallas.1} parent=0 // pred_check_branch
    %18 = sbr.rel (0) target = $region9
  $region8: #{cnn_forward_pallas.1} parent=0 // pred_region
    _
  $region9: #{cnn_forward_pallas.1} parent=0 // pred_fallthru
    _
  // Predicated region
  $region10: #{cnn_forward_pallas.1} parent=0 // pred_check
    _
  $region11: #{cnn_forward_pallas.1} parent=0 // pred_check_branch
    %20 = sbr.rel (0) target = $region13
  $region12: #{cnn_forward_pallas.1} parent=0 // pred_region
    _
  $region13: #{cnn_forward_pallas.1} parent=0 // pred_fallthru
    _
  // Predicated region
  $region14: #{cnn_forward_pallas.1} parent=0 // pred_check
    _
  $region15: #{cnn_forward_pallas.1} parent=0 // pred_check_branch
    %22 = sbr.rel (0) target = $region17
  $region16: #{cnn_forward_pallas.1} parent=0 // pred_region
    _
  $region17: #{cnn_forward_pallas.1} parent=0 // pred_fallthru
    _
  // Predicated region
  $region18: #{cnn_forward_pallas.1} parent=0 // pred_check
    _
  $region19: #{cnn_forward_pallas.1} parent=0 // pred_check_branch
    %24 = sbr.rel (0) target = $region21
  $region20: #{cnn_forward_pallas.1} parent=0 // pred_region
    _
  $region21: #{cnn_forward_pallas.1} parent=0 // pred_fallthru
    _
  // Predicated region
  $region22: #{cnn_forward_pallas.1} parent=0 // pred_check
    _
  $region23: #{cnn_forward_pallas.1} parent=0 // pred_check_branch
    %26 = sbr.rel (0) target = $region25
  $region24: #{cnn_forward_pallas.1} parent=0 // pred_region
    _
  $region25: #{cnn_forward_pallas.1} parent=0 // pred_fallthru
    _
  // Predicated region
  $region26: #{cnn_forward_pallas.1} parent=0 // pred_check
    _
  $region27: #{cnn_forward_pallas.1} parent=0 // pred_check_branch
    %28 = sbr.rel (0) target = $region29
  $region28: #{cnn_forward_pallas.1} parent=0 // pred_region
    _
  $region29: #{cnn_forward_pallas.1} parent=0 // pred_fallthru
    _
  // Predicated region
  $region30: #{cnn_forward_pallas.1} parent=0 // pred_check
    _
  $region31: #{cnn_forward_pallas.1} parent=0 // pred_check_branch
    %30 = sbr.rel (0) target = $region33
  $region32: #{cnn_forward_pallas.1} parent=0 // pred_region
    _
  $region33: #{cnn_forward_pallas.1} parent=0 // pred_fallthru
    _
  // Predicated region
  $region34: #{cnn_forward_pallas.1} parent=0 // pred_check
    _
  $region35: #{cnn_forward_pallas.1} parent=0 // pred_check_branch
    %32 = sbr.rel (0) target = $region37
  $region36: #{cnn_forward_pallas.1} parent=0 // pred_region
    _
  $region37: #{cnn_forward_pallas.1} parent=0 // pred_fallthru
    _
  // Predicated region
  $region38: #{cnn_forward_pallas.1} parent=0 // pred_check
    _
  $region39: #{cnn_forward_pallas.1} parent=0 // pred_check_branch
    %34 = sbr.rel (0) target = $region41
  $region40: #{cnn_forward_pallas.1} parent=0 // pred_region
    _
  $region41: #{cnn_forward_pallas.1} parent=0 // pred_fallthru
    _
  %v35 = vld [vmem:[%s0] sm:$0xff]
  %v36 = vld [vmem:[%s0 + $0x8] sm:$0xff]
  %v37 = vld [vmem:[%s0 + $0x10] sm:$0xff]
  %v38 = vld [vmem:[%s0 + $0x18] sm:$0xff]
  %v39 = vld [vmem:[%s0 + $0x20] sm:$0xff]
  %v40 = vld [vmem:[%s0 + $0x28] sm:$0xff]
  %v41 = vld [vmem:[%s0 + $0x30] sm:$0xff]
  %49 = vrot.lane.b32.xlu0 %v35, 29
  %v50 = vpop.permute.xlu0 %49
  %51 = vrot.lane.b32.xlu0 %v36, 29
  %v52 = vpop.permute.xlu0 %51
  %53 = vrot.lane.b32.xlu0 %v37, 29
  %v54 = vpop.permute.xlu0 %53
  %55 = vrot.lane.b32.xlu0 %v38, 29
  %v56 = vpop.permute.xlu0 %55
  %57 = vrot.lane.b32.xlu0 %v39, 29
  %v58 = vpop.permute.xlu0 %57
  %59 = vrot.lane.b32.xlu0 %v40, 29
  %v60 = vpop.permute.xlu0 %59
  %61 = vrot.lane.b32.xlu0 %v41, 29
  %v62 = vpop.permute.xlu0 %61
  %vm63 = vcmask 236544
  %v64 = vsel %vm63, %v50, %v52
  %v65 = vsel %vm63, %v52, %v54
  %v66 = vsel %vm63, %v54, %v56
  %v67 = vsel %vm63, %v56, %v58
  %v68 = vsel %vm63, %v58, %v60
  %v69 = vsel %vm63, %v60, %v62
  %v77 = vsel %vm63, 0.0, %v50
  %vm78 = vcmask 367616
  %v79 = vsel %vm78, %v69, 0.0
  %v80 = vld [vmem:[%s3] sm:$0xff]
  %v81 = vld [vmem:[%s3 + $0x8] sm:$0x3f]
  %v84 = vperm.slane %v80, 0
  %v85 = vperm.slane %v80, 2
  %v86 = vperm.slane %v80, 4
  %v87 = vperm.slane %v80, 6
  %v88 = vperm.slane %v81, 0
  %v89 = vperm.slane %v81, 2
  %v90 = vperm.slane %v81, 4
  %v98 = vperm.slane %v84, 0
  %v99 = vperm.slane %v85, 0
  %v100 = vperm.slane %v86, 0
  %v101 = vperm.slane %v87, 0
  %v102 = vperm.slane %v88, 0
  %v103 = vperm.slane %v89, 0
  %v104 = vperm.slane %v90, 0
  %v105 = vmul.f32 %v77, %v98
  %v106 = vmul.f32 %v64, %v99
  %v107 = vmul.f32 %v65, %v100
  %v108 = vmul.f32 %v66, %v101
  %v109 = vmul.f32 %v67, %v102
  %v110 = vmul.f32 %v68, %v103
  %v111 = vmul.f32 %v79, %v104
  %v112 = vperm.slane %v80, 1
  %v113 = vperm.slane %v80, 3
  %v114 = vperm.slane %v80, 5
  %v115 = vperm.slane %v80, 7
  %v116 = vperm.slane %v81, 1
  %v117 = vperm.slane %v81, 3
  %v118 = vperm.slane %v81, 5
  %v126 = vperm.slane %v112, 1
  %v127 = vperm.slane %v113, 1
  %v128 = vperm.slane %v114, 1
  %v129 = vperm.slane %v115, 1
  %v130 = vperm.slane %v116, 1
  %v131 = vperm.slane %v117, 1
  %v132 = vperm.slane %v118, 1
  %140 = vrot.lane.b32.xlu0 %v126, 2
  %v141 = vpop.permute.xlu0 %140
  %142 = vrot.lane.b32.xlu0 %v127, 2
  %v143 = vpop.permute.xlu0 %142
  %144 = vrot.lane.b32.xlu0 %v128, 2
  %v145 = vpop.permute.xlu0 %144
  %146 = vrot.lane.b32.xlu0 %v129, 2
  %v147 = vpop.permute.xlu0 %146
  %148 = vrot.lane.b32.xlu0 %v130, 2
  %v149 = vpop.permute.xlu0 %148
  %150 = vrot.lane.b32.xlu0 %v131, 2
  %v151 = vpop.permute.xlu0 %150
  %152 = vrot.lane.b32.xlu0 %v132, 2
  %v153 = vpop.permute.xlu0 %152
  %vm154 = vcmask 15360
  %v155 = vsel %vm154, %v141, %v143
  %v156 = vsel %vm154, %v143, %v145
  %v157 = vsel %vm154, %v145, %v147
  %v158 = vsel %vm154, %v147, %v149
  %v159 = vsel %vm154, %v149, %v151
  %v160 = vsel %vm154, %v151, %v153
  %v168 = vmul.f32 %v77, %v141
  %v169 = vmul.f32 %v64, %v155
  %v170 = vmul.f32 %v65, %v156
  %v171 = vmul.f32 %v66, %v157
  %v172 = vmul.f32 %v67, %v158
  %v173 = vmul.f32 %v68, %v159
  %v174 = vmul.f32 %v79, %v160
  %182 = vrot.lane.b32.xlu0 %v98, 28
  %v183 = vpop.permute.xlu0 %182
  %184 = vrot.lane.b32.xlu0 %v99, 28
  %v185 = vpop.permute.xlu0 %184
  %186 = vrot.lane.b32.xlu0 %v100, 28
  %v187 = vpop.permute.xlu0 %186
  %188 = vrot.lane.b32.xlu0 %v101, 28
  %v189 = vpop.permute.xlu0 %188
  %190 = vrot.lane.b32.xlu0 %v102, 28
  %v191 = vpop.permute.xlu0 %190
  %192 = vrot.lane.b32.xlu0 %v103, 28
  %v193 = vpop.permute.xlu0 %192
  %194 = vrot.lane.b32.xlu0 %v104, 28
  %v195 = vpop.permute.xlu0 %194
  %vm196 = vcmask 228352
  %v197 = vsel %vm196, %v183, %v185
  %v198 = vsel %vm196, %v185, %v187
  %v199 = vsel %vm196, %v187, %v189
  %v200 = vsel %vm196, %v189, %v191
  %v201 = vsel %vm196, %v191, %v193
  %v202 = vsel %vm196, %v193, %v195
  %v210 = vmul.f32 %v77, %v183
  %v211 = vmul.f32 %v64, %v197
  %v212 = vmul.f32 %v65, %v198
  %v213 = vmul.f32 %v66, %v199
  %v214 = vmul.f32 %v67, %v200
  %v215 = vmul.f32 %v68, %v201
  %v216 = vmul.f32 %v79, %v202
  %217 = vrot.lane.b32.xlu0 %v126, 30
  %v218 = vpop.permute.xlu0 %217
  %219 = vrot.lane.b32.xlu0 %v127, 30
  %v220 = vpop.permute.xlu0 %219
  %221 = vrot.lane.b32.xlu0 %v128, 30
  %v222 = vpop.permute.xlu0 %221
  %223 = vrot.lane.b32.xlu0 %v129, 30
  %v224 = vpop.permute.xlu0 %223
  %225 = vrot.lane.b32.xlu0 %v130, 30
  %v226 = vpop.permute.xlu0 %225
  %227 = vrot.lane.b32.xlu0 %v131, 30
  %v228 = vpop.permute.xlu0 %227
  %229 = vrot.lane.b32.xlu0 %v132, 30
  %v230 = vpop.permute.xlu0 %229
  %vm231 = vcmask 244736
  %v232 = vsel %vm231, %v218, %v220
  %v233 = vsel %vm231, %v220, %v222
  %v234 = vsel %vm231, %v222, %v224
  %v235 = vsel %vm231, %v224, %v226
  %v236 = vsel %vm231, %v226, %v228
  %v237 = vsel %vm231, %v228, %v230
  %v245 = vmul.f32 %v77, %v218
  %v246 = vmul.f32 %v64, %v232
  %v247 = vmul.f32 %v65, %v233
  %v248 = vmul.f32 %v66, %v234
  %v249 = vmul.f32 %v67, %v235
  %v250 = vmul.f32 %v68, %v236
  %v251 = vmul.f32 %v79, %v237
  %252 = vrot.lane.b32.xlu0 %v98, 56
  %v253 = vpop.permute.xlu0 %252
  %254 = vrot.lane.b32.xlu0 %v99, 56
  %v255 = vpop.permute.xlu0 %254
  %256 = vrot.lane.b32.xlu0 %v100, 56
  %v257 = vpop.permute.xlu0 %256
  %258 = vrot.lane.b32.xlu0 %v101, 56
  %v259 = vpop.permute.xlu0 %258
  %260 = vrot.lane.b32.xlu0 %v102, 56
  %v261 = vpop.permute.xlu0 %260
  %262 = vrot.lane.b32.xlu0 %v103, 56
  %v263 = vpop.permute.xlu0 %262
  %264 = vrot.lane.b32.xlu0 %v104, 56
  %v265 = vpop.permute.xlu0 %264
  %vm266 = vcmask 457728
  %v267 = vsel %vm266, %v253, %v255
  %v268 = vsel %vm266, %v255, %v257
  %v269 = vsel %vm266, %v257, %v259
  %v270 = vsel %vm266, %v259, %v261
  %v271 = vsel %vm266, %v261, %v263
  %v272 = vsel %vm266, %v263, %v265
  %v280 = vmul.f32 %v77, %v253
  %v281 = vmul.f32 %v64, %v267
  %v282 = vmul.f32 %v65, %v268
  %v283 = vmul.f32 %v66, %v269
  %v284 = vmul.f32 %v67, %v270
  %v285 = vmul.f32 %v68, %v271
  %v286 = vmul.f32 %v79, %v272
  %287 = vrot.lane.b32.xlu0 %v126, 58
  %v288 = vpop.permute.xlu0 %287
  %289 = vrot.lane.b32.xlu0 %v127, 58
  %v290 = vpop.permute.xlu0 %289
  %291 = vrot.lane.b32.xlu0 %v128, 58
  %v292 = vpop.permute.xlu0 %291
  %293 = vrot.lane.b32.xlu0 %v129, 58
  %v294 = vpop.permute.xlu0 %293
  %295 = vrot.lane.b32.xlu0 %v130, 58
  %v296 = vpop.permute.xlu0 %295
  %297 = vrot.lane.b32.xlu0 %v131, 58
  %v298 = vpop.permute.xlu0 %297
  %299 = vrot.lane.b32.xlu0 %v132, 58
  %v300 = vpop.permute.xlu0 %299
  %vm301 = vcmask 474112
  %v302 = vsel %vm301, %v288, %v290
  %v303 = vsel %vm301, %v290, %v292
  %v304 = vsel %vm301, %v292, %v294
  %v305 = vsel %vm301, %v294, %v296
  %v306 = vsel %vm301, %v296, %v298
  %v307 = vsel %vm301, %v298, %v300
  %v315 = vmul.f32 %v77, %v288
  %v316 = vmul.f32 %v64, %v302
  %v317 = vmul.f32 %v65, %v303
  %v318 = vmul.f32 %v66, %v304
  %v319 = vmul.f32 %v67, %v305
  %v320 = vmul.f32 %v68, %v306
  %v321 = vmul.f32 %v79, %v307
  %324 = vrot.lane.b32.xlu0 %v77, 127
  %v325 = vpop.permute.xlu0 %324
  %326 = vrot.lane.b32.xlu0 %v64, 127
  %v327 = vpop.permute.xlu0 %326
  %328 = vrot.lane.b32.xlu0 %v65, 127
  %v329 = vpop.permute.xlu0 %328
  %330 = vrot.lane.b32.xlu0 %v66, 127
  %v331 = vpop.permute.xlu0 %330
  %332 = vrot.lane.b32.xlu0 %v67, 127
  %v333 = vpop.permute.xlu0 %332
  %334 = vrot.lane.b32.xlu0 %v68, 127
  %v335 = vpop.permute.xlu0 %334
  %336 = vrot.lane.b32.xlu0 %v79, 127
  %v337 = vpop.permute.xlu0 %336
  %vm338 = vcmask 1039360
  %v339 = vsel %vm338, %v325, %v327
  %v340 = vsel %vm338, %v327, %v329
  %v341 = vsel %vm338, %v329, %v331
  %v342 = vsel %vm338, %v331, %v333
  %v343 = vsel %vm338, %v333, %v335
  %v344 = vsel %vm338, %v335, %v337
  %359 = vrot.lane.b32.xlu0 %v168, 126
  %v360 = vpop.permute.xlu0 %359
  %361 = vrot.lane.b32.xlu0 %v169, 126
  %v362 = vpop.permute.xlu0 %361
  %363 = vrot.lane.b32.xlu0 %v170, 126
  %v364 = vpop.permute.xlu0 %363
  %365 = vrot.lane.b32.xlu0 %v171, 126
  %v366 = vpop.permute.xlu0 %365
  %367 = vrot.lane.b32.xlu0 %v172, 126
  %v368 = vpop.permute.xlu0 %367
  %369 = vrot.lane.b32.xlu0 %v173, 126
  %v370 = vpop.permute.xlu0 %369
  %371 = vrot.lane.b32.xlu0 %v174, 126
  %v372 = vpop.permute.xlu0 %371
  %vm373 = vcmask 1031168
  %v374 = vsel %vm373, %v360, %v362
  %v375 = vsel %vm373, %v362, %v364
  %v376 = vsel %vm373, %v364, %v366
  %v377 = vsel %vm373, %v366, %v368
  %v378 = vsel %vm373, %v368, %v370
  %v379 = vsel %vm373, %v370, %v372
  %394 = vrot.lane.b32.xlu0 %v210, 100
  %v395 = vpop.permute.xlu0 %394
  %396 = vrot.lane.b32.xlu0 %v211, 100
  %v397 = vpop.permute.xlu0 %396
  %398 = vrot.lane.b32.xlu0 %v212, 100
  %v399 = vpop.permute.xlu0 %398
  %400 = vrot.lane.b32.xlu0 %v213, 100
  %v401 = vpop.permute.xlu0 %400
  %402 = vrot.lane.b32.xlu0 %v214, 100
  %v403 = vpop.permute.xlu0 %402
  %404 = vrot.lane.b32.xlu0 %v215, 100
  %v405 = vpop.permute.xlu0 %404
  %406 = vrot.lane.b32.xlu0 %v216, 100
  %v407 = vpop.permute.xlu0 %406
  %vm408 = vcmask 818176
  %v409 = vsel %vm408, %v395, %v397
  %v410 = vsel %vm408, %v397, %v399
  %v411 = vsel %vm408, %v399, %v401
  %v412 = vsel %vm408, %v401, %v403
  %v413 = vsel %vm408, %v403, %v405
  %v414 = vsel %vm408, %v405, %v407
  %422 = vrot.lane.b32.xlu0 %v77, 99
  %v423 = vpop.permute.xlu0 %422
  %424 = vrot.lane.b32.xlu0 %v64, 99
  %v425 = vpop.permute.xlu0 %424
  %426 = vrot.lane.b32.xlu0 %v65, 99
  %v427 = vpop.permute.xlu0 %426
  %428 = vrot.lane.b32.xlu0 %v66, 99
  %v429 = vpop.permute.xlu0 %428
  %430 = vrot.lane.b32.xlu0 %v67, 99
  %v431 = vpop.permute.xlu0 %430
  %432 = vrot.lane.b32.xlu0 %v68, 99
  %v433 = vpop.permute.xlu0 %432
  %434 = vrot.lane.b32.xlu0 %v79, 99
  %v435 = vpop.permute.xlu0 %434
  %vm436 = vcmask 809984
  %v437 = vsel %vm436, %v423, %v425
  %v438 = vsel %vm436, %v425, %v427
  %v439 = vsel %vm436, %v427, %v429
  %v440 = vsel %vm436, %v429, %v431
  %v441 = vsel %vm436, %v431, %v433
  %v442 = vsel %vm436, %v433, %v435
  %457 = vrot.lane.b32.xlu0 %v245, 98
  %v458 = vpop.permute.xlu0 %457
  %459 = vrot.lane.b32.xlu0 %v246, 98
  %v460 = vpop.permute.xlu0 %459
  %461 = vrot.lane.b32.xlu0 %v247, 98
  %v462 = vpop.permute.xlu0 %461
  %463 = vrot.lane.b32.xlu0 %v248, 98
  %v464 = vpop.permute.xlu0 %463
  %465 = vrot.lane.b32.xlu0 %v249, 98
  %v466 = vpop.permute.xlu0 %465
  %467 = vrot.lane.b32.xlu0 %v250, 98
  %v468 = vpop.permute.xlu0 %467
  %469 = vrot.lane.b32.xlu0 %v251, 98
  %v470 = vpop.permute.xlu0 %469
  %vm471 = vcmask 801792
  %v472 = vsel %vm471, %v458, %v460
  %v473 = vsel %vm471, %v460, %v462
  %v474 = vsel %vm471, %v462, %v464
  %v475 = vsel %vm471, %v464, %v466
  %v476 = vsel %vm471, %v466, %v468
  %v477 = vsel %vm471, %v468, %v470
  %492 = vrot.lane.b32.xlu0 %v280, 72
  %v493 = vpop.permute.xlu0 %492
  %494 = vrot.lane.b32.xlu0 %v281, 72
  %v495 = vpop.permute.xlu0 %494
  %496 = vrot.lane.b32.xlu0 %v282, 72
  %v497 = vpop.permute.xlu0 %496
  %498 = vrot.lane.b32.xlu0 %v283, 72
  %v499 = vpop.permute.xlu0 %498
  %500 = vrot.lane.b32.xlu0 %v284, 72
  %v501 = vpop.permute.xlu0 %500
  %502 = vrot.lane.b32.xlu0 %v285, 72
  %v503 = vpop.permute.xlu0 %502
  %504 = vrot.lane.b32.xlu0 %v286, 72
  %v505 = vpop.permute.xlu0 %504
  %vm506 = vcmask 588800
  %v507 = vsel %vm506, %v493, %v495
  %v508 = vsel %vm506, %v495, %v497
  %v509 = vsel %vm506, %v497, %v499
  %v510 = vsel %vm506, %v499, %v501
  %v511 = vsel %vm506, %v501, %v503
  %v512 = vsel %vm506, %v503, %v505
  %520 = vrot.lane.b32.xlu0 %v77, 71
  %v521 = vpop.permute.xlu0 %520
  %522 = vrot.lane.b32.xlu0 %v64, 71
  %v523 = vpop.permute.xlu0 %522
  %524 = vrot.lane.b32.xlu0 %v65, 71
  %v525 = vpop.permute.xlu0 %524
  %526 = vrot.lane.b32.xlu0 %v66, 71
  %v527 = vpop.permute.xlu0 %526
  %528 = vrot.lane.b32.xlu0 %v67, 71
  %v529 = vpop.permute.xlu0 %528
  %530 = vrot.lane.b32.xlu0 %v68, 71
  %v531 = vpop.permute.xlu0 %530
  %532 = vrot.lane.b32.xlu0 %v79, 71
  %v533 = vpop.permute.xlu0 %532
  %vm534 = vcmask 580608
  %v535 = vsel %vm534, %v521, %v523
  %v536 = vsel %vm534, %v523, %v525
  %v537 = vsel %vm534, %v525, %v527
  %v538 = vsel %vm534, %v527, %v529
  %v539 = vsel %vm534, %v529, %v531
  %v540 = vsel %vm534, %v531, %v533
  %555 = vrot.lane.b32.xlu0 %v315, 70
  %v556 = vpop.permute.xlu0 %555
  %557 = vrot.lane.b32.xlu0 %v316, 70
  %v558 = vpop.permute.xlu0 %557
  %559 = vrot.lane.b32.xlu0 %v317, 70
  %v560 = vpop.permute.xlu0 %559
  %561 = vrot.lane.b32.xlu0 %v318, 70
  %v562 = vpop.permute.xlu0 %561
  %563 = vrot.lane.b32.xlu0 %v319, 70
  %v564 = vpop.permute.xlu0 %563
  %565 = vrot.lane.b32.xlu0 %v320, 70
  %v566 = vpop.permute.xlu0 %565
  %567 = vrot.lane.b32.xlu0 %v321, 70
  %v568 = vpop.permute.xlu0 %567
  %vm569 = vcmask 572416
  %v570 = vsel %vm569, %v556, %v558
  %v571 = vsel %vm569, %v558, %v560
  %v572 = vsel %vm569, %v560, %v562
  %v573 = vsel %vm569, %v562, %v564
  %v574 = vsel %vm569, %v564, %v566
  %v575 = vsel %vm569, %v566, %v568
  %v583 = vld [vmem:[%s1] sm:$0xff]
  %v584 = vld [vmem:[%s1 + $0x8] sm:$0xff]
  %v585 = vld [vmem:[%s1 + $0x10] sm:$0xff]
  %v586 = vld [vmem:[%s1 + $0x18] sm:$0xff]
  %v587 = vld [vmem:[%s1 + $0x20] sm:$0xff]
  %v588 = vld [vmem:[%s1 + $0x28] sm:$0xff]
  %v589 = vld [vmem:[%s1 + $0x30] sm:$0xff]
  %v590 = vld [vmem:[%s1 + $0x38] sm:$0xff]
  %v591 = vld [vmem:[%s1 + $0x40] sm:$0xff]
  %v592 = vld [vmem:[%s1 + $0x48] sm:$0xff]
  %v593 = vld [vmem:[%s1 + $0x50] sm:$0xff]
  %v594 = vld [vmem:[%s1 + $0x58] sm:$0xff]
  %v595 = vld [vmem:[%s1 + $0x60] sm:$0xff]
  %v596 = vld [vmem:[%s1 + $0x68] sm:$0xff]
  %v597 = vld [vmem:[%s1 + $0x70] sm:$0xff]
  %v598 = vld [vmem:[%s1 + $0x78] sm:$0xff]
  %v599 = vld [vmem:[%s2] sm:$0xff]
  %v600 = vld [vmem:[%s2 + $0x8] sm:$0xff]
  %v601 = vld [vmem:[%s2 + $0x10] sm:$0xff]
  %v602 = vld [vmem:[%s2 + $0x18] sm:$0xff]
  %v603 = vld [vmem:[%s2 + $0x20] sm:$0xff]
  %v604 = vld [vmem:[%s2 + $0x28] sm:$0xff]
  %v605 = vld [vmem:[%s2 + $0x30] sm:$0xff]
  %v606 = vld [vmem:[%s2 + $0x38] sm:$0xff]
  %v607 = vld [vmem:[%s2 + $0x40] sm:$0xff]
  %v608 = vld [vmem:[%s2 + $0x48] sm:$0xff]
  %v609 = vld [vmem:[%s2 + $0x50] sm:$0xff]
  %v610 = vld [vmem:[%s2 + $0x58] sm:$0xff]
  %v611 = vld [vmem:[%s2 + $0x60] sm:$0xff]
  %v612 = vld [vmem:[%s2 + $0x68] sm:$0xff]
  %v613 = vld [vmem:[%s2 + $0x70] sm:$0xff]
  %v614 = vld [vmem:[%s2 + $0x78] sm:$0xff]
  %616 = vset.pattern.permute.xlu0 0
  %617 = vperm.xlu0 %616, %v599
  %v618 = vpop.permute.xlu0 %617
  %621 = vset.pattern.permute.xlu0 0
  %622 = vperm.xlu0 %621, %v600
  %v623 = vpop.permute.xlu0 %622
  %626 = vset.pattern.permute.xlu0 0
  %627 = vperm.xlu0 %626, %v601
  %v628 = vpop.permute.xlu0 %627
  %631 = vset.pattern.permute.xlu0 0
  %632 = vperm.xlu0 %631, %v602
  %v633 = vpop.permute.xlu0 %632
  %636 = vset.pattern.permute.xlu0 0
  %637 = vperm.xlu0 %636, %v603
  %v638 = vpop.permute.xlu0 %637
  %641 = vset.pattern.permute.xlu0 0
  %642 = vperm.xlu0 %641, %v604
  %v643 = vpop.permute.xlu0 %642
  %646 = vset.pattern.permute.xlu0 0
  %647 = vperm.xlu0 %646, %v605
  %v648 = vpop.permute.xlu0 %647
  %651 = vset.pattern.permute.xlu0 0
  %652 = vperm.xlu0 %651, %v606
  %v653 = vpop.permute.xlu0 %652
  %656 = vset.pattern.permute.xlu0 0
  %657 = vperm.xlu0 %656, %v607
  %v658 = vpop.permute.xlu0 %657
  %661 = vset.pattern.permute.xlu0 0
  %662 = vperm.xlu0 %661, %v608
  %v663 = vpop.permute.xlu0 %662
  %666 = vset.pattern.permute.xlu0 0
  %667 = vperm.xlu0 %666, %v609
  %v668 = vpop.permute.xlu0 %667
  %671 = vset.pattern.permute.xlu0 0
  %672 = vperm.xlu0 %671, %v610
  %v673 = vpop.permute.xlu0 %672
  %676 = vset.pattern.permute.xlu0 0
  %677 = vperm.xlu0 %676, %v611
  %v678 = vpop.permute.xlu0 %677
  %681 = vset.pattern.permute.xlu0 0
  %682 = vperm.xlu0 %681, %v612
  %v683 = vpop.permute.xlu0 %682
  %686 = vset.pattern.permute.xlu0 0
  %687 = vperm.xlu0 %686, %v613
  %v688 = vpop.permute.xlu0 %687
  %691 = vset.pattern.permute.xlu0 0
  %692 = vperm.xlu0 %691, %v614
  %v693 = vpop.permute.xlu0 %692
  %v696 = vsel %vm506, %v583, 0
  %v699 = vsel %vm506, %v584, 0
  %v702 = vsel %vm506, %v585, 0
  %v705 = vsel %vm506, %v586, 0
  %v708 = vsel %vm506, %v587, 0
  %v711 = vsel %vm506, %v588, 0
  %v714 = vsel %vm506, %v589, 0
  %v717 = vsel %vm506, %v590, 0
  %v720 = vsel %vm506, %v591, 0
  %v723 = vsel %vm506, %v592, 0
  %v726 = vsel %vm506, %v593, 0
  %v729 = vsel %vm506, %v594, 0
  %v732 = vsel %vm506, %v595, 0
  %v735 = vsel %vm506, %v596, 0
  %v738 = vsel %vm506, %v597, 0
  %v741 = vsel %vm506, %v598, 0
  %743 = vmatpush.msra.mxu0 0.0
  %744 = vmatpush.msra.mxu0 0.0
  %745 = vmatpush.msra.mxu0 0.0
  %746 = vmatpush.msra.mxu0 0.0
  %747 = vmatpush.msra.mxu0 0.0
  %748 = vmatpush.msra.mxu0 0.0
  %749 = vmatpush.msra.mxu0 0.0
  %750 = vmatpush.msra.mxu0 %v570
  %751 = vmatpush.msra.mxu0 %v535
  %752 = vmatpush.msra.mxu0 %v507
  %753 = vmatpush.msra.mxu0 %v472
  %754 = vmatpush.msra.mxu0 %v437
  %755 = vmatpush.msra.mxu0 %v409
  %756 = vmatpush.msra.mxu0 %v374
  %757 = vmatpush.msra.mxu0 %v339
  %758 = vmatpush.msra.mxu0 %v105
  %759 = vmatmul.f32.gmra.mxu0 %v696
  %v760 = vpop.f32.mrf.mxu0
  %v761 = vadd.f32 %v618, %v760
  %762 = vmatmul.f32.gmra.mxu0 %v699
  %v763 = vpop.f32.mrf.mxu0
  %v764 = vadd.f32 %v623, %v763
  %765 = vmatmul.f32.gmra.mxu0 %v702
  %v766 = vpop.f32.mrf.mxu0
  %v767 = vadd.f32 %v628, %v766
  %768 = vmatmul.f32.gmra.mxu0 %v705
  %v769 = vpop.f32.mrf.mxu0
  %v770 = vadd.f32 %v633, %v769
  %771 = vmatmul.f32.gmra.mxu0 %v708
  %v772 = vpop.f32.mrf.mxu0
  %v773 = vadd.f32 %v638, %v772
  %774 = vmatmul.f32.gmra.mxu0 %v711
  %v775 = vpop.f32.mrf.mxu0
  %v776 = vadd.f32 %v643, %v775
  %777 = vmatmul.f32.gmra.mxu0 %v714
  %v778 = vpop.f32.mrf.mxu0
  %v779 = vadd.f32 %v648, %v778
  %780 = vmatmul.f32.gmra.mxu0 %v717
  %v781 = vpop.f32.mrf.mxu0
  %v782 = vadd.f32 %v653, %v781
  %783 = vmatmul.f32.gmra.mxu0 %v720
  %v784 = vpop.f32.mrf.mxu0
  %v785 = vadd.f32 %v658, %v784
  %786 = vmatmul.f32.gmra.mxu0 %v723
  %v787 = vpop.f32.mrf.mxu0
  %v788 = vadd.f32 %v663, %v787
  %789 = vmatmul.f32.gmra.mxu0 %v726
  %v790 = vpop.f32.mrf.mxu0
  %v791 = vadd.f32 %v668, %v790
  %792 = vmatmul.f32.gmra.mxu0 %v729
  %v793 = vpop.f32.mrf.mxu0
  %v794 = vadd.f32 %v673, %v793
  %795 = vmatmul.f32.gmra.mxu0 %v732
  %v796 = vpop.f32.mrf.mxu0
  %v797 = vadd.f32 %v678, %v796
  %798 = vmatmul.f32.gmra.mxu0 %v735
  %v799 = vpop.f32.mrf.mxu0
  %v800 = vadd.f32 %v683, %v799
  %801 = vmatmul.f32.gmra.mxu0 %v738
  %v802 = vpop.f32.mrf.mxu0
  %v803 = vadd.f32 %v688, %v802
  %804 = vmatmul.f32.gmra.mxu0 %v741
  %v805 = vpop.f32.mrf.mxu0
  %v806 = vadd.f32 %v693, %v805
  %807 = vdwg.mxu0
  %808 = vmatpush.msra.mxu0 0.0
  %809 = vmatpush.msra.mxu0 0.0
  %810 = vmatpush.msra.mxu0 0.0
  %811 = vmatpush.msra.mxu0 0.0
  %812 = vmatpush.msra.mxu0 0.0
  %813 = vmatpush.msra.mxu0 0.0
  %814 = vmatpush.msra.mxu0 0.0
  %815 = vmatpush.msra.mxu0 %v571
  %816 = vmatpush.msra.mxu0 %v536
  %817 = vmatpush.msra.mxu0 %v508
  %818 = vmatpush.msra.mxu0 %v473
  %819 = vmatpush.msra.mxu0 %v438
  %820 = vmatpush.msra.mxu0 %v410
  %821 = vmatpush.msra.mxu0 %v375
  %822 = vmatpush.msra.mxu0 %v340
  %823 = vmatpush.msra.mxu0 %v106
  %824 = vmatmul.f32.gmra.mxu0 %v696
  %v825 = vpop.f32.mrf.mxu0
  %v826 = vadd.f32 %v618, %v825
  %827 = vmatmul.f32.gmra.mxu0 %v699
  %v828 = vpop.f32.mrf.mxu0
  %v829 = vadd.f32 %v623, %v828
  %830 = vmatmul.f32.gmra.mxu0 %v702
  %v831 = vpop.f32.mrf.mxu0
  %v832 = vadd.f32 %v628, %v831
  %833 = vmatmul.f32.gmra.mxu0 %v705
  %v834 = vpop.f32.mrf.mxu0
  %v835 = vadd.f32 %v633, %v834
  %836 = vmatmul.f32.gmra.mxu0 %v708
  %v837 = vpop.f32.mrf.mxu0
  %v838 = vadd.f32 %v638, %v837
  %839 = vmatmul.f32.gmra.mxu0 %v711
  %v840 = vpop.f32.mrf.mxu0
  %v841 = vadd.f32 %v643, %v840
  %842 = vmatmul.f32.gmra.mxu0 %v714
  %v843 = vpop.f32.mrf.mxu0
  %v844 = vadd.f32 %v648, %v843
  %845 = vmatmul.f32.gmra.mxu0 %v717
  %v846 = vpop.f32.mrf.mxu0
  %v847 = vadd.f32 %v653, %v846
  %848 = vmatmul.f32.gmra.mxu0 %v720
  %v849 = vpop.f32.mrf.mxu0
  %v850 = vadd.f32 %v658, %v849
  %851 = vmatmul.f32.gmra.mxu0 %v723
  %v852 = vpop.f32.mrf.mxu0
  %v853 = vadd.f32 %v663, %v852
  %854 = vmatmul.f32.gmra.mxu0 %v726
  %v855 = vpop.f32.mrf.mxu0
  %v856 = vadd.f32 %v668, %v855
  %857 = vmatmul.f32.gmra.mxu0 %v729
  %v858 = vpop.f32.mrf.mxu0
  %v859 = vadd.f32 %v673, %v858
  %860 = vmatmul.f32.gmra.mxu0 %v732
  %v861 = vpop.f32.mrf.mxu0
  %v862 = vadd.f32 %v678, %v861
  %863 = vmatmul.f32.gmra.mxu0 %v735
  %v864 = vpop.f32.mrf.mxu0
  %v865 = vadd.f32 %v683, %v864
  %866 = vmatmul.f32.gmra.mxu0 %v738
  %v867 = vpop.f32.mrf.mxu0
  %v868 = vadd.f32 %v688, %v867
  %869 = vmatmul.f32.gmra.mxu0 %v741
  %v870 = vpop.f32.mrf.mxu0
  %v871 = vadd.f32 %v693, %v870
  %872 = vdwg.mxu0
  %873 = vmatpush.msra.mxu0 0.0
  %874 = vmatpush.msra.mxu0 0.0
  %875 = vmatpush.msra.mxu0 0.0
  %876 = vmatpush.msra.mxu0 0.0
  %877 = vmatpush.msra.mxu0 0.0
  %878 = vmatpush.msra.mxu0 0.0
  %879 = vmatpush.msra.mxu0 0.0
  %880 = vmatpush.msra.mxu0 %v572
  %881 = vmatpush.msra.mxu0 %v537
  %882 = vmatpush.msra.mxu0 %v509
  %883 = vmatpush.msra.mxu0 %v474
  %884 = vmatpush.msra.mxu0 %v439
  %885 = vmatpush.msra.mxu0 %v411
  %886 = vmatpush.msra.mxu0 %v376
  %887 = vmatpush.msra.mxu0 %v341
  %888 = vmatpush.msra.mxu0 %v107
  %889 = vmatmul.f32.gmra.mxu0 %v696
  %v890 = vpop.f32.mrf.mxu0
  %v891 = vadd.f32 %v618, %v890
  %892 = vmatmul.f32.gmra.mxu0 %v699
  %v893 = vpop.f32.mrf.mxu0
  %v894 = vadd.f32 %v623, %v893
  %895 = vmatmul.f32.gmra.mxu0 %v702
  %v896 = vpop.f32.mrf.mxu0
  %v897 = vadd.f32 %v628, %v896
  %898 = vmatmul.f32.gmra.mxu0 %v705
  %v899 = vpop.f32.mrf.mxu0
  %v900 = vadd.f32 %v633, %v899
  %901 = vmatmul.f32.gmra.mxu0 %v708
  %v902 = vpop.f32.mrf.mxu0
  %v903 = vadd.f32 %v638, %v902
  %904 = vmatmul.f32.gmra.mxu0 %v711
  %v905 = vpop.f32.mrf.mxu0
  %v906 = vadd.f32 %v643, %v905
  %907 = vmatmul.f32.gmra.mxu0 %v714
  %v908 = vpop.f32.mrf.mxu0
  %v909 = vadd.f32 %v648, %v908
  %910 = vmatmul.f32.gmra.mxu0 %v717
  %v911 = vpop.f32.mrf.mxu0
  %v912 = vadd.f32 %v653, %v911
  %913 = vmatmul.f32.gmra.mxu0 %v720
  %v914 = vpop.f32.mrf.mxu0
  %v915 = vadd.f32 %v658, %v914
  %916 = vmatmul.f32.gmra.mxu0 %v723
  %v917 = vpop.f32.mrf.mxu0
  %v918 = vadd.f32 %v663, %v917
  %919 = vmatmul.f32.gmra.mxu0 %v726
  %v920 = vpop.f32.mrf.mxu0
  %v921 = vadd.f32 %v668, %v920
  %922 = vmatmul.f32.gmra.mxu0 %v729
  %v923 = vpop.f32.mrf.mxu0
  %v924 = vadd.f32 %v673, %v923
  %925 = vmatmul.f32.gmra.mxu0 %v732
  %v926 = vpop.f32.mrf.mxu0
  %v927 = vadd.f32 %v678, %v926
  %928 = vmatmul.f32.gmra.mxu0 %v735
  %v929 = vpop.f32.mrf.mxu0
  %v930 = vadd.f32 %v683, %v929
  %931 = vmatmul.f32.gmra.mxu0 %v738
  %v932 = vpop.f32.mrf.mxu0
  %v933 = vadd.f32 %v688, %v932
  %934 = vmatmul.f32.gmra.mxu0 %v741
  %v935 = vpop.f32.mrf.mxu0
  %v936 = vadd.f32 %v693, %v935
  %937 = vdwg.mxu0
  %938 = vmatpush.msra.mxu0 0.0
  %939 = vmatpush.msra.mxu0 0.0
  %940 = vmatpush.msra.mxu0 0.0
  %941 = vmatpush.msra.mxu0 0.0
  %942 = vmatpush.msra.mxu0 0.0
  %943 = vmatpush.msra.mxu0 0.0
  %944 = vmatpush.msra.mxu0 0.0
  %945 = vmatpush.msra.mxu0 %v573
  %946 = vmatpush.msra.mxu0 %v538
  %947 = vmatpush.msra.mxu0 %v510
  %948 = vmatpush.msra.mxu0 %v475
  %949 = vmatpush.msra.mxu0 %v440
  %950 = vmatpush.msra.mxu0 %v412
  %951 = vmatpush.msra.mxu0 %v377
  %952 = vmatpush.msra.mxu0 %v342
  %953 = vmatpush.msra.mxu0 %v108
  %954 = vmatmul.f32.gmra.mxu0 %v696
  %v955 = vpop.f32.mrf.mxu0
  %v956 = vadd.f32 %v618, %v955
  %957 = vmatmul.f32.gmra.mxu0 %v699
  %v958 = vpop.f32.mrf.mxu0
  %v959 = vadd.f32 %v623, %v958
  %960 = vmatmul.f32.gmra.mxu0 %v702
  %v961 = vpop.f32.mrf.mxu0
  %v962 = vadd.f32 %v628, %v961
  %963 = vmatmul.f32.gmra.mxu0 %v705
  %v964 = vpop.f32.mrf.mxu0
  %v965 = vadd.f32 %v633, %v964
  %966 = vmatmul.f32.gmra.mxu0 %v708
  %v967 = vpop.f32.mrf.mxu0
  %v968 = vadd.f32 %v638, %v967
  %969 = vmatmul.f32.gmra.mxu0 %v711
  %v970 = vpop.f32.mrf.mxu0
  %v971 = vadd.f32 %v643, %v970
  %972 = vmatmul.f32.gmra.mxu0 %v714
  %v973 = vpop.f32.mrf.mxu0
  %v974 = vadd.f32 %v648, %v973
  %975 = vmatmul.f32.gmra.mxu0 %v717
  %v976 = vpop.f32.mrf.mxu0
  %v977 = vadd.f32 %v653, %v976
  %978 = vmatmul.f32.gmra.mxu0 %v720
  %v979 = vpop.f32.mrf.mxu0
  %v980 = vadd.f32 %v658, %v979
  %981 = vmatmul.f32.gmra.mxu0 %v723
  %v982 = vpop.f32.mrf.mxu0
  %v983 = vadd.f32 %v663, %v982
  %984 = vmatmul.f32.gmra.mxu0 %v726
  %v985 = vpop.f32.mrf.mxu0
  %v986 = vadd.f32 %v668, %v985
  %987 = vmatmul.f32.gmra.mxu0 %v729
  %v988 = vpop.f32.mrf.mxu0
  %v989 = vadd.f32 %v673, %v988
  %990 = vmatmul.f32.gmra.mxu0 %v732
  %v991 = vpop.f32.mrf.mxu0
  %v992 = vadd.f32 %v678, %v991
  %993 = vmatmul.f32.gmra.mxu0 %v735
  %v994 = vpop.f32.mrf.mxu0
  %v995 = vadd.f32 %v683, %v994
  %996 = vmatmul.f32.gmra.mxu0 %v738
  %v997 = vpop.f32.mrf.mxu0
  %v998 = vadd.f32 %v688, %v997
  %999 = vmatmul.f32.gmra.mxu0 %v741
  %v1000 = vpop.f32.mrf.mxu0
  %v1001 = vadd.f32 %v693, %v1000
  %1002 = vdwg.mxu0
  %1003 = vmatpush.msra.mxu0 0.0
  %1004 = vmatpush.msra.mxu0 0.0
  %1005 = vmatpush.msra.mxu0 0.0
  %1006 = vmatpush.msra.mxu0 0.0
  %1007 = vmatpush.msra.mxu0 0.0
  %1008 = vmatpush.msra.mxu0 0.0
  %1009 = vmatpush.msra.mxu0 0.0
  %1010 = vmatpush.msra.mxu0 %v574
  %1011 = vmatpush.msra.mxu0 %v539
  %1012 = vmatpush.msra.mxu0 %v511
  %1013 = vmatpush.msra.mxu0 %v476
  %1014 = vmatpush.msra.mxu0 %v441
  %1015 = vmatpush.msra.mxu0 %v413
  %1016 = vmatpush.msra.mxu0 %v378
  %1017 = vmatpush.msra.mxu0 %v343
  %1018 = vmatpush.msra.mxu0 %v109
  %1019 = vmatmul.f32.gmra.mxu0 %v696
  %v1020 = vpop.f32.mrf.mxu0
  %v1021 = vadd.f32 %v618, %v1020
  %1022 = vmatmul.f32.gmra.mxu0 %v699
  %v1023 = vpop.f32.mrf.mxu0
  %v1024 = vadd.f32 %v623, %v1023
  %1025 = vmatmul.f32.gmra.mxu0 %v702
  %v1026 = vpop.f32.mrf.mxu0
  %v1027 = vadd.f32 %v628, %v1026
  %1028 = vmatmul.f32.gmra.mxu0 %v705
  %v1029 = vpop.f32.mrf.mxu0
  %v1030 = vadd.f32 %v633, %v1029
  %1031 = vmatmul.f32.gmra.mxu0 %v708
  %v1032 = vpop.f32.mrf.mxu0
  %v1033 = vadd.f32 %v638, %v1032
  %1034 = vmatmul.f32.gmra.mxu0 %v711
  %v1035 = vpop.f32.mrf.mxu0
  %v1036 = vadd.f32 %v643, %v1035
  %1037 = vmatmul.f32.gmra.mxu0 %v714
  %v1038 = vpop.f32.mrf.mxu0
  %v1039 = vadd.f32 %v648, %v1038
  %1040 = vmatmul.f32.gmra.mxu0 %v717
  %v1041 = vpop.f32.mrf.mxu0
  %v1042 = vadd.f32 %v653, %v1041
  %1043 = vmatmul.f32.gmra.mxu0 %v720
  %v1044 = vpop.f32.mrf.mxu0
  %v1045 = vadd.f32 %v658, %v1044
  %1046 = vmatmul.f32.gmra.mxu0 %v723
  %v1047 = vpop.f32.mrf.mxu0
  %v1048 = vadd.f32 %v663, %v1047
  %1049 = vmatmul.f32.gmra.mxu0 %v726
  %v1050 = vpop.f32.mrf.mxu0
  %v1051 = vadd.f32 %v668, %v1050
  %1052 = vmatmul.f32.gmra.mxu0 %v729
  %v1053 = vpop.f32.mrf.mxu0
  %v1054 = vadd.f32 %v673, %v1053
  %1055 = vmatmul.f32.gmra.mxu0 %v732
  %v1056 = vpop.f32.mrf.mxu0
  %v1057 = vadd.f32 %v678, %v1056
  %1058 = vmatmul.f32.gmra.mxu0 %v735
  %v1059 = vpop.f32.mrf.mxu0
  %v1060 = vadd.f32 %v683, %v1059
  %1061 = vmatmul.f32.gmra.mxu0 %v738
  %v1062 = vpop.f32.mrf.mxu0
  %v1063 = vadd.f32 %v688, %v1062
  %1064 = vmatmul.f32.gmra.mxu0 %v741
  %v1065 = vpop.f32.mrf.mxu0
  %v1066 = vadd.f32 %v693, %v1065
  %1067 = vdwg.mxu0
  %1068 = vmatpush.msra.mxu0 0.0
  %1069 = vmatpush.msra.mxu0 0.0
  %1070 = vmatpush.msra.mxu0 0.0
  %1071 = vmatpush.msra.mxu0 0.0
  %1072 = vmatpush.msra.mxu0 0.0
  %1073 = vmatpush.msra.mxu0 0.0
  %1074 = vmatpush.msra.mxu0 0.0
  %1075 = vmatpush.msra.mxu0 %v575
  %1076 = vmatpush.msra.mxu0 %v540
  %1077 = vmatpush.msra.mxu0 %v512
  %1078 = vmatpush.msra.mxu0 %v477
  %1079 = vmatpush.msra.mxu0 %v442
  %1080 = vmatpush.msra.mxu0 %v414
  %1081 = vmatpush.msra.mxu0 %v379
  %1082 = vmatpush.msra.mxu0 %v344
  %1083 = vmatpush.msra.mxu0 %v110
  %1084 = vmatmul.f32.gmra.mxu0 %v696
  %v1085 = vpop.f32.mrf.mxu0
  %v1086 = vadd.f32 %v618, %v1085
  %1087 = vmatmul.f32.gmra.mxu0 %v699
  %v1088 = vpop.f32.mrf.mxu0
  %v1089 = vadd.f32 %v623, %v1088
  %1090 = vmatmul.f32.gmra.mxu0 %v702
  %v1091 = vpop.f32.mrf.mxu0
  %v1092 = vadd.f32 %v628, %v1091
  %1093 = vmatmul.f32.gmra.mxu0 %v705
  %v1094 = vpop.f32.mrf.mxu0
  %v1095 = vadd.f32 %v633, %v1094
  %1096 = vmatmul.f32.gmra.mxu0 %v708
  %v1097 = vpop.f32.mrf.mxu0
  %v1098 = vadd.f32 %v638, %v1097
  %1099 = vmatmul.f32.gmra.mxu0 %v711
  %v1100 = vpop.f32.mrf.mxu0
  %v1101 = vadd.f32 %v643, %v1100
  %1102 = vmatmul.f32.gmra.mxu0 %v714
  %v1103 = vpop.f32.mrf.mxu0
  %v1104 = vadd.f32 %v648, %v1103
  %1105 = vmatmul.f32.gmra.mxu0 %v717
  %v1106 = vpop.f32.mrf.mxu0
  %v1107 = vadd.f32 %v653, %v1106
  %1108 = vmatmul.f32.gmra.mxu0 %v720
  %v1109 = vpop.f32.mrf.mxu0
  %v1110 = vadd.f32 %v658, %v1109
  %1111 = vmatmul.f32.gmra.mxu0 %v723
  %v1112 = vpop.f32.mrf.mxu0
  %v1113 = vadd.f32 %v663, %v1112
  %1114 = vmatmul.f32.gmra.mxu0 %v726
  %v1115 = vpop.f32.mrf.mxu0
  %v1116 = vadd.f32 %v668, %v1115
  %1117 = vmatmul.f32.gmra.mxu0 %v729
  %v1118 = vpop.f32.mrf.mxu0
  %v1119 = vadd.f32 %v673, %v1118
  %1120 = vmatmul.f32.gmra.mxu0 %v732
  %v1121 = vpop.f32.mrf.mxu0
  %v1122 = vadd.f32 %v678, %v1121
  %1123 = vmatmul.f32.gmra.mxu0 %v735
  %v1124 = vpop.f32.mrf.mxu0
  %v1125 = vadd.f32 %v683, %v1124
  %1126 = vmatmul.f32.gmra.mxu0 %v738
  %v1127 = vpop.f32.mrf.mxu0
  %v1128 = vadd.f32 %v688, %v1127
  %1129 = vmatmul.f32.gmra.mxu0 %v741
  %v1130 = vpop.f32.mrf.mxu0
  %v1131 = vadd.f32 %v693, %v1130
  %1132 = vdwg.mxu0
  %1133 = vmatpush.msra.mxu0 0.0
  %1134 = vmatpush.msra.mxu0 0.0
  %1135 = vmatpush.msra.mxu0 0.0
  %1136 = vmatpush.msra.mxu0 0.0
  %1137 = vmatpush.msra.mxu0 0.0
  %1138 = vmatpush.msra.mxu0 0.0
  %1139 = vmatpush.msra.mxu0 0.0
  %1140 = vmatpush.msra.mxu0 %v568
  %1141 = vmatpush.msra.mxu0 %v533
  %1142 = vmatpush.msra.mxu0 %v505
  %1143 = vmatpush.msra.mxu0 %v470
  %1144 = vmatpush.msra.mxu0 %v435
  %1145 = vmatpush.msra.mxu0 %v407
  %1146 = vmatpush.msra.mxu0 %v372
  %1147 = vmatpush.msra.mxu0 %v337
  %1148 = vmatpush.msra.mxu0 %v111
  %1149 = vmatmul.f32.gmra.mxu0 %v696
  %v1150 = vpop.f32.mrf.mxu0
  %v1151 = vadd.f32 %v618, %v1150
  %1152 = vmatmul.f32.gmra.mxu0 %v699
  %v1153 = vpop.f32.mrf.mxu0
  %v1154 = vadd.f32 %v623, %v1153
  %1155 = vmatmul.f32.gmra.mxu0 %v702
  %v1156 = vpop.f32.mrf.mxu0
  %v1157 = vadd.f32 %v628, %v1156
  %1158 = vmatmul.f32.gmra.mxu0 %v705
  %v1159 = vpop.f32.mrf.mxu0
  %v1160 = vadd.f32 %v633, %v1159
  %1161 = vmatmul.f32.gmra.mxu0 %v708
  %v1162 = vpop.f32.mrf.mxu0
  %v1163 = vadd.f32 %v638, %v1162
  %1164 = vmatmul.f32.gmra.mxu0 %v711
  %v1165 = vpop.f32.mrf.mxu0
  %v1166 = vadd.f32 %v643, %v1165
  %1167 = vmatmul.f32.gmra.mxu0 %v714
  %v1168 = vpop.f32.mrf.mxu0
  %v1169 = vadd.f32 %v648, %v1168
  %1170 = vmatmul.f32.gmra.mxu0 %v717
  %v1171 = vpop.f32.mrf.mxu0
  %v1172 = vadd.f32 %v653, %v1171
  %1173 = vmatmul.f32.gmra.mxu0 %v720
  %v1174 = vpop.f32.mrf.mxu0
  %v1175 = vadd.f32 %v658, %v1174
  %1176 = vmatmul.f32.gmra.mxu0 %v723
  %v1177 = vpop.f32.mrf.mxu0
  %v1178 = vadd.f32 %v663, %v1177
  %1179 = vmatmul.f32.gmra.mxu0 %v726
  %v1180 = vpop.f32.mrf.mxu0
  %v1181 = vadd.f32 %v668, %v1180
  %1182 = vmatmul.f32.gmra.mxu0 %v729
  %v1183 = vpop.f32.mrf.mxu0
  %v1184 = vadd.f32 %v673, %v1183
  %1185 = vmatmul.f32.gmra.mxu0 %v732
  %v1186 = vpop.f32.mrf.mxu0
  %v1187 = vadd.f32 %v678, %v1186
  %1188 = vmatmul.f32.gmra.mxu0 %v735
  %v1189 = vpop.f32.mrf.mxu0
  %v1190 = vadd.f32 %v683, %v1189
  %1191 = vmatmul.f32.gmra.mxu0 %v738
  %v1192 = vpop.f32.mrf.mxu0
  %v1193 = vadd.f32 %v688, %v1192
  %1194 = vmatmul.f32.gmra.mxu0 %v741
  %v1195 = vpop.f32.mrf.mxu0
  %v1196 = vadd.f32 %v693, %v1195
  %1197 = vdwg.mxu0
  %v1198 = vmax.f32 %v761, 0.0
  %v1199 = vmax.f32 %v826, 0.0
  %v1200 = vmax.f32 %v891, 0.0
  %v1201 = vmax.f32 %v956, 0.0
  %v1202 = vmax.f32 %v1021, 0.0
  %v1203 = vmax.f32 %v1086, 0.0
  %v1204 = vmax.f32 %v1151, 0.0
  %v1205 = vmax.f32 %v764, 0.0
  %v1206 = vmax.f32 %v829, 0.0
  %v1207 = vmax.f32 %v894, 0.0
  %v1208 = vmax.f32 %v959, 0.0
  %v1209 = vmax.f32 %v1024, 0.0
  %v1210 = vmax.f32 %v1089, 0.0
  %v1211 = vmax.f32 %v1154, 0.0
  %v1212 = vmax.f32 %v767, 0.0
  %v1213 = vmax.f32 %v832, 0.0
  %v1214 = vmax.f32 %v897, 0.0
  %v1215 = vmax.f32 %v962, 0.0
  %v1216 = vmax.f32 %v1027, 0.0
  %v1217 = vmax.f32 %v1092, 0.0
  %v1218 = vmax.f32 %v1157, 0.0
  %v1219 = vmax.f32 %v770, 0.0
  %v1220 = vmax.f32 %v835, 0.0
  %v1221 = vmax.f32 %v900, 0.0
  %v1222 = vmax.f32 %v965, 0.0
  %v1223 = vmax.f32 %v1030, 0.0
  %v1224 = vmax.f32 %v1095, 0.0
  %v1225 = vmax.f32 %v1160, 0.0
  %v1226 = vmax.f32 %v773, 0.0
  %v1227 = vmax.f32 %v838, 0.0
  %v1228 = vmax.f32 %v903, 0.0
  %v1229 = vmax.f32 %v968, 0.0
  %v1230 = vmax.f32 %v1033, 0.0
  %v1231 = vmax.f32 %v1098, 0.0
  %v1232 = vmax.f32 %v1163, 0.0
  %v1233 = vmax.f32 %v776, 0.0
  %v1234 = vmax.f32 %v841, 0.0
  %v1235 = vmax.f32 %v906, 0.0
  %v1236 = vmax.f32 %v971, 0.0
  %v1237 = vmax.f32 %v1036, 0.0
  %v1238 = vmax.f32 %v1101, 0.0
  %v1239 = vmax.f32 %v1166, 0.0
  %v1240 = vmax.f32 %v779, 0.0
  %v1241 = vmax.f32 %v844, 0.0
  %v1242 = vmax.f32 %v909, 0.0
  %v1243 = vmax.f32 %v974, 0.0
  %v1244 = vmax.f32 %v1039, 0.0
  %v1245 = vmax.f32 %v1104, 0.0
  %v1246 = vmax.f32 %v1169, 0.0
  %v1247 = vmax.f32 %v782, 0.0
  %v1248 = vmax.f32 %v847, 0.0
  %v1249 = vmax.f32 %v912, 0.0
  %v1250 = vmax.f32 %v977, 0.0
  %v1251 = vmax.f32 %v1042, 0.0
  %v1252 = vmax.f32 %v1107, 0.0
  %v1253 = vmax.f32 %v1172, 0.0
  %v1254 = vmax.f32 %v785, 0.0
  %v1255 = vmax.f32 %v850, 0.0
  %v1256 = vmax.f32 %v915, 0.0
  %v1257 = vmax.f32 %v980, 0.0
  %v1258 = vmax.f32 %v1045, 0.0
  %v1259 = vmax.f32 %v1110, 0.0
  %v1260 = vmax.f32 %v1175, 0.0
  %v1261 = vmax.f32 %v788, 0.0
  %v1262 = vmax.f32 %v853, 0.0
  %v1263 = vmax.f32 %v918, 0.0
  %v1264 = vmax.f32 %v983, 0.0
  %v1265 = vmax.f32 %v1048, 0.0
  %v1266 = vmax.f32 %v1113, 0.0
  %v1267 = vmax.f32 %v1178, 0.0
  %v1268 = vmax.f32 %v791, 0.0
  %v1269 = vmax.f32 %v856, 0.0
  %v1270 = vmax.f32 %v921, 0.0
  %v1271 = vmax.f32 %v986, 0.0
  %v1272 = vmax.f32 %v1051, 0.0
  %v1273 = vmax.f32 %v1116, 0.0
  %v1274 = vmax.f32 %v1181, 0.0
  %v1275 = vmax.f32 %v794, 0.0
  %v1276 = vmax.f32 %v859, 0.0
  %v1277 = vmax.f32 %v924, 0.0
  %v1278 = vmax.f32 %v989, 0.0
  %v1279 = vmax.f32 %v1054, 0.0
  %v1280 = vmax.f32 %v1119, 0.0
  %v1281 = vmax.f32 %v1184, 0.0
  %v1282 = vmax.f32 %v797, 0.0
  %v1283 = vmax.f32 %v862, 0.0
  %v1284 = vmax.f32 %v927, 0.0
  %v1285 = vmax.f32 %v992, 0.0
  %v1286 = vmax.f32 %v1057, 0.0
  %v1287 = vmax.f32 %v1122, 0.0
  %v1288 = vmax.f32 %v1187, 0.0
  %v1289 = vmax.f32 %v800, 0.0
  %v1290 = vmax.f32 %v865, 0.0
  %v1291 = vmax.f32 %v930, 0.0
  %v1292 = vmax.f32 %v995, 0.0
  %v1293 = vmax.f32 %v1060, 0.0
  %v1294 = vmax.f32 %v1125, 0.0
  %v1295 = vmax.f32 %v1190, 0.0
  %v1296 = vmax.f32 %v803, 0.0
  %v1297 = vmax.f32 %v868, 0.0
  %v1298 = vmax.f32 %v933, 0.0
  %v1299 = vmax.f32 %v998, 0.0
  %v1300 = vmax.f32 %v1063, 0.0
  %v1301 = vmax.f32 %v1128, 0.0
  %v1302 = vmax.f32 %v1193, 0.0
  %v1303 = vmax.f32 %v806, 0.0
  %v1304 = vmax.f32 %v871, 0.0
  %v1305 = vmax.f32 %v936, 0.0
  %v1306 = vmax.f32 %v1001, 0.0
  %v1307 = vmax.f32 %v1066, 0.0
  %v1308 = vmax.f32 %v1131, 0.0
  %v1309 = vmax.f32 %v1196, 0.0
  %1422 = vrot.lane.b32.xlu0 %v1198, 100
  %v1423 = vpop.permute.xlu0 %1422
  %1424 = vrot.lane.b32.xlu0 %v1199, 100
  %v1425 = vpop.permute.xlu0 %1424
  %1426 = vrot.lane.b32.xlu0 %v1200, 100
  %v1427 = vpop.permute.xlu0 %1426
  %1428 = vrot.lane.b32.xlu0 %v1201, 100
  %v1429 = vpop.permute.xlu0 %1428
  %1430 = vrot.lane.b32.xlu0 %v1202, 100
  %v1431 = vpop.permute.xlu0 %1430
  %1432 = vrot.lane.b32.xlu0 %v1203, 100
  %v1433 = vpop.permute.xlu0 %1432
  %1434 = vrot.lane.b32.xlu0 %v1204, 100
  %v1435 = vpop.permute.xlu0 %1434
  %1436 = vrot.lane.b32.xlu0 %v1205, 100
  %v1437 = vpop.permute.xlu0 %1436
  %1438 = vrot.lane.b32.xlu0 %v1206, 100
  %v1439 = vpop.permute.xlu0 %1438
  %1440 = vrot.lane.b32.xlu0 %v1207, 100
  %v1441 = vpop.permute.xlu0 %1440
  %1442 = vrot.lane.b32.xlu0 %v1208, 100
  %v1443 = vpop.permute.xlu0 %1442
  %1444 = vrot.lane.b32.xlu0 %v1209, 100
  %v1445 = vpop.permute.xlu0 %1444
  %1446 = vrot.lane.b32.xlu0 %v1210, 100
  %v1447 = vpop.permute.xlu0 %1446
  %1448 = vrot.lane.b32.xlu0 %v1211, 100
  %v1449 = vpop.permute.xlu0 %1448
  %1450 = vrot.lane.b32.xlu0 %v1212, 100
  %v1451 = vpop.permute.xlu0 %1450
  %1452 = vrot.lane.b32.xlu0 %v1213, 100
  %v1453 = vpop.permute.xlu0 %1452
  %1454 = vrot.lane.b32.xlu0 %v1214, 100
  %v1455 = vpop.permute.xlu0 %1454
  %1456 = vrot.lane.b32.xlu0 %v1215, 100
  %v1457 = vpop.permute.xlu0 %1456
  %1458 = vrot.lane.b32.xlu0 %v1216, 100
  %v1459 = vpop.permute.xlu0 %1458
  %1460 = vrot.lane.b32.xlu0 %v1217, 100
  %v1461 = vpop.permute.xlu0 %1460
  %1462 = vrot.lane.b32.xlu0 %v1218, 100
  %v1463 = vpop.permute.xlu0 %1462
  %1464 = vrot.lane.b32.xlu0 %v1219, 100
  %v1465 = vpop.permute.xlu0 %1464
  %1466 = vrot.lane.b32.xlu0 %v1220, 100
  %v1467 = vpop.permute.xlu0 %1466
  %1468 = vrot.lane.b32.xlu0 %v1221, 100
  %v1469 = vpop.permute.xlu0 %1468
  %1470 = vrot.lane.b32.xlu0 %v1222, 100
  %v1471 = vpop.permute.xlu0 %1470
  %1472 = vrot.lane.b32.xlu0 %v1223, 100
  %v1473 = vpop.permute.xlu0 %1472
  %1474 = vrot.lane.b32.xlu0 %v1224, 100
  %v1475 = vpop.permute.xlu0 %1474
  %1476 = vrot.lane.b32.xlu0 %v1225, 100
  %v1477 = vpop.permute.xlu0 %1476
  %1478 = vrot.lane.b32.xlu0 %v1226, 100
  %v1479 = vpop.permute.xlu0 %1478
  %1480 = vrot.lane.b32.xlu0 %v1227, 100
  %v1481 = vpop.permute.xlu0 %1480
  %1482 = vrot.lane.b32.xlu0 %v1228, 100
  %v1483 = vpop.permute.xlu0 %1482
  %1484 = vrot.lane.b32.xlu0 %v1229, 100
  %v1485 = vpop.permute.xlu0 %1484
  %1486 = vrot.lane.b32.xlu0 %v1230, 100
  %v1487 = vpop.permute.xlu0 %1486
  %1488 = vrot.lane.b32.xlu0 %v1231, 100
  %v1489 = vpop.permute.xlu0 %1488
  %1490 = vrot.lane.b32.xlu0 %v1232, 100
  %v1491 = vpop.permute.xlu0 %1490
  %1492 = vrot.lane.b32.xlu0 %v1233, 100
  %v1493 = vpop.permute.xlu0 %1492
  %1494 = vrot.lane.b32.xlu0 %v1234, 100
  %v1495 = vpop.permute.xlu0 %1494
  %1496 = vrot.lane.b32.xlu0 %v1235, 100
  %v1497 = vpop.permute.xlu0 %1496
  %1498 = vrot.lane.b32.xlu0 %v1236, 100
  %v1499 = vpop.permute.xlu0 %1498
  %1500 = vrot.lane.b32.xlu0 %v1237, 100
  %v1501 = vpop.permute.xlu0 %1500
  %1502 = vrot.lane.b32.xlu0 %v1238, 100
  %v1503 = vpop.permute.xlu0 %1502
  %1504 = vrot.lane.b32.xlu0 %v1239, 100
  %v1505 = vpop.permute.xlu0 %1504
  %1506 = vrot.lane.b32.xlu0 %v1240, 100
  %v1507 = vpop.permute.xlu0 %1506
  %1508 = vrot.lane.b32.xlu0 %v1241, 100
  %v1509 = vpop.permute.xlu0 %1508
  %1510 = vrot.lane.b32.xlu0 %v1242, 100
  %v1511 = vpop.permute.xlu0 %1510
  %1512 = vrot.lane.b32.xlu0 %v1243, 100
  %v1513 = vpop.permute.xlu0 %1512
  %1514 = vrot.lane.b32.xlu0 %v1244, 100
  %v1515 = vpop.permute.xlu0 %1514
  %1516 = vrot.lane.b32.xlu0 %v1245, 100
  %v1517 = vpop.permute.xlu0 %1516
  %1518 = vrot.lane.b32.xlu0 %v1246, 100
  %v1519 = vpop.permute.xlu0 %1518
  %1520 = vrot.lane.b32.xlu0 %v1247, 100
  %v1521 = vpop.permute.xlu0 %1520
  %1522 = vrot.lane.b32.xlu0 %v1248, 100
  %v1523 = vpop.permute.xlu0 %1522
  %1524 = vrot.lane.b32.xlu0 %v1249, 100
  %v1525 = vpop.permute.xlu0 %1524
  %1526 = vrot.lane.b32.xlu0 %v1250, 100
  %v1527 = vpop.permute.xlu0 %1526
  %1528 = vrot.lane.b32.xlu0 %v1251, 100
  %v1529 = vpop.permute.xlu0 %1528
  %1530 = vrot.lane.b32.xlu0 %v1252, 100
  %v1531 = vpop.permute.xlu0 %1530
  %1532 = vrot.lane.b32.xlu0 %v1253, 100
  %v1533 = vpop.permute.xlu0 %1532
  %1534 = vrot.lane.b32.xlu0 %v1254, 100
  %v1535 = vpop.permute.xlu0 %1534
  %1536 = vrot.lane.b32.xlu0 %v1255, 100
  %v1537 = vpop.permute.xlu0 %1536
  %1538 = vrot.lane.b32.xlu0 %v1256, 100
  %v1539 = vpop.permute.xlu0 %1538
  %1540 = vrot.lane.b32.xlu0 %v1257, 100
  %v1541 = vpop.permute.xlu0 %1540
  %1542 = vrot.lane.b32.xlu0 %v1258, 100
  %v1543 = vpop.permute.xlu0 %1542
  %1544 = vrot.lane.b32.xlu0 %v1259, 100
  %v1545 = vpop.permute.xlu0 %1544
  %1546 = vrot.lane.b32.xlu0 %v1260, 100
  %v1547 = vpop.permute.xlu0 %1546
  %1548 = vrot.lane.b32.xlu0 %v1261, 100
  %v1549 = vpop.permute.xlu0 %1548
  %1550 = vrot.lane.b32.xlu0 %v1262, 100
  %v1551 = vpop.permute.xlu0 %1550
  %1552 = vrot.lane.b32.xlu0 %v1263, 100
  %v1553 = vpop.permute.xlu0 %1552
  %1554 = vrot.lane.b32.xlu0 %v1264, 100
  %v1555 = vpop.permute.xlu0 %1554
  %1556 = vrot.lane.b32.xlu0 %v1265, 100
  %v1557 = vpop.permute.xlu0 %1556
  %1558 = vrot.lane.b32.xlu0 %v1266, 100
  %v1559 = vpop.permute.xlu0 %1558
  %1560 = vrot.lane.b32.xlu0 %v1267, 100
  %v1561 = vpop.permute.xlu0 %1560
  %1562 = vrot.lane.b32.xlu0 %v1268, 100
  %v1563 = vpop.permute.xlu0 %1562
  %1564 = vrot.lane.b32.xlu0 %v1269, 100
  %v1565 = vpop.permute.xlu0 %1564
  %1566 = vrot.lane.b32.xlu0 %v1270, 100
  %v1567 = vpop.permute.xlu0 %1566
  %1568 = vrot.lane.b32.xlu0 %v1271, 100
  %v1569 = vpop.permute.xlu0 %1568
  %1570 = vrot.lane.b32.xlu0 %v1272, 100
  %v1571 = vpop.permute.xlu0 %1570
  %1572 = vrot.lane.b32.xlu0 %v1273, 100
  %v1573 = vpop.permute.xlu0 %1572
  %1574 = vrot.lane.b32.xlu0 %v1274, 100
  %v1575 = vpop.permute.xlu0 %1574
  %1576 = vrot.lane.b32.xlu0 %v1275, 100
  %v1577 = vpop.permute.xlu0 %1576
  %1578 = vrot.lane.b32.xlu0 %v1276, 100
  %v1579 = vpop.permute.xlu0 %1578
  %1580 = vrot.lane.b32.xlu0 %v1277, 100
  %v1581 = vpop.permute.xlu0 %1580
  %1582 = vrot.lane.b32.xlu0 %v1278, 100
  %v1583 = vpop.permute.xlu0 %1582
  %1584 = vrot.lane.b32.xlu0 %v1279, 100
  %v1585 = vpop.permute.xlu0 %1584
  %1586 = vrot.lane.b32.xlu0 %v1280, 100
  %v1587 = vpop.permute.xlu0 %1586
  %1588 = vrot.lane.b32.xlu0 %v1281, 100
  %v1589 = vpop.permute.xlu0 %1588
  %1590 = vrot.lane.b32.xlu0 %v1282, 100
  %v1591 = vpop.permute.xlu0 %1590
  %1592 = vrot.lane.b32.xlu0 %v1283, 100
  %v1593 = vpop.permute.xlu0 %1592
  %1594 = vrot.lane.b32.xlu0 %v1284, 100
  %v1595 = vpop.permute.xlu0 %1594
  %1596 = vrot.lane.b32.xlu0 %v1285, 100
  %v1597 = vpop.permute.xlu0 %1596
  %1598 = vrot.lane.b32.xlu0 %v1286, 100
  %v1599 = vpop.permute.xlu0 %1598
  %1600 = vrot.lane.b32.xlu0 %v1287, 100
  %v1601 = vpop.permute.xlu0 %1600
  %1602 = vrot.lane.b32.xlu0 %v1288, 100
  %v1603 = vpop.permute.xlu0 %1602
  %1604 = vrot.lane.b32.xlu0 %v1289, 100
  %v1605 = vpop.permute.xlu0 %1604
  %1606 = vrot.lane.b32.xlu0 %v1290, 100
  %v1607 = vpop.permute.xlu0 %1606
  %1608 = vrot.lane.b32.xlu0 %v1291, 100
  %v1609 = vpop.permute.xlu0 %1608
  %1610 = vrot.lane.b32.xlu0 %v1292, 100
  %v1611 = vpop.permute.xlu0 %1610
  %1612 = vrot.lane.b32.xlu0 %v1293, 100
  %v1613 = vpop.permute.xlu0 %1612
  %1614 = vrot.lane.b32.xlu0 %v1294, 100
  %v1615 = vpop.permute.xlu0 %1614
  %1616 = vrot.lane.b32.xlu0 %v1295, 100
  %v1617 = vpop.permute.xlu0 %1616
  %1618 = vrot.lane.b32.xlu0 %v1296, 100
  %v1619 = vpop.permute.xlu0 %1618
  %1620 = vrot.lane.b32.xlu0 %v1297, 100
  %v1621 = vpop.permute.xlu0 %1620
  %1622 = vrot.lane.b32.xlu0 %v1298, 100
  %v1623 = vpop.permute.xlu0 %1622
  %1624 = vrot.lane.b32.xlu0 %v1299, 100
  %v1625 = vpop.permute.xlu0 %1624
  %1626 = vrot.lane.b32.xlu0 %v1300, 100
  %v1627 = vpop.permute.xlu0 %1626
  %1628 = vrot.lane.b32.xlu0 %v1301, 100
  %v1629 = vpop.permute.xlu0 %1628
  %1630 = vrot.lane.b32.xlu0 %v1302, 100
  %v1631 = vpop.permute.xlu0 %1630
  %1632 = vrot.lane.b32.xlu0 %v1303, 100
  %v1633 = vpop.permute.xlu0 %1632
  %1634 = vrot.lane.b32.xlu0 %v1304, 100
  %v1635 = vpop.permute.xlu0 %1634
  %1636 = vrot.lane.b32.xlu0 %v1305, 100
  %v1637 = vpop.permute.xlu0 %1636
  %1638 = vrot.lane.b32.xlu0 %v1306, 100
  %v1639 = vpop.permute.xlu0 %1638
  %1640 = vrot.lane.b32.xlu0 %v1307, 100
  %v1641 = vpop.permute.xlu0 %1640
  %1642 = vrot.lane.b32.xlu0 %v1308, 100
  %v1643 = vpop.permute.xlu0 %1642
  %1644 = vrot.lane.b32.xlu0 %v1309, 100
  %v1645 = vpop.permute.xlu0 %1644
  %v1646 = vsel %vm408, %v1423, %v1425
  %v1647 = vsel %vm408, %v1425, %v1427
  %v1648 = vsel %vm408, %v1427, %v1429
  %v1649 = vsel %vm408, %v1429, %v1431
  %v1650 = vsel %vm408, %v1431, %v1433
  %v1651 = vsel %vm408, %v1433, %v1435
  %v1652 = vsel %vm408, %v1437, %v1439
  %v1653 = vsel %vm408, %v1439, %v1441
  %v1654 = vsel %vm408, %v1441, %v1443
  %v1655 = vsel %vm408, %v1443, %v1445
  %v1656 = vsel %vm408, %v1445, %v1447
  %v1657 = vsel %vm408, %v1447, %v1449
  %v1658 = vsel %vm408, %v1451, %v1453
  %v1659 = vsel %vm408, %v1453, %v1455
  %v1660 = vsel %vm408, %v1455, %v1457
  %v1661 = vsel %vm408, %v1457, %v1459
  %v1662 = vsel %vm408, %v1459, %v1461
  %v1663 = vsel %vm408, %v1461, %v1463
  %v1664 = vsel %vm408, %v1465, %v1467
  %v1665 = vsel %vm408, %v1467, %v1469
  %v1666 = vsel %vm408, %v1469, %v1471
  %v1667 = vsel %vm408, %v1471, %v1473
  %v1668 = vsel %vm408, %v1473, %v1475
  %v1669 = vsel %vm408, %v1475, %v1477
  %v1670 = vsel %vm408, %v1479, %v1481
  %v1671 = vsel %vm408, %v1481, %v1483
  %v1672 = vsel %vm408, %v1483, %v1485
  %v1673 = vsel %vm408, %v1485, %v1487
  %v1674 = vsel %vm408, %v1487, %v1489
  %v1675 = vsel %vm408, %v1489, %v1491
  %v1676 = vsel %vm408, %v1493, %v1495
  %v1677 = vsel %vm408, %v1495, %v1497
  %v1678 = vsel %vm408, %v1497, %v1499
  %v1679 = vsel %vm408, %v1499, %v1501
  %v1680 = vsel %vm408, %v1501, %v1503
  %v1681 = vsel %vm408, %v1503, %v1505
  %v1682 = vsel %vm408, %v1507, %v1509
  %v1683 = vsel %vm408, %v1509, %v1511
  %v1684 = vsel %vm408, %v1511, %v1513
  %v1685 = vsel %vm408, %v1513, %v1515
  %v1686 = vsel %vm408, %v1515, %v1517
  %v1687 = vsel %vm408, %v1517, %v1519
  %v1688 = vsel %vm408, %v1521, %v1523
  %v1689 = vsel %vm408, %v1523, %v1525
  %v1690 = vsel %vm408, %v1525, %v1527
  %v1691 = vsel %vm408, %v1527, %v1529
  %v1692 = vsel %vm408, %v1529, %v1531
  %v1693 = vsel %vm408, %v1531, %v1533
  %v1694 = vsel %vm408, %v1535, %v1537
  %v1695 = vsel %vm408, %v1537, %v1539
  %v1696 = vsel %vm408, %v1539, %v1541
  %v1697 = vsel %vm408, %v1541, %v1543
  %v1698 = vsel %vm408, %v1543, %v1545
  %v1699 = vsel %vm408, %v1545, %v1547
  %v1700 = vsel %vm408, %v1549, %v1551
  %v1701 = vsel %vm408, %v1551, %v1553
  %v1702 = vsel %vm408, %v1553, %v1555
  %v1703 = vsel %vm408, %v1555, %v1557
  %v1704 = vsel %vm408, %v1557, %v1559
  %v1705 = vsel %vm408, %v1559, %v1561
  %v1706 = vsel %vm408, %v1563, %v1565
  %v1707 = vsel %vm408, %v1565, %v1567
  %v1708 = vsel %vm408, %v1567, %v1569
  %v1709 = vsel %vm408, %v1569, %v1571
  %v1710 = vsel %vm408, %v1571, %v1573
  %v1711 = vsel %vm408, %v1573, %v1575
  %v1712 = vsel %vm408, %v1577, %v1579
  %v1713 = vsel %vm408, %v1579, %v1581
  %v1714 = vsel %vm408, %v1581, %v1583
  %v1715 = vsel %vm408, %v1583, %v1585
  %v1716 = vsel %vm408, %v1585, %v1587
  %v1717 = vsel %vm408, %v1587, %v1589
  %v1718 = vsel %vm408, %v1591, %v1593
  %v1719 = vsel %vm408, %v1593, %v1595
  %v1720 = vsel %vm408, %v1595, %v1597
  %v1721 = vsel %vm408, %v1597, %v1599
  %v1722 = vsel %vm408, %v1599, %v1601
  %v1723 = vsel %vm408, %v1601, %v1603
  %v1724 = vsel %vm408, %v1605, %v1607
  %v1725 = vsel %vm408, %v1607, %v1609
  %v1726 = vsel %vm408, %v1609, %v1611
  %v1727 = vsel %vm408, %v1611, %v1613
  %v1728 = vsel %vm408, %v1613, %v1615
  %v1729 = vsel %vm408, %v1615, %v1617
  %v1730 = vsel %vm408, %v1619, %v1621
  %v1731 = vsel %vm408, %v1621, %v1623
  %v1732 = vsel %vm408, %v1623, %v1625
  %v1733 = vsel %vm408, %v1625, %v1627
  %v1734 = vsel %vm408, %v1627, %v1629
  %v1735 = vsel %vm408, %v1629, %v1631
  %v1736 = vsel %vm408, %v1633, %v1635
  %v1737 = vsel %vm408, %v1635, %v1637
  %v1738 = vsel %vm408, %v1637, %v1639
  %v1739 = vsel %vm408, %v1639, %v1641
  %v1740 = vsel %vm408, %v1641, %v1643
  %v1741 = vsel %vm408, %v1643, %v1645
  %v1838 = vmax.f32 %v1198, %v1646
  %v1839 = vmax.f32 %v1199, %v1647
  %v1840 = vmax.f32 %v1200, %v1648
  %v1841 = vmax.f32 %v1201, %v1649
  %v1842 = vmax.f32 %v1202, %v1650
  %v1843 = vmax.f32 %v1203, %v1651
  %v1844 = vmax.f32 %v1205, %v1652
  %v1845 = vmax.f32 %v1206, %v1653
  %v1846 = vmax.f32 %v1207, %v1654
  %v1847 = vmax.f32 %v1208, %v1655
  %v1848 = vmax.f32 %v1209, %v1656
  %v1849 = vmax.f32 %v1210, %v1657
  %v1850 = vmax.f32 %v1212, %v1658
  %v1851 = vmax.f32 %v1213, %v1659
  %v1852 = vmax.f32 %v1214, %v1660
  %v1853 = vmax.f32 %v1215, %v1661
  %v1854 = vmax.f32 %v1216, %v1662
  %v1855 = vmax.f32 %v1217, %v1663
  %v1856 = vmax.f32 %v1219, %v1664
  %v1857 = vmax.f32 %v1220, %v1665
  %v1858 = vmax.f32 %v1221, %v1666
  %v1859 = vmax.f32 %v1222, %v1667
  %v1860 = vmax.f32 %v1223, %v1668
  %v1861 = vmax.f32 %v1224, %v1669
  %v1862 = vmax.f32 %v1226, %v1670
  %v1863 = vmax.f32 %v1227, %v1671
  %v1864 = vmax.f32 %v1228, %v1672
  %v1865 = vmax.f32 %v1229, %v1673
  %v1866 = vmax.f32 %v1230, %v1674
  %v1867 = vmax.f32 %v1231, %v1675
  %v1868 = vmax.f32 %v1233, %v1676
  %v1869 = vmax.f32 %v1234, %v1677
  %v1870 = vmax.f32 %v1235, %v1678
  %v1871 = vmax.f32 %v1236, %v1679
  %v1872 = vmax.f32 %v1237, %v1680
  %v1873 = vmax.f32 %v1238, %v1681
  %v1874 = vmax.f32 %v1240, %v1682
  %v1875 = vmax.f32 %v1241, %v1683
  %v1876 = vmax.f32 %v1242, %v1684
  %v1877 = vmax.f32 %v1243, %v1685
  %v1878 = vmax.f32 %v1244, %v1686
  %v1879 = vmax.f32 %v1245, %v1687
  %v1880 = vmax.f32 %v1247, %v1688
  %v1881 = vmax.f32 %v1248, %v1689
  %v1882 = vmax.f32 %v1249, %v1690
  %v1883 = vmax.f32 %v1250, %v1691
  %v1884 = vmax.f32 %v1251, %v1692
  %v1885 = vmax.f32 %v1252, %v1693
  %v1886 = vmax.f32 %v1254, %v1694
  %v1887 = vmax.f32 %v1255, %v1695
  %v1888 = vmax.f32 %v1256, %v1696
  %v1889 = vmax.f32 %v1257, %v1697
  %v1890 = vmax.f32 %v1258, %v1698
  %v1891 = vmax.f32 %v1259, %v1699
  %v1892 = vmax.f32 %v1261, %v1700
  %v1893 = vmax.f32 %v1262, %v1701
  %v1894 = vmax.f32 %v1263, %v1702
  %v1895 = vmax.f32 %v1264, %v1703
  %v1896 = vmax.f32 %v1265, %v1704
  %v1897 = vmax.f32 %v1266, %v1705
  %v1898 = vmax.f32 %v1268, %v1706
  %v1899 = vmax.f32 %v1269, %v1707
  %v1900 = vmax.f32 %v1270, %v1708
  %v1901 = vmax.f32 %v1271, %v1709
  %v1902 = vmax.f32 %v1272, %v1710
  %v1903 = vmax.f32 %v1273, %v1711
  %v1904 = vmax.f32 %v1275, %v1712
  %v1905 = vmax.f32 %v1276, %v1713
  %v1906 = vmax.f32 %v1277, %v1714
  %v1907 = vmax.f32 %v1278, %v1715
  %v1908 = vmax.f32 %v1279, %v1716
  %v1909 = vmax.f32 %v1280, %v1717
  %v1910 = vmax.f32 %v1282, %v1718
  %v1911 = vmax.f32 %v1283, %v1719
  %v1912 = vmax.f32 %v1284, %v1720
  %v1913 = vmax.f32 %v1285, %v1721
  %v1914 = vmax.f32 %v1286, %v1722
  %v1915 = vmax.f32 %v1287, %v1723
  %v1916 = vmax.f32 %v1289, %v1724
  %v1917 = vmax.f32 %v1290, %v1725
  %v1918 = vmax.f32 %v1291, %v1726
  %v1919 = vmax.f32 %v1292, %v1727
  %v1920 = vmax.f32 %v1293, %v1728
  %v1921 = vmax.f32 %v1294, %v1729
  %v1922 = vmax.f32 %v1296, %v1730
  %v1923 = vmax.f32 %v1297, %v1731
  %v1924 = vmax.f32 %v1298, %v1732
  %v1925 = vmax.f32 %v1299, %v1733
  %v1926 = vmax.f32 %v1300, %v1734
  %v1927 = vmax.f32 %v1301, %v1735
  %v1928 = vmax.f32 %v1303, %v1736
  %v1929 = vmax.f32 %v1304, %v1737
  %v1930 = vmax.f32 %v1305, %v1738
  %v1931 = vmax.f32 %v1306, %v1739
  %v1932 = vmax.f32 %v1307, %v1740
  %v1933 = vmax.f32 %v1308, %v1741
  %2030 = vrot.lane.b32.xlu0 %v1838, 127
  %v2031 = vpop.permute.xlu0 %2030
  %2032 = vrot.lane.b32.xlu0 %v1839, 127
  %v2033 = vpop.permute.xlu0 %2032
  %2034 = vrot.lane.b32.xlu0 %v1840, 127
  %v2035 = vpop.permute.xlu0 %2034
  %2036 = vrot.lane.b32.xlu0 %v1841, 127
  %v2037 = vpop.permute.xlu0 %2036
  %2038 = vrot.lane.b32.xlu0 %v1842, 127
  %v2039 = vpop.permute.xlu0 %2038
  %2040 = vrot.lane.b32.xlu0 %v1843, 127
  %v2041 = vpop.permute.xlu0 %2040
  %2042 = vrot.lane.b32.xlu0 %v1844, 127
  %v2043 = vpop.permute.xlu0 %2042
  %2044 = vrot.lane.b32.xlu0 %v1845, 127
  %v2045 = vpop.permute.xlu0 %2044
  %2046 = vrot.lane.b32.xlu0 %v1846, 127
  %v2047 = vpop.permute.xlu0 %2046
  %2048 = vrot.lane.b32.xlu0 %v1847, 127
  %v2049 = vpop.permute.xlu0 %2048
  %2050 = vrot.lane.b32.xlu0 %v1848, 127
  %v2051 = vpop.permute.xlu0 %2050
  %2052 = vrot.lane.b32.xlu0 %v1849, 127
  %v2053 = vpop.permute.xlu0 %2052
  %2054 = vrot.lane.b32.xlu0 %v1850, 127
  %v2055 = vpop.permute.xlu0 %2054
  %2056 = vrot.lane.b32.xlu0 %v1851, 127
  %v2057 = vpop.permute.xlu0 %2056
  %2058 = vrot.lane.b32.xlu0 %v1852, 127
  %v2059 = vpop.permute.xlu0 %2058
  %2060 = vrot.lane.b32.xlu0 %v1853, 127
  %v2061 = vpop.permute.xlu0 %2060
  %2062 = vrot.lane.b32.xlu0 %v1854, 127
  %v2063 = vpop.permute.xlu0 %2062
  %2064 = vrot.lane.b32.xlu0 %v1855, 127
  %v2065 = vpop.permute.xlu0 %2064
  %2066 = vrot.lane.b32.xlu0 %v1856, 127
  %v2067 = vpop.permute.xlu0 %2066
  %2068 = vrot.lane.b32.xlu0 %v1857, 127
  %v2069 = vpop.permute.xlu0 %2068
  %2070 = vrot.lane.b32.xlu0 %v1858, 127
  %v2071 = vpop.permute.xlu0 %2070
  %2072 = vrot.lane.b32.xlu0 %v1859, 127
  %v2073 = vpop.permute.xlu0 %2072
  %2074 = vrot.lane.b32.xlu0 %v1860, 127
  %v2075 = vpop.permute.xlu0 %2074
  %2076 = vrot.lane.b32.xlu0 %v1861, 127
  %v2077 = vpop.permute.xlu0 %2076
  %2078 = vrot.lane.b32.xlu0 %v1862, 127
  %v2079 = vpop.permute.xlu0 %2078
  %2080 = vrot.lane.b32.xlu0 %v1863, 127
  %v2081 = vpop.permute.xlu0 %2080
  %2082 = vrot.lane.b32.xlu0 %v1864, 127
  %v2083 = vpop.permute.xlu0 %2082
  %2084 = vrot.lane.b32.xlu0 %v1865, 127
  %v2085 = vpop.permute.xlu0 %2084
  %2086 = vrot.lane.b32.xlu0 %v1866, 127
  %v2087 = vpop.permute.xlu0 %2086
  %2088 = vrot.lane.b32.xlu0 %v1867, 127
  %v2089 = vpop.permute.xlu0 %2088
  %2090 = vrot.lane.b32.xlu0 %v1868, 127
  %v2091 = vpop.permute.xlu0 %2090
  %2092 = vrot.lane.b32.xlu0 %v1869, 127
  %v2093 = vpop.permute.xlu0 %2092
  %2094 = vrot.lane.b32.xlu0 %v1870, 127
  %v2095 = vpop.permute.xlu0 %2094
  %2096 = vrot.lane.b32.xlu0 %v1871, 127
  %v2097 = vpop.permute.xlu0 %2096
  %2098 = vrot.lane.b32.xlu0 %v1872, 127
  %v2099 = vpop.permute.xlu0 %2098
  %2100 = vrot.lane.b32.xlu0 %v1873, 127
  %v2101 = vpop.permute.xlu0 %2100
  %2102 = vrot.lane.b32.xlu0 %v1874, 127
  %v2103 = vpop.permute.xlu0 %2102
  %2104 = vrot.lane.b32.xlu0 %v1875, 127
  %v2105 = vpop.permute.xlu0 %2104
  %2106 = vrot.lane.b32.xlu0 %v1876, 127
  %v2107 = vpop.permute.xlu0 %2106
  %2108 = vrot.lane.b32.xlu0 %v1877, 127
  %v2109 = vpop.permute.xlu0 %2108
  %2110 = vrot.lane.b32.xlu0 %v1878, 127
  %v2111 = vpop.permute.xlu0 %2110
  %2112 = vrot.lane.b32.xlu0 %v1879, 127
  %v2113 = vpop.permute.xlu0 %2112
  %2114 = vrot.lane.b32.xlu0 %v1880, 127
  %v2115 = vpop.permute.xlu0 %2114
  %2116 = vrot.lane.b32.xlu0 %v1881, 127
  %v2117 = vpop.permute.xlu0 %2116
  %2118 = vrot.lane.b32.xlu0 %v1882, 127
  %v2119 = vpop.permute.xlu0 %2118
  %2120 = vrot.lane.b32.xlu0 %v1883, 127
  %v2121 = vpop.permute.xlu0 %2120
  %2122 = vrot.lane.b32.xlu0 %v1884, 127
  %v2123 = vpop.permute.xlu0 %2122
  %2124 = vrot.lane.b32.xlu0 %v1885, 127
  %v2125 = vpop.permute.xlu0 %2124
  %2126 = vrot.lane.b32.xlu0 %v1886, 127
  %v2127 = vpop.permute.xlu0 %2126
  %2128 = vrot.lane.b32.xlu0 %v1887, 127
  %v2129 = vpop.permute.xlu0 %2128
  %2130 = vrot.lane.b32.xlu0 %v1888, 127
  %v2131 = vpop.permute.xlu0 %2130
  %2132 = vrot.lane.b32.xlu0 %v1889, 127
  %v2133 = vpop.permute.xlu0 %2132
  %2134 = vrot.lane.b32.xlu0 %v1890, 127
  %v2135 = vpop.permute.xlu0 %2134
  %2136 = vrot.lane.b32.xlu0 %v1891, 127
  %v2137 = vpop.permute.xlu0 %2136
  %2138 = vrot.lane.b32.xlu0 %v1892, 127
  %v2139 = vpop.permute.xlu0 %2138
  %2140 = vrot.lane.b32.xlu0 %v1893, 127
  %v2141 = vpop.permute.xlu0 %2140
  %2142 = vrot.lane.b32.xlu0 %v1894, 127
  %v2143 = vpop.permute.xlu0 %2142
  %2144 = vrot.lane.b32.xlu0 %v1895, 127
  %v2145 = vpop.permute.xlu0 %2144
  %2146 = vrot.lane.b32.xlu0 %v1896, 127
  %v2147 = vpop.permute.xlu0 %2146
  %2148 = vrot.lane.b32.xlu0 %v1897, 127
  %v2149 = vpop.permute.xlu0 %2148
  %2150 = vrot.lane.b32.xlu0 %v1898, 127
  %v2151 = vpop.permute.xlu0 %2150
  %2152 = vrot.lane.b32.xlu0 %v1899, 127
  %v2153 = vpop.permute.xlu0 %2152
  %2154 = vrot.lane.b32.xlu0 %v1900, 127
  %v2155 = vpop.permute.xlu0 %2154
  %2156 = vrot.lane.b32.xlu0 %v1901, 127
  %v2157 = vpop.permute.xlu0 %2156
  %2158 = vrot.lane.b32.xlu0 %v1902, 127
  %v2159 = vpop.permute.xlu0 %2158
  %2160 = vrot.lane.b32.xlu0 %v1903, 127
  %v2161 = vpop.permute.xlu0 %2160
  %2162 = vrot.lane.b32.xlu0 %v1904, 127
  %v2163 = vpop.permute.xlu0 %2162
  %2164 = vrot.lane.b32.xlu0 %v1905, 127
  %v2165 = vpop.permute.xlu0 %2164
  %2166 = vrot.lane.b32.xlu0 %v1906, 127
  %v2167 = vpop.permute.xlu0 %2166
  %2168 = vrot.lane.b32.xlu0 %v1907, 127
  %v2169 = vpop.permute.xlu0 %2168
  %2170 = vrot.lane.b32.xlu0 %v1908, 127
  %v2171 = vpop.permute.xlu0 %2170
  %2172 = vrot.lane.b32.xlu0 %v1909, 127
  %v2173 = vpop.permute.xlu0 %2172
  %2174 = vrot.lane.b32.xlu0 %v1910, 127
  %v2175 = vpop.permute.xlu0 %2174
  %2176 = vrot.lane.b32.xlu0 %v1911, 127
  %v2177 = vpop.permute.xlu0 %2176
  %2178 = vrot.lane.b32.xlu0 %v1912, 127
  %v2179 = vpop.permute.xlu0 %2178
  %2180 = vrot.lane.b32.xlu0 %v1913, 127
  %v2181 = vpop.permute.xlu0 %2180
  %2182 = vrot.lane.b32.xlu0 %v1914, 127
  %v2183 = vpop.permute.xlu0 %2182
  %2184 = vrot.lane.b32.xlu0 %v1915, 127
  %v2185 = vpop.permute.xlu0 %2184
  %2186 = vrot.lane.b32.xlu0 %v1916, 127
  %v2187 = vpop.permute.xlu0 %2186
  %2188 = vrot.lane.b32.xlu0 %v1917, 127
  %v2189 = vpop.permute.xlu0 %2188
  %2190 = vrot.lane.b32.xlu0 %v1918, 127
  %v2191 = vpop.permute.xlu0 %2190
  %2192 = vrot.lane.b32.xlu0 %v1919, 127
  %v2193 = vpop.permute.xlu0 %2192
  %2194 = vrot.lane.b32.xlu0 %v1920, 127
  %v2195 = vpop.permute.xlu0 %2194
  %2196 = vrot.lane.b32.xlu0 %v1921, 127
  %v2197 = vpop.permute.xlu0 %2196
  %2198 = vrot.lane.b32.xlu0 %v1922, 127
  %v2199 = vpop.permute.xlu0 %2198
  %2200 = vrot.lane.b32.xlu0 %v1923, 127
  %v2201 = vpop.permute.xlu0 %2200
  %2202 = vrot.lane.b32.xlu0 %v1924, 127
  %v2203 = vpop.permute.xlu0 %2202
  %2204 = vrot.lane.b32.xlu0 %v1925, 127
  %v2205 = vpop.permute.xlu0 %2204
  %2206 = vrot.lane.b32.xlu0 %v1926, 127
  %v2207 = vpop.permute.xlu0 %2206
  %2208 = vrot.lane.b32.xlu0 %v1927, 127
  %v2209 = vpop.permute.xlu0 %2208
  %2210 = vrot.lane.b32.xlu0 %v1928, 127
  %v2211 = vpop.permute.xlu0 %2210
  %2212 = vrot.lane.b32.xlu0 %v1929, 127
  %v2213 = vpop.permute.xlu0 %2212
  %2214 = vrot.lane.b32.xlu0 %v1930, 127
  %v2215 = vpop.permute.xlu0 %2214
  %2216 = vrot.lane.b32.xlu0 %v1931, 127
  %v2217 = vpop.permute.xlu0 %2216
  %2218 = vrot.lane.b32.xlu0 %v1932, 127
  %v2219 = vpop.permute.xlu0 %2218
  %2220 = vrot.lane.b32.xlu0 %v1933, 127
  %v2221 = vpop.permute.xlu0 %2220
  %v2222 = vsel %vm338, %v2031, %v2033
  %v2223 = vsel %vm338, %v2033, %v2035
  %v2224 = vsel %vm338, %v2035, %v2037
  %v2225 = vsel %vm338, %v2037, %v2039
  %v2226 = vsel %vm338, %v2039, %v2041
  %v2227 = vsel %vm338, %v2043, %v2045
  %v2228 = vsel %vm338, %v2045, %v2047
  %v2229 = vsel %vm338, %v2047, %v2049
  %v2230 = vsel %vm338, %v2049, %v2051
  %v2231 = vsel %vm338, %v2051, %v2053
  %v2232 = vsel %vm338, %v2055, %v2057
  %v2233 = vsel %vm338, %v2057, %v2059
  %v2234 = vsel %vm338, %v2059, %v2061
  %v2235 = vsel %vm338, %v2061, %v2063
  %v2236 = vsel %vm338, %v2063, %v2065
  %v2237 = vsel %vm338, %v2067, %v2069
  %v2238 = vsel %vm338, %v2069, %v2071
  %v2239 = vsel %vm338, %v2071, %v2073
  %v2240 = vsel %vm338, %v2073, %v2075
  %v2241 = vsel %vm338, %v2075, %v2077
  %v2242 = vsel %vm338, %v2079, %v2081
  %v2243 = vsel %vm338, %v2081, %v2083
  %v2244 = vsel %vm338, %v2083, %v2085
  %v2245 = vsel %vm338, %v2085, %v2087
  %v2246 = vsel %vm338, %v2087, %v2089
  %v2247 = vsel %vm338, %v2091, %v2093
  %v2248 = vsel %vm338, %v2093, %v2095
  %v2249 = vsel %vm338, %v2095, %v2097
  %v2250 = vsel %vm338, %v2097, %v2099
  %v2251 = vsel %vm338, %v2099, %v2101
  %v2252 = vsel %vm338, %v2103, %v2105
  %v2253 = vsel %vm338, %v2105, %v2107
  %v2254 = vsel %vm338, %v2107, %v2109
  %v2255 = vsel %vm338, %v2109, %v2111
  %v2256 = vsel %vm338, %v2111, %v2113
  %v2257 = vsel %vm338, %v2115, %v2117
  %v2258 = vsel %vm338, %v2117, %v2119
  %v2259 = vsel %vm338, %v2119, %v2121
  %v2260 = vsel %vm338, %v2121, %v2123
  %v2261 = vsel %vm338, %v2123, %v2125
  %v2262 = vsel %vm338, %v2127, %v2129
  %v2263 = vsel %vm338, %v2129, %v2131
  %v2264 = vsel %vm338, %v2131, %v2133
  %v2265 = vsel %vm338, %v2133, %v2135
  %v2266 = vsel %vm338, %v2135, %v2137
  %v2267 = vsel %vm338, %v2139, %v2141
  %v2268 = vsel %vm338, %v2141, %v2143
  %v2269 = vsel %vm338, %v2143, %v2145
  %v2270 = vsel %vm338, %v2145, %v2147
  %v2271 = vsel %vm338, %v2147, %v2149
  %v2272 = vsel %vm338, %v2151, %v2153
  %v2273 = vsel %vm338, %v2153, %v2155
  %v2274 = vsel %vm338, %v2155, %v2157
  %v2275 = vsel %vm338, %v2157, %v2159
  %v2276 = vsel %vm338, %v2159, %v2161
  %v2277 = vsel %vm338, %v2163, %v2165
  %v2278 = vsel %vm338, %v2165, %v2167
  %v2279 = vsel %vm338, %v2167, %v2169
  %v2280 = vsel %vm338, %v2169, %v2171
  %v2281 = vsel %vm338, %v2171, %v2173
  %v2282 = vsel %vm338, %v2175, %v2177
  %v2283 = vsel %vm338, %v2177, %v2179
  %v2284 = vsel %vm338, %v2179, %v2181
  %v2285 = vsel %vm338, %v2181, %v2183
  %v2286 = vsel %vm338, %v2183, %v2185
  %v2287 = vsel %vm338, %v2187, %v2189
  %v2288 = vsel %vm338, %v2189, %v2191
  %v2289 = vsel %vm338, %v2191, %v2193
  %v2290 = vsel %vm338, %v2193, %v2195
  %v2291 = vsel %vm338, %v2195, %v2197
  %v2292 = vsel %vm338, %v2199, %v2201
  %v2293 = vsel %vm338, %v2201, %v2203
  %v2294 = vsel %vm338, %v2203, %v2205
  %v2295 = vsel %vm338, %v2205, %v2207
  %v2296 = vsel %vm338, %v2207, %v2209
  %v2297 = vsel %vm338, %v2211, %v2213
  %v2298 = vsel %vm338, %v2213, %v2215
  %v2299 = vsel %vm338, %v2215, %v2217
  %v2300 = vsel %vm338, %v2217, %v2219
  %v2301 = vsel %vm338, %v2219, %v2221
  %v2398 = vmax.f32 %v1838, %v2222
  %v2399 = vmax.f32 %v1839, %v2223
  %v2400 = vmax.f32 %v1840, %v2224
  %v2401 = vmax.f32 %v1841, %v2225
  %v2402 = vmax.f32 %v1842, %v2226
  %v2403 = vmax.f32 %v1843, %v2041
  %v2404 = vmax.f32 %v1844, %v2227
  %v2405 = vmax.f32 %v1845, %v2228
  %v2406 = vmax.f32 %v1846, %v2229
  %v2407 = vmax.f32 %v1847, %v2230
  %v2408 = vmax.f32 %v1848, %v2231
  %v2409 = vmax.f32 %v1849, %v2053
  %v2410 = vmax.f32 %v1850, %v2232
  %v2411 = vmax.f32 %v1851, %v2233
  %v2412 = vmax.f32 %v1852, %v2234
  %v2413 = vmax.f32 %v1853, %v2235
  %v2414 = vmax.f32 %v1854, %v2236
  %v2415 = vmax.f32 %v1855, %v2065
  %v2416 = vmax.f32 %v1856, %v2237
  %v2417 = vmax.f32 %v1857, %v2238
  %v2418 = vmax.f32 %v1858, %v2239
  %v2419 = vmax.f32 %v1859, %v2240
  %v2420 = vmax.f32 %v1860, %v2241
  %v2421 = vmax.f32 %v1861, %v2077
  %v2422 = vmax.f32 %v1862, %v2242
  %v2423 = vmax.f32 %v1863, %v2243
  %v2424 = vmax.f32 %v1864, %v2244
  %v2425 = vmax.f32 %v1865, %v2245
  %v2426 = vmax.f32 %v1866, %v2246
  %v2427 = vmax.f32 %v1867, %v2089
  %v2428 = vmax.f32 %v1868, %v2247
  %v2429 = vmax.f32 %v1869, %v2248
  %v2430 = vmax.f32 %v1870, %v2249
  %v2431 = vmax.f32 %v1871, %v2250
  %v2432 = vmax.f32 %v1872, %v2251
  %v2433 = vmax.f32 %v1873, %v2101
  %v2434 = vmax.f32 %v1874, %v2252
  %v2435 = vmax.f32 %v1875, %v2253
  %v2436 = vmax.f32 %v1876, %v2254
  %v2437 = vmax.f32 %v1877, %v2255
  %v2438 = vmax.f32 %v1878, %v2256
  %v2439 = vmax.f32 %v1879, %v2113
  %v2440 = vmax.f32 %v1880, %v2257
  %v2441 = vmax.f32 %v1881, %v2258
  %v2442 = vmax.f32 %v1882, %v2259
  %v2443 = vmax.f32 %v1883, %v2260
  %v2444 = vmax.f32 %v1884, %v2261
  %v2445 = vmax.f32 %v1885, %v2125
  %v2446 = vmax.f32 %v1886, %v2262
  %v2447 = vmax.f32 %v1887, %v2263
  %v2448 = vmax.f32 %v1888, %v2264
  %v2449 = vmax.f32 %v1889, %v2265
  %v2450 = vmax.f32 %v1890, %v2266
  %v2451 = vmax.f32 %v1891, %v2137
  %v2452 = vmax.f32 %v1892, %v2267
  %v2453 = vmax.f32 %v1893, %v2268
  %v2454 = vmax.f32 %v1894, %v2269
  %v2455 = vmax.f32 %v1895, %v2270
  %v2456 = vmax.f32 %v1896, %v2271
  %v2457 = vmax.f32 %v1897, %v2149
  %v2458 = vmax.f32 %v1898, %v2272
  %v2459 = vmax.f32 %v1899, %v2273
  %v2460 = vmax.f32 %v1900, %v2274
  %v2461 = vmax.f32 %v1901, %v2275
  %v2462 = vmax.f32 %v1902, %v2276
  %v2463 = vmax.f32 %v1903, %v2161
  %v2464 = vmax.f32 %v1904, %v2277
  %v2465 = vmax.f32 %v1905, %v2278
  %v2466 = vmax.f32 %v1906, %v2279
  %v2467 = vmax.f32 %v1907, %v2280
  %v2468 = vmax.f32 %v1908, %v2281
  %v2469 = vmax.f32 %v1909, %v2173
  %v2470 = vmax.f32 %v1910, %v2282
  %v2471 = vmax.f32 %v1911, %v2283
  %v2472 = vmax.f32 %v1912, %v2284
  %v2473 = vmax.f32 %v1913, %v2285
  %v2474 = vmax.f32 %v1914, %v2286
  %v2475 = vmax.f32 %v1915, %v2185
  %v2476 = vmax.f32 %v1916, %v2287
  %v2477 = vmax.f32 %v1917, %v2288
  %v2478 = vmax.f32 %v1918, %v2289
  %v2479 = vmax.f32 %v1919, %v2290
  %v2480 = vmax.f32 %v1920, %v2291
  %v2481 = vmax.f32 %v1921, %v2197
  %v2482 = vmax.f32 %v1922, %v2292
  %v2483 = vmax.f32 %v1923, %v2293
  %v2484 = vmax.f32 %v1924, %v2294
  %v2485 = vmax.f32 %v1925, %v2295
  %v2486 = vmax.f32 %v1926, %v2296
  %v2487 = vmax.f32 %v1927, %v2209
  %v2488 = vmax.f32 %v1928, %v2297
  %v2489 = vmax.f32 %v1929, %v2298
  %v2490 = vmax.f32 %v1930, %v2299
  %v2491 = vmax.f32 %v1931, %v2300
  %v2492 = vmax.f32 %v1932, %v2301
  %v2493 = vmax.f32 %v1933, %v2221
  %v2494 = vld [vmem:[%s4] sm:$0xff]
  %v2495 = vld [vmem:[%s4 + $0x8] sm:$0xff]
  %v2496 = vld [vmem:[%s4 + $0x10] sm:$0xff]
  %v2497 = vld [vmem:[%s4 + $0x18] sm:$0xff]
  %v2498 = vld [vmem:[%s4 + $0x20] sm:$0xff]
  %v2499 = vld [vmem:[%s4 + $0x28] sm:$0xff]
  %v2500 = vld [vmem:[%s4 + $0x30] sm:$0xff]
  %v2501 = vld [vmem:[%s4 + $0x38] sm:$0xff]
  %v2502 = vld [vmem:[%s4 + $0x40] sm:$0xff]
  %v2503 = vld [vmem:[%s4 + $0x48] sm:$0xff]
  %v2504 = vld [vmem:[%s4 + $0x50] sm:$0xff]
  %v2505 = vld [vmem:[%s4 + $0x58] sm:$0xff]
  %v2506 = vld [vmem:[%s4 + $0x60] sm:$0xff]
  %v2507 = vld [vmem:[%s4 + $0x68] sm:$0xff]
  %v2508 = vld [vmem:[%s4 + $0x70] sm:$0xff]
  %v2509 = vld [vmem:[%s4 + $0x78] sm:$0xff]
  %v2510 = vld [vmem:[%s4 + $0x80] sm:$0xff]
  %v2511 = vld [vmem:[%s4 + $0x88] sm:$0xff]
  %v2512 = vld [vmem:[%s4 + $0x90] sm:$0xff]
  %v2513 = vld [vmem:[%s4 + $0x98] sm:$0xff]
  %v2514 = vld [vmem:[%s4 + $0xa0] sm:$0xff]
  %v2515 = vld [vmem:[%s4 + $0xa8] sm:$0xff]
  %v2516 = vld [vmem:[%s4 + $0xb0] sm:$0xff]
  %v2517 = vld [vmem:[%s4 + $0xb8] sm:$0xff]
  %v2518 = vld [vmem:[%s4 + $0xc0] sm:$0xff]
  %v2519 = vld [vmem:[%s4 + $0xc8] sm:$0xff]
  %v2520 = vld [vmem:[%s4 + $0xd0] sm:$0xff]
  %v2521 = vld [vmem:[%s4 + $0xd8] sm:$0xff]
  %v2522 = vld [vmem:[%s4 + $0xe0] sm:$0xff]
  %v2523 = vld [vmem:[%s4 + $0xe8] sm:$0xff]
  %v2524 = vld [vmem:[%s4 + $0xf0] sm:$0xff]
  %v2525 = vld [vmem:[%s4 + $0xf8] sm:$0xff]
  %v2526 = vld [vmem:[%s4 + $0x100] sm:$0xff]
  %v2527 = vld [vmem:[%s4 + $0x108] sm:$0xff]
  %v2528 = vld [vmem:[%s4 + $0x110] sm:$0xff]
  %v2529 = vld [vmem:[%s4 + $0x118] sm:$0xff]
  %v2530 = vld [vmem:[%s4 + $0x120] sm:$0xff]
  %v2531 = vld [vmem:[%s4 + $0x128] sm:$0xff]
  %v2532 = vld [vmem:[%s4 + $0x130] sm:$0xff]
  %v2533 = vld [vmem:[%s4 + $0x138] sm:$0xff]
  %v2534 = vld [vmem:[%s4 + $0x140] sm:$0xff]
  %v2535 = vld [vmem:[%s4 + $0x148] sm:$0xff]
  %v2536 = vld [vmem:[%s4 + $0x150] sm:$0xff]
  %v2537 = vld [vmem:[%s4 + $0x158] sm:$0xff]
  %v2538 = vld [vmem:[%s4 + $0x160] sm:$0xff]
  %v2539 = vld [vmem:[%s4 + $0x168] sm:$0xff]
  %v2540 = vld [vmem:[%s4 + $0x170] sm:$0xff]
  %v2541 = vld [vmem:[%s4 + $0x178] sm:$0xff]
  %v2542 = vld [vmem:[%s4 + $0x180] sm:$0xff]
  %v2543 = vld [vmem:[%s4 + $0x188] sm:$0xff]
  %v2544 = vld [vmem:[%s4 + $0x190] sm:$0xff]
  %v2545 = vld [vmem:[%s4 + $0x198] sm:$0xff]
  %v2546 = vld [vmem:[%s4 + $0x1a0] sm:$0xff]
  %v2547 = vld [vmem:[%s4 + $0x1a8] sm:$0xff]
  %v2548 = vld [vmem:[%s4 + $0x1b0] sm:$0xff]
  %v2549 = vld [vmem:[%s4 + $0x1b8] sm:$0xff]
  %v2550 = vld [vmem:[%s4 + $0x1c0] sm:$0xff]
  %v2551 = vld [vmem:[%s4 + $0x1c8] sm:$0xff]
  %v2552 = vld [vmem:[%s4 + $0x1d0] sm:$0xff]
  %v2553 = vld [vmem:[%s4 + $0x1d8] sm:$0xff]
  %v2554 = vld [vmem:[%s4 + $0x1e0] sm:$0xff]
  %v2555 = vld [vmem:[%s4 + $0x1e8] sm:$0xff]
  %v2556 = vld [vmem:[%s4 + $0x1f0] sm:$0xff]
  %v2557 = vld [vmem:[%s4 + $0x1f8] sm:$0xff]
  %v2558 = vld [vmem:[%s4 + $0x200] sm:$0xff]
  %v2559 = vld [vmem:[%s4 + $0x208] sm:$0xff]
  %v2560 = vld [vmem:[%s4 + $0x210] sm:$0xff]
  %v2561 = vld [vmem:[%s4 + $0x218] sm:$0xff]
  %v2562 = vld [vmem:[%s4 + $0x220] sm:$0xff]
  %v2563 = vld [vmem:[%s4 + $0x228] sm:$0xff]
  %v2564 = vld [vmem:[%s4 + $0x230] sm:$0xff]
  %v2565 = vld [vmem:[%s4 + $0x238] sm:$0xff]
  %v2566 = vld [vmem:[%s4 + $0x240] sm:$0xff]
  %v2567 = vld [vmem:[%s4 + $0x248] sm:$0xff]
  %v2568 = vld [vmem:[%s4 + $0x250] sm:$0xff]
  %v2569 = vld [vmem:[%s4 + $0x258] sm:$0xff]
  %v2570 = vld [vmem:[%s4 + $0x260] sm:$0xff]
  %v2571 = vld [vmem:[%s4 + $0x268] sm:$0xff]
  %v2572 = vld [vmem:[%s4 + $0x270] sm:$0xff]
  %v2573 = vld [vmem:[%s4 + $0x278] sm:$0xff]
  %v2574 = vld [vmem:[%s4 + $0x280] sm:$0xff]
  %v2575 = vld [vmem:[%s4 + $0x288] sm:$0xff]
  %v2576 = vld [vmem:[%s4 + $0x290] sm:$0xff]
  %v2577 = vld [vmem:[%s4 + $0x298] sm:$0xff]
  %v2578 = vld [vmem:[%s4 + $0x2a0] sm:$0xff]
  %v2579 = vld [vmem:[%s4 + $0x2a8] sm:$0xff]
  %v2580 = vld [vmem:[%s4 + $0x2b0] sm:$0xff]
  %v2581 = vld [vmem:[%s4 + $0x2b8] sm:$0xff]
  %v2582 = vld [vmem:[%s4 + $0x2c0] sm:$0xff]
  %v2583 = vld [vmem:[%s4 + $0x2c8] sm:$0xff]
  %v2584 = vld [vmem:[%s4 + $0x2d0] sm:$0xff]
  %v2585 = vld [vmem:[%s4 + $0x2d8] sm:$0xff]
  %v2586 = vld [vmem:[%s4 + $0x2e0] sm:$0xff]
  %v2587 = vld [vmem:[%s4 + $0x2e8] sm:$0xff]
  %v2588 = vld [vmem:[%s4 + $0x2f0] sm:$0xff]
  %v2589 = vld [vmem:[%s4 + $0x2f8] sm:$0xff]
  %v2590 = vld [vmem:[%s4 + $0x300] sm:$0xff]
  %v2591 = vld [vmem:[%s4 + $0x308] sm:$0xff]
  %v2592 = vld [vmem:[%s4 + $0x310] sm:$0xff]
  %v2593 = vld [vmem:[%s4 + $0x318] sm:$0xff]
  %v2594 = vld [vmem:[%s4 + $0x320] sm:$0xff]
  %v2595 = vld [vmem:[%s4 + $0x328] sm:$0xff]
  %v2596 = vld [vmem:[%s4 + $0x330] sm:$0xff]
  %v2597 = vld [vmem:[%s4 + $0x338] sm:$0xff]
  %v2598 = vld [vmem:[%s4 + $0x340] sm:$0xff]
  %v2599 = vld [vmem:[%s4 + $0x348] sm:$0xff]
  %v2600 = vld [vmem:[%s4 + $0x350] sm:$0xff]
  %v2601 = vld [vmem:[%s4 + $0x358] sm:$0xff]
  %v2602 = vld [vmem:[%s4 + $0x360] sm:$0xff]
  %v2603 = vld [vmem:[%s4 + $0x368] sm:$0xff]
  %v2604 = vld [vmem:[%s4 + $0x370] sm:$0xff]
  %v2605 = vld [vmem:[%s4 + $0x378] sm:$0xff]
  %v2606 = vld [vmem:[%s4 + $0x380] sm:$0xff]
  %v2607 = vld [vmem:[%s4 + $0x388] sm:$0xff]
  %v2608 = vld [vmem:[%s4 + $0x390] sm:$0xff]
  %v2609 = vld [vmem:[%s4 + $0x398] sm:$0xff]
  %v2610 = vld [vmem:[%s4 + $0x3a0] sm:$0xff]
  %v2611 = vld [vmem:[%s4 + $0x3a8] sm:$0xff]
  %v2612 = vld [vmem:[%s4 + $0x3b0] sm:$0xff]
  %v2613 = vld [vmem:[%s4 + $0x3b8] sm:$0xff]
  %v2614 = vld [vmem:[%s4 + $0x3c0] sm:$0xff]
  %v2615 = vld [vmem:[%s4 + $0x3c8] sm:$0xff]
  %v2616 = vld [vmem:[%s4 + $0x3d0] sm:$0xff]
  %v2617 = vld [vmem:[%s4 + $0x3d8] sm:$0xff]
  %v2618 = vld [vmem:[%s4 + $0x3e0] sm:$0xff]
  %v2619 = vld [vmem:[%s4 + $0x3e8] sm:$0xff]
  %v2620 = vld [vmem:[%s4 + $0x3f0] sm:$0xff]
  %v2621 = vld [vmem:[%s4 + $0x3f8] sm:$0xff]
  %v2622 = vld [vmem:[%s4 + $0x400] sm:$0xff]
  %v2623 = vld [vmem:[%s4 + $0x408] sm:$0xff]
  %v2624 = vld [vmem:[%s4 + $0x410] sm:$0xff]
  %v2625 = vld [vmem:[%s4 + $0x418] sm:$0xff]
  %v2626 = vld [vmem:[%s4 + $0x420] sm:$0xff]
  %v2627 = vld [vmem:[%s4 + $0x428] sm:$0xff]
  %v2628 = vld [vmem:[%s4 + $0x430] sm:$0xff]
  %v2629 = vld [vmem:[%s4 + $0x438] sm:$0xff]
  %v2630 = vld [vmem:[%s4 + $0x440] sm:$0xff]
  %v2631 = vld [vmem:[%s4 + $0x448] sm:$0xff]
  %v2632 = vld [vmem:[%s4 + $0x450] sm:$0xff]
  %v2633 = vld [vmem:[%s4 + $0x458] sm:$0xff]
  %v2634 = vld [vmem:[%s4 + $0x460] sm:$0xff]
  %v2635 = vld [vmem:[%s4 + $0x468] sm:$0xff]
  %v2636 = vld [vmem:[%s4 + $0x470] sm:$0xff]
  %v2637 = vld [vmem:[%s4 + $0x478] sm:$0xff]
  %v2638 = vld [vmem:[%s4 + $0x480] sm:$0xff]
  %v2639 = vld [vmem:[%s4 + $0x488] sm:$0xff]
  %v2640 = vld [vmem:[%s4 + $0x490] sm:$0xff]
  %v2641 = vld [vmem:[%s4 + $0x498] sm:$0xff]
  %v2642 = vld [vmem:[%s4 + $0x4a0] sm:$0xff]
  %v2643 = vld [vmem:[%s4 + $0x4a8] sm:$0xff]
  %v2644 = vld [vmem:[%s4 + $0x4b0] sm:$0xff]
  %v2645 = vld [vmem:[%s4 + $0x4b8] sm:$0xff]
  %v2646 = vld [vmem:[%s4 + $0x4c0] sm:$0xff]
  %v2647 = vld [vmem:[%s4 + $0x4c8] sm:$0xff]
  %v2648 = vld [vmem:[%s4 + $0x4d0] sm:$0xff]
  %v2649 = vld [vmem:[%s4 + $0x4d8] sm:$0xff]
  %v2650 = vld [vmem:[%s4 + $0x4e0] sm:$0xff]
  %v2651 = vld [vmem:[%s4 + $0x4e8] sm:$0xff]
  %v2652 = vld [vmem:[%s4 + $0x4f0] sm:$0xff]
  %v2653 = vld [vmem:[%s4 + $0x4f8] sm:$0xff]
  %v2654 = vld [vmem:[%s4 + $0x500] sm:$0xff]
  %v2655 = vld [vmem:[%s4 + $0x508] sm:$0xff]
  %v2656 = vld [vmem:[%s4 + $0x510] sm:$0xff]
  %v2657 = vld [vmem:[%s4 + $0x518] sm:$0xff]
  %v2658 = vld [vmem:[%s4 + $0x520] sm:$0xff]
  %v2659 = vld [vmem:[%s4 + $0x528] sm:$0xff]
  %v2660 = vld [vmem:[%s4 + $0x530] sm:$0xff]
  %v2661 = vld [vmem:[%s4 + $0x538] sm:$0xff]
  %v2662 = vld [vmem:[%s4 + $0x540] sm:$0xff]
  %v2663 = vld [vmem:[%s4 + $0x548] sm:$0xff]
  %v2664 = vld [vmem:[%s4 + $0x550] sm:$0xff]
  %v2665 = vld [vmem:[%s4 + $0x558] sm:$0xff]
  %v2666 = vld [vmem:[%s4 + $0x560] sm:$0xff]
  %v2667 = vld [vmem:[%s4 + $0x568] sm:$0xff]
  %v2668 = vld [vmem:[%s4 + $0x570] sm:$0xff]
  %v2669 = vld [vmem:[%s4 + $0x578] sm:$0xff]
  %v2670 = vld [vmem:[%s4 + $0x580] sm:$0xff]
  %v2671 = vld [vmem:[%s4 + $0x588] sm:$0xff]
  %v2672 = vld [vmem:[%s4 + $0x590] sm:$0xff]
  %v2673 = vld [vmem:[%s4 + $0x598] sm:$0xff]
  %v2674 = vld [vmem:[%s4 + $0x5a0] sm:$0xff]
  %v2675 = vld [vmem:[%s4 + $0x5a8] sm:$0xff]
  %v2676 = vld [vmem:[%s4 + $0x5b0] sm:$0xff]
  %v2677 = vld [vmem:[%s4 + $0x5b8] sm:$0xff]
  %v2678 = vld [vmem:[%s4 + $0x5c0] sm:$0xff]
  %v2679 = vld [vmem:[%s4 + $0x5c8] sm:$0xff]
  %v2680 = vld [vmem:[%s4 + $0x5d0] sm:$0xff]
  %v2681 = vld [vmem:[%s4 + $0x5d8] sm:$0xff]
  %v2682 = vld [vmem:[%s4 + $0x5e0] sm:$0x7]
  %v2683 = vld [vmem:[%s4 + $0x5e8] sm:$0x7]
  %vm2684 = vcmask 941056
  %v2686 = vsel %vm2684, %v2403, 0
  %v2689 = vsel %vm2684, %v2409, 0
  %v2692 = vsel %vm2684, %v2415, 0
  %v2695 = vsel %vm2684, %v2421, 0
  %v2698 = vsel %vm2684, %v2427, 0
  %v2701 = vsel %vm2684, %v2433, 0
  %v2704 = vsel %vm2684, %v2439, 0
  %v2707 = vsel %vm2684, %v2445, 0
  %v2710 = vsel %vm2684, %v2451, 0
  %v2713 = vsel %vm2684, %v2457, 0
  %v2716 = vsel %vm2684, %v2463, 0
  %v2719 = vsel %vm2684, %v2469, 0
  %v2722 = vsel %vm2684, %v2475, 0
  %v2725 = vsel %vm2684, %v2481, 0
  %v2728 = vsel %vm2684, %v2487, 0
  %v2731 = vsel %vm2684, %v2493, 0
  %vm2733 = vcmask 1042432
  %v2735 = vsel %vm2733, %v2682, 0
  %v2738 = vsel %vm2733, %v2683, 0
  %2740 = vmatpush.msra.mxu0 %v2524
  %2741 = vmatpush.msra.mxu0 %v2522
  %2742 = vmatpush.msra.mxu0 %v2520
  %2743 = vmatpush.msra.mxu0 %v2518
  %2744 = vmatpush.msra.mxu0 %v2516
  %2745 = vmatpush.msra.mxu0 %v2514
  %2746 = vmatpush.msra.mxu0 %v2512
  %2747 = vmatpush.msra.mxu0 %v2510
  %2748 = vmatpush.msra.mxu0 %v2508
  %2749 = vmatpush.msra.mxu0 %v2506
  %2750 = vmatpush.msra.mxu0 %v2504
  %2751 = vmatpush.msra.mxu0 %v2502
  %2752 = vmatpush.msra.mxu0 %v2500
  %2753 = vmatpush.msra.mxu0 %v2498
  %2754 = vmatpush.msra.mxu0 %v2496
  %2755 = vmatpush.msra.mxu0 %v2494
  %2756 = vmatmul.f32.gmra.mxu0 %v2398
  %v2757 = vpop.f32.mrf.mxu0
  %v2758 = vadd.f32 0.0, %v2757
  %2759 = vmatmul.f32.gmra.mxu0 %v2404
  %v2760 = vpop.f32.mrf.mxu0
  %v2761 = vadd.f32 0.0, %v2760
  %2762 = vmatmul.f32.gmra.mxu0 %v2410
  %v2763 = vpop.f32.mrf.mxu0
  %v2764 = vadd.f32 0.0, %v2763
  %2765 = vmatmul.f32.gmra.mxu0 %v2416
  %v2766 = vpop.f32.mrf.mxu0
  %v2767 = vadd.f32 0.0, %v2766
  %2768 = vmatmul.f32.gmra.mxu0 %v2422
  %v2769 = vpop.f32.mrf.mxu0
  %v2770 = vadd.f32 0.0, %v2769
  %2771 = vmatmul.f32.gmra.mxu0 %v2428
  %v2772 = vpop.f32.mrf.mxu0
  %v2773 = vadd.f32 0.0, %v2772
  %2774 = vmatmul.f32.gmra.mxu0 %v2434
  %v2775 = vpop.f32.mrf.mxu0
  %v2776 = vadd.f32 0.0, %v2775
  %2777 = vmatmul.f32.gmra.mxu0 %v2440
  %v2778 = vpop.f32.mrf.mxu0
  %v2779 = vadd.f32 0.0, %v2778
  %2780 = vmatmul.f32.gmra.mxu0 %v2446
  %v2781 = vpop.f32.mrf.mxu0
  %v2782 = vadd.f32 0.0, %v2781
  %2783 = vmatmul.f32.gmra.mxu0 %v2452
  %v2784 = vpop.f32.mrf.mxu0
  %v2785 = vadd.f32 0.0, %v2784
  %2786 = vmatmul.f32.gmra.mxu0 %v2458
  %v2787 = vpop.f32.mrf.mxu0
  %v2788 = vadd.f32 0.0, %v2787
  %2789 = vmatmul.f32.gmra.mxu0 %v2464
  %v2790 = vpop.f32.mrf.mxu0
  %v2791 = vadd.f32 0.0, %v2790
  %2792 = vmatmul.f32.gmra.mxu0 %v2470
  %v2793 = vpop.f32.mrf.mxu0
  %v2794 = vadd.f32 0.0, %v2793
  %2795 = vmatmul.f32.gmra.mxu0 %v2476
  %v2796 = vpop.f32.mrf.mxu0
  %v2797 = vadd.f32 0.0, %v2796
  %2798 = vmatmul.f32.gmra.mxu0 %v2482
  %v2799 = vpop.f32.mrf.mxu0
  %v2800 = vadd.f32 0.0, %v2799
  %2801 = vmatmul.f32.gmra.mxu0 %v2488
  %v2802 = vpop.f32.mrf.mxu0
  %v2803 = vadd.f32 0.0, %v2802
  %2804 = vdwg.mxu0
  %2805 = vmatpush.msra.mxu0 %v2556
  %2806 = vmatpush.msra.mxu0 %v2554
  %2807 = vmatpush.msra.mxu0 %v2552
  %2808 = vmatpush.msra.mxu0 %v2550
  %2809 = vmatpush.msra.mxu0 %v2548
  %2810 = vmatpush.msra.mxu0 %v2546
  %2811 = vmatpush.msra.mxu0 %v2544
  %2812 = vmatpush.msra.mxu0 %v2542
  %2813 = vmatpush.msra.mxu0 %v2540
  %2814 = vmatpush.msra.mxu0 %v2538
  %2815 = vmatpush.msra.mxu0 %v2536
  %2816 = vmatpush.msra.mxu0 %v2534
  %2817 = vmatpush.msra.mxu0 %v2532
  %2818 = vmatpush.msra.mxu0 %v2530
  %2819 = vmatpush.msra.mxu0 %v2528
  %2820 = vmatpush.msra.mxu0 %v2526
  %2821 = vmatmul.f32.gmra.mxu0 %v2399
  %v2822 = vpop.f32.mrf.mxu0
  %v2823 = vadd.f32 %v2758, %v2822
  %2824 = vmatmul.f32.gmra.mxu0 %v2405
  %v2825 = vpop.f32.mrf.mxu0
  %v2826 = vadd.f32 %v2761, %v2825
  %2827 = vmatmul.f32.gmra.mxu0 %v2411
  %v2828 = vpop.f32.mrf.mxu0
  %v2829 = vadd.f32 %v2764, %v2828
  %2830 = vmatmul.f32.gmra.mxu0 %v2417
  %v2831 = vpop.f32.mrf.mxu0
  %v2832 = vadd.f32 %v2767, %v2831
  %2833 = vmatmul.f32.gmra.mxu0 %v2423
  %v2834 = vpop.f32.mrf.mxu0
  %v2835 = vadd.f32 %v2770, %v2834
  %2836 = vmatmul.f32.gmra.mxu0 %v2429
  %v2837 = vpop.f32.mrf.mxu0
  %v2838 = vadd.f32 %v2773, %v2837
  %2839 = vmatmul.f32.gmra.mxu0 %v2435
  %v2840 = vpop.f32.mrf.mxu0
  %v2841 = vadd.f32 %v2776, %v2840
  %2842 = vmatmul.f32.gmra.mxu0 %v2441
  %v2843 = vpop.f32.mrf.mxu0
  %v2844 = vadd.f32 %v2779, %v2843
  %2845 = vmatmul.f32.gmra.mxu0 %v2447
  %v2846 = vpop.f32.mrf.mxu0
  %v2847 = vadd.f32 %v2782, %v2846
  %2848 = vmatmul.f32.gmra.mxu0 %v2453
  %v2849 = vpop.f32.mrf.mxu0
  %v2850 = vadd.f32 %v2785, %v2849
  %2851 = vmatmul.f32.gmra.mxu0 %v2459
  %v2852 = vpop.f32.mrf.mxu0
  %v2853 = vadd.f32 %v2788, %v2852
  %2854 = vmatmul.f32.gmra.mxu0 %v2465
  %v2855 = vpop.f32.mrf.mxu0
  %v2856 = vadd.f32 %v2791, %v2855
  %2857 = vmatmul.f32.gmra.mxu0 %v2471
  %v2858 = vpop.f32.mrf.mxu0
  %v2859 = vadd.f32 %v2794, %v2858
  %2860 = vmatmul.f32.gmra.mxu0 %v2477
  %v2861 = vpop.f32.mrf.mxu0
  %v2862 = vadd.f32 %v2797, %v2861
  %2863 = vmatmul.f32.gmra.mxu0 %v2483
  %v2864 = vpop.f32.mrf.mxu0
  %v2865 = vadd.f32 %v2800, %v2864
  %2866 = vmatmul.f32.gmra.mxu0 %v2489
  %v2867 = vpop.f32.mrf.mxu0
  %v2868 = vadd.f32 %v2803, %v2867
  %2869 = vdwg.mxu0
  %2870 = vmatpush.msra.mxu0 %v2588
  %2871 = vmatpush.msra.mxu0 %v2586
  %2872 = vmatpush.msra.mxu0 %v2584
  %2873 = vmatpush.msra.mxu0 %v2582
  %2874 = vmatpush.msra.mxu0 %v2580
  %2875 = vmatpush.msra.mxu0 %v2578
  %2876 = vmatpush.msra.mxu0 %v2576
  %2877 = vmatpush.msra.mxu0 %v2574
  %2878 = vmatpush.msra.mxu0 %v2572
  %2879 = vmatpush.msra.mxu0 %v2570
  %2880 = vmatpush.msra.mxu0 %v2568
  %2881 = vmatpush.msra.mxu0 %v2566
  %2882 = vmatpush.msra.mxu0 %v2564
  %2883 = vmatpush.msra.mxu0 %v2562
  %2884 = vmatpush.msra.mxu0 %v2560
  %2885 = vmatpush.msra.mxu0 %v2558
  %2886 = vmatmul.f32.gmra.mxu0 %v2400
  %v2887 = vpop.f32.mrf.mxu0
  %v2888 = vadd.f32 %v2823, %v2887
  %2889 = vmatmul.f32.gmra.mxu0 %v2406
  %v2890 = vpop.f32.mrf.mxu0
  %v2891 = vadd.f32 %v2826, %v2890
  %2892 = vmatmul.f32.gmra.mxu0 %v2412
  %v2893 = vpop.f32.mrf.mxu0
  %v2894 = vadd.f32 %v2829, %v2893
  %2895 = vmatmul.f32.gmra.mxu0 %v2418
  %v2896 = vpop.f32.mrf.mxu0
  %v2897 = vadd.f32 %v2832, %v2896
  %2898 = vmatmul.f32.gmra.mxu0 %v2424
  %v2899 = vpop.f32.mrf.mxu0
  %v2900 = vadd.f32 %v2835, %v2899
  %2901 = vmatmul.f32.gmra.mxu0 %v2430
  %v2902 = vpop.f32.mrf.mxu0
  %v2903 = vadd.f32 %v2838, %v2902
  %2904 = vmatmul.f32.gmra.mxu0 %v2436
  %v2905 = vpop.f32.mrf.mxu0
  %v2906 = vadd.f32 %v2841, %v2905
  %2907 = vmatmul.f32.gmra.mxu0 %v2442
  %v2908 = vpop.f32.mrf.mxu0
  %v2909 = vadd.f32 %v2844, %v2908
  %2910 = vmatmul.f32.gmra.mxu0 %v2448
  %v2911 = vpop.f32.mrf.mxu0
  %v2912 = vadd.f32 %v2847, %v2911
  %2913 = vmatmul.f32.gmra.mxu0 %v2454
  %v2914 = vpop.f32.mrf.mxu0
  %v2915 = vadd.f32 %v2850, %v2914
  %2916 = vmatmul.f32.gmra.mxu0 %v2460
  %v2917 = vpop.f32.mrf.mxu0
  %v2918 = vadd.f32 %v2853, %v2917
  %2919 = vmatmul.f32.gmra.mxu0 %v2466
  %v2920 = vpop.f32.mrf.mxu0
  %v2921 = vadd.f32 %v2856, %v2920
  %2922 = vmatmul.f32.gmra.mxu0 %v2472
  %v2923 = vpop.f32.mrf.mxu0
  %v2924 = vadd.f32 %v2859, %v2923
  %2925 = vmatmul.f32.gmra.mxu0 %v2478
  %v2926 = vpop.f32.mrf.mxu0
  %v2927 = vadd.f32 %v2862, %v2926
  %2928 = vmatmul.f32.gmra.mxu0 %v2484
  %v2929 = vpop.f32.mrf.mxu0
  %v2930 = vadd.f32 %v2865, %v2929
  %2931 = vmatmul.f32.gmra.mxu0 %v2490
  %v2932 = vpop.f32.mrf.mxu0
  %v2933 = vadd.f32 %v2868, %v2932
  %2934 = vdwg.mxu0
  %2935 = vmatpush.msra.mxu0 %v2620
  %2936 = vmatpush.msra.mxu0 %v2618
  %2937 = vmatpush.msra.mxu0 %v2616
  %2938 = vmatpush.msra.mxu0 %v2614
  %2939 = vmatpush.msra.mxu0 %v2612
  %2940 = vmatpush.msra.mxu0 %v2610
  %2941 = vmatpush.msra.mxu0 %v2608
  %2942 = vmatpush.msra.mxu0 %v2606
  %2943 = vmatpush.msra.mxu0 %v2604
  %2944 = vmatpush.msra.mxu0 %v2602
  %2945 = vmatpush.msra.mxu0 %v2600
  %2946 = vmatpush.msra.mxu0 %v2598
  %2947 = vmatpush.msra.mxu0 %v2596
  %2948 = vmatpush.msra.mxu0 %v2594
  %2949 = vmatpush.msra.mxu0 %v2592
  %2950 = vmatpush.msra.mxu0 %v2590
  %2951 = vmatmul.f32.gmra.mxu0 %v2401
  %v2952 = vpop.f32.mrf.mxu0
  %v2953 = vadd.f32 %v2888, %v2952
  %2954 = vmatmul.f32.gmra.mxu0 %v2407
  %v2955 = vpop.f32.mrf.mxu0
  %v2956 = vadd.f32 %v2891, %v2955
  %2957 = vmatmul.f32.gmra.mxu0 %v2413
  %v2958 = vpop.f32.mrf.mxu0
  %v2959 = vadd.f32 %v2894, %v2958
  %2960 = vmatmul.f32.gmra.mxu0 %v2419
  %v2961 = vpop.f32.mrf.mxu0
  %v2962 = vadd.f32 %v2897, %v2961
  %2963 = vmatmul.f32.gmra.mxu0 %v2425
  %v2964 = vpop.f32.mrf.mxu0
  %v2965 = vadd.f32 %v2900, %v2964
  %2966 = vmatmul.f32.gmra.mxu0 %v2431
  %v2967 = vpop.f32.mrf.mxu0
  %v2968 = vadd.f32 %v2903, %v2967
  %2969 = vmatmul.f32.gmra.mxu0 %v2437
  %v2970 = vpop.f32.mrf.mxu0
  %v2971 = vadd.f32 %v2906, %v2970
  %2972 = vmatmul.f32.gmra.mxu0 %v2443
  %v2973 = vpop.f32.mrf.mxu0
  %v2974 = vadd.f32 %v2909, %v2973
  %2975 = vmatmul.f32.gmra.mxu0 %v2449
  %v2976 = vpop.f32.mrf.mxu0
  %v2977 = vadd.f32 %v2912, %v2976
  %2978 = vmatmul.f32.gmra.mxu0 %v2455
  %v2979 = vpop.f32.mrf.mxu0
  %v2980 = vadd.f32 %v2915, %v2979
  %2981 = vmatmul.f32.gmra.mxu0 %v2461
  %v2982 = vpop.f32.mrf.mxu0
  %v2983 = vadd.f32 %v2918, %v2982
  %2984 = vmatmul.f32.gmra.mxu0 %v2467
  %v2985 = vpop.f32.mrf.mxu0
  %v2986 = vadd.f32 %v2921, %v2985
  %2987 = vmatmul.f32.gmra.mxu0 %v2473
  %v2988 = vpop.f32.mrf.mxu0
  %v2989 = vadd.f32 %v2924, %v2988
  %2990 = vmatmul.f32.gmra.mxu0 %v2479
  %v2991 = vpop.f32.mrf.mxu0
  %v2992 = vadd.f32 %v2927, %v2991
  %2993 = vmatmul.f32.gmra.mxu0 %v2485
  %v2994 = vpop.f32.mrf.mxu0
  %v2995 = vadd.f32 %v2930, %v2994
  %2996 = vmatmul.f32.gmra.mxu0 %v2491
  %v2997 = vpop.f32.mrf.mxu0
  %v2998 = vadd.f32 %v2933, %v2997
  %2999 = vdwg.mxu0
  %3000 = vmatpush.msra.mxu0 %v2652
  %3001 = vmatpush.msra.mxu0 %v2650
  %3002 = vmatpush.msra.mxu0 %v2648
  %3003 = vmatpush.msra.mxu0 %v2646
  %3004 = vmatpush.msra.mxu0 %v2644
  %3005 = vmatpush.msra.mxu0 %v2642
  %3006 = vmatpush.msra.mxu0 %v2640
  %3007 = vmatpush.msra.mxu0 %v2638
  %3008 = vmatpush.msra.mxu0 %v2636
  %3009 = vmatpush.msra.mxu0 %v2634
  %3010 = vmatpush.msra.mxu0 %v2632
  %3011 = vmatpush.msra.mxu0 %v2630
  %3012 = vmatpush.msra.mxu0 %v2628
  %3013 = vmatpush.msra.mxu0 %v2626
  %3014 = vmatpush.msra.mxu0 %v2624
  %3015 = vmatpush.msra.mxu0 %v2622
  %3016 = vmatmul.f32.gmra.mxu0 %v2402
  %v3017 = vpop.f32.mrf.mxu0
  %v3018 = vadd.f32 %v2953, %v3017
  %3019 = vmatmul.f32.gmra.mxu0 %v2408
  %v3020 = vpop.f32.mrf.mxu0
  %v3021 = vadd.f32 %v2956, %v3020
  %3022 = vmatmul.f32.gmra.mxu0 %v2414
  %v3023 = vpop.f32.mrf.mxu0
  %v3024 = vadd.f32 %v2959, %v3023
  %3025 = vmatmul.f32.gmra.mxu0 %v2420
  %v3026 = vpop.f32.mrf.mxu0
  %v3027 = vadd.f32 %v2962, %v3026
  %3028 = vmatmul.f32.gmra.mxu0 %v2426
  %v3029 = vpop.f32.mrf.mxu0
  %v3030 = vadd.f32 %v2965, %v3029
  %3031 = vmatmul.f32.gmra.mxu0 %v2432
  %v3032 = vpop.f32.mrf.mxu0
  %v3033 = vadd.f32 %v2968, %v3032
  %3034 = vmatmul.f32.gmra.mxu0 %v2438
  %v3035 = vpop.f32.mrf.mxu0
  %v3036 = vadd.f32 %v2971, %v3035
  %3037 = vmatmul.f32.gmra.mxu0 %v2444
  %v3038 = vpop.f32.mrf.mxu0
  %v3039 = vadd.f32 %v2974, %v3038
  %3040 = vmatmul.f32.gmra.mxu0 %v2450
  %v3041 = vpop.f32.mrf.mxu0
  %v3042 = vadd.f32 %v2977, %v3041
  %3043 = vmatmul.f32.gmra.mxu0 %v2456
  %v3044 = vpop.f32.mrf.mxu0
  %v3045 = vadd.f32 %v2980, %v3044
  %3046 = vmatmul.f32.gmra.mxu0 %v2462
  %v3047 = vpop.f32.mrf.mxu0
  %v3048 = vadd.f32 %v2983, %v3047
  %3049 = vmatmul.f32.gmra.mxu0 %v2468
  %v3050 = vpop.f32.mrf.mxu0
  %v3051 = vadd.f32 %v2986, %v3050
  %3052 = vmatmul.f32.gmra.mxu0 %v2474
  %v3053 = vpop.f32.mrf.mxu0
  %v3054 = vadd.f32 %v2989, %v3053
  %3055 = vmatmul.f32.gmra.mxu0 %v2480
  %v3056 = vpop.f32.mrf.mxu0
  %v3057 = vadd.f32 %v2992, %v3056
  %3058 = vmatmul.f32.gmra.mxu0 %v2486
  %v3059 = vpop.f32.mrf.mxu0
  %v3060 = vadd.f32 %v2995, %v3059
  %3061 = vmatmul.f32.gmra.mxu0 %v2492
  %v3062 = vpop.f32.mrf.mxu0
  %v3063 = vadd.f32 %v2998, %v3062
  %3064 = vdwg.mxu0
  %3065 = vmatpush.msra.mxu0 0.0
  %3066 = vmatpush.msra.mxu0 %v2735
  %3067 = vmatpush.msra.mxu0 %v2680
  %3068 = vmatpush.msra.mxu0 %v2678
  %3069 = vmatpush.msra.mxu0 %v2676
  %3070 = vmatpush.msra.mxu0 %v2674
  %3071 = vmatpush.msra.mxu0 %v2672
  %3072 = vmatpush.msra.mxu0 %v2670
  %3073 = vmatpush.msra.mxu0 %v2668
  %3074 = vmatpush.msra.mxu0 %v2666
  %3075 = vmatpush.msra.mxu0 %v2664
  %3076 = vmatpush.msra.mxu0 %v2662
  %3077 = vmatpush.msra.mxu0 %v2660
  %3078 = vmatpush.msra.mxu0 %v2658
  %3079 = vmatpush.msra.mxu0 %v2656
  %3080 = vmatpush.msra.mxu0 %v2654
  %3081 = vmatmul.f32.gmra.mxu0 %v2686
  %v3082 = vpop.f32.mrf.mxu0
  %v3083 = vadd.f32 %v3018, %v3082
  %3084 = vmatmul.f32.gmra.mxu0 %v2689
  %v3085 = vpop.f32.mrf.mxu0
  %v3086 = vadd.f32 %v3021, %v3085
  %3087 = vmatmul.f32.gmra.mxu0 %v2692
  %v3088 = vpop.f32.mrf.mxu0
  %v3089 = vadd.f32 %v3024, %v3088
  %3090 = vmatmul.f32.gmra.mxu0 %v2695
  %v3091 = vpop.f32.mrf.mxu0
  %v3092 = vadd.f32 %v3027, %v3091
  %3093 = vmatmul.f32.gmra.mxu0 %v2698
  %v3094 = vpop.f32.mrf.mxu0
  %v3095 = vadd.f32 %v3030, %v3094
  %3096 = vmatmul.f32.gmra.mxu0 %v2701
  %v3097 = vpop.f32.mrf.mxu0
  %v3098 = vadd.f32 %v3033, %v3097
  %3099 = vmatmul.f32.gmra.mxu0 %v2704
  %v3100 = vpop.f32.mrf.mxu0
  %v3101 = vadd.f32 %v3036, %v3100
  %3102 = vmatmul.f32.gmra.mxu0 %v2707
  %v3103 = vpop.f32.mrf.mxu0
  %v3104 = vadd.f32 %v3039, %v3103
  %3105 = vmatmul.f32.gmra.mxu0 %v2710
  %v3106 = vpop.f32.mrf.mxu0
  %v3107 = vadd.f32 %v3042, %v3106
  %3108 = vmatmul.f32.gmra.mxu0 %v2713
  %v3109 = vpop.f32.mrf.mxu0
  %v3110 = vadd.f32 %v3045, %v3109
  %3111 = vmatmul.f32.gmra.mxu0 %v2716
  %v3112 = vpop.f32.mrf.mxu0
  %v3113 = vadd.f32 %v3048, %v3112
  %3114 = vmatmul.f32.gmra.mxu0 %v2719
  %v3115 = vpop.f32.mrf.mxu0
  %v3116 = vadd.f32 %v3051, %v3115
  %3117 = vmatmul.f32.gmra.mxu0 %v2722
  %v3118 = vpop.f32.mrf.mxu0
  %v3119 = vadd.f32 %v3054, %v3118
  %3120 = vmatmul.f32.gmra.mxu0 %v2725
  %v3121 = vpop.f32.mrf.mxu0
  %v3122 = vadd.f32 %v3057, %v3121
  %3123 = vmatmul.f32.gmra.mxu0 %v2728
  %v3124 = vpop.f32.mrf.mxu0
  %v3125 = vadd.f32 %v3060, %v3124
  %3126 = vmatmul.f32.gmra.mxu0 %v2731
  %v3127 = vpop.f32.mrf.mxu0
  %v3128 = vadd.f32 %v3063, %v3127
  %3129 = vdwg.mxu0
  %3130 = vmatpush.msra.mxu0 %v2525
  %3131 = vmatpush.msra.mxu0 %v2523
  %3132 = vmatpush.msra.mxu0 %v2521
  %3133 = vmatpush.msra.mxu0 %v2519
  %3134 = vmatpush.msra.mxu0 %v2517
  %3135 = vmatpush.msra.mxu0 %v2515
  %3136 = vmatpush.msra.mxu0 %v2513
  %3137 = vmatpush.msra.mxu0 %v2511
  %3138 = vmatpush.msra.mxu0 %v2509
  %3139 = vmatpush.msra.mxu0 %v2507
  %3140 = vmatpush.msra.mxu0 %v2505
  %3141 = vmatpush.msra.mxu0 %v2503
  %3142 = vmatpush.msra.mxu0 %v2501
  %3143 = vmatpush.msra.mxu0 %v2499
  %3144 = vmatpush.msra.mxu0 %v2497
  %3145 = vmatpush.msra.mxu0 %v2495
  %3146 = vmatmul.f32.gmra.mxu0 %v2398
  %v3147 = vpop.f32.mrf.mxu0
  %v3148 = vadd.f32 0.0, %v3147
  %3149 = vmatmul.f32.gmra.mxu0 %v2404
  %v3150 = vpop.f32.mrf.mxu0
  %v3151 = vadd.f32 0.0, %v3150
  %3152 = vmatmul.f32.gmra.mxu0 %v2410
  %v3153 = vpop.f32.mrf.mxu0
  %v3154 = vadd.f32 0.0, %v3153
  %3155 = vmatmul.f32.gmra.mxu0 %v2416
  %v3156 = vpop.f32.mrf.mxu0
  %v3157 = vadd.f32 0.0, %v3156
  %3158 = vmatmul.f32.gmra.mxu0 %v2422
  %v3159 = vpop.f32.mrf.mxu0
  %v3160 = vadd.f32 0.0, %v3159
  %3161 = vmatmul.f32.gmra.mxu0 %v2428
  %v3162 = vpop.f32.mrf.mxu0
  %v3163 = vadd.f32 0.0, %v3162
  %3164 = vmatmul.f32.gmra.mxu0 %v2434
  %v3165 = vpop.f32.mrf.mxu0
  %v3166 = vadd.f32 0.0, %v3165
  %3167 = vmatmul.f32.gmra.mxu0 %v2440
  %v3168 = vpop.f32.mrf.mxu0
  %v3169 = vadd.f32 0.0, %v3168
  %3170 = vmatmul.f32.gmra.mxu0 %v2446
  %v3171 = vpop.f32.mrf.mxu0
  %v3172 = vadd.f32 0.0, %v3171
  %3173 = vmatmul.f32.gmra.mxu0 %v2452
  %v3174 = vpop.f32.mrf.mxu0
  %v3175 = vadd.f32 0.0, %v3174
  %3176 = vmatmul.f32.gmra.mxu0 %v2458
  %v3177 = vpop.f32.mrf.mxu0
  %v3178 = vadd.f32 0.0, %v3177
  %3179 = vmatmul.f32.gmra.mxu0 %v2464
  %v3180 = vpop.f32.mrf.mxu0
  %v3181 = vadd.f32 0.0, %v3180
  %3182 = vmatmul.f32.gmra.mxu0 %v2470
  %v3183 = vpop.f32.mrf.mxu0
  %v3184 = vadd.f32 0.0, %v3183
  %3185 = vmatmul.f32.gmra.mxu0 %v2476
  %v3186 = vpop.f32.mrf.mxu0
  %v3187 = vadd.f32 0.0, %v3186
  %3188 = vmatmul.f32.gmra.mxu0 %v2482
  %v3189 = vpop.f32.mrf.mxu0
  %v3190 = vadd.f32 0.0, %v3189
  %3191 = vmatmul.f32.gmra.mxu0 %v2488
  %v3192 = vpop.f32.mrf.mxu0
  %v3193 = vadd.f32 0.0, %v3192
  %3194 = vdwg.mxu0
  %3195 = vmatpush.msra.mxu0 %v2557
  %3196 = vmatpush.msra.mxu0 %v2555
  %3197 = vmatpush.msra.mxu0 %v2553
  %3198 = vmatpush.msra.mxu0 %v2551
  %3199 = vmatpush.msra.mxu0 %v2549
  %3200 = vmatpush.msra.mxu0 %v2547
  %3201 = vmatpush.msra.mxu0 %v2545
  %3202 = vmatpush.msra.mxu0 %v2543
  %3203 = vmatpush.msra.mxu0 %v2541
  %3204 = vmatpush.msra.mxu0 %v2539
  %3205 = vmatpush.msra.mxu0 %v2537
  %3206 = vmatpush.msra.mxu0 %v2535
  %3207 = vmatpush.msra.mxu0 %v2533
  %3208 = vmatpush.msra.mxu0 %v2531
  %3209 = vmatpush.msra.mxu0 %v2529
  %3210 = vmatpush.msra.mxu0 %v2527
  %3211 = vmatmul.f32.gmra.mxu0 %v2399
  %v3212 = vpop.f32.mrf.mxu0
  %v3213 = vadd.f32 %v3148, %v3212
  %3214 = vmatmul.f32.gmra.mxu0 %v2405
  %v3215 = vpop.f32.mrf.mxu0
  %v3216 = vadd.f32 %v3151, %v3215
  %3217 = vmatmul.f32.gmra.mxu0 %v2411
  %v3218 = vpop.f32.mrf.mxu0
  %v3219 = vadd.f32 %v3154, %v3218
  %3220 = vmatmul.f32.gmra.mxu0 %v2417
  %v3221 = vpop.f32.mrf.mxu0
  %v3222 = vadd.f32 %v3157, %v3221
  %3223 = vmatmul.f32.gmra.mxu0 %v2423
  %v3224 = vpop.f32.mrf.mxu0
  %v3225 = vadd.f32 %v3160, %v3224
  %3226 = vmatmul.f32.gmra.mxu0 %v2429
  %v3227 = vpop.f32.mrf.mxu0
  %v3228 = vadd.f32 %v3163, %v3227
  %3229 = vmatmul.f32.gmra.mxu0 %v2435
  %v3230 = vpop.f32.mrf.mxu0
  %v3231 = vadd.f32 %v3166, %v3230
  %3232 = vmatmul.f32.gmra.mxu0 %v2441
  %v3233 = vpop.f32.mrf.mxu0
  %v3234 = vadd.f32 %v3169, %v3233
  %3235 = vmatmul.f32.gmra.mxu0 %v2447
  %v3236 = vpop.f32.mrf.mxu0
  %v3237 = vadd.f32 %v3172, %v3236
  %3238 = vmatmul.f32.gmra.mxu0 %v2453
  %v3239 = vpop.f32.mrf.mxu0
  %v3240 = vadd.f32 %v3175, %v3239
  %3241 = vmatmul.f32.gmra.mxu0 %v2459
  %v3242 = vpop.f32.mrf.mxu0
  %v3243 = vadd.f32 %v3178, %v3242
  %3244 = vmatmul.f32.gmra.mxu0 %v2465
  %v3245 = vpop.f32.mrf.mxu0
  %v3246 = vadd.f32 %v3181, %v3245
  %3247 = vmatmul.f32.gmra.mxu0 %v2471
  %v3248 = vpop.f32.mrf.mxu0
  %v3249 = vadd.f32 %v3184, %v3248
  %3250 = vmatmul.f32.gmra.mxu0 %v2477
  %v3251 = vpop.f32.mrf.mxu0
  %v3252 = vadd.f32 %v3187, %v3251
  %3253 = vmatmul.f32.gmra.mxu0 %v2483
  %v3254 = vpop.f32.mrf.mxu0
  %v3255 = vadd.f32 %v3190, %v3254
  %3256 = vmatmul.f32.gmra.mxu0 %v2489
  %v3257 = vpop.f32.mrf.mxu0
  %v3258 = vadd.f32 %v3193, %v3257
  %3259 = vdwg.mxu0
  %3260 = vmatpush.msra.mxu0 %v2589
  %3261 = vmatpush.msra.mxu0 %v2587
  %3262 = vmatpush.msra.mxu0 %v2585
  %3263 = vmatpush.msra.mxu0 %v2583
  %3264 = vmatpush.msra.mxu0 %v2581
  %3265 = vmatpush.msra.mxu0 %v2579
  %3266 = vmatpush.msra.mxu0 %v2577
  %3267 = vmatpush.msra.mxu0 %v2575
  %3268 = vmatpush.msra.mxu0 %v2573
  %3269 = vmatpush.msra.mxu0 %v2571
  %3270 = vmatpush.msra.mxu0 %v2569
  %3271 = vmatpush.msra.mxu0 %v2567
  %3272 = vmatpush.msra.mxu0 %v2565
  %3273 = vmatpush.msra.mxu0 %v2563
  %3274 = vmatpush.msra.mxu0 %v2561
  %3275 = vmatpush.msra.mxu0 %v2559
  %3276 = vmatmul.f32.gmra.mxu0 %v2400
  %v3277 = vpop.f32.mrf.mxu0
  %v3278 = vadd.f32 %v3213, %v3277
  %3279 = vmatmul.f32.gmra.mxu0 %v2406
  %v3280 = vpop.f32.mrf.mxu0
  %v3281 = vadd.f32 %v3216, %v3280
  %3282 = vmatmul.f32.gmra.mxu0 %v2412
  %v3283 = vpop.f32.mrf.mxu0
  %v3284 = vadd.f32 %v3219, %v3283
  %3285 = vmatmul.f32.gmra.mxu0 %v2418
  %v3286 = vpop.f32.mrf.mxu0
  %v3287 = vadd.f32 %v3222, %v3286
  %3288 = vmatmul.f32.gmra.mxu0 %v2424
  %v3289 = vpop.f32.mrf.mxu0
  %v3290 = vadd.f32 %v3225, %v3289
  %3291 = vmatmul.f32.gmra.mxu0 %v2430
  %v3292 = vpop.f32.mrf.mxu0
  %v3293 = vadd.f32 %v3228, %v3292
  %3294 = vmatmul.f32.gmra.mxu0 %v2436
  %v3295 = vpop.f32.mrf.mxu0
  %v3296 = vadd.f32 %v3231, %v3295
  %3297 = vmatmul.f32.gmra.mxu0 %v2442
  %v3298 = vpop.f32.mrf.mxu0
  %v3299 = vadd.f32 %v3234, %v3298
  %3300 = vmatmul.f32.gmra.mxu0 %v2448
  %v3301 = vpop.f32.mrf.mxu0
  %v3302 = vadd.f32 %v3237, %v3301
  %3303 = vmatmul.f32.gmra.mxu0 %v2454
  %v3304 = vpop.f32.mrf.mxu0
  %v3305 = vadd.f32 %v3240, %v3304
  %3306 = vmatmul.f32.gmra.mxu0 %v2460
  %v3307 = vpop.f32.mrf.mxu0
  %v3308 = vadd.f32 %v3243, %v3307
  %3309 = vmatmul.f32.gmra.mxu0 %v2466
  %v3310 = vpop.f32.mrf.mxu0
  %v3311 = vadd.f32 %v3246, %v3310
  %3312 = vmatmul.f32.gmra.mxu0 %v2472
  %v3313 = vpop.f32.mrf.mxu0
  %v3314 = vadd.f32 %v3249, %v3313
  %3315 = vmatmul.f32.gmra.mxu0 %v2478
  %v3316 = vpop.f32.mrf.mxu0
  %v3317 = vadd.f32 %v3252, %v3316
  %3318 = vmatmul.f32.gmra.mxu0 %v2484
  %v3319 = vpop.f32.mrf.mxu0
  %v3320 = vadd.f32 %v3255, %v3319
  %3321 = vmatmul.f32.gmra.mxu0 %v2490
  %v3322 = vpop.f32.mrf.mxu0
  %v3323 = vadd.f32 %v3258, %v3322
  %3324 = vdwg.mxu0
  %3325 = vmatpush.msra.mxu0 %v2621
  %3326 = vmatpush.msra.mxu0 %v2619
  %3327 = vmatpush.msra.mxu0 %v2617
  %3328 = vmatpush.msra.mxu0 %v2615
  %3329 = vmatpush.msra.mxu0 %v2613
  %3330 = vmatpush.msra.mxu0 %v2611
  %3331 = vmatpush.msra.mxu0 %v2609
  %3332 = vmatpush.msra.mxu0 %v2607
  %3333 = vmatpush.msra.mxu0 %v2605
  %3334 = vmatpush.msra.mxu0 %v2603
  %3335 = vmatpush.msra.mxu0 %v2601
  %3336 = vmatpush.msra.mxu0 %v2599
  %3337 = vmatpush.msra.mxu0 %v2597
  %3338 = vmatpush.msra.mxu0 %v2595
  %3339 = vmatpush.msra.mxu0 %v2593
  %3340 = vmatpush.msra.mxu0 %v2591
  %3341 = vmatmul.f32.gmra.mxu0 %v2401
  %v3342 = vpop.f32.mrf.mxu0
  %v3343 = vadd.f32 %v3278, %v3342
  %3344 = vmatmul.f32.gmra.mxu0 %v2407
  %v3345 = vpop.f32.mrf.mxu0
  %v3346 = vadd.f32 %v3281, %v3345
  %3347 = vmatmul.f32.gmra.mxu0 %v2413
  %v3348 = vpop.f32.mrf.mxu0
  %v3349 = vadd.f32 %v3284, %v3348
  %3350 = vmatmul.f32.gmra.mxu0 %v2419
  %v3351 = vpop.f32.mrf.mxu0
  %v3352 = vadd.f32 %v3287, %v3351
  %3353 = vmatmul.f32.gmra.mxu0 %v2425
  %v3354 = vpop.f32.mrf.mxu0
  %v3355 = vadd.f32 %v3290, %v3354
  %3356 = vmatmul.f32.gmra.mxu0 %v2431
  %v3357 = vpop.f32.mrf.mxu0
  %v3358 = vadd.f32 %v3293, %v3357
  %3359 = vmatmul.f32.gmra.mxu0 %v2437
  %v3360 = vpop.f32.mrf.mxu0
  %v3361 = vadd.f32 %v3296, %v3360
  %3362 = vmatmul.f32.gmra.mxu0 %v2443
  %v3363 = vpop.f32.mrf.mxu0
  %v3364 = vadd.f32 %v3299, %v3363
  %3365 = vmatmul.f32.gmra.mxu0 %v2449
  %v3366 = vpop.f32.mrf.mxu0
  %v3367 = vadd.f32 %v3302, %v3366
  %3368 = vmatmul.f32.gmra.mxu0 %v2455
  %v3369 = vpop.f32.mrf.mxu0
  %v3370 = vadd.f32 %v3305, %v3369
  %3371 = vmatmul.f32.gmra.mxu0 %v2461
  %v3372 = vpop.f32.mrf.mxu0
  %v3373 = vadd.f32 %v3308, %v3372
  %3374 = vmatmul.f32.gmra.mxu0 %v2467
  %v3375 = vpop.f32.mrf.mxu0
  %v3376 = vadd.f32 %v3311, %v3375
  %3377 = vmatmul.f32.gmra.mxu0 %v2473
  %v3378 = vpop.f32.mrf.mxu0
  %v3379 = vadd.f32 %v3314, %v3378
  %3380 = vmatmul.f32.gmra.mxu0 %v2479
  %v3381 = vpop.f32.mrf.mxu0
  %v3382 = vadd.f32 %v3317, %v3381
  %3383 = vmatmul.f32.gmra.mxu0 %v2485
  %v3384 = vpop.f32.mrf.mxu0
  %v3385 = vadd.f32 %v3320, %v3384
  %3386 = vmatmul.f32.gmra.mxu0 %v2491
  %v3387 = vpop.f32.mrf.mxu0
  %v3388 = vadd.f32 %v3323, %v3387
  %3389 = vdwg.mxu0
  %3390 = vmatpush.msra.mxu0 %v2653
  %3391 = vmatpush.msra.mxu0 %v2651
  %3392 = vmatpush.msra.mxu0 %v2649
  %3393 = vmatpush.msra.mxu0 %v2647
  %3394 = vmatpush.msra.mxu0 %v2645
  %3395 = vmatpush.msra.mxu0 %v2643
  %3396 = vmatpush.msra.mxu0 %v2641
  %3397 = vmatpush.msra.mxu0 %v2639
  %3398 = vmatpush.msra.mxu0 %v2637
  %3399 = vmatpush.msra.mxu0 %v2635
  %3400 = vmatpush.msra.mxu0 %v2633
  %3401 = vmatpush.msra.mxu0 %v2631
  %3402 = vmatpush.msra.mxu0 %v2629
  %3403 = vmatpush.msra.mxu0 %v2627
  %3404 = vmatpush.msra.mxu0 %v2625
  %3405 = vmatpush.msra.mxu0 %v2623
  %3406 = vmatmul.f32.gmra.mxu0 %v2402
  %v3407 = vpop.f32.mrf.mxu0
  %v3408 = vadd.f32 %v3343, %v3407
  %3409 = vmatmul.f32.gmra.mxu0 %v2408
  %v3410 = vpop.f32.mrf.mxu0
  %v3411 = vadd.f32 %v3346, %v3410
  %3412 = vmatmul.f32.gmra.mxu0 %v2414
  %v3413 = vpop.f32.mrf.mxu0
  %v3414 = vadd.f32 %v3349, %v3413
  %3415 = vmatmul.f32.gmra.mxu0 %v2420
  %v3416 = vpop.f32.mrf.mxu0
  %v3417 = vadd.f32 %v3352, %v3416
  %3418 = vmatmul.f32.gmra.mxu0 %v2426
  %v3419 = vpop.f32.mrf.mxu0
  %v3420 = vadd.f32 %v3355, %v3419
  %3421 = vmatmul.f32.gmra.mxu0 %v2432
  %v3422 = vpop.f32.mrf.mxu0
  %v3423 = vadd.f32 %v3358, %v3422
  %3424 = vmatmul.f32.gmra.mxu0 %v2438
  %v3425 = vpop.f32.mrf.mxu0
  %v3426 = vadd.f32 %v3361, %v3425
  %3427 = vmatmul.f32.gmra.mxu0 %v2444
  %v3428 = vpop.f32.mrf.mxu0
  %v3429 = vadd.f32 %v3364, %v3428
  %3430 = vmatmul.f32.gmra.mxu0 %v2450
  %v3431 = vpop.f32.mrf.mxu0
  %v3432 = vadd.f32 %v3367, %v3431
  %3433 = vmatmul.f32.gmra.mxu0 %v2456
  %v3434 = vpop.f32.mrf.mxu0
  %v3435 = vadd.f32 %v3370, %v3434
  %3436 = vmatmul.f32.gmra.mxu0 %v2462
  %v3437 = vpop.f32.mrf.mxu0
  %v3438 = vadd.f32 %v3373, %v3437
  %3439 = vmatmul.f32.gmra.mxu0 %v2468
  %v3440 = vpop.f32.mrf.mxu0
  %v3441 = vadd.f32 %v3376, %v3440
  %3442 = vmatmul.f32.gmra.mxu0 %v2474
  %v3443 = vpop.f32.mrf.mxu0
  %v3444 = vadd.f32 %v3379, %v3443
  %3445 = vmatmul.f32.gmra.mxu0 %v2480
  %v3446 = vpop.f32.mrf.mxu0
  %v3447 = vadd.f32 %v3382, %v3446
  %3448 = vmatmul.f32.gmra.mxu0 %v2486
  %v3449 = vpop.f32.mrf.mxu0
  %v3450 = vadd.f32 %v3385, %v3449
  %3451 = vmatmul.f32.gmra.mxu0 %v2492
  %v3452 = vpop.f32.mrf.mxu0
  %v3453 = vadd.f32 %v3388, %v3452
  %3454 = vdwg.mxu0
  %3455 = vmatpush.msra.mxu0 0.0
  %3456 = vmatpush.msra.mxu0 %v2738
  %3457 = vmatpush.msra.mxu0 %v2681
  %3458 = vmatpush.msra.mxu0 %v2679
  %3459 = vmatpush.msra.mxu0 %v2677
  %3460 = vmatpush.msra.mxu0 %v2675
  %3461 = vmatpush.msra.mxu0 %v2673
  %3462 = vmatpush.msra.mxu0 %v2671
  %3463 = vmatpush.msra.mxu0 %v2669
  %3464 = vmatpush.msra.mxu0 %v2667
  %3465 = vmatpush.msra.mxu0 %v2665
  %3466 = vmatpush.msra.mxu0 %v2663
  %3467 = vmatpush.msra.mxu0 %v2661
  %3468 = vmatpush.msra.mxu0 %v2659
  %3469 = vmatpush.msra.mxu0 %v2657
  %3470 = vmatpush.msra.mxu0 %v2655
  %3471 = vmatmul.f32.gmra.mxu0 %v2686
  %v3472 = vpop.f32.mrf.mxu0
  %v3473 = vadd.f32 %v3408, %v3472
  %3474 = vmatmul.f32.gmra.mxu0 %v2689
  %v3475 = vpop.f32.mrf.mxu0
  %v3476 = vadd.f32 %v3411, %v3475
  %3477 = vmatmul.f32.gmra.mxu0 %v2692
  %v3478 = vpop.f32.mrf.mxu0
  %v3479 = vadd.f32 %v3414, %v3478
  %3480 = vmatmul.f32.gmra.mxu0 %v2695
  %v3481 = vpop.f32.mrf.mxu0
  %v3482 = vadd.f32 %v3417, %v3481
  %3483 = vmatmul.f32.gmra.mxu0 %v2698
  %v3484 = vpop.f32.mrf.mxu0
  %v3485 = vadd.f32 %v3420, %v3484
  %3486 = vmatmul.f32.gmra.mxu0 %v2701
  %v3487 = vpop.f32.mrf.mxu0
  %v3488 = vadd.f32 %v3423, %v3487
  %3489 = vmatmul.f32.gmra.mxu0 %v2704
  %v3490 = vpop.f32.mrf.mxu0
  %v3491 = vadd.f32 %v3426, %v3490
  %3492 = vmatmul.f32.gmra.mxu0 %v2707
  %v3493 = vpop.f32.mrf.mxu0
  %v3494 = vadd.f32 %v3429, %v3493
  %3495 = vmatmul.f32.gmra.mxu0 %v2710
  %v3496 = vpop.f32.mrf.mxu0
  %v3497 = vadd.f32 %v3432, %v3496
  %3498 = vmatmul.f32.gmra.mxu0 %v2713
  %v3499 = vpop.f32.mrf.mxu0
  %v3500 = vadd.f32 %v3435, %v3499
  %3501 = vmatmul.f32.gmra.mxu0 %v2716
  %v3502 = vpop.f32.mrf.mxu0
  %v3503 = vadd.f32 %v3438, %v3502
  %3504 = vmatmul.f32.gmra.mxu0 %v2719
  %v3505 = vpop.f32.mrf.mxu0
  %v3506 = vadd.f32 %v3441, %v3505
  %3507 = vmatmul.f32.gmra.mxu0 %v2722
  %v3508 = vpop.f32.mrf.mxu0
  %v3509 = vadd.f32 %v3444, %v3508
  %3510 = vmatmul.f32.gmra.mxu0 %v2725
  %v3511 = vpop.f32.mrf.mxu0
  %v3512 = vadd.f32 %v3447, %v3511
  %3513 = vmatmul.f32.gmra.mxu0 %v2728
  %v3514 = vpop.f32.mrf.mxu0
  %v3515 = vadd.f32 %v3450, %v3514
  %3516 = vmatmul.f32.gmra.mxu0 %v2731
  %v3517 = vpop.f32.mrf.mxu0
  %v3518 = vadd.f32 %v3453, %v3517
  %3519 = vdwg.mxu0
  %3552 = vrot.lane.b32.xlu0 %v3083, 15
  %v3553 = vpop.permute.xlu0 %3552
  %3554 = vrot.lane.b32.xlu0 %v3473, 15
  %v3555 = vpop.permute.xlu0 %3554
  %3556 = vrot.lane.b32.xlu0 %v3086, 15
  %v3557 = vpop.permute.xlu0 %3556
  %3558 = vrot.lane.b32.xlu0 %v3476, 15
  %v3559 = vpop.permute.xlu0 %3558
  %3560 = vrot.lane.b32.xlu0 %v3089, 15
  %v3561 = vpop.permute.xlu0 %3560
  %3562 = vrot.lane.b32.xlu0 %v3479, 15
  %v3563 = vpop.permute.xlu0 %3562
  %3564 = vrot.lane.b32.xlu0 %v3092, 15
  %v3565 = vpop.permute.xlu0 %3564
  %3566 = vrot.lane.b32.xlu0 %v3482, 15
  %v3567 = vpop.permute.xlu0 %3566
  %3568 = vrot.lane.b32.xlu0 %v3095, 15
  %v3569 = vpop.permute.xlu0 %3568
  %3570 = vrot.lane.b32.xlu0 %v3485, 15
  %v3571 = vpop.permute.xlu0 %3570
  %3572 = vrot.lane.b32.xlu0 %v3098, 15
  %v3573 = vpop.permute.xlu0 %3572
  %3574 = vrot.lane.b32.xlu0 %v3488, 15
  %v3575 = vpop.permute.xlu0 %3574
  %3576 = vrot.lane.b32.xlu0 %v3101, 15
  %v3577 = vpop.permute.xlu0 %3576
  %3578 = vrot.lane.b32.xlu0 %v3491, 15
  %v3579 = vpop.permute.xlu0 %3578
  %3580 = vrot.lane.b32.xlu0 %v3104, 15
  %v3581 = vpop.permute.xlu0 %3580
  %3582 = vrot.lane.b32.xlu0 %v3494, 15
  %v3583 = vpop.permute.xlu0 %3582
  %3584 = vrot.lane.b32.xlu0 %v3107, 15
  %v3585 = vpop.permute.xlu0 %3584
  %3586 = vrot.lane.b32.xlu0 %v3497, 15
  %v3587 = vpop.permute.xlu0 %3586
  %3588 = vrot.lane.b32.xlu0 %v3110, 15
  %v3589 = vpop.permute.xlu0 %3588
  %3590 = vrot.lane.b32.xlu0 %v3500, 15
  %v3591 = vpop.permute.xlu0 %3590
  %3592 = vrot.lane.b32.xlu0 %v3113, 15
  %v3593 = vpop.permute.xlu0 %3592
  %3594 = vrot.lane.b32.xlu0 %v3503, 15
  %v3595 = vpop.permute.xlu0 %3594
  %3596 = vrot.lane.b32.xlu0 %v3116, 15
  %v3597 = vpop.permute.xlu0 %3596
  %3598 = vrot.lane.b32.xlu0 %v3506, 15
  %v3599 = vpop.permute.xlu0 %3598
  %3600 = vrot.lane.b32.xlu0 %v3119, 15
  %v3601 = vpop.permute.xlu0 %3600
  %3602 = vrot.lane.b32.xlu0 %v3509, 15
  %v3603 = vpop.permute.xlu0 %3602
  %3604 = vrot.lane.b32.xlu0 %v3122, 15
  %v3605 = vpop.permute.xlu0 %3604
  %3606 = vrot.lane.b32.xlu0 %v3512, 15
  %v3607 = vpop.permute.xlu0 %3606
  %3608 = vrot.lane.b32.xlu0 %v3125, 15
  %v3609 = vpop.permute.xlu0 %3608
  %3610 = vrot.lane.b32.xlu0 %v3515, 15
  %v3611 = vpop.permute.xlu0 %3610
  %3612 = vrot.lane.b32.xlu0 %v3128, 15
  %v3613 = vpop.permute.xlu0 %3612
  %3614 = vrot.lane.b32.xlu0 %v3518, 15
  %v3615 = vpop.permute.xlu0 %3614
  %vm3616 = vcmask 121856
  %v3617 = vsel %vm3616, %v3553, %v3555
  %v3618 = vsel %vm3616, %v3557, %v3559
  %v3619 = vsel %vm3616, %v3561, %v3563
  %v3620 = vsel %vm3616, %v3565, %v3567
  %v3621 = vsel %vm3616, %v3569, %v3571
  %v3622 = vsel %vm3616, %v3573, %v3575
  %v3623 = vsel %vm3616, %v3577, %v3579
  %v3624 = vsel %vm3616, %v3581, %v3583
  %v3625 = vsel %vm3616, %v3585, %v3587
  %v3626 = vsel %vm3616, %v3589, %v3591
  %v3627 = vsel %vm3616, %v3593, %v3595
  %v3628 = vsel %vm3616, %v3597, %v3599
  %v3629 = vsel %vm3616, %v3601, %v3603
  %v3630 = vsel %vm3616, %v3605, %v3607
  %v3631 = vsel %vm3616, %v3609, %v3611
  %v3632 = vsel %vm3616, %v3613, %v3615
  %v3665 = vsel %vm3616, 0.0, %v3553
  %v3666 = vsel %vm3616, 0.0, %v3557
  %v3667 = vsel %vm3616, 0.0, %v3561
  %v3668 = vsel %vm3616, 0.0, %v3565
  %v3669 = vsel %vm3616, 0.0, %v3569
  %v3670 = vsel %vm3616, 0.0, %v3573
  %v3671 = vsel %vm3616, 0.0, %v3577
  %v3672 = vsel %vm3616, 0.0, %v3581
  %v3673 = vsel %vm3616, 0.0, %v3585
  %v3674 = vsel %vm3616, 0.0, %v3589
  %v3675 = vsel %vm3616, 0.0, %v3593
  %v3676 = vsel %vm3616, 0.0, %v3597
  %v3677 = vsel %vm3616, 0.0, %v3601
  %v3678 = vsel %vm3616, 0.0, %v3605
  %v3679 = vsel %vm3616, 0.0, %v3609
  %v3680 = vsel %vm3616, 0.0, %v3613
  %vm3681 = vcmask 678912
  %v3682 = vsel %vm3681, %v3617, 0.0
  %v3683 = vsel %vm3681, %v3618, 0.0
  %v3684 = vsel %vm3681, %v3619, 0.0
  %v3685 = vsel %vm3681, %v3620, 0.0
  %v3686 = vsel %vm3681, %v3621, 0.0
  %v3687 = vsel %vm3681, %v3622, 0.0
  %v3688 = vsel %vm3681, %v3623, 0.0
  %v3689 = vsel %vm3681, %v3624, 0.0
  %v3690 = vsel %vm3681, %v3625, 0.0
  %v3691 = vsel %vm3681, %v3626, 0.0
  %v3692 = vsel %vm3681, %v3627, 0.0
  %v3693 = vsel %vm3681, %v3628, 0.0
  %v3694 = vsel %vm3681, %v3629, 0.0
  %v3695 = vsel %vm3681, %v3630, 0.0
  %v3696 = vsel %vm3681, %v3631, 0.0
  %v3697 = vsel %vm3681, %v3632, 0.0
  %v3698 = vld [vmem:[%s7] sm:$0xf]
  %v3700 = vperm.slane %v3698, 0
  %v3701 = vperm.slane %v3698, 2
  %v3704 = vperm.slane %v3700, 0
  %v3705 = vperm.slane %v3701, 0
  %v3706 = vmul.f32 %v3665, %v3704
  %v3707 = vmul.f32 %v3682, %v3705
  %v3708 = vmul.f32 %v3666, %v3704
  %v3709 = vmul.f32 %v3683, %v3705
  %v3710 = vmul.f32 %v3667, %v3704
  %v3711 = vmul.f32 %v3684, %v3705
  %v3712 = vmul.f32 %v3668, %v3704
  %v3713 = vmul.f32 %v3685, %v3705
  %v3714 = vmul.f32 %v3669, %v3704
  %v3715 = vmul.f32 %v3686, %v3705
  %v3716 = vmul.f32 %v3670, %v3704
  %v3717 = vmul.f32 %v3687, %v3705
  %v3718 = vmul.f32 %v3671, %v3704
  %v3719 = vmul.f32 %v3688, %v3705
  %v3720 = vmul.f32 %v3672, %v3704
  %v3721 = vmul.f32 %v3689, %v3705
  %v3722 = vmul.f32 %v3673, %v3704
  %v3723 = vmul.f32 %v3690, %v3705
  %v3724 = vmul.f32 %v3674, %v3704
  %v3725 = vmul.f32 %v3691, %v3705
  %v3726 = vmul.f32 %v3675, %v3704
  %v3727 = vmul.f32 %v3692, %v3705
  %v3728 = vmul.f32 %v3676, %v3704
  %v3729 = vmul.f32 %v3693, %v3705
  %v3730 = vmul.f32 %v3677, %v3704
  %v3731 = vmul.f32 %v3694, %v3705
  %v3732 = vmul.f32 %v3678, %v3704
  %v3733 = vmul.f32 %v3695, %v3705
  %v3734 = vmul.f32 %v3679, %v3704
  %v3735 = vmul.f32 %v3696, %v3705
  %v3736 = vmul.f32 %v3680, %v3704
  %v3737 = vmul.f32 %v3697, %v3705
  %v3738 = vpack.c.bf16 %v3707, %v3706
  %v3739 = vpack.c.bf16 %v3709, %v3708
  %v3740 = vpack.c.bf16 %v3711, %v3710
  %v3741 = vpack.c.bf16 %v3713, %v3712
  %v3742 = vpack.c.bf16 %v3715, %v3714
  %v3743 = vpack.c.bf16 %v3717, %v3716
  %v3744 = vpack.c.bf16 %v3719, %v3718
  %v3745 = vpack.c.bf16 %v3721, %v3720
  %v3746 = vpack.c.bf16 %v3723, %v3722
  %v3747 = vpack.c.bf16 %v3725, %v3724
  %v3748 = vpack.c.bf16 %v3727, %v3726
  %v3749 = vpack.c.bf16 %v3729, %v3728
  %v3750 = vpack.c.bf16 %v3731, %v3730
  %v3751 = vpack.c.bf16 %v3733, %v3732
  %v3752 = vpack.c.bf16 %v3735, %v3734
  %v3753 = vpack.c.bf16 %v3737, %v3736
  %v3754 = vpack.c.bf16 %v3682, %v3665
  %v3755 = vpack.c.bf16 %v3683, %v3666
  %v3756 = vpack.c.bf16 %v3684, %v3667
  %v3757 = vpack.c.bf16 %v3685, %v3668
  %v3758 = vpack.c.bf16 %v3686, %v3669
  %v3759 = vpack.c.bf16 %v3687, %v3670
  %v3760 = vpack.c.bf16 %v3688, %v3671
  %v3761 = vpack.c.bf16 %v3689, %v3672
  %v3762 = vpack.c.bf16 %v3690, %v3673
  %v3763 = vpack.c.bf16 %v3691, %v3674
  %v3764 = vpack.c.bf16 %v3692, %v3675
  %v3765 = vpack.c.bf16 %v3693, %v3676
  %v3766 = vpack.c.bf16 %v3694, %v3677
  %v3767 = vpack.c.bf16 %v3695, %v3678
  %v3768 = vpack.c.bf16 %v3696, %v3679
  %v3769 = vpack.c.bf16 %v3697, %v3680
  %v3770 = vperm.slane %v3698, 1
  %v3771 = vperm.slane %v3698, 3
  %v3774 = vperm.slane %v3770, 1
  %v3775 = vperm.slane %v3771, 1
  %3778 = vrot.lane.b32.xlu0 %v3774, 2
  %v3779 = vpop.permute.xlu0 %3778
  %3780 = vrot.lane.b32.xlu0 %v3775, 2
  %v3781 = vpop.permute.xlu0 %3780
  %v3782 = vsel %vm154, %v3779, %v3781
  %v3785 = vmul.f32 %v3665, %v3779
  %v3786 = vmul.f32 %v3682, %v3782
  %v3787 = vmul.f32 %v3666, %v3779
  %v3788 = vmul.f32 %v3683, %v3782
  %v3789 = vmul.f32 %v3667, %v3779
  %v3790 = vmul.f32 %v3684, %v3782
  %v3791 = vmul.f32 %v3668, %v3779
  %v3792 = vmul.f32 %v3685, %v3782
  %v3793 = vmul.f32 %v3669, %v3779
  %v3794 = vmul.f32 %v3686, %v3782
  %v3795 = vmul.f32 %v3670, %v3779
  %v3796 = vmul.f32 %v3687, %v3782
  %v3797 = vmul.f32 %v3671, %v3779
  %v3798 = vmul.f32 %v3688, %v3782
  %v3799 = vmul.f32 %v3672, %v3779
  %v3800 = vmul.f32 %v3689, %v3782
  %v3801 = vmul.f32 %v3673, %v3779
  %v3802 = vmul.f32 %v3690, %v3782
  %v3803 = vmul.f32 %v3674, %v3779
  %v3804 = vmul.f32 %v3691, %v3782
  %v3805 = vmul.f32 %v3675, %v3779
  %v3806 = vmul.f32 %v3692, %v3782
  %v3807 = vmul.f32 %v3676, %v3779
  %v3808 = vmul.f32 %v3693, %v3782
  %v3809 = vmul.f32 %v3677, %v3779
  %v3810 = vmul.f32 %v3694, %v3782
  %v3811 = vmul.f32 %v3678, %v3779
  %v3812 = vmul.f32 %v3695, %v3782
  %v3813 = vmul.f32 %v3679, %v3779
  %v3814 = vmul.f32 %v3696, %v3782
  %v3815 = vmul.f32 %v3680, %v3779
  %v3816 = vmul.f32 %v3697, %v3782
  %v3817 = vpack.c.bf16 %v3786, %v3785
  %v3818 = vpack.c.bf16 %v3788, %v3787
  %v3819 = vpack.c.bf16 %v3790, %v3789
  %v3820 = vpack.c.bf16 %v3792, %v3791
  %v3821 = vpack.c.bf16 %v3794, %v3793
  %v3822 = vpack.c.bf16 %v3796, %v3795
  %v3823 = vpack.c.bf16 %v3798, %v3797
  %v3824 = vpack.c.bf16 %v3800, %v3799
  %v3825 = vpack.c.bf16 %v3802, %v3801
  %v3826 = vpack.c.bf16 %v3804, %v3803
  %v3827 = vpack.c.bf16 %v3806, %v3805
  %v3828 = vpack.c.bf16 %v3808, %v3807
  %v3829 = vpack.c.bf16 %v3810, %v3809
  %v3830 = vpack.c.bf16 %v3812, %v3811
  %v3831 = vpack.c.bf16 %v3814, %v3813
  %v3832 = vpack.c.bf16 %v3816, %v3815
  %3835 = vrot.lane.b32.xlu0 %v3704, 14
  %v3836 = vpop.permute.xlu0 %3835
  %3837 = vrot.lane.b32.xlu0 %v3705, 14
  %v3838 = vpop.permute.xlu0 %3837
  %vm3839 = vcmask 113664
  %v3840 = vsel %vm3839, %v3836, %v3838
  %v3843 = vmul.f32 %v3665, %v3836
  %v3844 = vmul.f32 %v3682, %v3840
  %v3845 = vmul.f32 %v3666, %v3836
  %v3846 = vmul.f32 %v3683, %v3840
  %v3847 = vmul.f32 %v3667, %v3836
  %v3848 = vmul.f32 %v3684, %v3840
  %v3849 = vmul.f32 %v3668, %v3836
  %v3850 = vmul.f32 %v3685, %v3840
  %v3851 = vmul.f32 %v3669, %v3836
  %v3852 = vmul.f32 %v3686, %v3840
  %v3853 = vmul.f32 %v3670, %v3836
  %v3854 = vmul.f32 %v3687, %v3840
  %v3855 = vmul.f32 %v3671, %v3836
  %v3856 = vmul.f32 %v3688, %v3840
  %v3857 = vmul.f32 %v3672, %v3836
  %v3858 = vmul.f32 %v3689, %v3840
  %v3859 = vmul.f32 %v3673, %v3836
  %v3860 = vmul.f32 %v3690, %v3840
  %v3861 = vmul.f32 %v3674, %v3836
  %v3862 = vmul.f32 %v3691, %v3840
  %v3863 = vmul.f32 %v3675, %v3836
  %v3864 = vmul.f32 %v3692, %v3840
  %v3865 = vmul.f32 %v3676, %v3836
  %v3866 = vmul.f32 %v3693, %v3840
  %v3867 = vmul.f32 %v3677, %v3836
  %v3868 = vmul.f32 %v3694, %v3840
  %v3869 = vmul.f32 %v3678, %v3836
  %v3870 = vmul.f32 %v3695, %v3840
  %v3871 = vmul.f32 %v3679, %v3836
  %v3872 = vmul.f32 %v3696, %v3840
  %v3873 = vmul.f32 %v3680, %v3836
  %v3874 = vmul.f32 %v3697, %v3840
  %v3875 = vpack.c.bf16 %v3844, %v3843
  %v3876 = vpack.c.bf16 %v3846, %v3845
  %v3877 = vpack.c.bf16 %v3848, %v3847
  %v3878 = vpack.c.bf16 %v3850, %v3849
  %v3879 = vpack.c.bf16 %v3852, %v3851
  %v3880 = vpack.c.bf16 %v3854, %v3853
  %v3881 = vpack.c.bf16 %v3856, %v3855
  %v3882 = vpack.c.bf16 %v3858, %v3857
  %v3883 = vpack.c.bf16 %v3860, %v3859
  %v3884 = vpack.c.bf16 %v3862, %v3861
  %v3885 = vpack.c.bf16 %v3864, %v3863
  %v3886 = vpack.c.bf16 %v3866, %v3865
  %v3887 = vpack.c.bf16 %v3868, %v3867
  %v3888 = vpack.c.bf16 %v3870, %v3869
  %v3889 = vpack.c.bf16 %v3872, %v3871
  %v3890 = vpack.c.bf16 %v3874, %v3873
  %3891 = vrot.lane.b32.xlu0 %v3774, 16
  %v3892 = vpop.permute.xlu0 %3891
  %3893 = vrot.lane.b32.xlu0 %v3775, 16
  %v3894 = vpop.permute.xlu0 %3893
  %vm3895 = vcmask 130048
  %v3896 = vsel %vm3895, %v3892, %v3894
  %v3899 = vmul.f32 %v3665, %v3892
  %v3900 = vmul.f32 %v3682, %v3896
  %v3901 = vmul.f32 %v3666, %v3892
  %v3902 = vmul.f32 %v3683, %v3896
  %v3903 = vmul.f32 %v3667, %v3892
  %v3904 = vmul.f32 %v3684, %v3896
  %v3905 = vmul.f32 %v3668, %v3892
  %v3906 = vmul.f32 %v3685, %v3896
  %v3907 = vmul.f32 %v3669, %v3892
  %v3908 = vmul.f32 %v3686, %v3896
  %v3909 = vmul.f32 %v3670, %v3892
  %v3910 = vmul.f32 %v3687, %v3896
  %v3911 = vmul.f32 %v3671, %v3892
  %v3912 = vmul.f32 %v3688, %v3896
  %v3913 = vmul.f32 %v3672, %v3892
  %v3914 = vmul.f32 %v3689, %v3896
  %v3915 = vmul.f32 %v3673, %v3892
  %v3916 = vmul.f32 %v3690, %v3896
  %v3917 = vmul.f32 %v3674, %v3892
  %v3918 = vmul.f32 %v3691, %v3896
  %v3919 = vmul.f32 %v3675, %v3892
  %v3920 = vmul.f32 %v3692, %v3896
  %v3921 = vmul.f32 %v3676, %v3892
  %v3922 = vmul.f32 %v3693, %v3896
  %v3923 = vmul.f32 %v3677, %v3892
  %v3924 = vmul.f32 %v3694, %v3896
  %v3925 = vmul.f32 %v3678, %v3892
  %v3926 = vmul.f32 %v3695, %v3896
  %v3927 = vmul.f32 %v3679, %v3892
  %v3928 = vmul.f32 %v3696, %v3896
  %v3929 = vmul.f32 %v3680, %v3892
  %v3930 = vmul.f32 %v3697, %v3896
  %v3931 = vpack.c.bf16 %v3900, %v3899
  %v3932 = vpack.c.bf16 %v3902, %v3901
  %v3933 = vpack.c.bf16 %v3904, %v3903
  %v3934 = vpack.c.bf16 %v3906, %v3905
  %v3935 = vpack.c.bf16 %v3908, %v3907
  %v3936 = vpack.c.bf16 %v3910, %v3909
  %v3937 = vpack.c.bf16 %v3912, %v3911
  %v3938 = vpack.c.bf16 %v3914, %v3913
  %v3939 = vpack.c.bf16 %v3916, %v3915
  %v3940 = vpack.c.bf16 %v3918, %v3917
  %v3941 = vpack.c.bf16 %v3920, %v3919
  %v3942 = vpack.c.bf16 %v3922, %v3921
  %v3943 = vpack.c.bf16 %v3924, %v3923
  %v3944 = vpack.c.bf16 %v3926, %v3925
  %v3945 = vpack.c.bf16 %v3928, %v3927
  %v3946 = vpack.c.bf16 %v3930, %v3929
  %3947 = vrot.lane.b32.xlu0 %v3704, 28
  %v3948 = vpop.permute.xlu0 %3947
  %3949 = vrot.lane.b32.xlu0 %v3705, 28
  %v3950 = vpop.permute.xlu0 %3949
  %v3951 = vsel %vm196, %v3948, %v3950
  %v3954 = vmul.f32 %v3665, %v3948
  %v3955 = vmul.f32 %v3682, %v3951
  %v3956 = vmul.f32 %v3666, %v3948
  %v3957 = vmul.f32 %v3683, %v3951
  %v3958 = vmul.f32 %v3667, %v3948
  %v3959 = vmul.f32 %v3684, %v3951
  %v3960 = vmul.f32 %v3668, %v3948
  %v3961 = vmul.f32 %v3685, %v3951
  %v3962 = vmul.f32 %v3669, %v3948
  %v3963 = vmul.f32 %v3686, %v3951
  %v3964 = vmul.f32 %v3670, %v3948
  %v3965 = vmul.f32 %v3687, %v3951
  %v3966 = vmul.f32 %v3671, %v3948
  %v3967 = vmul.f32 %v3688, %v3951
  %v3968 = vmul.f32 %v3672, %v3948
  %v3969 = vmul.f32 %v3689, %v3951
  %v3970 = vmul.f32 %v3673, %v3948
  %v3971 = vmul.f32 %v3690, %v3951
  %v3972 = vmul.f32 %v3674, %v3948
  %v3973 = vmul.f32 %v3691, %v3951
  %v3974 = vmul.f32 %v3675, %v3948
  %v3975 = vmul.f32 %v3692, %v3951
  %v3976 = vmul.f32 %v3676, %v3948
  %v3977 = vmul.f32 %v3693, %v3951
  %v3978 = vmul.f32 %v3677, %v3948
  %v3979 = vmul.f32 %v3694, %v3951
  %v3980 = vmul.f32 %v3678, %v3948
  %v3981 = vmul.f32 %v3695, %v3951
  %v3982 = vmul.f32 %v3679, %v3948
  %v3983 = vmul.f32 %v3696, %v3951
  %v3984 = vmul.f32 %v3680, %v3948
  %v3985 = vmul.f32 %v3697, %v3951
  %v3986 = vpack.c.bf16 %v3955, %v3954
  %v3987 = vpack.c.bf16 %v3957, %v3956
  %v3988 = vpack.c.bf16 %v3959, %v3958
  %v3989 = vpack.c.bf16 %v3961, %v3960
  %v3990 = vpack.c.bf16 %v3963, %v3962
  %v3991 = vpack.c.bf16 %v3965, %v3964
  %v3992 = vpack.c.bf16 %v3967, %v3966
  %v3993 = vpack.c.bf16 %v3969, %v3968
  %v3994 = vpack.c.bf16 %v3971, %v3970
  %v3995 = vpack.c.bf16 %v3973, %v3972
  %v3996 = vpack.c.bf16 %v3975, %v3974
  %v3997 = vpack.c.bf16 %v3977, %v3976
  %v3998 = vpack.c.bf16 %v3979, %v3978
  %v3999 = vpack.c.bf16 %v3981, %v3980
  %v4000 = vpack.c.bf16 %v3983, %v3982
  %v4001 = vpack.c.bf16 %v3985, %v3984
  %4002 = vrot.lane.b32.xlu0 %v3774, 30
  %v4003 = vpop.permute.xlu0 %4002
  %4004 = vrot.lane.b32.xlu0 %v3775, 30
  %v4005 = vpop.permute.xlu0 %4004
  %v4006 = vsel %vm231, %v4003, %v4005
  %v4009 = vmul.f32 %v3665, %v4003
  %v4010 = vmul.f32 %v3682, %v4006
  %v4011 = vmul.f32 %v3666, %v4003
  %v4012 = vmul.f32 %v3683, %v4006
  %v4013 = vmul.f32 %v3667, %v4003
  %v4014 = vmul.f32 %v3684, %v4006
  %v4015 = vmul.f32 %v3668, %v4003
  %v4016 = vmul.f32 %v3685, %v4006
  %v4017 = vmul.f32 %v3669, %v4003
  %v4018 = vmul.f32 %v3686, %v4006
  %v4019 = vmul.f32 %v3670, %v4003
  %v4020 = vmul.f32 %v3687, %v4006
  %v4021 = vmul.f32 %v3671, %v4003
  %v4022 = vmul.f32 %v3688, %v4006
  %v4023 = vmul.f32 %v3672, %v4003
  %v4024 = vmul.f32 %v3689, %v4006
  %v4025 = vmul.f32 %v3673, %v4003
  %v4026 = vmul.f32 %v3690, %v4006
  %v4027 = vmul.f32 %v3674, %v4003
  %v4028 = vmul.f32 %v3691, %v4006
  %v4029 = vmul.f32 %v3675, %v4003
  %v4030 = vmul.f32 %v3692, %v4006
  %v4031 = vmul.f32 %v3676, %v4003
  %v4032 = vmul.f32 %v3693, %v4006
  %v4033 = vmul.f32 %v3677, %v4003
  %v4034 = vmul.f32 %v3694, %v4006
  %v4035 = vmul.f32 %v3678, %v4003
  %v4036 = vmul.f32 %v3695, %v4006
  %v4037 = vmul.f32 %v3679, %v4003
  %v4038 = vmul.f32 %v3696, %v4006
  %v4039 = vmul.f32 %v3680, %v4003
  %v4040 = vmul.f32 %v3697, %v4006
  %v4041 = vpack.c.bf16 %v4010, %v4009
  %v4042 = vpack.c.bf16 %v4012, %v4011
  %v4043 = vpack.c.bf16 %v4014, %v4013
  %v4044 = vpack.c.bf16 %v4016, %v4015
  %v4045 = vpack.c.bf16 %v4018, %v4017
  %v4046 = vpack.c.bf16 %v4020, %v4019
  %v4047 = vpack.c.bf16 %v4022, %v4021
  %v4048 = vpack.c.bf16 %v4024, %v4023
  %v4049 = vpack.c.bf16 %v4026, %v4025
  %v4050 = vpack.c.bf16 %v4028, %v4027
  %v4051 = vpack.c.bf16 %v4030, %v4029
  %v4052 = vpack.c.bf16 %v4032, %v4031
  %v4053 = vpack.c.bf16 %v4034, %v4033
  %v4054 = vpack.c.bf16 %v4036, %v4035
  %v4055 = vpack.c.bf16 %v4038, %v4037
  %v4056 = vpack.c.bf16 %v4040, %v4039
  %v4073 = vunpack.c.l.b16 %v3738
  %v4074 = vunpack.c.h.b16 %v3738
  %v4075 = vunpack.c.l.b16 %v3739
  %v4076 = vunpack.c.h.b16 %v3739
  %v4077 = vunpack.c.l.b16 %v3740
  %v4078 = vunpack.c.h.b16 %v3740
  %v4079 = vunpack.c.l.b16 %v3741
  %v4080 = vunpack.c.h.b16 %v3741
  %v4081 = vunpack.c.l.b16 %v3742
  %v4082 = vunpack.c.h.b16 %v3742
  %v4083 = vunpack.c.l.b16 %v3743
  %v4084 = vunpack.c.h.b16 %v3743
  %v4085 = vunpack.c.l.b16 %v3744
  %v4086 = vunpack.c.h.b16 %v3744
  %v4087 = vunpack.c.l.b16 %v3745
  %v4088 = vunpack.c.h.b16 %v3745
  %v4089 = vunpack.c.l.b16 %v3746
  %v4090 = vunpack.c.h.b16 %v3746
  %v4091 = vunpack.c.l.b16 %v3747
  %v4092 = vunpack.c.h.b16 %v3747
  %v4093 = vunpack.c.l.b16 %v3748
  %v4094 = vunpack.c.h.b16 %v3748
  %v4095 = vunpack.c.l.b16 %v3749
  %v4096 = vunpack.c.h.b16 %v3749
  %v4097 = vunpack.c.l.b16 %v3750
  %v4098 = vunpack.c.h.b16 %v3750
  %v4099 = vunpack.c.l.b16 %v3751
  %v4100 = vunpack.c.h.b16 %v3751
  %v4101 = vunpack.c.l.b16 %v3752
  %v4102 = vunpack.c.h.b16 %v3752
  %v4103 = vunpack.c.l.b16 %v3753
  %v4104 = vunpack.c.h.b16 %v3753
  %v4105 = vpack.c.b16 %v4075, %v4073
  %v4106 = vpack.c.b16 %v4076, %v4074
  %v4107 = vpack.c.b16 %v4079, %v4077
  %v4108 = vpack.c.b16 %v4080, %v4078
  %v4109 = vpack.c.b16 %v4083, %v4081
  %v4110 = vpack.c.b16 %v4084, %v4082
  %v4111 = vpack.c.b16 %v4087, %v4085
  %v4112 = vpack.c.b16 %v4088, %v4086
  %v4113 = vpack.c.b16 %v4091, %v4089
  %v4114 = vpack.c.b16 %v4092, %v4090
  %v4115 = vpack.c.b16 %v4095, %v4093
  %v4116 = vpack.c.b16 %v4096, %v4094
  %v4117 = vpack.c.b16 %v4099, %v4097
  %v4118 = vpack.c.b16 %v4100, %v4098
  %v4119 = vpack.c.b16 %v4103, %v4101
  %v4120 = vpack.c.b16 %v4104, %v4102
  %v4153 = vunpack.c.l.b16 %v3754
  %v4154 = vunpack.c.h.b16 %v3754
  %v4155 = vunpack.c.l.b16 %v3755
  %v4156 = vunpack.c.h.b16 %v3755
  %v4157 = vunpack.c.l.b16 %v3756
  %v4158 = vunpack.c.h.b16 %v3756
  %v4159 = vunpack.c.l.b16 %v3757
  %v4160 = vunpack.c.h.b16 %v3757
  %v4161 = vunpack.c.l.b16 %v3758
  %v4162 = vunpack.c.h.b16 %v3758
  %v4163 = vunpack.c.l.b16 %v3759
  %v4164 = vunpack.c.h.b16 %v3759
  %v4165 = vunpack.c.l.b16 %v3760
  %v4166 = vunpack.c.h.b16 %v3760
  %v4167 = vunpack.c.l.b16 %v3761
  %v4168 = vunpack.c.h.b16 %v3761
  %v4169 = vunpack.c.l.b16 %v3762
  %v4170 = vunpack.c.h.b16 %v3762
  %v4171 = vunpack.c.l.b16 %v3763
  %v4172 = vunpack.c.h.b16 %v3763
  %v4173 = vunpack.c.l.b16 %v3764
  %v4174 = vunpack.c.h.b16 %v3764
  %v4175 = vunpack.c.l.b16 %v3765
  %v4176 = vunpack.c.h.b16 %v3765
  %v4177 = vunpack.c.l.b16 %v3766
  %v4178 = vunpack.c.h.b16 %v3766
  %v4179 = vunpack.c.l.b16 %v3767
  %v4180 = vunpack.c.h.b16 %v3767
  %v4181 = vunpack.c.l.b16 %v3768
  %v4182 = vunpack.c.h.b16 %v3768
  %v4183 = vunpack.c.l.b16 %v3769
  %v4184 = vunpack.c.h.b16 %v3769
  %v4185 = vpack.c.b16 %v4155, %v4153
  %v4186 = vpack.c.b16 %v4156, %v4154
  %v4187 = vpack.c.b16 %v4159, %v4157
  %v4188 = vpack.c.b16 %v4160, %v4158
  %v4189 = vpack.c.b16 %v4163, %v4161
  %v4190 = vpack.c.b16 %v4164, %v4162
  %v4191 = vpack.c.b16 %v4167, %v4165
  %v4192 = vpack.c.b16 %v4168, %v4166
  %v4193 = vpack.c.b16 %v4171, %v4169
  %v4194 = vpack.c.b16 %v4172, %v4170
  %v4195 = vpack.c.b16 %v4175, %v4173
  %v4196 = vpack.c.b16 %v4176, %v4174
  %v4197 = vpack.c.b16 %v4179, %v4177
  %v4198 = vpack.c.b16 %v4180, %v4178
  %v4199 = vpack.c.b16 %v4183, %v4181
  %v4200 = vpack.c.b16 %v4184, %v4182
  %4201 = vrot.lane.b32.xlu0 %v4185, 127
  %v4202 = vpop.permute.xlu0 %4201
  %4203 = vrot.lane.b32.xlu0 %v4186, 127
  %v4204 = vpop.permute.xlu0 %4203
  %4205 = vrot.lane.b32.xlu0 %v4187, 127
  %v4206 = vpop.permute.xlu0 %4205
  %4207 = vrot.lane.b32.xlu0 %v4188, 127
  %v4208 = vpop.permute.xlu0 %4207
  %4209 = vrot.lane.b32.xlu0 %v4189, 127
  %v4210 = vpop.permute.xlu0 %4209
  %4211 = vrot.lane.b32.xlu0 %v4190, 127
  %v4212 = vpop.permute.xlu0 %4211
  %4213 = vrot.lane.b32.xlu0 %v4191, 127
  %v4214 = vpop.permute.xlu0 %4213
  %4215 = vrot.lane.b32.xlu0 %v4192, 127
  %v4216 = vpop.permute.xlu0 %4215
  %4217 = vrot.lane.b32.xlu0 %v4193, 127
  %v4218 = vpop.permute.xlu0 %4217
  %4219 = vrot.lane.b32.xlu0 %v4194, 127
  %v4220 = vpop.permute.xlu0 %4219
  %4221 = vrot.lane.b32.xlu0 %v4195, 127
  %v4222 = vpop.permute.xlu0 %4221
  %4223 = vrot.lane.b32.xlu0 %v4196, 127
  %v4224 = vpop.permute.xlu0 %4223
  %4225 = vrot.lane.b32.xlu0 %v4197, 127
  %v4226 = vpop.permute.xlu0 %4225
  %4227 = vrot.lane.b32.xlu0 %v4198, 127
  %v4228 = vpop.permute.xlu0 %4227
  %4229 = vrot.lane.b32.xlu0 %v4199, 127
  %v4230 = vpop.permute.xlu0 %4229
  %4231 = vrot.lane.b32.xlu0 %v4200, 127
  %v4232 = vpop.permute.xlu0 %4231
  %vm4233 = vcmask 1039360
  %v4234 = vsel %vm4233, %v4202, %v4204
  %v4235 = vsel %vm4233, %v4206, %v4208
  %v4236 = vsel %vm4233, %v4210, %v4212
  %v4237 = vsel %vm4233, %v4214, %v4216
  %v4238 = vsel %vm4233, %v4218, %v4220
  %v4239 = vsel %vm4233, %v4222, %v4224
  %v4240 = vsel %vm4233, %v4226, %v4228
  %v4241 = vsel %vm4233, %v4230, %v4232
  %v4274 = vunpack.c.l.b16 %v3817
  %v4275 = vunpack.c.h.b16 %v3817
  %v4276 = vunpack.c.l.b16 %v3818
  %v4277 = vunpack.c.h.b16 %v3818
  %v4278 = vunpack.c.l.b16 %v3819
  %v4279 = vunpack.c.h.b16 %v3819
  %v4280 = vunpack.c.l.b16 %v3820
  %v4281 = vunpack.c.h.b16 %v3820
  %v4282 = vunpack.c.l.b16 %v3821
  %v4283 = vunpack.c.h.b16 %v3821
  %v4284 = vunpack.c.l.b16 %v3822
  %v4285 = vunpack.c.h.b16 %v3822
  %v4286 = vunpack.c.l.b16 %v3823
  %v4287 = vunpack.c.h.b16 %v3823
  %v4288 = vunpack.c.l.b16 %v3824
  %v4289 = vunpack.c.h.b16 %v3824
  %v4290 = vunpack.c.l.b16 %v3825
  %v4291 = vunpack.c.h.b16 %v3825
  %v4292 = vunpack.c.l.b16 %v3826
  %v4293 = vunpack.c.h.b16 %v3826
  %v4294 = vunpack.c.l.b16 %v3827
  %v4295 = vunpack.c.h.b16 %v3827
  %v4296 = vunpack.c.l.b16 %v3828
  %v4297 = vunpack.c.h.b16 %v3828
  %v4298 = vunpack.c.l.b16 %v3829
  %v4299 = vunpack.c.h.b16 %v3829
  %v4300 = vunpack.c.l.b16 %v3830
  %v4301 = vunpack.c.h.b16 %v3830
  %v4302 = vunpack.c.l.b16 %v3831
  %v4303 = vunpack.c.h.b16 %v3831
  %v4304 = vunpack.c.l.b16 %v3832
  %v4305 = vunpack.c.h.b16 %v3832
  %v4306 = vpack.c.b16 %v4276, %v4274
  %v4307 = vpack.c.b16 %v4277, %v4275
  %v4308 = vpack.c.b16 %v4280, %v4278
  %v4309 = vpack.c.b16 %v4281, %v4279
  %v4310 = vpack.c.b16 %v4284, %v4282
  %v4311 = vpack.c.b16 %v4285, %v4283
  %v4312 = vpack.c.b16 %v4288, %v4286
  %v4313 = vpack.c.b16 %v4289, %v4287
  %v4314 = vpack.c.b16 %v4292, %v4290
  %v4315 = vpack.c.b16 %v4293, %v4291
  %v4316 = vpack.c.b16 %v4296, %v4294
  %v4317 = vpack.c.b16 %v4297, %v4295
  %v4318 = vpack.c.b16 %v4300, %v4298
  %v4319 = vpack.c.b16 %v4301, %v4299
  %v4320 = vpack.c.b16 %v4304, %v4302
  %v4321 = vpack.c.b16 %v4305, %v4303
  %4322 = vrot.lane.b32.xlu0 %v4306, 126
  %v4323 = vpop.permute.xlu0 %4322
  %4324 = vrot.lane.b32.xlu0 %v4307, 126
  %v4325 = vpop.permute.xlu0 %4324
  %4326 = vrot.lane.b32.xlu0 %v4308, 126
  %v4327 = vpop.permute.xlu0 %4326
  %4328 = vrot.lane.b32.xlu0 %v4309, 126
  %v4329 = vpop.permute.xlu0 %4328
  %4330 = vrot.lane.b32.xlu0 %v4310, 126
  %v4331 = vpop.permute.xlu0 %4330
  %4332 = vrot.lane.b32.xlu0 %v4311, 126
  %v4333 = vpop.permute.xlu0 %4332
  %4334 = vrot.lane.b32.xlu0 %v4312, 126
  %v4335 = vpop.permute.xlu0 %4334
  %4336 = vrot.lane.b32.xlu0 %v4313, 126
  %v4337 = vpop.permute.xlu0 %4336
  %4338 = vrot.lane.b32.xlu0 %v4314, 126
  %v4339 = vpop.permute.xlu0 %4338
  %4340 = vrot.lane.b32.xlu0 %v4315, 126
  %v4341 = vpop.permute.xlu0 %4340
  %4342 = vrot.lane.b32.xlu0 %v4316, 126
  %v4343 = vpop.permute.xlu0 %4342
  %4344 = vrot.lane.b32.xlu0 %v4317, 126
  %v4345 = vpop.permute.xlu0 %4344
  %4346 = vrot.lane.b32.xlu0 %v4318, 126
  %v4347 = vpop.permute.xlu0 %4346
  %4348 = vrot.lane.b32.xlu0 %v4319, 126
  %v4349 = vpop.permute.xlu0 %4348
  %4350 = vrot.lane.b32.xlu0 %v4320, 126
  %v4351 = vpop.permute.xlu0 %4350
  %4352 = vrot.lane.b32.xlu0 %v4321, 126
  %v4353 = vpop.permute.xlu0 %4352
  %vm4354 = vcmask 1031168
  %v4355 = vsel %vm4354, %v4323, %v4325
  %v4356 = vsel %vm4354, %v4327, %v4329
  %v4357 = vsel %vm4354, %v4331, %v4333
  %v4358 = vsel %vm4354, %v4335, %v4337
  %v4359 = vsel %vm4354, %v4339, %v4341
  %v4360 = vsel %vm4354, %v4343, %v4345
  %v4361 = vsel %vm4354, %v4347, %v4349
  %v4362 = vsel %vm4354, %v4351, %v4353
  %v4395 = vunpack.c.l.b16 %v3875
  %v4396 = vunpack.c.h.b16 %v3875
  %v4397 = vunpack.c.l.b16 %v3876
  %v4398 = vunpack.c.h.b16 %v3876
  %v4399 = vunpack.c.l.b16 %v3877
  %v4400 = vunpack.c.h.b16 %v3877
  %v4401 = vunpack.c.l.b16 %v3878
  %v4402 = vunpack.c.h.b16 %v3878
  %v4403 = vunpack.c.l.b16 %v3879
  %v4404 = vunpack.c.h.b16 %v3879
  %v4405 = vunpack.c.l.b16 %v3880
  %v4406 = vunpack.c.h.b16 %v3880
  %v4407 = vunpack.c.l.b16 %v3881
  %v4408 = vunpack.c.h.b16 %v3881
  %v4409 = vunpack.c.l.b16 %v3882
  %v4410 = vunpack.c.h.b16 %v3882
  %v4411 = vunpack.c.l.b16 %v3883
  %v4412 = vunpack.c.h.b16 %v3883
  %v4413 = vunpack.c.l.b16 %v3884
  %v4414 = vunpack.c.h.b16 %v3884
  %v4415 = vunpack.c.l.b16 %v3885
  %v4416 = vunpack.c.h.b16 %v3885
  %v4417 = vunpack.c.l.b16 %v3886
  %v4418 = vunpack.c.h.b16 %v3886
  %v4419 = vunpack.c.l.b16 %v3887
  %v4420 = vunpack.c.h.b16 %v3887
  %v4421 = vunpack.c.l.b16 %v3888
  %v4422 = vunpack.c.h.b16 %v3888
  %v4423 = vunpack.c.l.b16 %v3889
  %v4424 = vunpack.c.h.b16 %v3889
  %v4425 = vunpack.c.l.b16 %v3890
  %v4426 = vunpack.c.h.b16 %v3890
  %v4427 = vpack.c.b16 %v4397, %v4395
  %v4428 = vpack.c.b16 %v4398, %v4396
  %v4429 = vpack.c.b16 %v4401, %v4399
  %v4430 = vpack.c.b16 %v4402, %v4400
  %v4431 = vpack.c.b16 %v4405, %v4403
  %v4432 = vpack.c.b16 %v4406, %v4404
  %v4433 = vpack.c.b16 %v4409, %v4407
  %v4434 = vpack.c.b16 %v4410, %v4408
  %v4435 = vpack.c.b16 %v4413, %v4411
  %v4436 = vpack.c.b16 %v4414, %v4412
  %v4437 = vpack.c.b16 %v4417, %v4415
  %v4438 = vpack.c.b16 %v4418, %v4416
  %v4439 = vpack.c.b16 %v4421, %v4419
  %v4440 = vpack.c.b16 %v4422, %v4420
  %v4441 = vpack.c.b16 %v4425, %v4423
  %v4442 = vpack.c.b16 %v4426, %v4424
  %4443 = vrot.lane.b32.xlu0 %v4427, 114
  %v4444 = vpop.permute.xlu0 %4443
  %4445 = vrot.lane.b32.xlu0 %v4428, 114
  %v4446 = vpop.permute.xlu0 %4445
  %4447 = vrot.lane.b32.xlu0 %v4429, 114
  %v4448 = vpop.permute.xlu0 %4447
  %4449 = vrot.lane.b32.xlu0 %v4430, 114
  %v4450 = vpop.permute.xlu0 %4449
  %4451 = vrot.lane.b32.xlu0 %v4431, 114
  %v4452 = vpop.permute.xlu0 %4451
  %4453 = vrot.lane.b32.xlu0 %v4432, 114
  %v4454 = vpop.permute.xlu0 %4453
  %4455 = vrot.lane.b32.xlu0 %v4433, 114
  %v4456 = vpop.permute.xlu0 %4455
  %4457 = vrot.lane.b32.xlu0 %v4434, 114
  %v4458 = vpop.permute.xlu0 %4457
  %4459 = vrot.lane.b32.xlu0 %v4435, 114
  %v4460 = vpop.permute.xlu0 %4459
  %4461 = vrot.lane.b32.xlu0 %v4436, 114
  %v4462 = vpop.permute.xlu0 %4461
  %4463 = vrot.lane.b32.xlu0 %v4437, 114
  %v4464 = vpop.permute.xlu0 %4463
  %4465 = vrot.lane.b32.xlu0 %v4438, 114
  %v4466 = vpop.permute.xlu0 %4465
  %4467 = vrot.lane.b32.xlu0 %v4439, 114
  %v4468 = vpop.permute.xlu0 %4467
  %4469 = vrot.lane.b32.xlu0 %v4440, 114
  %v4470 = vpop.permute.xlu0 %4469
  %4471 = vrot.lane.b32.xlu0 %v4441, 114
  %v4472 = vpop.permute.xlu0 %4471
  %4473 = vrot.lane.b32.xlu0 %v4442, 114
  %v4474 = vpop.permute.xlu0 %4473
  %vm4475 = vcmask 932864
  %v4476 = vsel %vm4475, %v4444, %v4446
  %v4477 = vsel %vm4475, %v4448, %v4450
  %v4478 = vsel %vm4475, %v4452, %v4454
  %v4479 = vsel %vm4475, %v4456, %v4458
  %v4480 = vsel %vm4475, %v4460, %v4462
  %v4481 = vsel %vm4475, %v4464, %v4466
  %v4482 = vsel %vm4475, %v4468, %v4470
  %v4483 = vsel %vm4475, %v4472, %v4474
  %4500 = vrot.lane.b32.xlu0 %v4185, 113
  %v4501 = vpop.permute.xlu0 %4500
  %4502 = vrot.lane.b32.xlu0 %v4186, 113
  %v4503 = vpop.permute.xlu0 %4502
  %4504 = vrot.lane.b32.xlu0 %v4187, 113
  %v4505 = vpop.permute.xlu0 %4504
  %4506 = vrot.lane.b32.xlu0 %v4188, 113
  %v4507 = vpop.permute.xlu0 %4506
  %4508 = vrot.lane.b32.xlu0 %v4189, 113
  %v4509 = vpop.permute.xlu0 %4508
  %4510 = vrot.lane.b32.xlu0 %v4190, 113
  %v4511 = vpop.permute.xlu0 %4510
  %4512 = vrot.lane.b32.xlu0 %v4191, 113
  %v4513 = vpop.permute.xlu0 %4512
  %4514 = vrot.lane.b32.xlu0 %v4192, 113
  %v4515 = vpop.permute.xlu0 %4514
  %4516 = vrot.lane.b32.xlu0 %v4193, 113
  %v4517 = vpop.permute.xlu0 %4516
  %4518 = vrot.lane.b32.xlu0 %v4194, 113
  %v4519 = vpop.permute.xlu0 %4518
  %4520 = vrot.lane.b32.xlu0 %v4195, 113
  %v4521 = vpop.permute.xlu0 %4520
  %4522 = vrot.lane.b32.xlu0 %v4196, 113
  %v4523 = vpop.permute.xlu0 %4522
  %4524 = vrot.lane.b32.xlu0 %v4197, 113
  %v4525 = vpop.permute.xlu0 %4524
  %4526 = vrot.lane.b32.xlu0 %v4198, 113
  %v4527 = vpop.permute.xlu0 %4526
  %4528 = vrot.lane.b32.xlu0 %v4199, 113
  %v4529 = vpop.permute.xlu0 %4528
  %4530 = vrot.lane.b32.xlu0 %v4200, 113
  %v4531 = vpop.permute.xlu0 %4530
  %vm4532 = vcmask 924672
  %v4533 = vsel %vm4532, %v4501, %v4503
  %v4534 = vsel %vm4532, %v4505, %v4507
  %v4535 = vsel %vm4532, %v4509, %v4511
  %v4536 = vsel %vm4532, %v4513, %v4515
  %v4537 = vsel %vm4532, %v4517, %v4519
  %v4538 = vsel %vm4532, %v4521, %v4523
  %v4539 = vsel %vm4532, %v4525, %v4527
  %v4540 = vsel %vm4532, %v4529, %v4531
  %v4573 = vunpack.c.l.b16 %v3931
  %v4574 = vunpack.c.h.b16 %v3931
  %v4575 = vunpack.c.l.b16 %v3932
  %v4576 = vunpack.c.h.b16 %v3932
  %v4577 = vunpack.c.l.b16 %v3933
  %v4578 = vunpack.c.h.b16 %v3933
  %v4579 = vunpack.c.l.b16 %v3934
  %v4580 = vunpack.c.h.b16 %v3934
  %v4581 = vunpack.c.l.b16 %v3935
  %v4582 = vunpack.c.h.b16 %v3935
  %v4583 = vunpack.c.l.b16 %v3936
  %v4584 = vunpack.c.h.b16 %v3936
  %v4585 = vunpack.c.l.b16 %v3937
  %v4586 = vunpack.c.h.b16 %v3937
  %v4587 = vunpack.c.l.b16 %v3938
  %v4588 = vunpack.c.h.b16 %v3938
  %v4589 = vunpack.c.l.b16 %v3939
  %v4590 = vunpack.c.h.b16 %v3939
  %v4591 = vunpack.c.l.b16 %v3940
  %v4592 = vunpack.c.h.b16 %v3940
  %v4593 = vunpack.c.l.b16 %v3941
  %v4594 = vunpack.c.h.b16 %v3941
  %v4595 = vunpack.c.l.b16 %v3942
  %v4596 = vunpack.c.h.b16 %v3942
  %v4597 = vunpack.c.l.b16 %v3943
  %v4598 = vunpack.c.h.b16 %v3943
  %v4599 = vunpack.c.l.b16 %v3944
  %v4600 = vunpack.c.h.b16 %v3944
  %v4601 = vunpack.c.l.b16 %v3945
  %v4602 = vunpack.c.h.b16 %v3945
  %v4603 = vunpack.c.l.b16 %v3946
  %v4604 = vunpack.c.h.b16 %v3946
  %v4605 = vpack.c.b16 %v4575, %v4573
  %v4606 = vpack.c.b16 %v4576, %v4574
  %v4607 = vpack.c.b16 %v4579, %v4577
  %v4608 = vpack.c.b16 %v4580, %v4578
  %v4609 = vpack.c.b16 %v4583, %v4581
  %v4610 = vpack.c.b16 %v4584, %v4582
  %v4611 = vpack.c.b16 %v4587, %v4585
  %v4612 = vpack.c.b16 %v4588, %v4586
  %v4613 = vpack.c.b16 %v4591, %v4589
  %v4614 = vpack.c.b16 %v4592, %v4590
  %v4615 = vpack.c.b16 %v4595, %v4593
  %v4616 = vpack.c.b16 %v4596, %v4594
  %v4617 = vpack.c.b16 %v4599, %v4597
  %v4618 = vpack.c.b16 %v4600, %v4598
  %v4619 = vpack.c.b16 %v4603, %v4601
  %v4620 = vpack.c.b16 %v4604, %v4602
  %4621 = vrot.lane.b32.xlu0 %v4605, 112
  %v4622 = vpop.permute.xlu0 %4621
  %4623 = vrot.lane.b32.xlu0 %v4606, 112
  %v4624 = vpop.permute.xlu0 %4623
  %4625 = vrot.lane.b32.xlu0 %v4607, 112
  %v4626 = vpop.permute.xlu0 %4625
  %4627 = vrot.lane.b32.xlu0 %v4608, 112
  %v4628 = vpop.permute.xlu0 %4627
  %4629 = vrot.lane.b32.xlu0 %v4609, 112
  %v4630 = vpop.permute.xlu0 %4629
  %4631 = vrot.lane.b32.xlu0 %v4610, 112
  %v4632 = vpop.permute.xlu0 %4631
  %4633 = vrot.lane.b32.xlu0 %v4611, 112
  %v4634 = vpop.permute.xlu0 %4633
  %4635 = vrot.lane.b32.xlu0 %v4612, 112
  %v4636 = vpop.permute.xlu0 %4635
  %4637 = vrot.lane.b32.xlu0 %v4613, 112
  %v4638 = vpop.permute.xlu0 %4637
  %4639 = vrot.lane.b32.xlu0 %v4614, 112
  %v4640 = vpop.permute.xlu0 %4639
  %4641 = vrot.lane.b32.xlu0 %v4615, 112
  %v4642 = vpop.permute.xlu0 %4641
  %4643 = vrot.lane.b32.xlu0 %v4616, 112
  %v4644 = vpop.permute.xlu0 %4643
  %4645 = vrot.lane.b32.xlu0 %v4617, 112
  %v4646 = vpop.permute.xlu0 %4645
  %4647 = vrot.lane.b32.xlu0 %v4618, 112
  %v4648 = vpop.permute.xlu0 %4647
  %4649 = vrot.lane.b32.xlu0 %v4619, 112
  %v4650 = vpop.permute.xlu0 %4649
  %4651 = vrot.lane.b32.xlu0 %v4620, 112
  %v4652 = vpop.permute.xlu0 %4651
  %vm4653 = vcmask 916480
  %v4654 = vsel %vm4653, %v4622, %v4624
  %v4655 = vsel %vm4653, %v4626, %v4628
  %v4656 = vsel %vm4653, %v4630, %v4632
  %v4657 = vsel %vm4653, %v4634, %v4636
  %v4658 = vsel %vm4653, %v4638, %v4640
  %v4659 = vsel %vm4653, %v4642, %v4644
  %v4660 = vsel %vm4653, %v4646, %v4648
  %v4661 = vsel %vm4653, %v4650, %v4652
  %v4694 = vunpack.c.l.b16 %v3986
  %v4695 = vunpack.c.h.b16 %v3986
  %v4696 = vunpack.c.l.b16 %v3987
  %v4697 = vunpack.c.h.b16 %v3987
  %v4698 = vunpack.c.l.b16 %v3988
  %v4699 = vunpack.c.h.b16 %v3988
  %v4700 = vunpack.c.l.b16 %v3989
  %v4701 = vunpack.c.h.b16 %v3989
  %v4702 = vunpack.c.l.b16 %v3990
  %v4703 = vunpack.c.h.b16 %v3990
  %v4704 = vunpack.c.l.b16 %v3991
  %v4705 = vunpack.c.h.b16 %v3991
  %v4706 = vunpack.c.l.b16 %v3992
  %v4707 = vunpack.c.h.b16 %v3992
  %v4708 = vunpack.c.l.b16 %v3993
  %v4709 = vunpack.c.h.b16 %v3993
  %v4710 = vunpack.c.l.b16 %v3994
  %v4711 = vunpack.c.h.b16 %v3994
  %v4712 = vunpack.c.l.b16 %v3995
  %v4713 = vunpack.c.h.b16 %v3995
  %v4714 = vunpack.c.l.b16 %v3996
  %v4715 = vunpack.c.h.b16 %v3996
  %v4716 = vunpack.c.l.b16 %v3997
  %v4717 = vunpack.c.h.b16 %v3997
  %v4718 = vunpack.c.l.b16 %v3998
  %v4719 = vunpack.c.h.b16 %v3998
  %v4720 = vunpack.c.l.b16 %v3999
  %v4721 = vunpack.c.h.b16 %v3999
  %v4722 = vunpack.c.l.b16 %v4000
  %v4723 = vunpack.c.h.b16 %v4000
  %v4724 = vunpack.c.l.b16 %v4001
  %v4725 = vunpack.c.h.b16 %v4001
  %v4726 = vpack.c.b16 %v4696, %v4694
  %v4727 = vpack.c.b16 %v4697, %v4695
  %v4728 = vpack.c.b16 %v4700, %v4698
  %v4729 = vpack.c.b16 %v4701, %v4699
  %v4730 = vpack.c.b16 %v4704, %v4702
  %v4731 = vpack.c.b16 %v4705, %v4703
  %v4732 = vpack.c.b16 %v4708, %v4706
  %v4733 = vpack.c.b16 %v4709, %v4707
  %v4734 = vpack.c.b16 %v4712, %v4710
  %v4735 = vpack.c.b16 %v4713, %v4711
  %v4736 = vpack.c.b16 %v4716, %v4714
  %v4737 = vpack.c.b16 %v4717, %v4715
  %v4738 = vpack.c.b16 %v4720, %v4718
  %v4739 = vpack.c.b16 %v4721, %v4719
  %v4740 = vpack.c.b16 %v4724, %v4722
  %v4741 = vpack.c.b16 %v4725, %v4723
  %4742 = vrot.lane.b32.xlu0 %v4726, 100
  %v4743 = vpop.permute.xlu0 %4742
  %4744 = vrot.lane.b32.xlu0 %v4727, 100
  %v4745 = vpop.permute.xlu0 %4744
  %4746 = vrot.lane.b32.xlu0 %v4728, 100
  %v4747 = vpop.permute.xlu0 %4746
  %4748 = vrot.lane.b32.xlu0 %v4729, 100
  %v4749 = vpop.permute.xlu0 %4748
  %4750 = vrot.lane.b32.xlu0 %v4730, 100
  %v4751 = vpop.permute.xlu0 %4750
  %4752 = vrot.lane.b32.xlu0 %v4731, 100
  %v4753 = vpop.permute.xlu0 %4752
  %4754 = vrot.lane.b32.xlu0 %v4732, 100
  %v4755 = vpop.permute.xlu0 %4754
  %4756 = vrot.lane.b32.xlu0 %v4733, 100
  %v4757 = vpop.permute.xlu0 %4756
  %4758 = vrot.lane.b32.xlu0 %v4734, 100
  %v4759 = vpop.permute.xlu0 %4758
  %4760 = vrot.lane.b32.xlu0 %v4735, 100
  %v4761 = vpop.permute.xlu0 %4760
  %4762 = vrot.lane.b32.xlu0 %v4736, 100
  %v4763 = vpop.permute.xlu0 %4762
  %4764 = vrot.lane.b32.xlu0 %v4737, 100
  %v4765 = vpop.permute.xlu0 %4764
  %4766 = vrot.lane.b32.xlu0 %v4738, 100
  %v4767 = vpop.permute.xlu0 %4766
  %4768 = vrot.lane.b32.xlu0 %v4739, 100
  %v4769 = vpop.permute.xlu0 %4768
  %4770 = vrot.lane.b32.xlu0 %v4740, 100
  %v4771 = vpop.permute.xlu0 %4770
  %4772 = vrot.lane.b32.xlu0 %v4741, 100
  %v4773 = vpop.permute.xlu0 %4772
  %vm4774 = vcmask 818176
  %v4775 = vsel %vm4774, %v4743, %v4745
  %v4776 = vsel %vm4774, %v4747, %v4749
  %v4777 = vsel %vm4774, %v4751, %v4753
  %v4778 = vsel %vm4774, %v4755, %v4757
  %v4779 = vsel %vm4774, %v4759, %v4761
  %v4780 = vsel %vm4774, %v4763, %v4765
  %v4781 = vsel %vm4774, %v4767, %v4769
  %v4782 = vsel %vm4774, %v4771, %v4773
  %4799 = vrot.lane.b32.xlu0 %v4185, 99
  %v4800 = vpop.permute.xlu0 %4799
  %4801 = vrot.lane.b32.xlu0 %v4186, 99
  %v4802 = vpop.permute.xlu0 %4801
  %4803 = vrot.lane.b32.xlu0 %v4187, 99
  %v4804 = vpop.permute.xlu0 %4803
  %4805 = vrot.lane.b32.xlu0 %v4188, 99
  %v4806 = vpop.permute.xlu0 %4805
  %4807 = vrot.lane.b32.xlu0 %v4189, 99
  %v4808 = vpop.permute.xlu0 %4807
  %4809 = vrot.lane.b32.xlu0 %v4190, 99
  %v4810 = vpop.permute.xlu0 %4809
  %4811 = vrot.lane.b32.xlu0 %v4191, 99
  %v4812 = vpop.permute.xlu0 %4811
  %4813 = vrot.lane.b32.xlu0 %v4192, 99
  %v4814 = vpop.permute.xlu0 %4813
  %4815 = vrot.lane.b32.xlu0 %v4193, 99
  %v4816 = vpop.permute.xlu0 %4815
  %4817 = vrot.lane.b32.xlu0 %v4194, 99
  %v4818 = vpop.permute.xlu0 %4817
  %4819 = vrot.lane.b32.xlu0 %v4195, 99
  %v4820 = vpop.permute.xlu0 %4819
  %4821 = vrot.lane.b32.xlu0 %v4196, 99
  %v4822 = vpop.permute.xlu0 %4821
  %4823 = vrot.lane.b32.xlu0 %v4197, 99
  %v4824 = vpop.permute.xlu0 %4823
  %4825 = vrot.lane.b32.xlu0 %v4198, 99
  %v4826 = vpop.permute.xlu0 %4825
  %4827 = vrot.lane.b32.xlu0 %v4199, 99
  %v4828 = vpop.permute.xlu0 %4827
  %4829 = vrot.lane.b32.xlu0 %v4200, 99
  %v4830 = vpop.permute.xlu0 %4829
  %vm4831 = vcmask 809984
  %v4832 = vsel %vm4831, %v4800, %v4802
  %v4833 = vsel %vm4831, %v4804, %v4806
  %v4834 = vsel %vm4831, %v4808, %v4810
  %v4835 = vsel %vm4831, %v4812, %v4814
  %v4836 = vsel %vm4831, %v4816, %v4818
  %v4837 = vsel %vm4831, %v4820, %v4822
  %v4838 = vsel %vm4831, %v4824, %v4826
  %v4839 = vsel %vm4831, %v4828, %v4830
  %v4872 = vunpack.c.l.b16 %v4041
  %v4873 = vunpack.c.h.b16 %v4041
  %v4874 = vunpack.c.l.b16 %v4042
  %v4875 = vunpack.c.h.b16 %v4042
  %v4876 = vunpack.c.l.b16 %v4043
  %v4877 = vunpack.c.h.b16 %v4043
  %v4878 = vunpack.c.l.b16 %v4044
  %v4879 = vunpack.c.h.b16 %v4044
  %v4880 = vunpack.c.l.b16 %v4045
  %v4881 = vunpack.c.h.b16 %v4045
  %v4882 = vunpack.c.l.b16 %v4046
  %v4883 = vunpack.c.h.b16 %v4046
  %v4884 = vunpack.c.l.b16 %v4047
  %v4885 = vunpack.c.h.b16 %v4047
  %v4886 = vunpack.c.l.b16 %v4048
  %v4887 = vunpack.c.h.b16 %v4048
  %v4888 = vunpack.c.l.b16 %v4049
  %v4889 = vunpack.c.h.b16 %v4049
  %v4890 = vunpack.c.l.b16 %v4050
  %v4891 = vunpack.c.h.b16 %v4050
  %v4892 = vunpack.c.l.b16 %v4051
  %v4893 = vunpack.c.h.b16 %v4051
  %v4894 = vunpack.c.l.b16 %v4052
  %v4895 = vunpack.c.h.b16 %v4052
  %v4896 = vunpack.c.l.b16 %v4053
  %v4897 = vunpack.c.h.b16 %v4053
  %v4898 = vunpack.c.l.b16 %v4054
  %v4899 = vunpack.c.h.b16 %v4054
  %v4900 = vunpack.c.l.b16 %v4055
  %v4901 = vunpack.c.h.b16 %v4055
  %v4902 = vunpack.c.l.b16 %v4056
  %v4903 = vunpack.c.h.b16 %v4056
  %v4904 = vpack.c.b16 %v4874, %v4872
  %v4905 = vpack.c.b16 %v4875, %v4873
  %v4906 = vpack.c.b16 %v4878, %v4876
  %v4907 = vpack.c.b16 %v4879, %v4877
  %v4908 = vpack.c.b16 %v4882, %v4880
  %v4909 = vpack.c.b16 %v4883, %v4881
  %v4910 = vpack.c.b16 %v4886, %v4884
  %v4911 = vpack.c.b16 %v4887, %v4885
  %v4912 = vpack.c.b16 %v4890, %v4888
  %v4913 = vpack.c.b16 %v4891, %v4889
  %v4914 = vpack.c.b16 %v4894, %v4892
  %v4915 = vpack.c.b16 %v4895, %v4893
  %v4916 = vpack.c.b16 %v4898, %v4896
  %v4917 = vpack.c.b16 %v4899, %v4897
  %v4918 = vpack.c.b16 %v4902, %v4900
  %v4919 = vpack.c.b16 %v4903, %v4901
  %4920 = vrot.lane.b32.xlu0 %v4904, 98
  %v4921 = vpop.permute.xlu0 %4920
  %4922 = vrot.lane.b32.xlu0 %v4905, 98
  %v4923 = vpop.permute.xlu0 %4922
  %4924 = vrot.lane.b32.xlu0 %v4906, 98
  %v4925 = vpop.permute.xlu0 %4924
  %4926 = vrot.lane.b32.xlu0 %v4907, 98
  %v4927 = vpop.permute.xlu0 %4926
  %4928 = vrot.lane.b32.xlu0 %v4908, 98
  %v4929 = vpop.permute.xlu0 %4928
  %4930 = vrot.lane.b32.xlu0 %v4909, 98
  %v4931 = vpop.permute.xlu0 %4930
  %4932 = vrot.lane.b32.xlu0 %v4910, 98
  %v4933 = vpop.permute.xlu0 %4932
  %4934 = vrot.lane.b32.xlu0 %v4911, 98
  %v4935 = vpop.permute.xlu0 %4934
  %4936 = vrot.lane.b32.xlu0 %v4912, 98
  %v4937 = vpop.permute.xlu0 %4936
  %4938 = vrot.lane.b32.xlu0 %v4913, 98
  %v4939 = vpop.permute.xlu0 %4938
  %4940 = vrot.lane.b32.xlu0 %v4914, 98
  %v4941 = vpop.permute.xlu0 %4940
  %4942 = vrot.lane.b32.xlu0 %v4915, 98
  %v4943 = vpop.permute.xlu0 %4942
  %4944 = vrot.lane.b32.xlu0 %v4916, 98
  %v4945 = vpop.permute.xlu0 %4944
  %4946 = vrot.lane.b32.xlu0 %v4917, 98
  %v4947 = vpop.permute.xlu0 %4946
  %4948 = vrot.lane.b32.xlu0 %v4918, 98
  %v4949 = vpop.permute.xlu0 %4948
  %4950 = vrot.lane.b32.xlu0 %v4919, 98
  %v4951 = vpop.permute.xlu0 %4950
  %vm4952 = vcmask 801792
  %v4953 = vsel %vm4952, %v4921, %v4923
  %v4954 = vsel %vm4952, %v4925, %v4927
  %v4955 = vsel %vm4952, %v4929, %v4931
  %v4956 = vsel %vm4952, %v4933, %v4935
  %v4957 = vsel %vm4952, %v4937, %v4939
  %v4958 = vsel %vm4952, %v4941, %v4943
  %v4959 = vsel %vm4952, %v4945, %v4947
  %v4960 = vsel %vm4952, %v4949, %v4951
  %v4977 = vld [vmem:[%s5] sm:$0xff]
  %v4978 = vld [vmem:[%s5 + $0x8] sm:$0xff]
  %v4979 = vld [vmem:[%s5 + $0x10] sm:$0xff]
  %v4980 = vld [vmem:[%s5 + $0x18] sm:$0xff]
  %v4981 = vld [vmem:[%s5 + $0x20] sm:$0xf]
  %v4982 = vld [vmem:[%s5 + $0x24] sm:$0xff]
  %v4983 = vld [vmem:[%s5 + $0x2c] sm:$0xff]
  %v4984 = vld [vmem:[%s5 + $0x34] sm:$0xff]
  %v4985 = vld [vmem:[%s5 + $0x3c] sm:$0xff]
  %v4986 = vld [vmem:[%s5 + $0x44] sm:$0xf]
  %v4987 = vld [vmem:[%s5 + $0x48] sm:$0xff]
  %v4988 = vld [vmem:[%s5 + $0x50] sm:$0xff]
  %v4989 = vld [vmem:[%s5 + $0x58] sm:$0xff]
  %v4990 = vld [vmem:[%s5 + $0x60] sm:$0xff]
  %v4991 = vld [vmem:[%s5 + $0x68] sm:$0xf]
  %v4992 = vld [vmem:[%s5 + $0x6c] sm:$0xff]
  %v4993 = vld [vmem:[%s5 + $0x74] sm:$0xff]
  %v4994 = vld [vmem:[%s5 + $0x7c] sm:$0xff]
  %v4995 = vld [vmem:[%s5 + $0x84] sm:$0xff]
  %v4996 = vld [vmem:[%s5 + $0x8c] sm:$0xf]
  %v4997 = vld [vmem:[%s5 + $0x90] sm:$0xff]
  %v4998 = vld [vmem:[%s5 + $0x98] sm:$0xff]
  %v4999 = vld [vmem:[%s5 + $0xa0] sm:$0xff]
  %v5000 = vld [vmem:[%s5 + $0xa8] sm:$0xff]
  %v5001 = vld [vmem:[%s5 + $0xb0] sm:$0xf]
  %v5002 = vld [vmem:[%s5 + $0xb4] sm:$0xff]
  %v5003 = vld [vmem:[%s5 + $0xbc] sm:$0xff]
  %v5004 = vld [vmem:[%s5 + $0xc4] sm:$0xff]
  %v5005 = vld [vmem:[%s5 + $0xcc] sm:$0xff]
  %v5006 = vld [vmem:[%s5 + $0xd4] sm:$0xf]
  %v5007 = vld [vmem:[%s5 + $0xd8] sm:$0xff]
  %v5008 = vld [vmem:[%s5 + $0xe0] sm:$0xff]
  %v5009 = vld [vmem:[%s5 + $0xe8] sm:$0xff]
  %v5010 = vld [vmem:[%s5 + $0xf0] sm:$0xff]
  %v5011 = vld [vmem:[%s5 + $0xf8] sm:$0xf]
  %v5012 = vld [vmem:[%s5 + $0xfc] sm:$0xff]
  %v5013 = vld [vmem:[%s5 + $0x104] sm:$0xff]
  %v5014 = vld [vmem:[%s5 + $0x10c] sm:$0xff]
  %v5015 = vld [vmem:[%s5 + $0x114] sm:$0xff]
  %v5016 = vld [vmem:[%s5 + $0x11c] sm:$0xf]
  %v5017 = vld [vmem:[%s5 + $0x120] sm:$0xff]
  %v5018 = vld [vmem:[%s5 + $0x128] sm:$0xff]
  %v5019 = vld [vmem:[%s5 + $0x130] sm:$0xff]
  %v5020 = vld [vmem:[%s5 + $0x138] sm:$0xff]
  %v5021 = vld [vmem:[%s5 + $0x140] sm:$0xf]
  %v5022 = vld [vmem:[%s5 + $0x144] sm:$0xff]
  %v5023 = vld [vmem:[%s5 + $0x14c] sm:$0xff]
  %v5024 = vld [vmem:[%s5 + $0x154] sm:$0xff]
  %v5025 = vld [vmem:[%s5 + $0x15c] sm:$0xff]
  %v5026 = vld [vmem:[%s5 + $0x164] sm:$0xf]
  %v5027 = vld [vmem:[%s5 + $0x168] sm:$0xff]
  %v5028 = vld [vmem:[%s5 + $0x170] sm:$0xff]
  %v5029 = vld [vmem:[%s5 + $0x178] sm:$0xff]
  %v5030 = vld [vmem:[%s5 + $0x180] sm:$0xff]
  %v5031 = vld [vmem:[%s5 + $0x188] sm:$0xf]
  %v5032 = vld [vmem:[%s5 + $0x18c] sm:$0xff]
  %v5033 = vld [vmem:[%s5 + $0x194] sm:$0xff]
  %v5034 = vld [vmem:[%s5 + $0x19c] sm:$0xff]
  %v5035 = vld [vmem:[%s5 + $0x1a4] sm:$0xff]
  %v5036 = vld [vmem:[%s5 + $0x1ac] sm:$0xf]
  %v5037 = vld [vmem:[%s5 + $0x1b0] sm:$0xff]
  %v5038 = vld [vmem:[%s5 + $0x1b8] sm:$0xff]
  %v5039 = vld [vmem:[%s5 + $0x1c0] sm:$0xff]
  %v5040 = vld [vmem:[%s5 + $0x1c8] sm:$0xff]
  %v5041 = vld [vmem:[%s5 + $0x1d0] sm:$0xf]
  %v5042 = vld [vmem:[%s5 + $0x1d4] sm:$0xff]
  %v5043 = vld [vmem:[%s5 + $0x1dc] sm:$0xff]
  %v5044 = vld [vmem:[%s5 + $0x1e4] sm:$0xff]
  %v5045 = vld [vmem:[%s5 + $0x1ec] sm:$0xff]
  %v5046 = vld [vmem:[%s5 + $0x1f4] sm:$0xf]
  %v5047 = vld [vmem:[%s5 + $0x1f8] sm:$0xff]
  %v5048 = vld [vmem:[%s5 + $0x200] sm:$0xff]
  %v5049 = vld [vmem:[%s5 + $0x208] sm:$0xff]
  %v5050 = vld [vmem:[%s5 + $0x210] sm:$0xff]
  %v5051 = vld [vmem:[%s5 + $0x218] sm:$0xf]
  %v5052 = vld [vmem:[%s5 + $0x21c] sm:$0xff]
  %v5053 = vld [vmem:[%s5 + $0x224] sm:$0xff]
  %v5054 = vld [vmem:[%s5 + $0x22c] sm:$0xff]
  %v5055 = vld [vmem:[%s5 + $0x234] sm:$0xff]
  %v5056 = vld [vmem:[%s5 + $0x23c] sm:$0xf]
  %v5057 = vld [vmem:[%s5 + $0x240] sm:$0xff]
  %v5058 = vld [vmem:[%s5 + $0x248] sm:$0xff]
  %v5059 = vld [vmem:[%s5 + $0x250] sm:$0xff]
  %v5060 = vld [vmem:[%s5 + $0x258] sm:$0xff]
  %v5061 = vld [vmem:[%s5 + $0x260] sm:$0xf]
  %v5062 = vld [vmem:[%s5 + $0x264] sm:$0xff]
  %v5063 = vld [vmem:[%s5 + $0x26c] sm:$0xff]
  %v5064 = vld [vmem:[%s5 + $0x274] sm:$0xff]
  %v5065 = vld [vmem:[%s5 + $0x27c] sm:$0xff]
  %v5066 = vld [vmem:[%s5 + $0x284] sm:$0xf]
  %v5067 = vld [vmem:[%s5 + $0x288] sm:$0xff]
  %v5068 = vld [vmem:[%s5 + $0x290] sm:$0xff]
  %v5069 = vld [vmem:[%s5 + $0x298] sm:$0xff]
  %v5070 = vld [vmem:[%s5 + $0x2a0] sm:$0xff]
  %v5071 = vld [vmem:[%s5 + $0x2a8] sm:$0xf]
  %v5072 = vld [vmem:[%s5 + $0x2ac] sm:$0xff]
  %v5073 = vld [vmem:[%s5 + $0x2b4] sm:$0xff]
  %v5074 = vld [vmem:[%s5 + $0x2bc] sm:$0xff]
  %v5075 = vld [vmem:[%s5 + $0x2c4] sm:$0xff]
  %v5076 = vld [vmem:[%s5 + $0x2cc] sm:$0xf]
  %v5077 = vld [vmem:[%s5 + $0x2d0] sm:$0xff]
  %v5078 = vld [vmem:[%s5 + $0x2d8] sm:$0xff]
  %v5079 = vld [vmem:[%s5 + $0x2e0] sm:$0xff]
  %v5080 = vld [vmem:[%s5 + $0x2e8] sm:$0xff]
  %v5081 = vld [vmem:[%s5 + $0x2f0] sm:$0xf]
  %v5082 = vld [vmem:[%s5 + $0x2f4] sm:$0xff]
  %v5083 = vld [vmem:[%s5 + $0x2fc] sm:$0xff]
  %v5084 = vld [vmem:[%s5 + $0x304] sm:$0xff]
  %v5085 = vld [vmem:[%s5 + $0x30c] sm:$0xff]
  %v5086 = vld [vmem:[%s5 + $0x314] sm:$0xf]
  %v5087 = vld [vmem:[%s5 + $0x318] sm:$0xff]
  %v5088 = vld [vmem:[%s5 + $0x320] sm:$0xff]
  %v5089 = vld [vmem:[%s5 + $0x328] sm:$0xff]
  %v5090 = vld [vmem:[%s5 + $0x330] sm:$0xff]
  %v5091 = vld [vmem:[%s5 + $0x338] sm:$0xf]
  %v5092 = vld [vmem:[%s5 + $0x33c] sm:$0xff]
  %v5093 = vld [vmem:[%s5 + $0x344] sm:$0xff]
  %v5094 = vld [vmem:[%s5 + $0x34c] sm:$0xff]
  %v5095 = vld [vmem:[%s5 + $0x354] sm:$0xff]
  %v5096 = vld [vmem:[%s5 + $0x35c] sm:$0xf]
  %v5097 = vld [vmem:[%s5 + $0x360] sm:$0xff]
  %v5098 = vld [vmem:[%s5 + $0x368] sm:$0xff]
  %v5099 = vld [vmem:[%s5 + $0x370] sm:$0xff]
  %v5100 = vld [vmem:[%s5 + $0x378] sm:$0xff]
  %v5101 = vld [vmem:[%s5 + $0x380] sm:$0xf]
  %v5102 = vld [vmem:[%s5 + $0x384] sm:$0xff]
  %v5103 = vld [vmem:[%s5 + $0x38c] sm:$0xff]
  %v5104 = vld [vmem:[%s5 + $0x394] sm:$0xff]
  %v5105 = vld [vmem:[%s5 + $0x39c] sm:$0xff]
  %v5106 = vld [vmem:[%s5 + $0x3a4] sm:$0xf]
  %v5107 = vld [vmem:[%s5 + $0x3a8] sm:$0xff]
  %v5108 = vld [vmem:[%s5 + $0x3b0] sm:$0xff]
  %v5109 = vld [vmem:[%s5 + $0x3b8] sm:$0xff]
  %v5110 = vld [vmem:[%s5 + $0x3c0] sm:$0xff]
  %v5111 = vld [vmem:[%s5 + $0x3c8] sm:$0xf]
  %v5112 = vld [vmem:[%s5 + $0x3cc] sm:$0xff]
  %v5113 = vld [vmem:[%s5 + $0x3d4] sm:$0xff]
  %v5114 = vld [vmem:[%s5 + $0x3dc] sm:$0xff]
  %v5115 = vld [vmem:[%s5 + $0x3e4] sm:$0xff]
  %v5116 = vld [vmem:[%s5 + $0x3ec] sm:$0xf]
  %v5117 = vld [vmem:[%s5 + $0x3f0] sm:$0xff]
  %v5118 = vld [vmem:[%s5 + $0x3f8] sm:$0xff]
  %v5119 = vld [vmem:[%s5 + $0x400] sm:$0xff]
  %v5120 = vld [vmem:[%s5 + $0x408] sm:$0xff]
  %v5121 = vld [vmem:[%s5 + $0x410] sm:$0xf]
  %v5122 = vld [vmem:[%s5 + $0x414] sm:$0xff]
  %v5123 = vld [vmem:[%s5 + $0x41c] sm:$0xff]
  %v5124 = vld [vmem:[%s5 + $0x424] sm:$0xff]
  %v5125 = vld [vmem:[%s5 + $0x42c] sm:$0xff]
  %v5126 = vld [vmem:[%s5 + $0x434] sm:$0xf]
  %v5127 = vld [vmem:[%s5 + $0x438] sm:$0xff]
  %v5128 = vld [vmem:[%s5 + $0x440] sm:$0xff]
  %v5129 = vld [vmem:[%s5 + $0x448] sm:$0xff]
  %v5130 = vld [vmem:[%s5 + $0x450] sm:$0xff]
  %v5131 = vld [vmem:[%s5 + $0x458] sm:$0xf]
  %v5132 = vld [vmem:[%s5 + $0x45c] sm:$0xff]
  %v5133 = vld [vmem:[%s5 + $0x464] sm:$0xff]
  %v5134 = vld [vmem:[%s5 + $0x46c] sm:$0xff]
  %v5135 = vld [vmem:[%s5 + $0x474] sm:$0xff]
  %v5136 = vld [vmem:[%s5 + $0x47c] sm:$0xf]
  %v5137 = vld [vmem:[%s6] sm:$0xff]
  %v5138 = vld [vmem:[%s6 + $0x8] sm:$0xff]
  %v5139 = vld [vmem:[%s6 + $0x10] sm:$0xff]
  %v5140 = vld [vmem:[%s6 + $0x18] sm:$0xff]
  %v5141 = vld [vmem:[%s6 + $0x20] sm:$0xff]
  %v5142 = vld [vmem:[%s6 + $0x28] sm:$0xff]
  %v5143 = vld [vmem:[%s6 + $0x30] sm:$0xff]
  %v5144 = vld [vmem:[%s6 + $0x38] sm:$0xff]
  %v5145 = vld [vmem:[%s6 + $0x40] sm:$0xff]
  %v5146 = vld [vmem:[%s6 + $0x48] sm:$0xff]
  %v5147 = vld [vmem:[%s6 + $0x50] sm:$0xff]
  %v5148 = vld [vmem:[%s6 + $0x58] sm:$0xff]
  %v5149 = vld [vmem:[%s6 + $0x60] sm:$0xff]
  %v5150 = vld [vmem:[%s6 + $0x68] sm:$0xff]
  %v5151 = vld [vmem:[%s6 + $0x70] sm:$0xff]
  %v5152 = vld [vmem:[%s6 + $0x78] sm:$0xff]
  %v5153 = vld [vmem:[%s6 + $0x80] sm:$0xff]
  %v5154 = vld [vmem:[%s6 + $0x88] sm:$0xff]
  %v5155 = vld [vmem:[%s6 + $0x90] sm:$0xff]
  %v5156 = vld [vmem:[%s6 + $0x98] sm:$0xff]
  %v5157 = vld [vmem:[%s6 + $0xa0] sm:$0xff]
  %v5158 = vld [vmem:[%s6 + $0xa8] sm:$0xff]
  %v5159 = vld [vmem:[%s6 + $0xb0] sm:$0xff]
  %v5160 = vld [vmem:[%s6 + $0xb8] sm:$0xff]
  %v5161 = vld [vmem:[%s6 + $0xc0] sm:$0xff]
  %v5162 = vld [vmem:[%s6 + $0xc8] sm:$0xff]
  %v5163 = vld [vmem:[%s6 + $0xd0] sm:$0xff]
  %v5164 = vld [vmem:[%s6 + $0xd8] sm:$0xff]
  %v5165 = vld [vmem:[%s6 + $0xe0] sm:$0xff]
  %v5166 = vld [vmem:[%s6 + $0xe8] sm:$0xff]
  %v5167 = vld [vmem:[%s6 + $0xf0] sm:$0xff]
  %v5168 = vld [vmem:[%s6 + $0xf8] sm:$0xff]
  %5170 = vset.pattern.permute.xlu0 0
  %5171 = vperm.xlu0 %5170, %v5137
  %v5172 = vpop.permute.xlu0 %5171
  %5175 = vset.pattern.permute.xlu0 0
  %5176 = vperm.xlu0 %5175, %v5138
  %v5177 = vpop.permute.xlu0 %5176
  %5180 = vset.pattern.permute.xlu0 0
  %5181 = vperm.xlu0 %5180, %v5139
  %v5182 = vpop.permute.xlu0 %5181
  %5185 = vset.pattern.permute.xlu0 0
  %5186 = vperm.xlu0 %5185, %v5140
  %v5187 = vpop.permute.xlu0 %5186
  %5190 = vset.pattern.permute.xlu0 0
  %5191 = vperm.xlu0 %5190, %v5141
  %v5192 = vpop.permute.xlu0 %5191
  %5195 = vset.pattern.permute.xlu0 0
  %5196 = vperm.xlu0 %5195, %v5142
  %v5197 = vpop.permute.xlu0 %5196
  %5200 = vset.pattern.permute.xlu0 0
  %5201 = vperm.xlu0 %5200, %v5143
  %v5202 = vpop.permute.xlu0 %5201
  %5205 = vset.pattern.permute.xlu0 0
  %5206 = vperm.xlu0 %5205, %v5144
  %v5207 = vpop.permute.xlu0 %5206
  %5210 = vset.pattern.permute.xlu0 0
  %5211 = vperm.xlu0 %5210, %v5145
  %v5212 = vpop.permute.xlu0 %5211
  %5215 = vset.pattern.permute.xlu0 0
  %5216 = vperm.xlu0 %5215, %v5146
  %v5217 = vpop.permute.xlu0 %5216
  %5220 = vset.pattern.permute.xlu0 0
  %5221 = vperm.xlu0 %5220, %v5147
  %v5222 = vpop.permute.xlu0 %5221
  %5225 = vset.pattern.permute.xlu0 0
  %5226 = vperm.xlu0 %5225, %v5148
  %v5227 = vpop.permute.xlu0 %5226
  %5230 = vset.pattern.permute.xlu0 0
  %5231 = vperm.xlu0 %5230, %v5149
  %v5232 = vpop.permute.xlu0 %5231
  %5235 = vset.pattern.permute.xlu0 0
  %5236 = vperm.xlu0 %5235, %v5150
  %v5237 = vpop.permute.xlu0 %5236
  %5240 = vset.pattern.permute.xlu0 0
  %5241 = vperm.xlu0 %5240, %v5151
  %v5242 = vpop.permute.xlu0 %5241
  %5245 = vset.pattern.permute.xlu0 0
  %5246 = vperm.xlu0 %5245, %v5152
  %v5247 = vpop.permute.xlu0 %5246
  %5250 = vset.pattern.permute.xlu0 0
  %5251 = vperm.xlu0 %5250, %v5153
  %v5252 = vpop.permute.xlu0 %5251
  %5255 = vset.pattern.permute.xlu0 0
  %5256 = vperm.xlu0 %5255, %v5154
  %v5257 = vpop.permute.xlu0 %5256
  %5260 = vset.pattern.permute.xlu0 0
  %5261 = vperm.xlu0 %5260, %v5155
  %v5262 = vpop.permute.xlu0 %5261
  %5265 = vset.pattern.permute.xlu0 0
  %5266 = vperm.xlu0 %5265, %v5156
  %v5267 = vpop.permute.xlu0 %5266
  %5270 = vset.pattern.permute.xlu0 0
  %5271 = vperm.xlu0 %5270, %v5157
  %v5272 = vpop.permute.xlu0 %5271
  %5275 = vset.pattern.permute.xlu0 0
  %5276 = vperm.xlu0 %5275, %v5158
  %v5277 = vpop.permute.xlu0 %5276
  %5280 = vset.pattern.permute.xlu0 0
  %5281 = vperm.xlu0 %5280, %v5159
  %v5282 = vpop.permute.xlu0 %5281
  %5285 = vset.pattern.permute.xlu0 0
  %5286 = vperm.xlu0 %5285, %v5160
  %v5287 = vpop.permute.xlu0 %5286
  %5290 = vset.pattern.permute.xlu0 0
  %5291 = vperm.xlu0 %5290, %v5161
  %v5292 = vpop.permute.xlu0 %5291
  %5295 = vset.pattern.permute.xlu0 0
  %5296 = vperm.xlu0 %5295, %v5162
  %v5297 = vpop.permute.xlu0 %5296
  %5300 = vset.pattern.permute.xlu0 0
  %5301 = vperm.xlu0 %5300, %v5163
  %v5302 = vpop.permute.xlu0 %5301
  %5305 = vset.pattern.permute.xlu0 0
  %5306 = vperm.xlu0 %5305, %v5164
  %v5307 = vpop.permute.xlu0 %5306
  %5310 = vset.pattern.permute.xlu0 0
  %5311 = vperm.xlu0 %5310, %v5165
  %v5312 = vpop.permute.xlu0 %5311
  %5315 = vset.pattern.permute.xlu0 0
  %5316 = vperm.xlu0 %5315, %v5166
  %v5317 = vpop.permute.xlu0 %5316
  %5320 = vset.pattern.permute.xlu0 0
  %5321 = vperm.xlu0 %5320, %v5167
  %v5322 = vpop.permute.xlu0 %5321
  %5325 = vset.pattern.permute.xlu0 0
  %5326 = vperm.xlu0 %5325, %v5168
  %v5327 = vpop.permute.xlu0 %5326
  %v5489 = vunpack.c.l.b16 %v4977
  %v5490 = vunpack.c.h.b16 %v4977
  %v5491 = vunpack.c.l.b16 %v4978
  %v5492 = vunpack.c.h.b16 %v4978
  %v5493 = vunpack.c.l.b16 %v4979
  %v5494 = vunpack.c.h.b16 %v4979
  %v5495 = vunpack.c.l.b16 %v4980
  %v5496 = vunpack.c.h.b16 %v4980
  %v5497 = vunpack.c.l.b16 %v4981
  %v5498 = vunpack.c.l.b16 %v4982
  %v5499 = vunpack.c.h.b16 %v4982
  %v5500 = vunpack.c.l.b16 %v4983
  %v5501 = vunpack.c.h.b16 %v4983
  %v5502 = vunpack.c.l.b16 %v4984
  %v5503 = vunpack.c.h.b16 %v4984
  %v5504 = vunpack.c.l.b16 %v4985
  %v5505 = vunpack.c.h.b16 %v4985
  %v5506 = vunpack.c.l.b16 %v4986
  %v5507 = vunpack.c.l.b16 %v4987
  %v5508 = vunpack.c.h.b16 %v4987
  %v5509 = vunpack.c.l.b16 %v4988
  %v5510 = vunpack.c.h.b16 %v4988
  %v5511 = vunpack.c.l.b16 %v4989
  %v5512 = vunpack.c.h.b16 %v4989
  %v5513 = vunpack.c.l.b16 %v4990
  %v5514 = vunpack.c.h.b16 %v4990
  %v5515 = vunpack.c.l.b16 %v4991
  %v5516 = vunpack.c.l.b16 %v4992
  %v5517 = vunpack.c.h.b16 %v4992
  %v5518 = vunpack.c.l.b16 %v4993
  %v5519 = vunpack.c.h.b16 %v4993
  %v5520 = vunpack.c.l.b16 %v4994
  %v5521 = vunpack.c.h.b16 %v4994
  %v5522 = vunpack.c.l.b16 %v4995
  %v5523 = vunpack.c.h.b16 %v4995
  %v5524 = vunpack.c.l.b16 %v4996
  %v5525 = vunpack.c.l.b16 %v4997
  %v5526 = vunpack.c.h.b16 %v4997
  %v5527 = vunpack.c.l.b16 %v4998
  %v5528 = vunpack.c.h.b16 %v4998
  %v5529 = vunpack.c.l.b16 %v4999
  %v5530 = vunpack.c.h.b16 %v4999
  %v5531 = vunpack.c.l.b16 %v5000
  %v5532 = vunpack.c.h.b16 %v5000
  %v5533 = vunpack.c.l.b16 %v5001
  %v5534 = vunpack.c.l.b16 %v5002
  %v5535 = vunpack.c.h.b16 %v5002
  %v5536 = vunpack.c.l.b16 %v5003
  %v5537 = vunpack.c.h.b16 %v5003
  %v5538 = vunpack.c.l.b16 %v5004
  %v5539 = vunpack.c.h.b16 %v5004
  %v5540 = vunpack.c.l.b16 %v5005
  %v5541 = vunpack.c.h.b16 %v5005
  %v5542 = vunpack.c.l.b16 %v5006
  %v5543 = vunpack.c.l.b16 %v5007
  %v5544 = vunpack.c.h.b16 %v5007
  %v5545 = vunpack.c.l.b16 %v5008
  %v5546 = vunpack.c.h.b16 %v5008
  %v5547 = vunpack.c.l.b16 %v5009
  %v5548 = vunpack.c.h.b16 %v5009
  %v5549 = vunpack.c.l.b16 %v5010
  %v5550 = vunpack.c.h.b16 %v5010
  %v5551 = vunpack.c.l.b16 %v5011
  %v5552 = vunpack.c.l.b16 %v5012
  %v5553 = vunpack.c.h.b16 %v5012
  %v5554 = vunpack.c.l.b16 %v5013
  %v5555 = vunpack.c.h.b16 %v5013
  %v5556 = vunpack.c.l.b16 %v5014
  %v5557 = vunpack.c.h.b16 %v5014
  %v5558 = vunpack.c.l.b16 %v5015
  %v5559 = vunpack.c.h.b16 %v5015
  %v5560 = vunpack.c.l.b16 %v5016
  %v5561 = vunpack.c.l.b16 %v5017
  %v5562 = vunpack.c.h.b16 %v5017
  %v5563 = vunpack.c.l.b16 %v5018
  %v5564 = vunpack.c.h.b16 %v5018
  %v5565 = vunpack.c.l.b16 %v5019
  %v5566 = vunpack.c.h.b16 %v5019
  %v5567 = vunpack.c.l.b16 %v5020
  %v5568 = vunpack.c.h.b16 %v5020
  %v5569 = vunpack.c.l.b16 %v5021
  %v5570 = vunpack.c.l.b16 %v5022
  %v5571 = vunpack.c.h.b16 %v5022
  %v5572 = vunpack.c.l.b16 %v5023
  %v5573 = vunpack.c.h.b16 %v5023
  %v5574 = vunpack.c.l.b16 %v5024
  %v5575 = vunpack.c.h.b16 %v5024
  %v5576 = vunpack.c.l.b16 %v5025
  %v5577 = vunpack.c.h.b16 %v5025
  %v5578 = vunpack.c.l.b16 %v5026
  %v5579 = vunpack.c.l.b16 %v5027
  %v5580 = vunpack.c.h.b16 %v5027
  %v5581 = vunpack.c.l.b16 %v5028
  %v5582 = vunpack.c.h.b16 %v5028
  %v5583 = vunpack.c.l.b16 %v5029
  %v5584 = vunpack.c.h.b16 %v5029
  %v5585 = vunpack.c.l.b16 %v5030
  %v5586 = vunpack.c.h.b16 %v5030
  %v5587 = vunpack.c.l.b16 %v5031
  %v5588 = vunpack.c.l.b16 %v5032
  %v5589 = vunpack.c.h.b16 %v5032
  %v5590 = vunpack.c.l.b16 %v5033
  %v5591 = vunpack.c.h.b16 %v5033
  %v5592 = vunpack.c.l.b16 %v5034
  %v5593 = vunpack.c.h.b16 %v5034
  %v5594 = vunpack.c.l.b16 %v5035
  %v5595 = vunpack.c.h.b16 %v5035
  %v5596 = vunpack.c.l.b16 %v5036
  %v5597 = vunpack.c.l.b16 %v5037
  %v5598 = vunpack.c.h.b16 %v5037
  %v5599 = vunpack.c.l.b16 %v5038
  %v5600 = vunpack.c.h.b16 %v5038
  %v5601 = vunpack.c.l.b16 %v5039
  %v5602 = vunpack.c.h.b16 %v5039
  %v5603 = vunpack.c.l.b16 %v5040
  %v5604 = vunpack.c.h.b16 %v5040
  %v5605 = vunpack.c.l.b16 %v5041
  %v5606 = vunpack.c.l.b16 %v5042
  %v5607 = vunpack.c.h.b16 %v5042
  %v5608 = vunpack.c.l.b16 %v5043
  %v5609 = vunpack.c.h.b16 %v5043
  %v5610 = vunpack.c.l.b16 %v5044
  %v5611 = vunpack.c.h.b16 %v5044
  %v5612 = vunpack.c.l.b16 %v5045
  %v5613 = vunpack.c.h.b16 %v5045
  %v5614 = vunpack.c.l.b16 %v5046
  %v5615 = vunpack.c.l.b16 %v5047
  %v5616 = vunpack.c.h.b16 %v5047
  %v5617 = vunpack.c.l.b16 %v5048
  %v5618 = vunpack.c.h.b16 %v5048
  %v5619 = vunpack.c.l.b16 %v5049
  %v5620 = vunpack.c.h.b16 %v5049
  %v5621 = vunpack.c.l.b16 %v5050
  %v5622 = vunpack.c.h.b16 %v5050
  %v5623 = vunpack.c.l.b16 %v5051
  %v5624 = vunpack.c.l.b16 %v5052
  %v5625 = vunpack.c.h.b16 %v5052
  %v5626 = vunpack.c.l.b16 %v5053
  %v5627 = vunpack.c.h.b16 %v5053
  %v5628 = vunpack.c.l.b16 %v5054
  %v5629 = vunpack.c.h.b16 %v5054
  %v5630 = vunpack.c.l.b16 %v5055
  %v5631 = vunpack.c.h.b16 %v5055
  %v5632 = vunpack.c.l.b16 %v5056
  %v5633 = vunpack.c.l.b16 %v5057
  %v5634 = vunpack.c.h.b16 %v5057
  %v5635 = vunpack.c.l.b16 %v5058
  %v5636 = vunpack.c.h.b16 %v5058
  %v5637 = vunpack.c.l.b16 %v5059
  %v5638 = vunpack.c.h.b16 %v5059
  %v5639 = vunpack.c.l.b16 %v5060
  %v5640 = vunpack.c.h.b16 %v5060
  %v5641 = vunpack.c.l.b16 %v5061
  %v5642 = vunpack.c.l.b16 %v5062
  %v5643 = vunpack.c.h.b16 %v5062
  %v5644 = vunpack.c.l.b16 %v5063
  %v5645 = vunpack.c.h.b16 %v5063
  %v5646 = vunpack.c.l.b16 %v5064
  %v5647 = vunpack.c.h.b16 %v5064
  %v5648 = vunpack.c.l.b16 %v5065
  %v5649 = vunpack.c.h.b16 %v5065
  %v5650 = vunpack.c.l.b16 %v5066
  %v5651 = vunpack.c.l.b16 %v5067
  %v5652 = vunpack.c.h.b16 %v5067
  %v5653 = vunpack.c.l.b16 %v5068
  %v5654 = vunpack.c.h.b16 %v5068
  %v5655 = vunpack.c.l.b16 %v5069
  %v5656 = vunpack.c.h.b16 %v5069
  %v5657 = vunpack.c.l.b16 %v5070
  %v5658 = vunpack.c.h.b16 %v5070
  %v5659 = vunpack.c.l.b16 %v5071
  %v5660 = vunpack.c.l.b16 %v5072
  %v5661 = vunpack.c.h.b16 %v5072
  %v5662 = vunpack.c.l.b16 %v5073
  %v5663 = vunpack.c.h.b16 %v5073
  %v5664 = vunpack.c.l.b16 %v5074
  %v5665 = vunpack.c.h.b16 %v5074
  %v5666 = vunpack.c.l.b16 %v5075
  %v5667 = vunpack.c.h.b16 %v5075
  %v5668 = vunpack.c.l.b16 %v5076
  %v5669 = vunpack.c.l.b16 %v5077
  %v5670 = vunpack.c.h.b16 %v5077
  %v5671 = vunpack.c.l.b16 %v5078
  %v5672 = vunpack.c.h.b16 %v5078
  %v5673 = vunpack.c.l.b16 %v5079
  %v5674 = vunpack.c.h.b16 %v5079
  %v5675 = vunpack.c.l.b16 %v5080
  %v5676 = vunpack.c.h.b16 %v5080
  %v5677 = vunpack.c.l.b16 %v5081
  %v5678 = vunpack.c.l.b16 %v5082
  %v5679 = vunpack.c.h.b16 %v5082
  %v5680 = vunpack.c.l.b16 %v5083
  %v5681 = vunpack.c.h.b16 %v5083
  %v5682 = vunpack.c.l.b16 %v5084
  %v5683 = vunpack.c.h.b16 %v5084
  %v5684 = vunpack.c.l.b16 %v5085
  %v5685 = vunpack.c.h.b16 %v5085
  %v5686 = vunpack.c.l.b16 %v5086
  %v5687 = vunpack.c.l.b16 %v5087
  %v5688 = vunpack.c.h.b16 %v5087
  %v5689 = vunpack.c.l.b16 %v5088
  %v5690 = vunpack.c.h.b16 %v5088
  %v5691 = vunpack.c.l.b16 %v5089
  %v5692 = vunpack.c.h.b16 %v5089
  %v5693 = vunpack.c.l.b16 %v5090
  %v5694 = vunpack.c.h.b16 %v5090
  %v5695 = vunpack.c.l.b16 %v5091
  %v5696 = vunpack.c.l.b16 %v5092
  %v5697 = vunpack.c.h.b16 %v5092
  %v5698 = vunpack.c.l.b16 %v5093
  %v5699 = vunpack.c.h.b16 %v5093
  %v5700 = vunpack.c.l.b16 %v5094
  %v5701 = vunpack.c.h.b16 %v5094
  %v5702 = vunpack.c.l.b16 %v5095
  %v5703 = vunpack.c.h.b16 %v5095
  %v5704 = vunpack.c.l.b16 %v5096
  %v5705 = vunpack.c.l.b16 %v5097
  %v5706 = vunpack.c.h.b16 %v5097
  %v5707 = vunpack.c.l.b16 %v5098
  %v5708 = vunpack.c.h.b16 %v5098
  %v5709 = vunpack.c.l.b16 %v5099
  %v5710 = vunpack.c.h.b16 %v5099
  %v5711 = vunpack.c.l.b16 %v5100
  %v5712 = vunpack.c.h.b16 %v5100
  %v5713 = vunpack.c.l.b16 %v5101
  %v5714 = vunpack.c.l.b16 %v5102
  %v5715 = vunpack.c.h.b16 %v5102
  %v5716 = vunpack.c.l.b16 %v5103
  %v5717 = vunpack.c.h.b16 %v5103
  %v5718 = vunpack.c.l.b16 %v5104
  %v5719 = vunpack.c.h.b16 %v5104
  %v5720 = vunpack.c.l.b16 %v5105
  %v5721 = vunpack.c.h.b16 %v5105
  %v5722 = vunpack.c.l.b16 %v5106
  %v5723 = vunpack.c.l.b16 %v5107
  %v5724 = vunpack.c.h.b16 %v5107
  %v5725 = vunpack.c.l.b16 %v5108
  %v5726 = vunpack.c.h.b16 %v5108
  %v5727 = vunpack.c.l.b16 %v5109
  %v5728 = vunpack.c.h.b16 %v5109
  %v5729 = vunpack.c.l.b16 %v5110
  %v5730 = vunpack.c.h.b16 %v5110
  %v5731 = vunpack.c.l.b16 %v5111
  %v5732 = vunpack.c.l.b16 %v5112
  %v5733 = vunpack.c.h.b16 %v5112
  %v5734 = vunpack.c.l.b16 %v5113
  %v5735 = vunpack.c.h.b16 %v5113
  %v5736 = vunpack.c.l.b16 %v5114
  %v5737 = vunpack.c.h.b16 %v5114
  %v5738 = vunpack.c.l.b16 %v5115
  %v5739 = vunpack.c.h.b16 %v5115
  %v5740 = vunpack.c.l.b16 %v5116
  %v5741 = vunpack.c.l.b16 %v5117
  %v5742 = vunpack.c.h.b16 %v5117
  %v5743 = vunpack.c.l.b16 %v5118
  %v5744 = vunpack.c.h.b16 %v5118
  %v5745 = vunpack.c.l.b16 %v5119
  %v5746 = vunpack.c.h.b16 %v5119
  %v5747 = vunpack.c.l.b16 %v5120
  %v5748 = vunpack.c.h.b16 %v5120
  %v5749 = vunpack.c.l.b16 %v5121
  %v5750 = vunpack.c.l.b16 %v5122
  %v5751 = vunpack.c.h.b16 %v5122
  %v5752 = vunpack.c.l.b16 %v5123
  %v5753 = vunpack.c.h.b16 %v5123
  %v5754 = vunpack.c.l.b16 %v5124
  %v5755 = vunpack.c.h.b16 %v5124
  %v5756 = vunpack.c.l.b16 %v5125
  %v5757 = vunpack.c.h.b16 %v5125
  %v5758 = vunpack.c.l.b16 %v5126
  %v5759 = vunpack.c.l.b16 %v5127
  %v5760 = vunpack.c.h.b16 %v5127
  %v5761 = vunpack.c.l.b16 %v5128
  %v5762 = vunpack.c.h.b16 %v5128
  %v5763 = vunpack.c.l.b16 %v5129
  %v5764 = vunpack.c.h.b16 %v5129
  %v5765 = vunpack.c.l.b16 %v5130
  %v5766 = vunpack.c.h.b16 %v5130
  %v5767 = vunpack.c.l.b16 %v5131
  %v5768 = vunpack.c.l.b16 %v5132
  %v5769 = vunpack.c.h.b16 %v5132
  %v5770 = vunpack.c.l.b16 %v5133
  %v5771 = vunpack.c.h.b16 %v5133
  %v5772 = vunpack.c.l.b16 %v5134
  %v5773 = vunpack.c.h.b16 %v5134
  %v5774 = vunpack.c.l.b16 %v5135
  %v5775 = vunpack.c.h.b16 %v5135
  %v5776 = vunpack.c.l.b16 %v5136
  %v5777 = vpack.c.b16 %v5498, %v5489
  %v5778 = vpack.c.b16 %v5499, %v5490
  %v5779 = vpack.c.b16 %v5500, %v5491
  %v5780 = vpack.c.b16 %v5501, %v5492
  %v5781 = vpack.c.b16 %v5502, %v5493
  %v5782 = vpack.c.b16 %v5503, %v5494
  %v5783 = vpack.c.b16 %v5504, %v5495
  %v5784 = vpack.c.b16 %v5505, %v5496
  %v5785 = vpack.c.b16 %v5506, %v5497
  %v5786 = vpack.c.b16 %v5516, %v5507
  %v5787 = vpack.c.b16 %v5517, %v5508
  %v5788 = vpack.c.b16 %v5518, %v5509
  %v5789 = vpack.c.b16 %v5519, %v5510
  %v5790 = vpack.c.b16 %v5520, %v5511
  %v5791 = vpack.c.b16 %v5521, %v5512
  %v5792 = vpack.c.b16 %v5522, %v5513
  %v5793 = vpack.c.b16 %v5523, %v5514
  %v5794 = vpack.c.b16 %v5524, %v5515
  %v5795 = vpack.c.b16 %v5534, %v5525
  %v5796 = vpack.c.b16 %v5535, %v5526
  %v5797 = vpack.c.b16 %v5536, %v5527
  %v5798 = vpack.c.b16 %v5537, %v5528
  %v5799 = vpack.c.b16 %v5538, %v5529
  %v5800 = vpack.c.b16 %v5539, %v5530
  %v5801 = vpack.c.b16 %v5540, %v5531
  %v5802 = vpack.c.b16 %v5541, %v5532
  %v5803 = vpack.c.b16 %v5542, %v5533
  %v5804 = vpack.c.b16 %v5552, %v5543
  %v5805 = vpack.c.b16 %v5553, %v5544
  %v5806 = vpack.c.b16 %v5554, %v5545
  %v5807 = vpack.c.b16 %v5555, %v5546
  %v5808 = vpack.c.b16 %v5556, %v5547
  %v5809 = vpack.c.b16 %v5557, %v5548
  %v5810 = vpack.c.b16 %v5558, %v5549
  %v5811 = vpack.c.b16 %v5559, %v5550
  %v5812 = vpack.c.b16 %v5560, %v5551
  %v5813 = vpack.c.b16 %v5570, %v5561
  %v5814 = vpack.c.b16 %v5571, %v5562
  %v5815 = vpack.c.b16 %v5572, %v5563
  %v5816 = vpack.c.b16 %v5573, %v5564
  %v5817 = vpack.c.b16 %v5574, %v5565
  %v5818 = vpack.c.b16 %v5575, %v5566
  %v5819 = vpack.c.b16 %v5576, %v5567
  %v5820 = vpack.c.b16 %v5577, %v5568
  %v5821 = vpack.c.b16 %v5578, %v5569
  %v5822 = vpack.c.b16 %v5588, %v5579
  %v5823 = vpack.c.b16 %v5589, %v5580
  %v5824 = vpack.c.b16 %v5590, %v5581
  %v5825 = vpack.c.b16 %v5591, %v5582
  %v5826 = vpack.c.b16 %v5592, %v5583
  %v5827 = vpack.c.b16 %v5593, %v5584
  %v5828 = vpack.c.b16 %v5594, %v5585
  %v5829 = vpack.c.b16 %v5595, %v5586
  %v5830 = vpack.c.b16 %v5596, %v5587
  %v5831 = vpack.c.b16 %v5606, %v5597
  %v5832 = vpack.c.b16 %v5607, %v5598
  %v5833 = vpack.c.b16 %v5608, %v5599
  %v5834 = vpack.c.b16 %v5609, %v5600
  %v5835 = vpack.c.b16 %v5610, %v5601
  %v5836 = vpack.c.b16 %v5611, %v5602
  %v5837 = vpack.c.b16 %v5612, %v5603
  %v5838 = vpack.c.b16 %v5613, %v5604
  %v5839 = vpack.c.b16 %v5614, %v5605
  %v5840 = vpack.c.b16 %v5624, %v5615
  %v5841 = vpack.c.b16 %v5625, %v5616
  %v5842 = vpack.c.b16 %v5626, %v5617
  %v5843 = vpack.c.b16 %v5627, %v5618
  %v5844 = vpack.c.b16 %v5628, %v5619
  %v5845 = vpack.c.b16 %v5629, %v5620
  %v5846 = vpack.c.b16 %v5630, %v5621
  %v5847 = vpack.c.b16 %v5631, %v5622
  %v5848 = vpack.c.b16 %v5632, %v5623
  %v5849 = vpack.c.b16 %v5642, %v5633
  %v5850 = vpack.c.b16 %v5643, %v5634
  %v5851 = vpack.c.b16 %v5644, %v5635
  %v5852 = vpack.c.b16 %v5645, %v5636
  %v5853 = vpack.c.b16 %v5646, %v5637
  %v5854 = vpack.c.b16 %v5647, %v5638
  %v5855 = vpack.c.b16 %v5648, %v5639
  %v5856 = vpack.c.b16 %v5649, %v5640
  %v5857 = vpack.c.b16 %v5650, %v5641
  %v5858 = vpack.c.b16 %v5660, %v5651
  %v5859 = vpack.c.b16 %v5661, %v5652
  %v5860 = vpack.c.b16 %v5662, %v5653
  %v5861 = vpack.c.b16 %v5663, %v5654
  %v5862 = vpack.c.b16 %v5664, %v5655
  %v5863 = vpack.c.b16 %v5665, %v5656
  %v5864 = vpack.c.b16 %v5666, %v5657
  %v5865 = vpack.c.b16 %v5667, %v5658
  %v5866 = vpack.c.b16 %v5668, %v5659
  %v5867 = vpack.c.b16 %v5678, %v5669
  %v5868 = vpack.c.b16 %v5679, %v5670
  %v5869 = vpack.c.b16 %v5680, %v5671
  %v5870 = vpack.c.b16 %v5681, %v5672
  %v5871 = vpack.c.b16 %v5682, %v5673
  %v5872 = vpack.c.b16 %v5683, %v5674
  %v5873 = vpack.c.b16 %v5684, %v5675
  %v5874 = vpack.c.b16 %v5685, %v5676
  %v5875 = vpack.c.b16 %v5686, %v5677
  %v5876 = vpack.c.b16 %v5696, %v5687
  %v5877 = vpack.c.b16 %v5697, %v5688
  %v5878 = vpack.c.b16 %v5698, %v5689
  %v5879 = vpack.c.b16 %v5699, %v5690
  %v5880 = vpack.c.b16 %v5700, %v5691
  %v5881 = vpack.c.b16 %v5701, %v5692
  %v5882 = vpack.c.b16 %v5702, %v5693
  %v5883 = vpack.c.b16 %v5703, %v5694
  %v5884 = vpack.c.b16 %v5704, %v5695
  %v5885 = vpack.c.b16 %v5714, %v5705
  %v5886 = vpack.c.b16 %v5715, %v5706
  %v5887 = vpack.c.b16 %v5716, %v5707
  %v5888 = vpack.c.b16 %v5717, %v5708
  %v5889 = vpack.c.b16 %v5718, %v5709
  %v5890 = vpack.c.b16 %v5719, %v5710
  %v5891 = vpack.c.b16 %v5720, %v5711
  %v5892 = vpack.c.b16 %v5721, %v5712
  %v5893 = vpack.c.b16 %v5722, %v5713
  %v5894 = vpack.c.b16 %v5732, %v5723
  %v5895 = vpack.c.b16 %v5733, %v5724
  %v5896 = vpack.c.b16 %v5734, %v5725
  %v5897 = vpack.c.b16 %v5735, %v5726
  %v5898 = vpack.c.b16 %v5736, %v5727
  %v5899 = vpack.c.b16 %v5737, %v5728
  %v5900 = vpack.c.b16 %v5738, %v5729
  %v5901 = vpack.c.b16 %v5739, %v5730
  %v5902 = vpack.c.b16 %v5740, %v5731
  %v5903 = vpack.c.b16 %v5750, %v5741
  %v5904 = vpack.c.b16 %v5751, %v5742
  %v5905 = vpack.c.b16 %v5752, %v5743
  %v5906 = vpack.c.b16 %v5753, %v5744
  %v5907 = vpack.c.b16 %v5754, %v5745
  %v5908 = vpack.c.b16 %v5755, %v5746
  %v5909 = vpack.c.b16 %v5756, %v5747
  %v5910 = vpack.c.b16 %v5757, %v5748
  %v5911 = vpack.c.b16 %v5758, %v5749
  %v5912 = vpack.c.b16 %v5768, %v5759
  %v5913 = vpack.c.b16 %v5769, %v5760
  %v5914 = vpack.c.b16 %v5770, %v5761
  %v5915 = vpack.c.b16 %v5771, %v5762
  %v5916 = vpack.c.b16 %v5772, %v5763
  %v5917 = vpack.c.b16 %v5773, %v5764
  %v5918 = vpack.c.b16 %v5774, %v5765
  %v5919 = vpack.c.b16 %v5775, %v5766
  %v5920 = vpack.c.b16 %v5776, %v5767
  %6065 = vmatpush.bf16.msra.mxu0 %v4119
  %6066 = vmatpush.bf16.msra.mxu0 %v4117
  %6067 = vmatpush.bf16.msra.mxu0 %v4115
  %6068 = vmatpush.bf16.msra.mxu0 %v4113
  %6069 = vmatpush.bf16.msra.mxu0 %v4111
  %6070 = vmatpush.bf16.msra.mxu0 %v4109
  %6071 = vmatpush.bf16.msra.mxu0 %v4107
  %6072 = vmatpush.bf16.msra.mxu0 %v4105
  %6073 = vmatmul.bf16.gmra.mxu0 %v5777
  %v6074 = vpop.f32.mrf.mxu0
  %v6075 = vadd.f32 %v5172, %v6074
  %v6076 = vpop.f32.mrf.mxu0
  %v6077 = vadd.f32 %v5177, %v6076
  %6078 = vmatmul.bf16.gmra.mxu0 %v5786
  %v6079 = vpop.f32.mrf.mxu0
  %v6080 = vadd.f32 %v5182, %v6079
  %v6081 = vpop.f32.mrf.mxu0
  %v6082 = vadd.f32 %v5187, %v6081
  %6083 = vmatmul.bf16.gmra.mxu0 %v5795
  %v6084 = vpop.f32.mrf.mxu0
  %v6085 = vadd.f32 %v5192, %v6084
  %v6086 = vpop.f32.mrf.mxu0
  %v6087 = vadd.f32 %v5197, %v6086
  %6088 = vmatmul.bf16.gmra.mxu0 %v5804
  %v6089 = vpop.f32.mrf.mxu0
  %v6090 = vadd.f32 %v5202, %v6089
  %v6091 = vpop.f32.mrf.mxu0
  %v6092 = vadd.f32 %v5207, %v6091
  %6093 = vmatmul.bf16.gmra.mxu0 %v5813
  %v6094 = vpop.f32.mrf.mxu0
  %v6095 = vadd.f32 %v5212, %v6094
  %v6096 = vpop.f32.mrf.mxu0
  %v6097 = vadd.f32 %v5217, %v6096
  %6098 = vmatmul.bf16.gmra.mxu0 %v5822
  %v6099 = vpop.f32.mrf.mxu0
  %v6100 = vadd.f32 %v5222, %v6099
  %v6101 = vpop.f32.mrf.mxu0
  %v6102 = vadd.f32 %v5227, %v6101
  %6103 = vmatmul.bf16.gmra.mxu0 %v5831
  %v6104 = vpop.f32.mrf.mxu0
  %v6105 = vadd.f32 %v5232, %v6104
  %v6106 = vpop.f32.mrf.mxu0
  %v6107 = vadd.f32 %v5237, %v6106
  %6108 = vmatmul.bf16.gmra.mxu0 %v5840
  %v6109 = vpop.f32.mrf.mxu0
  %v6110 = vadd.f32 %v5242, %v6109
  %v6111 = vpop.f32.mrf.mxu0
  %v6112 = vadd.f32 %v5247, %v6111
  %6113 = vmatmul.bf16.gmra.mxu0 %v5849
  %v6114 = vpop.f32.mrf.mxu0
  %v6115 = vadd.f32 %v5252, %v6114
  %v6116 = vpop.f32.mrf.mxu0
  %v6117 = vadd.f32 %v5257, %v6116
  %6118 = vmatmul.bf16.gmra.mxu0 %v5858
  %v6119 = vpop.f32.mrf.mxu0
  %v6120 = vadd.f32 %v5262, %v6119
  %v6121 = vpop.f32.mrf.mxu0
  %v6122 = vadd.f32 %v5267, %v6121
  %6123 = vmatmul.bf16.gmra.mxu0 %v5867
  %v6124 = vpop.f32.mrf.mxu0
  %v6125 = vadd.f32 %v5272, %v6124
  %v6126 = vpop.f32.mrf.mxu0
  %v6127 = vadd.f32 %v5277, %v6126
  %6128 = vmatmul.bf16.gmra.mxu0 %v5876
  %v6129 = vpop.f32.mrf.mxu0
  %v6130 = vadd.f32 %v5282, %v6129
  %v6131 = vpop.f32.mrf.mxu0
  %v6132 = vadd.f32 %v5287, %v6131
  %6133 = vmatmul.bf16.gmra.mxu0 %v5885
  %v6134 = vpop.f32.mrf.mxu0
  %v6135 = vadd.f32 %v5292, %v6134
  %v6136 = vpop.f32.mrf.mxu0
  %v6137 = vadd.f32 %v5297, %v6136
  %6138 = vmatmul.bf16.gmra.mxu0 %v5894
  %v6139 = vpop.f32.mrf.mxu0
  %v6140 = vadd.f32 %v5302, %v6139
  %v6141 = vpop.f32.mrf.mxu0
  %v6142 = vadd.f32 %v5307, %v6141
  %6143 = vmatmul.bf16.gmra.mxu0 %v5903
  %v6144 = vpop.f32.mrf.mxu0
  %v6145 = vadd.f32 %v5312, %v6144
  %v6146 = vpop.f32.mrf.mxu0
  %v6147 = vadd.f32 %v5317, %v6146
  %6148 = vmatmul.bf16.gmra.mxu0 %v5912
  %v6149 = vpop.f32.mrf.mxu0
  %v6150 = vadd.f32 %v5322, %v6149
  %v6151 = vpop.f32.mrf.mxu0
  %v6152 = vadd.f32 %v5327, %v6151
  %6153 = vdwg.mxu0
  %6154 = vmatpush.bf16.msra.mxu0 %v4241
  %6155 = vmatpush.bf16.msra.mxu0 %v4240
  %6156 = vmatpush.bf16.msra.mxu0 %v4239
  %6157 = vmatpush.bf16.msra.mxu0 %v4238
  %6158 = vmatpush.bf16.msra.mxu0 %v4237
  %6159 = vmatpush.bf16.msra.mxu0 %v4236
  %6160 = vmatpush.bf16.msra.mxu0 %v4235
  %6161 = vmatpush.bf16.msra.mxu0 %v4234
  %6162 = vmatmul.bf16.gmra.mxu0 %v5778
  %v6163 = vpop.f32.mrf.mxu0
  %v6164 = vadd.f32 %v6075, %v6163
  %v6165 = vpop.f32.mrf.mxu0
  %v6166 = vadd.f32 %v6077, %v6165
  %6167 = vmatmul.bf16.gmra.mxu0 %v5787
  %v6168 = vpop.f32.mrf.mxu0
  %v6169 = vadd.f32 %v6080, %v6168
  %v6170 = vpop.f32.mrf.mxu0
  %v6171 = vadd.f32 %v6082, %v6170
  %6172 = vmatmul.bf16.gmra.mxu0 %v5796
  %v6173 = vpop.f32.mrf.mxu0
  %v6174 = vadd.f32 %v6085, %v6173
  %v6175 = vpop.f32.mrf.mxu0
  %v6176 = vadd.f32 %v6087, %v6175
  %6177 = vmatmul.bf16.gmra.mxu0 %v5805
  %v6178 = vpop.f32.mrf.mxu0
  %v6179 = vadd.f32 %v6090, %v6178
  %v6180 = vpop.f32.mrf.mxu0
  %v6181 = vadd.f32 %v6092, %v6180
  %6182 = vmatmul.bf16.gmra.mxu0 %v5814
  %v6183 = vpop.f32.mrf.mxu0
  %v6184 = vadd.f32 %v6095, %v6183
  %v6185 = vpop.f32.mrf.mxu0
  %v6186 = vadd.f32 %v6097, %v6185
  %6187 = vmatmul.bf16.gmra.mxu0 %v5823
  %v6188 = vpop.f32.mrf.mxu0
  %v6189 = vadd.f32 %v6100, %v6188
  %v6190 = vpop.f32.mrf.mxu0
  %v6191 = vadd.f32 %v6102, %v6190
  %6192 = vmatmul.bf16.gmra.mxu0 %v5832
  %v6193 = vpop.f32.mrf.mxu0
  %v6194 = vadd.f32 %v6105, %v6193
  %v6195 = vpop.f32.mrf.mxu0
  %v6196 = vadd.f32 %v6107, %v6195
  %6197 = vmatmul.bf16.gmra.mxu0 %v5841
  %v6198 = vpop.f32.mrf.mxu0
  %v6199 = vadd.f32 %v6110, %v6198
  %v6200 = vpop.f32.mrf.mxu0
  %v6201 = vadd.f32 %v6112, %v6200
  %6202 = vmatmul.bf16.gmra.mxu0 %v5850
  %v6203 = vpop.f32.mrf.mxu0
  %v6204 = vadd.f32 %v6115, %v6203
  %v6205 = vpop.f32.mrf.mxu0
  %v6206 = vadd.f32 %v6117, %v6205
  %6207 = vmatmul.bf16.gmra.mxu0 %v5859
  %v6208 = vpop.f32.mrf.mxu0
  %v6209 = vadd.f32 %v6120, %v6208
  %v6210 = vpop.f32.mrf.mxu0
  %v6211 = vadd.f32 %v6122, %v6210
  %6212 = vmatmul.bf16.gmra.mxu0 %v5868
  %v6213 = vpop.f32.mrf.mxu0
  %v6214 = vadd.f32 %v6125, %v6213
  %v6215 = vpop.f32.mrf.mxu0
  %v6216 = vadd.f32 %v6127, %v6215
  %6217 = vmatmul.bf16.gmra.mxu0 %v5877
  %v6218 = vpop.f32.mrf.mxu0
  %v6219 = vadd.f32 %v6130, %v6218
  %v6220 = vpop.f32.mrf.mxu0
  %v6221 = vadd.f32 %v6132, %v6220
  %6222 = vmatmul.bf16.gmra.mxu0 %v5886
  %v6223 = vpop.f32.mrf.mxu0
  %v6224 = vadd.f32 %v6135, %v6223
  %v6225 = vpop.f32.mrf.mxu0
  %v6226 = vadd.f32 %v6137, %v6225
  %6227 = vmatmul.bf16.gmra.mxu0 %v5895
  %v6228 = vpop.f32.mrf.mxu0
  %v6229 = vadd.f32 %v6140, %v6228
  %v6230 = vpop.f32.mrf.mxu0
  %v6231 = vadd.f32 %v6142, %v6230
  %6232 = vmatmul.bf16.gmra.mxu0 %v5904
  %v6233 = vpop.f32.mrf.mxu0
  %v6234 = vadd.f32 %v6145, %v6233
  %v6235 = vpop.f32.mrf.mxu0
  %v6236 = vadd.f32 %v6147, %v6235
  %6237 = vmatmul.bf16.gmra.mxu0 %v5913
  %v6238 = vpop.f32.mrf.mxu0
  %v6239 = vadd.f32 %v6150, %v6238
  %v6240 = vpop.f32.mrf.mxu0
  %v6241 = vadd.f32 %v6152, %v6240
  %6242 = vdwg.mxu0
  %6243 = vmatpush.bf16.msra.mxu0 %v4362
  %6244 = vmatpush.bf16.msra.mxu0 %v4361
  %6245 = vmatpush.bf16.msra.mxu0 %v4360
  %6246 = vmatpush.bf16.msra.mxu0 %v4359
  %6247 = vmatpush.bf16.msra.mxu0 %v4358
  %6248 = vmatpush.bf16.msra.mxu0 %v4357
  %6249 = vmatpush.bf16.msra.mxu0 %v4356
  %6250 = vmatpush.bf16.msra.mxu0 %v4355
  %6251 = vmatmul.bf16.gmra.mxu0 %v5779
  %v6252 = vpop.f32.mrf.mxu0
  %v6253 = vadd.f32 %v6164, %v6252
  %v6254 = vpop.f32.mrf.mxu0
  %v6255 = vadd.f32 %v6166, %v6254
  %6256 = vmatmul.bf16.gmra.mxu0 %v5788
  %v6257 = vpop.f32.mrf.mxu0
  %v6258 = vadd.f32 %v6169, %v6257
  %v6259 = vpop.f32.mrf.mxu0
  %v6260 = vadd.f32 %v6171, %v6259
  %6261 = vmatmul.bf16.gmra.mxu0 %v5797
  %v6262 = vpop.f32.mrf.mxu0
  %v6263 = vadd.f32 %v6174, %v6262
  %v6264 = vpop.f32.mrf.mxu0
  %v6265 = vadd.f32 %v6176, %v6264
  %6266 = vmatmul.bf16.gmra.mxu0 %v5806
  %v6267 = vpop.f32.mrf.mxu0
  %v6268 = vadd.f32 %v6179, %v6267
  %v6269 = vpop.f32.mrf.mxu0
  %v6270 = vadd.f32 %v6181, %v6269
  %6271 = vmatmul.bf16.gmra.mxu0 %v5815
  %v6272 = vpop.f32.mrf.mxu0
  %v6273 = vadd.f32 %v6184, %v6272
  %v6274 = vpop.f32.mrf.mxu0
  %v6275 = vadd.f32 %v6186, %v6274
  %6276 = vmatmul.bf16.gmra.mxu0 %v5824
  %v6277 = vpop.f32.mrf.mxu0
  %v6278 = vadd.f32 %v6189, %v6277
  %v6279 = vpop.f32.mrf.mxu0
  %v6280 = vadd.f32 %v6191, %v6279
  %6281 = vmatmul.bf16.gmra.mxu0 %v5833
  %v6282 = vpop.f32.mrf.mxu0
  %v6283 = vadd.f32 %v6194, %v6282
  %v6284 = vpop.f32.mrf.mxu0
  %v6285 = vadd.f32 %v6196, %v6284
  %6286 = vmatmul.bf16.gmra.mxu0 %v5842
  %v6287 = vpop.f32.mrf.mxu0
  %v6288 = vadd.f32 %v6199, %v6287
  %v6289 = vpop.f32.mrf.mxu0
  %v6290 = vadd.f32 %v6201, %v6289
  %6291 = vmatmul.bf16.gmra.mxu0 %v5851
  %v6292 = vpop.f32.mrf.mxu0
  %v6293 = vadd.f32 %v6204, %v6292
  %v6294 = vpop.f32.mrf.mxu0
  %v6295 = vadd.f32 %v6206, %v6294
  %6296 = vmatmul.bf16.gmra.mxu0 %v5860
  %v6297 = vpop.f32.mrf.mxu0
  %v6298 = vadd.f32 %v6209, %v6297
  %v6299 = vpop.f32.mrf.mxu0
  %v6300 = vadd.f32 %v6211, %v6299
  %6301 = vmatmul.bf16.gmra.mxu0 %v5869
  %v6302 = vpop.f32.mrf.mxu0
  %v6303 = vadd.f32 %v6214, %v6302
  %v6304 = vpop.f32.mrf.mxu0
  %v6305 = vadd.f32 %v6216, %v6304
  %6306 = vmatmul.bf16.gmra.mxu0 %v5878
  %v6307 = vpop.f32.mrf.mxu0
  %v6308 = vadd.f32 %v6219, %v6307
  %v6309 = vpop.f32.mrf.mxu0
  %v6310 = vadd.f32 %v6221, %v6309
  %6311 = vmatmul.bf16.gmra.mxu0 %v5887
  %v6312 = vpop.f32.mrf.mxu0
  %v6313 = vadd.f32 %v6224, %v6312
  %v6314 = vpop.f32.mrf.mxu0
  %v6315 = vadd.f32 %v6226, %v6314
  %6316 = vmatmul.bf16.gmra.mxu0 %v5896
  %v6317 = vpop.f32.mrf.mxu0
  %v6318 = vadd.f32 %v6229, %v6317
  %v6319 = vpop.f32.mrf.mxu0
  %v6320 = vadd.f32 %v6231, %v6319
  %6321 = vmatmul.bf16.gmra.mxu0 %v5905
  %v6322 = vpop.f32.mrf.mxu0
  %v6323 = vadd.f32 %v6234, %v6322
  %v6324 = vpop.f32.mrf.mxu0
  %v6325 = vadd.f32 %v6236, %v6324
  %6326 = vmatmul.bf16.gmra.mxu0 %v5914
  %v6327 = vpop.f32.mrf.mxu0
  %v6328 = vadd.f32 %v6239, %v6327
  %v6329 = vpop.f32.mrf.mxu0
  %v6330 = vadd.f32 %v6241, %v6329
  %6331 = vdwg.mxu0
  %6332 = vmatpush.bf16.msra.mxu0 %v4483
  %6333 = vmatpush.bf16.msra.mxu0 %v4482
  %6334 = vmatpush.bf16.msra.mxu0 %v4481
  %6335 = vmatpush.bf16.msra.mxu0 %v4480
  %6336 = vmatpush.bf16.msra.mxu0 %v4479
  %6337 = vmatpush.bf16.msra.mxu0 %v4478
  %6338 = vmatpush.bf16.msra.mxu0 %v4477
  %6339 = vmatpush.bf16.msra.mxu0 %v4476
  %6340 = vmatmul.bf16.gmra.mxu0 %v5780
  %v6341 = vpop.f32.mrf.mxu0
  %v6342 = vadd.f32 %v6253, %v6341
  %v6343 = vpop.f32.mrf.mxu0
  %v6344 = vadd.f32 %v6255, %v6343
  %6345 = vmatmul.bf16.gmra.mxu0 %v5789
  %v6346 = vpop.f32.mrf.mxu0
  %v6347 = vadd.f32 %v6258, %v6346
  %v6348 = vpop.f32.mrf.mxu0
  %v6349 = vadd.f32 %v6260, %v6348
  %6350 = vmatmul.bf16.gmra.mxu0 %v5798
  %v6351 = vpop.f32.mrf.mxu0
  %v6352 = vadd.f32 %v6263, %v6351
  %v6353 = vpop.f32.mrf.mxu0
  %v6354 = vadd.f32 %v6265, %v6353
  %6355 = vmatmul.bf16.gmra.mxu0 %v5807
  %v6356 = vpop.f32.mrf.mxu0
  %v6357 = vadd.f32 %v6268, %v6356
  %v6358 = vpop.f32.mrf.mxu0
  %v6359 = vadd.f32 %v6270, %v6358
  %6360 = vmatmul.bf16.gmra.mxu0 %v5816
  %v6361 = vpop.f32.mrf.mxu0
  %v6362 = vadd.f32 %v6273, %v6361
  %v6363 = vpop.f32.mrf.mxu0
  %v6364 = vadd.f32 %v6275, %v6363
  %6365 = vmatmul.bf16.gmra.mxu0 %v5825
  %v6366 = vpop.f32.mrf.mxu0
  %v6367 = vadd.f32 %v6278, %v6366
  %v6368 = vpop.f32.mrf.mxu0
  %v6369 = vadd.f32 %v6280, %v6368
  %6370 = vmatmul.bf16.gmra.mxu0 %v5834
  %v6371 = vpop.f32.mrf.mxu0
  %v6372 = vadd.f32 %v6283, %v6371
  %v6373 = vpop.f32.mrf.mxu0
  %v6374 = vadd.f32 %v6285, %v6373
  %6375 = vmatmul.bf16.gmra.mxu0 %v5843
  %v6376 = vpop.f32.mrf.mxu0
  %v6377 = vadd.f32 %v6288, %v6376
  %v6378 = vpop.f32.mrf.mxu0
  %v6379 = vadd.f32 %v6290, %v6378
  %6380 = vmatmul.bf16.gmra.mxu0 %v5852
  %v6381 = vpop.f32.mrf.mxu0
  %v6382 = vadd.f32 %v6293, %v6381
  %v6383 = vpop.f32.mrf.mxu0
  %v6384 = vadd.f32 %v6295, %v6383
  %6385 = vmatmul.bf16.gmra.mxu0 %v5861
  %v6386 = vpop.f32.mrf.mxu0
  %v6387 = vadd.f32 %v6298, %v6386
  %v6388 = vpop.f32.mrf.mxu0
  %v6389 = vadd.f32 %v6300, %v6388
  %6390 = vmatmul.bf16.gmra.mxu0 %v5870
  %v6391 = vpop.f32.mrf.mxu0
  %v6392 = vadd.f32 %v6303, %v6391
  %v6393 = vpop.f32.mrf.mxu0
  %v6394 = vadd.f32 %v6305, %v6393
  %6395 = vmatmul.bf16.gmra.mxu0 %v5879
  %v6396 = vpop.f32.mrf.mxu0
  %v6397 = vadd.f32 %v6308, %v6396
  %v6398 = vpop.f32.mrf.mxu0
  %v6399 = vadd.f32 %v6310, %v6398
  %6400 = vmatmul.bf16.gmra.mxu0 %v5888
  %v6401 = vpop.f32.mrf.mxu0
  %v6402 = vadd.f32 %v6313, %v6401
  %v6403 = vpop.f32.mrf.mxu0
  %v6404 = vadd.f32 %v6315, %v6403
  %6405 = vmatmul.bf16.gmra.mxu0 %v5897
  %v6406 = vpop.f32.mrf.mxu0
  %v6407 = vadd.f32 %v6318, %v6406
  %v6408 = vpop.f32.mrf.mxu0
  %v6409 = vadd.f32 %v6320, %v6408
  %6410 = vmatmul.bf16.gmra.mxu0 %v5906
  %v6411 = vpop.f32.mrf.mxu0
  %v6412 = vadd.f32 %v6323, %v6411
  %v6413 = vpop.f32.mrf.mxu0
  %v6414 = vadd.f32 %v6325, %v6413
  %6415 = vmatmul.bf16.gmra.mxu0 %v5915
  %v6416 = vpop.f32.mrf.mxu0
  %v6417 = vadd.f32 %v6328, %v6416
  %v6418 = vpop.f32.mrf.mxu0
  %v6419 = vadd.f32 %v6330, %v6418
  %6420 = vdwg.mxu0
  %6421 = vmatpush.bf16.msra.mxu0 %v4540
  %6422 = vmatpush.bf16.msra.mxu0 %v4539
  %6423 = vmatpush.bf16.msra.mxu0 %v4538
  %6424 = vmatpush.bf16.msra.mxu0 %v4537
  %6425 = vmatpush.bf16.msra.mxu0 %v4536
  %6426 = vmatpush.bf16.msra.mxu0 %v4535
  %6427 = vmatpush.bf16.msra.mxu0 %v4534
  %6428 = vmatpush.bf16.msra.mxu0 %v4533
  %6429 = vmatmul.bf16.gmra.mxu0 %v5781
  %v6430 = vpop.f32.mrf.mxu0
  %v6431 = vadd.f32 %v6342, %v6430
  %v6432 = vpop.f32.mrf.mxu0
  %v6433 = vadd.f32 %v6344, %v6432
  %6434 = vmatmul.bf16.gmra.mxu0 %v5790
  %v6435 = vpop.f32.mrf.mxu0
  %v6436 = vadd.f32 %v6347, %v6435
  %v6437 = vpop.f32.mrf.mxu0
  %v6438 = vadd.f32 %v6349, %v6437
  %6439 = vmatmul.bf16.gmra.mxu0 %v5799
  %v6440 = vpop.f32.mrf.mxu0
  %v6441 = vadd.f32 %v6352, %v6440
  %v6442 = vpop.f32.mrf.mxu0
  %v6443 = vadd.f32 %v6354, %v6442
  %6444 = vmatmul.bf16.gmra.mxu0 %v5808
  %v6445 = vpop.f32.mrf.mxu0
  %v6446 = vadd.f32 %v6357, %v6445
  %v6447 = vpop.f32.mrf.mxu0
  %v6448 = vadd.f32 %v6359, %v6447
  %6449 = vmatmul.bf16.gmra.mxu0 %v5817
  %v6450 = vpop.f32.mrf.mxu0
  %v6451 = vadd.f32 %v6362, %v6450
  %v6452 = vpop.f32.mrf.mxu0
  %v6453 = vadd.f32 %v6364, %v6452
  %6454 = vmatmul.bf16.gmra.mxu0 %v5826
  %v6455 = vpop.f32.mrf.mxu0
  %v6456 = vadd.f32 %v6367, %v6455
  %v6457 = vpop.f32.mrf.mxu0
  %v6458 = vadd.f32 %v6369, %v6457
  %6459 = vmatmul.bf16.gmra.mxu0 %v5835
  %v6460 = vpop.f32.mrf.mxu0
  %v6461 = vadd.f32 %v6372, %v6460
  %v6462 = vpop.f32.mrf.mxu0
  %v6463 = vadd.f32 %v6374, %v6462
  %6464 = vmatmul.bf16.gmra.mxu0 %v5844
  %v6465 = vpop.f32.mrf.mxu0
  %v6466 = vadd.f32 %v6377, %v6465
  %v6467 = vpop.f32.mrf.mxu0
  %v6468 = vadd.f32 %v6379, %v6467
  %6469 = vmatmul.bf16.gmra.mxu0 %v5853
  %v6470 = vpop.f32.mrf.mxu0
  %v6471 = vadd.f32 %v6382, %v6470
  %v6472 = vpop.f32.mrf.mxu0
  %v6473 = vadd.f32 %v6384, %v6472
  %6474 = vmatmul.bf16.gmra.mxu0 %v5862
  %v6475 = vpop.f32.mrf.mxu0
  %v6476 = vadd.f32 %v6387, %v6475
  %v6477 = vpop.f32.mrf.mxu0
  %v6478 = vadd.f32 %v6389, %v6477
  %6479 = vmatmul.bf16.gmra.mxu0 %v5871
  %v6480 = vpop.f32.mrf.mxu0
  %v6481 = vadd.f32 %v6392, %v6480
  %v6482 = vpop.f32.mrf.mxu0
  %v6483 = vadd.f32 %v6394, %v6482
  %6484 = vmatmul.bf16.gmra.mxu0 %v5880
  %v6485 = vpop.f32.mrf.mxu0
  %v6486 = vadd.f32 %v6397, %v6485
  %v6487 = vpop.f32.mrf.mxu0
  %v6488 = vadd.f32 %v6399, %v6487
  %6489 = vmatmul.bf16.gmra.mxu0 %v5889
  %v6490 = vpop.f32.mrf.mxu0
  %v6491 = vadd.f32 %v6402, %v6490
  %v6492 = vpop.f32.mrf.mxu0
  %v6493 = vadd.f32 %v6404, %v6492
  %6494 = vmatmul.bf16.gmra.mxu0 %v5898
  %v6495 = vpop.f32.mrf.mxu0
  %v6496 = vadd.f32 %v6407, %v6495
  %v6497 = vpop.f32.mrf.mxu0
  %v6498 = vadd.f32 %v6409, %v6497
  %6499 = vmatmul.bf16.gmra.mxu0 %v5907
  %v6500 = vpop.f32.mrf.mxu0
  %v6501 = vadd.f32 %v6412, %v6500
  %v6502 = vpop.f32.mrf.mxu0
  %v6503 = vadd.f32 %v6414, %v6502
  %6504 = vmatmul.bf16.gmra.mxu0 %v5916
  %v6505 = vpop.f32.mrf.mxu0
  %v6506 = vadd.f32 %v6417, %v6505
  %v6507 = vpop.f32.mrf.mxu0
  %v6508 = vadd.f32 %v6419, %v6507
  %6509 = vdwg.mxu0
  %6510 = vmatpush.bf16.msra.mxu0 %v4661
  %6511 = vmatpush.bf16.msra.mxu0 %v4660
  %6512 = vmatpush.bf16.msra.mxu0 %v4659
  %6513 = vmatpush.bf16.msra.mxu0 %v4658
  %6514 = vmatpush.bf16.msra.mxu0 %v4657
  %6515 = vmatpush.bf16.msra.mxu0 %v4656
  %6516 = vmatpush.bf16.msra.mxu0 %v4655
  %6517 = vmatpush.bf16.msra.mxu0 %v4654
  %6518 = vmatmul.bf16.gmra.mxu0 %v5782
  %v6519 = vpop.f32.mrf.mxu0
  %v6520 = vadd.f32 %v6431, %v6519
  %v6521 = vpop.f32.mrf.mxu0
  %v6522 = vadd.f32 %v6433, %v6521
  %6523 = vmatmul.bf16.gmra.mxu0 %v5791
  %v6524 = vpop.f32.mrf.mxu0
  %v6525 = vadd.f32 %v6436, %v6524
  %v6526 = vpop.f32.mrf.mxu0
  %v6527 = vadd.f32 %v6438, %v6526
  %6528 = vmatmul.bf16.gmra.mxu0 %v5800
  %v6529 = vpop.f32.mrf.mxu0
  %v6530 = vadd.f32 %v6441, %v6529
  %v6531 = vpop.f32.mrf.mxu0
  %v6532 = vadd.f32 %v6443, %v6531
  %6533 = vmatmul.bf16.gmra.mxu0 %v5809
  %v6534 = vpop.f32.mrf.mxu0
  %v6535 = vadd.f32 %v6446, %v6534
  %v6536 = vpop.f32.mrf.mxu0
  %v6537 = vadd.f32 %v6448, %v6536
  %6538 = vmatmul.bf16.gmra.mxu0 %v5818
  %v6539 = vpop.f32.mrf.mxu0
  %v6540 = vadd.f32 %v6451, %v6539
  %v6541 = vpop.f32.mrf.mxu0
  %v6542 = vadd.f32 %v6453, %v6541
  %6543 = vmatmul.bf16.gmra.mxu0 %v5827
  %v6544 = vpop.f32.mrf.mxu0
  %v6545 = vadd.f32 %v6456, %v6544
  %v6546 = vpop.f32.mrf.mxu0
  %v6547 = vadd.f32 %v6458, %v6546
  %6548 = vmatmul.bf16.gmra.mxu0 %v5836
  %v6549 = vpop.f32.mrf.mxu0
  %v6550 = vadd.f32 %v6461, %v6549
  %v6551 = vpop.f32.mrf.mxu0
  %v6552 = vadd.f32 %v6463, %v6551
  %6553 = vmatmul.bf16.gmra.mxu0 %v5845
  %v6554 = vpop.f32.mrf.mxu0
  %v6555 = vadd.f32 %v6466, %v6554
  %v6556 = vpop.f32.mrf.mxu0
  %v6557 = vadd.f32 %v6468, %v6556
  %6558 = vmatmul.bf16.gmra.mxu0 %v5854
  %v6559 = vpop.f32.mrf.mxu0
  %v6560 = vadd.f32 %v6471, %v6559
  %v6561 = vpop.f32.mrf.mxu0
  %v6562 = vadd.f32 %v6473, %v6561
  %6563 = vmatmul.bf16.gmra.mxu0 %v5863
  %v6564 = vpop.f32.mrf.mxu0
  %v6565 = vadd.f32 %v6476, %v6564
  %v6566 = vpop.f32.mrf.mxu0
  %v6567 = vadd.f32 %v6478, %v6566
  %6568 = vmatmul.bf16.gmra.mxu0 %v5872
  %v6569 = vpop.f32.mrf.mxu0
  %v6570 = vadd.f32 %v6481, %v6569
  %v6571 = vpop.f32.mrf.mxu0
  %v6572 = vadd.f32 %v6483, %v6571
  %6573 = vmatmul.bf16.gmra.mxu0 %v5881
  %v6574 = vpop.f32.mrf.mxu0
  %v6575 = vadd.f32 %v6486, %v6574
  %v6576 = vpop.f32.mrf.mxu0
  %v6577 = vadd.f32 %v6488, %v6576
  %6578 = vmatmul.bf16.gmra.mxu0 %v5890
  %v6579 = vpop.f32.mrf.mxu0
  %v6580 = vadd.f32 %v6491, %v6579
  %v6581 = vpop.f32.mrf.mxu0
  %v6582 = vadd.f32 %v6493, %v6581
  %6583 = vmatmul.bf16.gmra.mxu0 %v5899
  %v6584 = vpop.f32.mrf.mxu0
  %v6585 = vadd.f32 %v6496, %v6584
  %v6586 = vpop.f32.mrf.mxu0
  %v6587 = vadd.f32 %v6498, %v6586
  %6588 = vmatmul.bf16.gmra.mxu0 %v5908
  %v6589 = vpop.f32.mrf.mxu0
  %v6590 = vadd.f32 %v6501, %v6589
  %v6591 = vpop.f32.mrf.mxu0
  %v6592 = vadd.f32 %v6503, %v6591
  %6593 = vmatmul.bf16.gmra.mxu0 %v5917
  %v6594 = vpop.f32.mrf.mxu0
  %v6595 = vadd.f32 %v6506, %v6594
  %v6596 = vpop.f32.mrf.mxu0
  %v6597 = vadd.f32 %v6508, %v6596
  %6598 = vdwg.mxu0
  %6599 = vmatpush.bf16.msra.mxu0 %v4782
  %6600 = vmatpush.bf16.msra.mxu0 %v4781
  %6601 = vmatpush.bf16.msra.mxu0 %v4780
  %6602 = vmatpush.bf16.msra.mxu0 %v4779
  %6603 = vmatpush.bf16.msra.mxu0 %v4778
  %6604 = vmatpush.bf16.msra.mxu0 %v4777
  %6605 = vmatpush.bf16.msra.mxu0 %v4776
  %6606 = vmatpush.bf16.msra.mxu0 %v4775
  %6607 = vmatmul.bf16.gmra.mxu0 %v5783
  %v6608 = vpop.f32.mrf.mxu0
  %v6609 = vadd.f32 %v6520, %v6608
  %v6610 = vpop.f32.mrf.mxu0
  %v6611 = vadd.f32 %v6522, %v6610
  %6612 = vmatmul.bf16.gmra.mxu0 %v5792
  %v6613 = vpop.f32.mrf.mxu0
  %v6614 = vadd.f32 %v6525, %v6613
  %v6615 = vpop.f32.mrf.mxu0
  %v6616 = vadd.f32 %v6527, %v6615
  %6617 = vmatmul.bf16.gmra.mxu0 %v5801
  %v6618 = vpop.f32.mrf.mxu0
  %v6619 = vadd.f32 %v6530, %v6618
  %v6620 = vpop.f32.mrf.mxu0
  %v6621 = vadd.f32 %v6532, %v6620
  %6622 = vmatmul.bf16.gmra.mxu0 %v5810
  %v6623 = vpop.f32.mrf.mxu0
  %v6624 = vadd.f32 %v6535, %v6623
  %v6625 = vpop.f32.mrf.mxu0
  %v6626 = vadd.f32 %v6537, %v6625
  %6627 = vmatmul.bf16.gmra.mxu0 %v5819
  %v6628 = vpop.f32.mrf.mxu0
  %v6629 = vadd.f32 %v6540, %v6628
  %v6630 = vpop.f32.mrf.mxu0
  %v6631 = vadd.f32 %v6542, %v6630
  %6632 = vmatmul.bf16.gmra.mxu0 %v5828
  %v6633 = vpop.f32.mrf.mxu0
  %v6634 = vadd.f32 %v6545, %v6633
  %v6635 = vpop.f32.mrf.mxu0
  %v6636 = vadd.f32 %v6547, %v6635
  %6637 = vmatmul.bf16.gmra.mxu0 %v5837
  %v6638 = vpop.f32.mrf.mxu0
  %v6639 = vadd.f32 %v6550, %v6638
  %v6640 = vpop.f32.mrf.mxu0
  %v6641 = vadd.f32 %v6552, %v6640
  %6642 = vmatmul.bf16.gmra.mxu0 %v5846
  %v6643 = vpop.f32.mrf.mxu0
  %v6644 = vadd.f32 %v6555, %v6643
  %v6645 = vpop.f32.mrf.mxu0
  %v6646 = vadd.f32 %v6557, %v6645
  %6647 = vmatmul.bf16.gmra.mxu0 %v5855
  %v6648 = vpop.f32.mrf.mxu0
  %v6649 = vadd.f32 %v6560, %v6648
  %v6650 = vpop.f32.mrf.mxu0
  %v6651 = vadd.f32 %v6562, %v6650
  %6652 = vmatmul.bf16.gmra.mxu0 %v5864
  %v6653 = vpop.f32.mrf.mxu0
  %v6654 = vadd.f32 %v6565, %v6653
  %v6655 = vpop.f32.mrf.mxu0
  %v6656 = vadd.f32 %v6567, %v6655
  %6657 = vmatmul.bf16.gmra.mxu0 %v5873
  %v6658 = vpop.f32.mrf.mxu0
  %v6659 = vadd.f32 %v6570, %v6658
  %v6660 = vpop.f32.mrf.mxu0
  %v6661 = vadd.f32 %v6572, %v6660
  %6662 = vmatmul.bf16.gmra.mxu0 %v5882
  %v6663 = vpop.f32.mrf.mxu0
  %v6664 = vadd.f32 %v6575, %v6663
  %v6665 = vpop.f32.mrf.mxu0
  %v6666 = vadd.f32 %v6577, %v6665
  %6667 = vmatmul.bf16.gmra.mxu0 %v5891
  %v6668 = vpop.f32.mrf.mxu0
  %v6669 = vadd.f32 %v6580, %v6668
  %v6670 = vpop.f32.mrf.mxu0
  %v6671 = vadd.f32 %v6582, %v6670
  %6672 = vmatmul.bf16.gmra.mxu0 %v5900
  %v6673 = vpop.f32.mrf.mxu0
  %v6674 = vadd.f32 %v6585, %v6673
  %v6675 = vpop.f32.mrf.mxu0
  %v6676 = vadd.f32 %v6587, %v6675
  %6677 = vmatmul.bf16.gmra.mxu0 %v5909
  %v6678 = vpop.f32.mrf.mxu0
  %v6679 = vadd.f32 %v6590, %v6678
  %v6680 = vpop.f32.mrf.mxu0
  %v6681 = vadd.f32 %v6592, %v6680
  %6682 = vmatmul.bf16.gmra.mxu0 %v5918
  %v6683 = vpop.f32.mrf.mxu0
  %v6684 = vadd.f32 %v6595, %v6683
  %v6685 = vpop.f32.mrf.mxu0
  %v6686 = vadd.f32 %v6597, %v6685
  %6687 = vdwg.mxu0
  %6688 = vmatpush.bf16.msra.mxu0 %v4839
  %6689 = vmatpush.bf16.msra.mxu0 %v4838
  %6690 = vmatpush.bf16.msra.mxu0 %v4837
  %6691 = vmatpush.bf16.msra.mxu0 %v4836
  %6692 = vmatpush.bf16.msra.mxu0 %v4835
  %6693 = vmatpush.bf16.msra.mxu0 %v4834
  %6694 = vmatpush.bf16.msra.mxu0 %v4833
  %6695 = vmatpush.bf16.msra.mxu0 %v4832
  %6696 = vmatmul.bf16.gmra.mxu0 %v5784
  %v6697 = vpop.f32.mrf.mxu0
  %v6698 = vadd.f32 %v6609, %v6697
  %v6699 = vpop.f32.mrf.mxu0
  %v6700 = vadd.f32 %v6611, %v6699
  %6701 = vmatmul.bf16.gmra.mxu0 %v5793
  %v6702 = vpop.f32.mrf.mxu0
  %v6703 = vadd.f32 %v6614, %v6702
  %v6704 = vpop.f32.mrf.mxu0
  %v6705 = vadd.f32 %v6616, %v6704
  %6706 = vmatmul.bf16.gmra.mxu0 %v5802
  %v6707 = vpop.f32.mrf.mxu0
  %v6708 = vadd.f32 %v6619, %v6707
  %v6709 = vpop.f32.mrf.mxu0
  %v6710 = vadd.f32 %v6621, %v6709
  %6711 = vmatmul.bf16.gmra.mxu0 %v5811
  %v6712 = vpop.f32.mrf.mxu0
  %v6713 = vadd.f32 %v6624, %v6712
  %v6714 = vpop.f32.mrf.mxu0
  %v6715 = vadd.f32 %v6626, %v6714
  %6716 = vmatmul.bf16.gmra.mxu0 %v5820
  %v6717 = vpop.f32.mrf.mxu0
  %v6718 = vadd.f32 %v6629, %v6717
  %v6719 = vpop.f32.mrf.mxu0
  %v6720 = vadd.f32 %v6631, %v6719
  %6721 = vmatmul.bf16.gmra.mxu0 %v5829
  %v6722 = vpop.f32.mrf.mxu0
  %v6723 = vadd.f32 %v6634, %v6722
  %v6724 = vpop.f32.mrf.mxu0
  %v6725 = vadd.f32 %v6636, %v6724
  %6726 = vmatmul.bf16.gmra.mxu0 %v5838
  %v6727 = vpop.f32.mrf.mxu0
  %v6728 = vadd.f32 %v6639, %v6727
  %v6729 = vpop.f32.mrf.mxu0
  %v6730 = vadd.f32 %v6641, %v6729
  %6731 = vmatmul.bf16.gmra.mxu0 %v5847
  %v6732 = vpop.f32.mrf.mxu0
  %v6733 = vadd.f32 %v6644, %v6732
  %v6734 = vpop.f32.mrf.mxu0
  %v6735 = vadd.f32 %v6646, %v6734
  %6736 = vmatmul.bf16.gmra.mxu0 %v5856
  %v6737 = vpop.f32.mrf.mxu0
  %v6738 = vadd.f32 %v6649, %v6737
  %v6739 = vpop.f32.mrf.mxu0
  %v6740 = vadd.f32 %v6651, %v6739
  %6741 = vmatmul.bf16.gmra.mxu0 %v5865
  %v6742 = vpop.f32.mrf.mxu0
  %v6743 = vadd.f32 %v6654, %v6742
  %v6744 = vpop.f32.mrf.mxu0
  %v6745 = vadd.f32 %v6656, %v6744
  %6746 = vmatmul.bf16.gmra.mxu0 %v5874
  %v6747 = vpop.f32.mrf.mxu0
  %v6748 = vadd.f32 %v6659, %v6747
  %v6749 = vpop.f32.mrf.mxu0
  %v6750 = vadd.f32 %v6661, %v6749
  %6751 = vmatmul.bf16.gmra.mxu0 %v5883
  %v6752 = vpop.f32.mrf.mxu0
  %v6753 = vadd.f32 %v6664, %v6752
  %v6754 = vpop.f32.mrf.mxu0
  %v6755 = vadd.f32 %v6666, %v6754
  %6756 = vmatmul.bf16.gmra.mxu0 %v5892
  %v6757 = vpop.f32.mrf.mxu0
  %v6758 = vadd.f32 %v6669, %v6757
  %v6759 = vpop.f32.mrf.mxu0
  %v6760 = vadd.f32 %v6671, %v6759
  %6761 = vmatmul.bf16.gmra.mxu0 %v5901
  %v6762 = vpop.f32.mrf.mxu0
  %v6763 = vadd.f32 %v6674, %v6762
  %v6764 = vpop.f32.mrf.mxu0
  %v6765 = vadd.f32 %v6676, %v6764
  %6766 = vmatmul.bf16.gmra.mxu0 %v5910
  %v6767 = vpop.f32.mrf.mxu0
  %v6768 = vadd.f32 %v6679, %v6767
  %v6769 = vpop.f32.mrf.mxu0
  %v6770 = vadd.f32 %v6681, %v6769
  %6771 = vmatmul.bf16.gmra.mxu0 %v5919
  %v6772 = vpop.f32.mrf.mxu0
  %v6773 = vadd.f32 %v6684, %v6772
  %v6774 = vpop.f32.mrf.mxu0
  %v6775 = vadd.f32 %v6686, %v6774
  %6776 = vdwg.mxu0
  %6777 = vmatpush.bf16.msra.mxu0 %v4960
  %6778 = vmatpush.bf16.msra.mxu0 %v4959
  %6779 = vmatpush.bf16.msra.mxu0 %v4958
  %6780 = vmatpush.bf16.msra.mxu0 %v4957
  %6781 = vmatpush.bf16.msra.mxu0 %v4956
  %6782 = vmatpush.bf16.msra.mxu0 %v4955
  %6783 = vmatpush.bf16.msra.mxu0 %v4954
  %6784 = vmatpush.bf16.msra.mxu0 %v4953
  %6785 = vmatmul.bf16.gmra.mxu0 %v5785
  %v6786 = vpop.f32.mrf.mxu0
  %v6787 = vadd.f32 %v6698, %v6786
  %v6788 = vpop.f32.mrf.mxu0
  %v6789 = vadd.f32 %v6700, %v6788
  %6790 = vmatmul.bf16.gmra.mxu0 %v5794
  %v6791 = vpop.f32.mrf.mxu0
  %v6792 = vadd.f32 %v6703, %v6791
  %v6793 = vpop.f32.mrf.mxu0
  %v6794 = vadd.f32 %v6705, %v6793
  %6795 = vmatmul.bf16.gmra.mxu0 %v5803
  %v6796 = vpop.f32.mrf.mxu0
  %v6797 = vadd.f32 %v6708, %v6796
  %v6798 = vpop.f32.mrf.mxu0
  %v6799 = vadd.f32 %v6710, %v6798
  %6800 = vmatmul.bf16.gmra.mxu0 %v5812
  %v6801 = vpop.f32.mrf.mxu0
  %v6802 = vadd.f32 %v6713, %v6801
  %v6803 = vpop.f32.mrf.mxu0
  %v6804 = vadd.f32 %v6715, %v6803
  %6805 = vmatmul.bf16.gmra.mxu0 %v5821
  %v6806 = vpop.f32.mrf.mxu0
  %v6807 = vadd.f32 %v6718, %v6806
  %v6808 = vpop.f32.mrf.mxu0
  %v6809 = vadd.f32 %v6720, %v6808
  %6810 = vmatmul.bf16.gmra.mxu0 %v5830
  %v6811 = vpop.f32.mrf.mxu0
  %v6812 = vadd.f32 %v6723, %v6811
  %v6813 = vpop.f32.mrf.mxu0
  %v6814 = vadd.f32 %v6725, %v6813
  %6815 = vmatmul.bf16.gmra.mxu0 %v5839
  %v6816 = vpop.f32.mrf.mxu0
  %v6817 = vadd.f32 %v6728, %v6816
  %v6818 = vpop.f32.mrf.mxu0
  %v6819 = vadd.f32 %v6730, %v6818
  %6820 = vmatmul.bf16.gmra.mxu0 %v5848
  %v6821 = vpop.f32.mrf.mxu0
  %v6822 = vadd.f32 %v6733, %v6821
  %v6823 = vpop.f32.mrf.mxu0
  %v6824 = vadd.f32 %v6735, %v6823
  %6825 = vmatmul.bf16.gmra.mxu0 %v5857
  %v6826 = vpop.f32.mrf.mxu0
  %v6827 = vadd.f32 %v6738, %v6826
  %v6828 = vpop.f32.mrf.mxu0
  %v6829 = vadd.f32 %v6740, %v6828
  %6830 = vmatmul.bf16.gmra.mxu0 %v5866
  %v6831 = vpop.f32.mrf.mxu0
  %v6832 = vadd.f32 %v6743, %v6831
  %v6833 = vpop.f32.mrf.mxu0
  %v6834 = vadd.f32 %v6745, %v6833
  %6835 = vmatmul.bf16.gmra.mxu0 %v5875
  %v6836 = vpop.f32.mrf.mxu0
  %v6837 = vadd.f32 %v6748, %v6836
  %v6838 = vpop.f32.mrf.mxu0
  %v6839 = vadd.f32 %v6750, %v6838
  %6840 = vmatmul.bf16.gmra.mxu0 %v5884
  %v6841 = vpop.f32.mrf.mxu0
  %v6842 = vadd.f32 %v6753, %v6841
  %v6843 = vpop.f32.mrf.mxu0
  %v6844 = vadd.f32 %v6755, %v6843
  %6845 = vmatmul.bf16.gmra.mxu0 %v5893
  %v6846 = vpop.f32.mrf.mxu0
  %v6847 = vadd.f32 %v6758, %v6846
  %v6848 = vpop.f32.mrf.mxu0
  %v6849 = vadd.f32 %v6760, %v6848
  %6850 = vmatmul.bf16.gmra.mxu0 %v5902
  %v6851 = vpop.f32.mrf.mxu0
  %v6852 = vadd.f32 %v6763, %v6851
  %v6853 = vpop.f32.mrf.mxu0
  %v6854 = vadd.f32 %v6765, %v6853
  %6855 = vmatmul.bf16.gmra.mxu0 %v5911
  %v6856 = vpop.f32.mrf.mxu0
  %v6857 = vadd.f32 %v6768, %v6856
  %v6858 = vpop.f32.mrf.mxu0
  %v6859 = vadd.f32 %v6770, %v6858
  %6860 = vmatmul.bf16.gmra.mxu0 %v5920
  %v6861 = vpop.f32.mrf.mxu0
  %v6862 = vadd.f32 %v6773, %v6861
  %v6863 = vpop.f32.mrf.mxu0
  %v6864 = vadd.f32 %v6775, %v6863
  %6865 = vdwg.mxu0
  %6866 = vmatpush.bf16.msra.mxu0 %v4120
  %6867 = vmatpush.bf16.msra.mxu0 %v4118
  %6868 = vmatpush.bf16.msra.mxu0 %v4116
  %6869 = vmatpush.bf16.msra.mxu0 %v4114
  %6870 = vmatpush.bf16.msra.mxu0 %v4112
  %6871 = vmatpush.bf16.msra.mxu0 %v4110
  %6872 = vmatpush.bf16.msra.mxu0 %v4108
  %6873 = vmatpush.bf16.msra.mxu0 %v4106
  %6874 = vmatmul.bf16.gmra.mxu0 %v5777
  %v6875 = vpop.f32.mrf.mxu0
  %v6876 = vadd.f32 %v5172, %v6875
  %v6877 = vpop.f32.mrf.mxu0
  %v6878 = vadd.f32 %v5177, %v6877
  %6879 = vmatmul.bf16.gmra.mxu0 %v5786
  %v6880 = vpop.f32.mrf.mxu0
  %v6881 = vadd.f32 %v5182, %v6880
  %v6882 = vpop.f32.mrf.mxu0
  %v6883 = vadd.f32 %v5187, %v6882
  %6884 = vmatmul.bf16.gmra.mxu0 %v5795
  %v6885 = vpop.f32.mrf.mxu0
  %v6886 = vadd.f32 %v5192, %v6885
  %v6887 = vpop.f32.mrf.mxu0
  %v6888 = vadd.f32 %v5197, %v6887
  %6889 = vmatmul.bf16.gmra.mxu0 %v5804
  %v6890 = vpop.f32.mrf.mxu0
  %v6891 = vadd.f32 %v5202, %v6890
  %v6892 = vpop.f32.mrf.mxu0
  %v6893 = vadd.f32 %v5207, %v6892
  %6894 = vmatmul.bf16.gmra.mxu0 %v5813
  %v6895 = vpop.f32.mrf.mxu0
  %v6896 = vadd.f32 %v5212, %v6895
  %v6897 = vpop.f32.mrf.mxu0
  %v6898 = vadd.f32 %v5217, %v6897
  %6899 = vmatmul.bf16.gmra.mxu0 %v5822
  %v6900 = vpop.f32.mrf.mxu0
  %v6901 = vadd.f32 %v5222, %v6900
  %v6902 = vpop.f32.mrf.mxu0
  %v6903 = vadd.f32 %v5227, %v6902
  %6904 = vmatmul.bf16.gmra.mxu0 %v5831
  %v6905 = vpop.f32.mrf.mxu0
  %v6906 = vadd.f32 %v5232, %v6905
  %v6907 = vpop.f32.mrf.mxu0
  %v6908 = vadd.f32 %v5237, %v6907
  %6909 = vmatmul.bf16.gmra.mxu0 %v5840
  %v6910 = vpop.f32.mrf.mxu0
  %v6911 = vadd.f32 %v5242, %v6910
  %v6912 = vpop.f32.mrf.mxu0
  %v6913 = vadd.f32 %v5247, %v6912
  %6914 = vmatmul.bf16.gmra.mxu0 %v5849
  %v6915 = vpop.f32.mrf.mxu0
  %v6916 = vadd.f32 %v5252, %v6915
  %v6917 = vpop.f32.mrf.mxu0
  %v6918 = vadd.f32 %v5257, %v6917
  %6919 = vmatmul.bf16.gmra.mxu0 %v5858
  %v6920 = vpop.f32.mrf.mxu0
  %v6921 = vadd.f32 %v5262, %v6920
  %v6922 = vpop.f32.mrf.mxu0
  %v6923 = vadd.f32 %v5267, %v6922
  %6924 = vmatmul.bf16.gmra.mxu0 %v5867
  %v6925 = vpop.f32.mrf.mxu0
  %v6926 = vadd.f32 %v5272, %v6925
  %v6927 = vpop.f32.mrf.mxu0
  %v6928 = vadd.f32 %v5277, %v6927
  %6929 = vmatmul.bf16.gmra.mxu0 %v5876
  %v6930 = vpop.f32.mrf.mxu0
  %v6931 = vadd.f32 %v5282, %v6930
  %v6932 = vpop.f32.mrf.mxu0
  %v6933 = vadd.f32 %v5287, %v6932
  %6934 = vmatmul.bf16.gmra.mxu0 %v5885
  %v6935 = vpop.f32.mrf.mxu0
  %v6936 = vadd.f32 %v5292, %v6935
  %v6937 = vpop.f32.mrf.mxu0
  %v6938 = vadd.f32 %v5297, %v6937
  %6939 = vmatmul.bf16.gmra.mxu0 %v5894
  %v6940 = vpop.f32.mrf.mxu0
  %v6941 = vadd.f32 %v5302, %v6940
  %v6942 = vpop.f32.mrf.mxu0
  %v6943 = vadd.f32 %v5307, %v6942
  %6944 = vmatmul.bf16.gmra.mxu0 %v5903
  %v6945 = vpop.f32.mrf.mxu0
  %v6946 = vadd.f32 %v5312, %v6945
  %v6947 = vpop.f32.mrf.mxu0
  %v6948 = vadd.f32 %v5317, %v6947
  %6949 = vmatmul.bf16.gmra.mxu0 %v5912
  %v6950 = vpop.f32.mrf.mxu0
  %v6951 = vadd.f32 %v5322, %v6950
  %v6952 = vpop.f32.mrf.mxu0
  %v6953 = vadd.f32 %v5327, %v6952
  %6954 = vdwg.mxu0
  %6955 = vmatpush.bf16.msra.mxu0 %v4232
  %6956 = vmatpush.bf16.msra.mxu0 %v4228
  %6957 = vmatpush.bf16.msra.mxu0 %v4224
  %6958 = vmatpush.bf16.msra.mxu0 %v4220
  %6959 = vmatpush.bf16.msra.mxu0 %v4216
  %6960 = vmatpush.bf16.msra.mxu0 %v4212
  %6961 = vmatpush.bf16.msra.mxu0 %v4208
  %6962 = vmatpush.bf16.msra.mxu0 %v4204
  %6963 = vmatmul.bf16.gmra.mxu0 %v5778
  %v6964 = vpop.f32.mrf.mxu0
  %v6965 = vadd.f32 %v6876, %v6964
  %v6966 = vpop.f32.mrf.mxu0
  %v6967 = vadd.f32 %v6878, %v6966
  %6968 = vmatmul.bf16.gmra.mxu0 %v5787
  %v6969 = vpop.f32.mrf.mxu0
  %v6970 = vadd.f32 %v6881, %v6969
  %v6971 = vpop.f32.mrf.mxu0
  %v6972 = vadd.f32 %v6883, %v6971
  %6973 = vmatmul.bf16.gmra.mxu0 %v5796
  %v6974 = vpop.f32.mrf.mxu0
  %v6975 = vadd.f32 %v6886, %v6974
  %v6976 = vpop.f32.mrf.mxu0
  %v6977 = vadd.f32 %v6888, %v6976
  %6978 = vmatmul.bf16.gmra.mxu0 %v5805
  %v6979 = vpop.f32.mrf.mxu0
  %v6980 = vadd.f32 %v6891, %v6979
  %v6981 = vpop.f32.mrf.mxu0
  %v6982 = vadd.f32 %v6893, %v6981
  %6983 = vmatmul.bf16.gmra.mxu0 %v5814
  %v6984 = vpop.f32.mrf.mxu0
  %v6985 = vadd.f32 %v6896, %v6984
  %v6986 = vpop.f32.mrf.mxu0
  %v6987 = vadd.f32 %v6898, %v6986
  %6988 = vmatmul.bf16.gmra.mxu0 %v5823
  %v6989 = vpop.f32.mrf.mxu0
  %v6990 = vadd.f32 %v6901, %v6989
  %v6991 = vpop.f32.mrf.mxu0
  %v6992 = vadd.f32 %v6903, %v6991
  %6993 = vmatmul.bf16.gmra.mxu0 %v5832
  %v6994 = vpop.f32.mrf.mxu0
  %v6995 = vadd.f32 %v6906, %v6994
  %v6996 = vpop.f32.mrf.mxu0
  %v6997 = vadd.f32 %v6908, %v6996
  %6998 = vmatmul.bf16.gmra.mxu0 %v5841
  %v6999 = vpop.f32.mrf.mxu0
  %v7000 = vadd.f32 %v6911, %v6999
  %v7001 = vpop.f32.mrf.mxu0
  %v7002 = vadd.f32 %v6913, %v7001
  %7003 = vmatmul.bf16.gmra.mxu0 %v5850
  %v7004 = vpop.f32.mrf.mxu0
  %v7005 = vadd.f32 %v6916, %v7004
  %v7006 = vpop.f32.mrf.mxu0
  %v7007 = vadd.f32 %v6918, %v7006
  %7008 = vmatmul.bf16.gmra.mxu0 %v5859
  %v7009 = vpop.f32.mrf.mxu0
  %v7010 = vadd.f32 %v6921, %v7009
  %v7011 = vpop.f32.mrf.mxu0
  %v7012 = vadd.f32 %v6923, %v7011
  %7013 = vmatmul.bf16.gmra.mxu0 %v5868
  %v7014 = vpop.f32.mrf.mxu0
  %v7015 = vadd.f32 %v6926, %v7014
  %v7016 = vpop.f32.mrf.mxu0
  %v7017 = vadd.f32 %v6928, %v7016
  %7018 = vmatmul.bf16.gmra.mxu0 %v5877
  %v7019 = vpop.f32.mrf.mxu0
  %v7020 = vadd.f32 %v6931, %v7019
  %v7021 = vpop.f32.mrf.mxu0
  %v7022 = vadd.f32 %v6933, %v7021
  %7023 = vmatmul.bf16.gmra.mxu0 %v5886
  %v7024 = vpop.f32.mrf.mxu0
  %v7025 = vadd.f32 %v6936, %v7024
  %v7026 = vpop.f32.mrf.mxu0
  %v7027 = vadd.f32 %v6938, %v7026
  %7028 = vmatmul.bf16.gmra.mxu0 %v5895
  %v7029 = vpop.f32.mrf.mxu0
  %v7030 = vadd.f32 %v6941, %v7029
  %v7031 = vpop.f32.mrf.mxu0
  %v7032 = vadd.f32 %v6943, %v7031
  %7033 = vmatmul.bf16.gmra.mxu0 %v5904
  %v7034 = vpop.f32.mrf.mxu0
  %v7035 = vadd.f32 %v6946, %v7034
  %v7036 = vpop.f32.mrf.mxu0
  %v7037 = vadd.f32 %v6948, %v7036
  %7038 = vmatmul.bf16.gmra.mxu0 %v5913
  %v7039 = vpop.f32.mrf.mxu0
  %v7040 = vadd.f32 %v6951, %v7039
  %v7041 = vpop.f32.mrf.mxu0
  %v7042 = vadd.f32 %v6953, %v7041
  %7043 = vdwg.mxu0
  %7044 = vmatpush.bf16.msra.mxu0 %v4353
  %7045 = vmatpush.bf16.msra.mxu0 %v4349
  %7046 = vmatpush.bf16.msra.mxu0 %v4345
  %7047 = vmatpush.bf16.msra.mxu0 %v4341
  %7048 = vmatpush.bf16.msra.mxu0 %v4337
  %7049 = vmatpush.bf16.msra.mxu0 %v4333
  %7050 = vmatpush.bf16.msra.mxu0 %v4329
  %7051 = vmatpush.bf16.msra.mxu0 %v4325
  %7052 = vmatmul.bf16.gmra.mxu0 %v5779
  %v7053 = vpop.f32.mrf.mxu0
  %v7054 = vadd.f32 %v6965, %v7053
  %v7055 = vpop.f32.mrf.mxu0
  %v7056 = vadd.f32 %v6967, %v7055
  %7057 = vmatmul.bf16.gmra.mxu0 %v5788
  %v7058 = vpop.f32.mrf.mxu0
  %v7059 = vadd.f32 %v6970, %v7058
  %v7060 = vpop.f32.mrf.mxu0
  %v7061 = vadd.f32 %v6972, %v7060
  %7062 = vmatmul.bf16.gmra.mxu0 %v5797
  %v7063 = vpop.f32.mrf.mxu0
  %v7064 = vadd.f32 %v6975, %v7063
  %v7065 = vpop.f32.mrf.mxu0
  %v7066 = vadd.f32 %v6977, %v7065
  %7067 = vmatmul.bf16.gmra.mxu0 %v5806
  %v7068 = vpop.f32.mrf.mxu0
  %v7069 = vadd.f32 %v6980, %v7068
  %v7070 = vpop.f32.mrf.mxu0
  %v7071 = vadd.f32 %v6982, %v7070
  %7072 = vmatmul.bf16.gmra.mxu0 %v5815
  %v7073 = vpop.f32.mrf.mxu0
  %v7074 = vadd.f32 %v6985, %v7073
  %v7075 = vpop.f32.mrf.mxu0
  %v7076 = vadd.f32 %v6987, %v7075
  %7077 = vmatmul.bf16.gmra.mxu0 %v5824
  %v7078 = vpop.f32.mrf.mxu0
  %v7079 = vadd.f32 %v6990, %v7078
  %v7080 = vpop.f32.mrf.mxu0
  %v7081 = vadd.f32 %v6992, %v7080
  %7082 = vmatmul.bf16.gmra.mxu0 %v5833
  %v7083 = vpop.f32.mrf.mxu0
  %v7084 = vadd.f32 %v6995, %v7083
  %v7085 = vpop.f32.mrf.mxu0
  %v7086 = vadd.f32 %v6997, %v7085
  %7087 = vmatmul.bf16.gmra.mxu0 %v5842
  %v7088 = vpop.f32.mrf.mxu0
  %v7089 = vadd.f32 %v7000, %v7088
  %v7090 = vpop.f32.mrf.mxu0
  %v7091 = vadd.f32 %v7002, %v7090
  %7092 = vmatmul.bf16.gmra.mxu0 %v5851
  %v7093 = vpop.f32.mrf.mxu0
  %v7094 = vadd.f32 %v7005, %v7093
  %v7095 = vpop.f32.mrf.mxu0
  %v7096 = vadd.f32 %v7007, %v7095
  %7097 = vmatmul.bf16.gmra.mxu0 %v5860
  %v7098 = vpop.f32.mrf.mxu0
  %v7099 = vadd.f32 %v7010, %v7098
  %v7100 = vpop.f32.mrf.mxu0
  %v7101 = vadd.f32 %v7012, %v7100
  %7102 = vmatmul.bf16.gmra.mxu0 %v5869
  %v7103 = vpop.f32.mrf.mxu0
  %v7104 = vadd.f32 %v7015, %v7103
  %v7105 = vpop.f32.mrf.mxu0
  %v7106 = vadd.f32 %v7017, %v7105
  %7107 = vmatmul.bf16.gmra.mxu0 %v5878
  %v7108 = vpop.f32.mrf.mxu0
  %v7109 = vadd.f32 %v7020, %v7108
  %v7110 = vpop.f32.mrf.mxu0
  %v7111 = vadd.f32 %v7022, %v7110
  %7112 = vmatmul.bf16.gmra.mxu0 %v5887
  %v7113 = vpop.f32.mrf.mxu0
  %v7114 = vadd.f32 %v7025, %v7113
  %v7115 = vpop.f32.mrf.mxu0
  %v7116 = vadd.f32 %v7027, %v7115
  %7117 = vmatmul.bf16.gmra.mxu0 %v5896
  %v7118 = vpop.f32.mrf.mxu0
  %v7119 = vadd.f32 %v7030, %v7118
  %v7120 = vpop.f32.mrf.mxu0
  %v7121 = vadd.f32 %v7032, %v7120
  %7122 = vmatmul.bf16.gmra.mxu0 %v5905
  %v7123 = vpop.f32.mrf.mxu0
  %v7124 = vadd.f32 %v7035, %v7123
  %v7125 = vpop.f32.mrf.mxu0
  %v7126 = vadd.f32 %v7037, %v7125
  %7127 = vmatmul.bf16.gmra.mxu0 %v5914
  %v7128 = vpop.f32.mrf.mxu0
  %v7129 = vadd.f32 %v7040, %v7128
  %v7130 = vpop.f32.mrf.mxu0
  %v7131 = vadd.f32 %v7042, %v7130
  %7132 = vdwg.mxu0
  %7133 = vmatpush.bf16.msra.mxu0 %v4474
  %7134 = vmatpush.bf16.msra.mxu0 %v4470
  %7135 = vmatpush.bf16.msra.mxu0 %v4466
  %7136 = vmatpush.bf16.msra.mxu0 %v4462
  %7137 = vmatpush.bf16.msra.mxu0 %v4458
  %7138 = vmatpush.bf16.msra.mxu0 %v4454
  %7139 = vmatpush.bf16.msra.mxu0 %v4450
  %7140 = vmatpush.bf16.msra.mxu0 %v4446
  %7141 = vmatmul.bf16.gmra.mxu0 %v5780
  %v7142 = vpop.f32.mrf.mxu0
  %v7143 = vadd.f32 %v7054, %v7142
  %v7144 = vpop.f32.mrf.mxu0
  %v7145 = vadd.f32 %v7056, %v7144
  %7146 = vmatmul.bf16.gmra.mxu0 %v5789
  %v7147 = vpop.f32.mrf.mxu0
  %v7148 = vadd.f32 %v7059, %v7147
  %v7149 = vpop.f32.mrf.mxu0
  %v7150 = vadd.f32 %v7061, %v7149
  %7151 = vmatmul.bf16.gmra.mxu0 %v5798
  %v7152 = vpop.f32.mrf.mxu0
  %v7153 = vadd.f32 %v7064, %v7152
  %v7154 = vpop.f32.mrf.mxu0
  %v7155 = vadd.f32 %v7066, %v7154
  %7156 = vmatmul.bf16.gmra.mxu0 %v5807
  %v7157 = vpop.f32.mrf.mxu0
  %v7158 = vadd.f32 %v7069, %v7157
  %v7159 = vpop.f32.mrf.mxu0
  %v7160 = vadd.f32 %v7071, %v7159
  %7161 = vmatmul.bf16.gmra.mxu0 %v5816
  %v7162 = vpop.f32.mrf.mxu0
  %v7163 = vadd.f32 %v7074, %v7162
  %v7164 = vpop.f32.mrf.mxu0
  %v7165 = vadd.f32 %v7076, %v7164
  %7166 = vmatmul.bf16.gmra.mxu0 %v5825
  %v7167 = vpop.f32.mrf.mxu0
  %v7168 = vadd.f32 %v7079, %v7167
  %v7169 = vpop.f32.mrf.mxu0
  %v7170 = vadd.f32 %v7081, %v7169
  %7171 = vmatmul.bf16.gmra.mxu0 %v5834
  %v7172 = vpop.f32.mrf.mxu0
  %v7173 = vadd.f32 %v7084, %v7172
  %v7174 = vpop.f32.mrf.mxu0
  %v7175 = vadd.f32 %v7086, %v7174
  %7176 = vmatmul.bf16.gmra.mxu0 %v5843
  %v7177 = vpop.f32.mrf.mxu0
  %v7178 = vadd.f32 %v7089, %v7177
  %v7179 = vpop.f32.mrf.mxu0
  %v7180 = vadd.f32 %v7091, %v7179
  %7181 = vmatmul.bf16.gmra.mxu0 %v5852
  %v7182 = vpop.f32.mrf.mxu0
  %v7183 = vadd.f32 %v7094, %v7182
  %v7184 = vpop.f32.mrf.mxu0
  %v7185 = vadd.f32 %v7096, %v7184
  %7186 = vmatmul.bf16.gmra.mxu0 %v5861
  %v7187 = vpop.f32.mrf.mxu0
  %v7188 = vadd.f32 %v7099, %v7187
  %v7189 = vpop.f32.mrf.mxu0
  %v7190 = vadd.f32 %v7101, %v7189
  %7191 = vmatmul.bf16.gmra.mxu0 %v5870
  %v7192 = vpop.f32.mrf.mxu0
  %v7193 = vadd.f32 %v7104, %v7192
  %v7194 = vpop.f32.mrf.mxu0
  %v7195 = vadd.f32 %v7106, %v7194
  %7196 = vmatmul.bf16.gmra.mxu0 %v5879
  %v7197 = vpop.f32.mrf.mxu0
  %v7198 = vadd.f32 %v7109, %v7197
  %v7199 = vpop.f32.mrf.mxu0
  %v7200 = vadd.f32 %v7111, %v7199
  %7201 = vmatmul.bf16.gmra.mxu0 %v5888
  %v7202 = vpop.f32.mrf.mxu0
  %v7203 = vadd.f32 %v7114, %v7202
  %v7204 = vpop.f32.mrf.mxu0
  %v7205 = vadd.f32 %v7116, %v7204
  %7206 = vmatmul.bf16.gmra.mxu0 %v5897
  %v7207 = vpop.f32.mrf.mxu0
  %v7208 = vadd.f32 %v7119, %v7207
  %v7209 = vpop.f32.mrf.mxu0
  %v7210 = vadd.f32 %v7121, %v7209
  %7211 = vmatmul.bf16.gmra.mxu0 %v5906
  %v7212 = vpop.f32.mrf.mxu0
  %v7213 = vadd.f32 %v7124, %v7212
  %v7214 = vpop.f32.mrf.mxu0
  %v7215 = vadd.f32 %v7126, %v7214
  %7216 = vmatmul.bf16.gmra.mxu0 %v5915
  %v7217 = vpop.f32.mrf.mxu0
  %v7218 = vadd.f32 %v7129, %v7217
  %v7219 = vpop.f32.mrf.mxu0
  %v7220 = vadd.f32 %v7131, %v7219
  %7221 = vdwg.mxu0
  %7222 = vmatpush.bf16.msra.mxu0 %v4531
  %7223 = vmatpush.bf16.msra.mxu0 %v4527
  %7224 = vmatpush.bf16.msra.mxu0 %v4523
  %7225 = vmatpush.bf16.msra.mxu0 %v4519
  %7226 = vmatpush.bf16.msra.mxu0 %v4515
  %7227 = vmatpush.bf16.msra.mxu0 %v4511
  %7228 = vmatpush.bf16.msra.mxu0 %v4507
  %7229 = vmatpush.bf16.msra.mxu0 %v4503
  %7230 = vmatmul.bf16.gmra.mxu0 %v5781
  %v7231 = vpop.f32.mrf.mxu0
  %v7232 = vadd.f32 %v7143, %v7231
  %v7233 = vpop.f32.mrf.mxu0
  %v7234 = vadd.f32 %v7145, %v7233
  %7235 = vmatmul.bf16.gmra.mxu0 %v5790
  %v7236 = vpop.f32.mrf.mxu0
  %v7237 = vadd.f32 %v7148, %v7236
  %v7238 = vpop.f32.mrf.mxu0
  %v7239 = vadd.f32 %v7150, %v7238
  %7240 = vmatmul.bf16.gmra.mxu0 %v5799
  %v7241 = vpop.f32.mrf.mxu0
  %v7242 = vadd.f32 %v7153, %v7241
  %v7243 = vpop.f32.mrf.mxu0
  %v7244 = vadd.f32 %v7155, %v7243
  %7245 = vmatmul.bf16.gmra.mxu0 %v5808
  %v7246 = vpop.f32.mrf.mxu0
  %v7247 = vadd.f32 %v7158, %v7246
  %v7248 = vpop.f32.mrf.mxu0
  %v7249 = vadd.f32 %v7160, %v7248
  %7250 = vmatmul.bf16.gmra.mxu0 %v5817
  %v7251 = vpop.f32.mrf.mxu0
  %v7252 = vadd.f32 %v7163, %v7251
  %v7253 = vpop.f32.mrf.mxu0
  %v7254 = vadd.f32 %v7165, %v7253
  %7255 = vmatmul.bf16.gmra.mxu0 %v5826
  %v7256 = vpop.f32.mrf.mxu0
  %v7257 = vadd.f32 %v7168, %v7256
  %v7258 = vpop.f32.mrf.mxu0
  %v7259 = vadd.f32 %v7170, %v7258
  %7260 = vmatmul.bf16.gmra.mxu0 %v5835
  %v7261 = vpop.f32.mrf.mxu0
  %v7262 = vadd.f32 %v7173, %v7261
  %v7263 = vpop.f32.mrf.mxu0
  %v7264 = vadd.f32 %v7175, %v7263
  %7265 = vmatmul.bf16.gmra.mxu0 %v5844
  %v7266 = vpop.f32.mrf.mxu0
  %v7267 = vadd.f32 %v7178, %v7266
  %v7268 = vpop.f32.mrf.mxu0
  %v7269 = vadd.f32 %v7180, %v7268
  %7270 = vmatmul.bf16.gmra.mxu0 %v5853
  %v7271 = vpop.f32.mrf.mxu0
  %v7272 = vadd.f32 %v7183, %v7271
  %v7273 = vpop.f32.mrf.mxu0
  %v7274 = vadd.f32 %v7185, %v7273
  %7275 = vmatmul.bf16.gmra.mxu0 %v5862
  %v7276 = vpop.f32.mrf.mxu0
  %v7277 = vadd.f32 %v7188, %v7276
  %v7278 = vpop.f32.mrf.mxu0
  %v7279 = vadd.f32 %v7190, %v7278
  %7280 = vmatmul.bf16.gmra.mxu0 %v5871
  %v7281 = vpop.f32.mrf.mxu0
  %v7282 = vadd.f32 %v7193, %v7281
  %v7283 = vpop.f32.mrf.mxu0
  %v7284 = vadd.f32 %v7195, %v7283
  %7285 = vmatmul.bf16.gmra.mxu0 %v5880
  %v7286 = vpop.f32.mrf.mxu0
  %v7287 = vadd.f32 %v7198, %v7286
  %v7288 = vpop.f32.mrf.mxu0
  %v7289 = vadd.f32 %v7200, %v7288
  %7290 = vmatmul.bf16.gmra.mxu0 %v5889
  %v7291 = vpop.f32.mrf.mxu0
  %v7292 = vadd.f32 %v7203, %v7291
  %v7293 = vpop.f32.mrf.mxu0
  %v7294 = vadd.f32 %v7205, %v7293
  %7295 = vmatmul.bf16.gmra.mxu0 %v5898
  %v7296 = vpop.f32.mrf.mxu0
  %v7297 = vadd.f32 %v7208, %v7296
  %v7298 = vpop.f32.mrf.mxu0
  %v7299 = vadd.f32 %v7210, %v7298
  %7300 = vmatmul.bf16.gmra.mxu0 %v5907
  %v7301 = vpop.f32.mrf.mxu0
  %v7302 = vadd.f32 %v7213, %v7301
  %v7303 = vpop.f32.mrf.mxu0
  %v7304 = vadd.f32 %v7215, %v7303
  %7305 = vmatmul.bf16.gmra.mxu0 %v5916
  %v7306 = vpop.f32.mrf.mxu0
  %v7307 = vadd.f32 %v7218, %v7306
  %v7308 = vpop.f32.mrf.mxu0
  %v7309 = vadd.f32 %v7220, %v7308
  %7310 = vdwg.mxu0
  %7311 = vmatpush.bf16.msra.mxu0 %v4652
  %7312 = vmatpush.bf16.msra.mxu0 %v4648
  %7313 = vmatpush.bf16.msra.mxu0 %v4644
  %7314 = vmatpush.bf16.msra.mxu0 %v4640
  %7315 = vmatpush.bf16.msra.mxu0 %v4636
  %7316 = vmatpush.bf16.msra.mxu0 %v4632
  %7317 = vmatpush.bf16.msra.mxu0 %v4628
  %7318 = vmatpush.bf16.msra.mxu0 %v4624
  %7319 = vmatmul.bf16.gmra.mxu0 %v5782
  %v7320 = vpop.f32.mrf.mxu0
  %v7321 = vadd.f32 %v7232, %v7320
  %v7322 = vpop.f32.mrf.mxu0
  %v7323 = vadd.f32 %v7234, %v7322
  %7324 = vmatmul.bf16.gmra.mxu0 %v5791
  %v7325 = vpop.f32.mrf.mxu0
  %v7326 = vadd.f32 %v7237, %v7325
  %v7327 = vpop.f32.mrf.mxu0
  %v7328 = vadd.f32 %v7239, %v7327
  %7329 = vmatmul.bf16.gmra.mxu0 %v5800
  %v7330 = vpop.f32.mrf.mxu0
  %v7331 = vadd.f32 %v7242, %v7330
  %v7332 = vpop.f32.mrf.mxu0
  %v7333 = vadd.f32 %v7244, %v7332
  %7334 = vmatmul.bf16.gmra.mxu0 %v5809
  %v7335 = vpop.f32.mrf.mxu0
  %v7336 = vadd.f32 %v7247, %v7335
  %v7337 = vpop.f32.mrf.mxu0
  %v7338 = vadd.f32 %v7249, %v7337
  %7339 = vmatmul.bf16.gmra.mxu0 %v5818
  %v7340 = vpop.f32.mrf.mxu0
  %v7341 = vadd.f32 %v7252, %v7340
  %v7342 = vpop.f32.mrf.mxu0
  %v7343 = vadd.f32 %v7254, %v7342
  %7344 = vmatmul.bf16.gmra.mxu0 %v5827
  %v7345 = vpop.f32.mrf.mxu0
  %v7346 = vadd.f32 %v7257, %v7345
  %v7347 = vpop.f32.mrf.mxu0
  %v7348 = vadd.f32 %v7259, %v7347
  %7349 = vmatmul.bf16.gmra.mxu0 %v5836
  %v7350 = vpop.f32.mrf.mxu0
  %v7351 = vadd.f32 %v7262, %v7350
  %v7352 = vpop.f32.mrf.mxu0
  %v7353 = vadd.f32 %v7264, %v7352
  %7354 = vmatmul.bf16.gmra.mxu0 %v5845
  %v7355 = vpop.f32.mrf.mxu0
  %v7356 = vadd.f32 %v7267, %v7355
  %v7357 = vpop.f32.mrf.mxu0
  %v7358 = vadd.f32 %v7269, %v7357
  %7359 = vmatmul.bf16.gmra.mxu0 %v5854
  %v7360 = vpop.f32.mrf.mxu0
  %v7361 = vadd.f32 %v7272, %v7360
  %v7362 = vpop.f32.mrf.mxu0
  %v7363 = vadd.f32 %v7274, %v7362
  %7364 = vmatmul.bf16.gmra.mxu0 %v5863
  %v7365 = vpop.f32.mrf.mxu0
  %v7366 = vadd.f32 %v7277, %v7365
  %v7367 = vpop.f32.mrf.mxu0
  %v7368 = vadd.f32 %v7279, %v7367
  %7369 = vmatmul.bf16.gmra.mxu0 %v5872
  %v7370 = vpop.f32.mrf.mxu0
  %v7371 = vadd.f32 %v7282, %v7370
  %v7372 = vpop.f32.mrf.mxu0
  %v7373 = vadd.f32 %v7284, %v7372
  %7374 = vmatmul.bf16.gmra.mxu0 %v5881
  %v7375 = vpop.f32.mrf.mxu0
  %v7376 = vadd.f32 %v7287, %v7375
  %v7377 = vpop.f32.mrf.mxu0
  %v7378 = vadd.f32 %v7289, %v7377
  %7379 = vmatmul.bf16.gmra.mxu0 %v5890
  %v7380 = vpop.f32.mrf.mxu0
  %v7381 = vadd.f32 %v7292, %v7380
  %v7382 = vpop.f32.mrf.mxu0
  %v7383 = vadd.f32 %v7294, %v7382
  %7384 = vmatmul.bf16.gmra.mxu0 %v5899
  %v7385 = vpop.f32.mrf.mxu0
  %v7386 = vadd.f32 %v7297, %v7385
  %v7387 = vpop.f32.mrf.mxu0
  %v7388 = vadd.f32 %v7299, %v7387
  %7389 = vmatmul.bf16.gmra.mxu0 %v5908
  %v7390 = vpop.f32.mrf.mxu0
  %v7391 = vadd.f32 %v7302, %v7390
  %v7392 = vpop.f32.mrf.mxu0
  %v7393 = vadd.f32 %v7304, %v7392
  %7394 = vmatmul.bf16.gmra.mxu0 %v5917
  %v7395 = vpop.f32.mrf.mxu0
  %v7396 = vadd.f32 %v7307, %v7395
  %v7397 = vpop.f32.mrf.mxu0
  %v7398 = vadd.f32 %v7309, %v7397
  %7399 = vdwg.mxu0
  %7400 = vmatpush.bf16.msra.mxu0 %v4773
  %7401 = vmatpush.bf16.msra.mxu0 %v4769
  %7402 = vmatpush.bf16.msra.mxu0 %v4765
  %7403 = vmatpush.bf16.msra.mxu0 %v4761
  %7404 = vmatpush.bf16.msra.mxu0 %v4757
  %7405 = vmatpush.bf16.msra.mxu0 %v4753
  %7406 = vmatpush.bf16.msra.mxu0 %v4749
  %7407 = vmatpush.bf16.msra.mxu0 %v4745
  %7408 = vmatmul.bf16.gmra.mxu0 %v5783
  %v7409 = vpop.f32.mrf.mxu0
  %v7410 = vadd.f32 %v7321, %v7409
  %v7411 = vpop.f32.mrf.mxu0
  %v7412 = vadd.f32 %v7323, %v7411
  %7413 = vmatmul.bf16.gmra.mxu0 %v5792
  %v7414 = vpop.f32.mrf.mxu0
  %v7415 = vadd.f32 %v7326, %v7414
  %v7416 = vpop.f32.mrf.mxu0
  %v7417 = vadd.f32 %v7328, %v7416
  %7418 = vmatmul.bf16.gmra.mxu0 %v5801
  %v7419 = vpop.f32.mrf.mxu0
  %v7420 = vadd.f32 %v7331, %v7419
  %v7421 = vpop.f32.mrf.mxu0
  %v7422 = vadd.f32 %v7333, %v7421
  %7423 = vmatmul.bf16.gmra.mxu0 %v5810
  %v7424 = vpop.f32.mrf.mxu0
  %v7425 = vadd.f32 %v7336, %v7424
  %v7426 = vpop.f32.mrf.mxu0
  %v7427 = vadd.f32 %v7338, %v7426
  %7428 = vmatmul.bf16.gmra.mxu0 %v5819
  %v7429 = vpop.f32.mrf.mxu0
  %v7430 = vadd.f32 %v7341, %v7429
  %v7431 = vpop.f32.mrf.mxu0
  %v7432 = vadd.f32 %v7343, %v7431
  %7433 = vmatmul.bf16.gmra.mxu0 %v5828
  %v7434 = vpop.f32.mrf.mxu0
  %v7435 = vadd.f32 %v7346, %v7434
  %v7436 = vpop.f32.mrf.mxu0
  %v7437 = vadd.f32 %v7348, %v7436
  %7438 = vmatmul.bf16.gmra.mxu0 %v5837
  %v7439 = vpop.f32.mrf.mxu0
  %v7440 = vadd.f32 %v7351, %v7439
  %v7441 = vpop.f32.mrf.mxu0
  %v7442 = vadd.f32 %v7353, %v7441
  %7443 = vmatmul.bf16.gmra.mxu0 %v5846
  %v7444 = vpop.f32.mrf.mxu0
  %v7445 = vadd.f32 %v7356, %v7444
  %v7446 = vpop.f32.mrf.mxu0
  %v7447 = vadd.f32 %v7358, %v7446
  %7448 = vmatmul.bf16.gmra.mxu0 %v5855
  %v7449 = vpop.f32.mrf.mxu0
  %v7450 = vadd.f32 %v7361, %v7449
  %v7451 = vpop.f32.mrf.mxu0
  %v7452 = vadd.f32 %v7363, %v7451
  %7453 = vmatmul.bf16.gmra.mxu0 %v5864
  %v7454 = vpop.f32.mrf.mxu0
  %v7455 = vadd.f32 %v7366, %v7454
  %v7456 = vpop.f32.mrf.mxu0
  %v7457 = vadd.f32 %v7368, %v7456
  %7458 = vmatmul.bf16.gmra.mxu0 %v5873
  %v7459 = vpop.f32.mrf.mxu0
  %v7460 = vadd.f32 %v7371, %v7459
  %v7461 = vpop.f32.mrf.mxu0
  %v7462 = vadd.f32 %v7373, %v7461
  %7463 = vmatmul.bf16.gmra.mxu0 %v5882
  %v7464 = vpop.f32.mrf.mxu0
  %v7465 = vadd.f32 %v7376, %v7464
  %v7466 = vpop.f32.mrf.mxu0
  %v7467 = vadd.f32 %v7378, %v7466
  %7468 = vmatmul.bf16.gmra.mxu0 %v5891
  %v7469 = vpop.f32.mrf.mxu0
  %v7470 = vadd.f32 %v7381, %v7469
  %v7471 = vpop.f32.mrf.mxu0
  %v7472 = vadd.f32 %v7383, %v7471
  %7473 = vmatmul.bf16.gmra.mxu0 %v5900
  %v7474 = vpop.f32.mrf.mxu0
  %v7475 = vadd.f32 %v7386, %v7474
  %v7476 = vpop.f32.mrf.mxu0
  %v7477 = vadd.f32 %v7388, %v7476
  %7478 = vmatmul.bf16.gmra.mxu0 %v5909
  %v7479 = vpop.f32.mrf.mxu0
  %v7480 = vadd.f32 %v7391, %v7479
  %v7481 = vpop.f32.mrf.mxu0
  %v7482 = vadd.f32 %v7393, %v7481
  %7483 = vmatmul.bf16.gmra.mxu0 %v5918
  %v7484 = vpop.f32.mrf.mxu0
  %v7485 = vadd.f32 %v7396, %v7484
  %v7486 = vpop.f32.mrf.mxu0
  %v7487 = vadd.f32 %v7398, %v7486
  %7488 = vdwg.mxu0
  %7489 = vmatpush.bf16.msra.mxu0 %v4830
  %7490 = vmatpush.bf16.msra.mxu0 %v4826
  %7491 = vmatpush.bf16.msra.mxu0 %v4822
  %7492 = vmatpush.bf16.msra.mxu0 %v4818
  %7493 = vmatpush.bf16.msra.mxu0 %v4814
  %7494 = vmatpush.bf16.msra.mxu0 %v4810
  %7495 = vmatpush.bf16.msra.mxu0 %v4806
  %7496 = vmatpush.bf16.msra.mxu0 %v4802
  %7497 = vmatmul.bf16.gmra.mxu0 %v5784
  %v7498 = vpop.f32.mrf.mxu0
  %v7499 = vadd.f32 %v7410, %v7498
  %v7500 = vpop.f32.mrf.mxu0
  %v7501 = vadd.f32 %v7412, %v7500
  %7502 = vmatmul.bf16.gmra.mxu0 %v5793
  %v7503 = vpop.f32.mrf.mxu0
  %v7504 = vadd.f32 %v7415, %v7503
  %v7505 = vpop.f32.mrf.mxu0
  %v7506 = vadd.f32 %v7417, %v7505
  %7507 = vmatmul.bf16.gmra.mxu0 %v5802
  %v7508 = vpop.f32.mrf.mxu0
  %v7509 = vadd.f32 %v7420, %v7508
  %v7510 = vpop.f32.mrf.mxu0
  %v7511 = vadd.f32 %v7422, %v7510
  %7512 = vmatmul.bf16.gmra.mxu0 %v5811
  %v7513 = vpop.f32.mrf.mxu0
  %v7514 = vadd.f32 %v7425, %v7513
  %v7515 = vpop.f32.mrf.mxu0
  %v7516 = vadd.f32 %v7427, %v7515
  %7517 = vmatmul.bf16.gmra.mxu0 %v5820
  %v7518 = vpop.f32.mrf.mxu0
  %v7519 = vadd.f32 %v7430, %v7518
  %v7520 = vpop.f32.mrf.mxu0
  %v7521 = vadd.f32 %v7432, %v7520
  %7522 = vmatmul.bf16.gmra.mxu0 %v5829
  %v7523 = vpop.f32.mrf.mxu0
  %v7524 = vadd.f32 %v7435, %v7523
  %v7525 = vpop.f32.mrf.mxu0
  %v7526 = vadd.f32 %v7437, %v7525
  %7527 = vmatmul.bf16.gmra.mxu0 %v5838
  %v7528 = vpop.f32.mrf.mxu0
  %v7529 = vadd.f32 %v7440, %v7528
  %v7530 = vpop.f32.mrf.mxu0
  %v7531 = vadd.f32 %v7442, %v7530
  %7532 = vmatmul.bf16.gmra.mxu0 %v5847
  %v7533 = vpop.f32.mrf.mxu0
  %v7534 = vadd.f32 %v7445, %v7533
  %v7535 = vpop.f32.mrf.mxu0
  %v7536 = vadd.f32 %v7447, %v7535
  %7537 = vmatmul.bf16.gmra.mxu0 %v5856
  %v7538 = vpop.f32.mrf.mxu0
  %v7539 = vadd.f32 %v7450, %v7538
  %v7540 = vpop.f32.mrf.mxu0
  %v7541 = vadd.f32 %v7452, %v7540
  %7542 = vmatmul.bf16.gmra.mxu0 %v5865
  %v7543 = vpop.f32.mrf.mxu0
  %v7544 = vadd.f32 %v7455, %v7543
  %v7545 = vpop.f32.mrf.mxu0
  %v7546 = vadd.f32 %v7457, %v7545
  %7547 = vmatmul.bf16.gmra.mxu0 %v5874
  %v7548 = vpop.f32.mrf.mxu0
  %v7549 = vadd.f32 %v7460, %v7548
  %v7550 = vpop.f32.mrf.mxu0
  %v7551 = vadd.f32 %v7462, %v7550
  %7552 = vmatmul.bf16.gmra.mxu0 %v5883
  %v7553 = vpop.f32.mrf.mxu0
  %v7554 = vadd.f32 %v7465, %v7553
  %v7555 = vpop.f32.mrf.mxu0
  %v7556 = vadd.f32 %v7467, %v7555
  %7557 = vmatmul.bf16.gmra.mxu0 %v5892
  %v7558 = vpop.f32.mrf.mxu0
  %v7559 = vadd.f32 %v7470, %v7558
  %v7560 = vpop.f32.mrf.mxu0
  %v7561 = vadd.f32 %v7472, %v7560
  %7562 = vmatmul.bf16.gmra.mxu0 %v5901
  %v7563 = vpop.f32.mrf.mxu0
  %v7564 = vadd.f32 %v7475, %v7563
  %v7565 = vpop.f32.mrf.mxu0
  %v7566 = vadd.f32 %v7477, %v7565
  %7567 = vmatmul.bf16.gmra.mxu0 %v5910
  %v7568 = vpop.f32.mrf.mxu0
  %v7569 = vadd.f32 %v7480, %v7568
  %v7570 = vpop.f32.mrf.mxu0
  %v7571 = vadd.f32 %v7482, %v7570
  %7572 = vmatmul.bf16.gmra.mxu0 %v5919
  %v7573 = vpop.f32.mrf.mxu0
  %v7574 = vadd.f32 %v7485, %v7573
  %v7575 = vpop.f32.mrf.mxu0
  %v7576 = vadd.f32 %v7487, %v7575
  %7577 = vdwg.mxu0
  %7578 = vmatpush.bf16.msra.mxu0 %v4951
  %7579 = vmatpush.bf16.msra.mxu0 %v4947
  %7580 = vmatpush.bf16.msra.mxu0 %v4943
  %7581 = vmatpush.bf16.msra.mxu0 %v4939
  %7582 = vmatpush.bf16.msra.mxu0 %v4935
  %7583 = vmatpush.bf16.msra.mxu0 %v4931
  %7584 = vmatpush.bf16.msra.mxu0 %v4927
  %7585 = vmatpush.bf16.msra.mxu0 %v4923
  %7586 = vmatmul.bf16.gmra.mxu0 %v5785
  %v7587 = vpop.f32.mrf.mxu0
  %v7588 = vadd.f32 %v7499, %v7587
  %v7589 = vpop.f32.mrf.mxu0
  %v7590 = vadd.f32 %v7501, %v7589
  %7591 = vmatmul.bf16.gmra.mxu0 %v5794
  %v7592 = vpop.f32.mrf.mxu0
  %v7593 = vadd.f32 %v7504, %v7592
  %v7594 = vpop.f32.mrf.mxu0
  %v7595 = vadd.f32 %v7506, %v7594
  %7596 = vmatmul.bf16.gmra.mxu0 %v5803
  %v7597 = vpop.f32.mrf.mxu0
  %v7598 = vadd.f32 %v7509, %v7597
  %v7599 = vpop.f32.mrf.mxu0
  %v7600 = vadd.f32 %v7511, %v7599
  %7601 = vmatmul.bf16.gmra.mxu0 %v5812
  %v7602 = vpop.f32.mrf.mxu0
  %v7603 = vadd.f32 %v7514, %v7602
  %v7604 = vpop.f32.mrf.mxu0
  %v7605 = vadd.f32 %v7516, %v7604
  %7606 = vmatmul.bf16.gmra.mxu0 %v5821
  %v7607 = vpop.f32.mrf.mxu0
  %v7608 = vadd.f32 %v7519, %v7607
  %v7609 = vpop.f32.mrf.mxu0
  %v7610 = vadd.f32 %v7521, %v7609
  %7611 = vmatmul.bf16.gmra.mxu0 %v5830
  %v7612 = vpop.f32.mrf.mxu0
  %v7613 = vadd.f32 %v7524, %v7612
  %v7614 = vpop.f32.mrf.mxu0
  %v7615 = vadd.f32 %v7526, %v7614
  %7616 = vmatmul.bf16.gmra.mxu0 %v5839
  %v7617 = vpop.f32.mrf.mxu0
  %v7618 = vadd.f32 %v7529, %v7617
  %v7619 = vpop.f32.mrf.mxu0
  %v7620 = vadd.f32 %v7531, %v7619
  %7621 = vmatmul.bf16.gmra.mxu0 %v5848
  %v7622 = vpop.f32.mrf.mxu0
  %v7623 = vadd.f32 %v7534, %v7622
  %v7624 = vpop.f32.mrf.mxu0
  %v7625 = vadd.f32 %v7536, %v7624
  %7626 = vmatmul.bf16.gmra.mxu0 %v5857
  %v7627 = vpop.f32.mrf.mxu0
  %v7628 = vadd.f32 %v7539, %v7627
  %v7629 = vpop.f32.mrf.mxu0
  %v7630 = vadd.f32 %v7541, %v7629
  %7631 = vmatmul.bf16.gmra.mxu0 %v5866
  %v7632 = vpop.f32.mrf.mxu0
  %v7633 = vadd.f32 %v7544, %v7632
  %v7634 = vpop.f32.mrf.mxu0
  %v7635 = vadd.f32 %v7546, %v7634
  %7636 = vmatmul.bf16.gmra.mxu0 %v5875
  %v7637 = vpop.f32.mrf.mxu0
  %v7638 = vadd.f32 %v7549, %v7637
  %v7639 = vpop.f32.mrf.mxu0
  %v7640 = vadd.f32 %v7551, %v7639
  %7641 = vmatmul.bf16.gmra.mxu0 %v5884
  %v7642 = vpop.f32.mrf.mxu0
  %v7643 = vadd.f32 %v7554, %v7642
  %v7644 = vpop.f32.mrf.mxu0
  %v7645 = vadd.f32 %v7556, %v7644
  %7646 = vmatmul.bf16.gmra.mxu0 %v5893
  %v7647 = vpop.f32.mrf.mxu0
  %v7648 = vadd.f32 %v7559, %v7647
  %v7649 = vpop.f32.mrf.mxu0
  %v7650 = vadd.f32 %v7561, %v7649
  %7651 = vmatmul.bf16.gmra.mxu0 %v5902
  %v7652 = vpop.f32.mrf.mxu0
  %v7653 = vadd.f32 %v7564, %v7652
  %v7654 = vpop.f32.mrf.mxu0
  %v7655 = vadd.f32 %v7566, %v7654
  %7656 = vmatmul.bf16.gmra.mxu0 %v5911
  %v7657 = vpop.f32.mrf.mxu0
  %v7658 = vadd.f32 %v7569, %v7657
  %v7659 = vpop.f32.mrf.mxu0
  %v7660 = vadd.f32 %v7571, %v7659
  %7661 = vmatmul.bf16.gmra.mxu0 %v5920
  %v7662 = vpop.f32.mrf.mxu0
  %v7663 = vadd.f32 %v7574, %v7662
  %v7664 = vpop.f32.mrf.mxu0
  %v7665 = vadd.f32 %v7576, %v7664
  %7666 = vdwg.mxu0
  %v7667 = vmax.f32 %v6787, 0.0
  %v7668 = vmax.f32 %v7588, 0.0
  %v7669 = vmax.f32 %v6789, 0.0
  %v7670 = vmax.f32 %v7590, 0.0
  %v7671 = vmax.f32 %v6792, 0.0
  %v7672 = vmax.f32 %v7593, 0.0
  %v7673 = vmax.f32 %v6794, 0.0
  %v7674 = vmax.f32 %v7595, 0.0
  %v7675 = vmax.f32 %v6797, 0.0
  %v7676 = vmax.f32 %v7598, 0.0
  %v7677 = vmax.f32 %v6799, 0.0
  %v7678 = vmax.f32 %v7600, 0.0
  %v7679 = vmax.f32 %v6802, 0.0
  %v7680 = vmax.f32 %v7603, 0.0
  %v7681 = vmax.f32 %v6804, 0.0
  %v7682 = vmax.f32 %v7605, 0.0
  %v7683 = vmax.f32 %v6807, 0.0
  %v7684 = vmax.f32 %v7608, 0.0
  %v7685 = vmax.f32 %v6809, 0.0
  %v7686 = vmax.f32 %v7610, 0.0
  %v7687 = vmax.f32 %v6812, 0.0
  %v7688 = vmax.f32 %v7613, 0.0
  %v7689 = vmax.f32 %v6814, 0.0
  %v7690 = vmax.f32 %v7615, 0.0
  %v7691 = vmax.f32 %v6817, 0.0
  %v7692 = vmax.f32 %v7618, 0.0
  %v7693 = vmax.f32 %v6819, 0.0
  %v7694 = vmax.f32 %v7620, 0.0
  %v7695 = vmax.f32 %v6822, 0.0
  %v7696 = vmax.f32 %v7623, 0.0
  %v7697 = vmax.f32 %v6824, 0.0
  %v7698 = vmax.f32 %v7625, 0.0
  %v7699 = vmax.f32 %v6827, 0.0
  %v7700 = vmax.f32 %v7628, 0.0
  %v7701 = vmax.f32 %v6829, 0.0
  %v7702 = vmax.f32 %v7630, 0.0
  %v7703 = vmax.f32 %v6832, 0.0
  %v7704 = vmax.f32 %v7633, 0.0
  %v7705 = vmax.f32 %v6834, 0.0
  %v7706 = vmax.f32 %v7635, 0.0
  %v7707 = vmax.f32 %v6837, 0.0
  %v7708 = vmax.f32 %v7638, 0.0
  %v7709 = vmax.f32 %v6839, 0.0
  %v7710 = vmax.f32 %v7640, 0.0
  %v7711 = vmax.f32 %v6842, 0.0
  %v7712 = vmax.f32 %v7643, 0.0
  %v7713 = vmax.f32 %v6844, 0.0
  %v7714 = vmax.f32 %v7645, 0.0
  %v7715 = vmax.f32 %v6847, 0.0
  %v7716 = vmax.f32 %v7648, 0.0
  %v7717 = vmax.f32 %v6849, 0.0
  %v7718 = vmax.f32 %v7650, 0.0
  %v7719 = vmax.f32 %v6852, 0.0
  %v7720 = vmax.f32 %v7653, 0.0
  %v7721 = vmax.f32 %v6854, 0.0
  %v7722 = vmax.f32 %v7655, 0.0
  %v7723 = vmax.f32 %v6857, 0.0
  %v7724 = vmax.f32 %v7658, 0.0
  %v7725 = vmax.f32 %v6859, 0.0
  %v7726 = vmax.f32 %v7660, 0.0
  %v7727 = vmax.f32 %v6862, 0.0
  %v7728 = vmax.f32 %v7663, 0.0
  %v7729 = vmax.f32 %v6864, 0.0
  %v7730 = vmax.f32 %v7665, 0.0
  %7795 = vrot.lane.b32.xlu0 %v7667, 114
  %v7796 = vpop.permute.xlu0 %7795
  %7797 = vrot.lane.b32.xlu0 %v7668, 114
  %v7798 = vpop.permute.xlu0 %7797
  %7799 = vrot.lane.b32.xlu0 %v7669, 114
  %v7800 = vpop.permute.xlu0 %7799
  %7801 = vrot.lane.b32.xlu0 %v7670, 114
  %v7802 = vpop.permute.xlu0 %7801
  %7803 = vrot.lane.b32.xlu0 %v7671, 114
  %v7804 = vpop.permute.xlu0 %7803
  %7805 = vrot.lane.b32.xlu0 %v7672, 114
  %v7806 = vpop.permute.xlu0 %7805
  %7807 = vrot.lane.b32.xlu0 %v7673, 114
  %v7808 = vpop.permute.xlu0 %7807
  %7809 = vrot.lane.b32.xlu0 %v7674, 114
  %v7810 = vpop.permute.xlu0 %7809
  %7811 = vrot.lane.b32.xlu0 %v7675, 114
  %v7812 = vpop.permute.xlu0 %7811
  %7813 = vrot.lane.b32.xlu0 %v7676, 114
  %v7814 = vpop.permute.xlu0 %7813
  %7815 = vrot.lane.b32.xlu0 %v7677, 114
  %v7816 = vpop.permute.xlu0 %7815
  %7817 = vrot.lane.b32.xlu0 %v7678, 114
  %v7818 = vpop.permute.xlu0 %7817
  %7819 = vrot.lane.b32.xlu0 %v7679, 114
  %v7820 = vpop.permute.xlu0 %7819
  %7821 = vrot.lane.b32.xlu0 %v7680, 114
  %v7822 = vpop.permute.xlu0 %7821
  %7823 = vrot.lane.b32.xlu0 %v7681, 114
  %v7824 = vpop.permute.xlu0 %7823
  %7825 = vrot.lane.b32.xlu0 %v7682, 114
  %v7826 = vpop.permute.xlu0 %7825
  %7827 = vrot.lane.b32.xlu0 %v7683, 114
  %v7828 = vpop.permute.xlu0 %7827
  %7829 = vrot.lane.b32.xlu0 %v7684, 114
  %v7830 = vpop.permute.xlu0 %7829
  %7831 = vrot.lane.b32.xlu0 %v7685, 114
  %v7832 = vpop.permute.xlu0 %7831
  %7833 = vrot.lane.b32.xlu0 %v7686, 114
  %v7834 = vpop.permute.xlu0 %7833
  %7835 = vrot.lane.b32.xlu0 %v7687, 114
  %v7836 = vpop.permute.xlu0 %7835
  %7837 = vrot.lane.b32.xlu0 %v7688, 114
  %v7838 = vpop.permute.xlu0 %7837
  %7839 = vrot.lane.b32.xlu0 %v7689, 114
  %v7840 = vpop.permute.xlu0 %7839
  %7841 = vrot.lane.b32.xlu0 %v7690, 114
  %v7842 = vpop.permute.xlu0 %7841
  %7843 = vrot.lane.b32.xlu0 %v7691, 114
  %v7844 = vpop.permute.xlu0 %7843
  %7845 = vrot.lane.b32.xlu0 %v7692, 114
  %v7846 = vpop.permute.xlu0 %7845
  %7847 = vrot.lane.b32.xlu0 %v7693, 114
  %v7848 = vpop.permute.xlu0 %7847
  %7849 = vrot.lane.b32.xlu0 %v7694, 114
  %v7850 = vpop.permute.xlu0 %7849
  %7851 = vrot.lane.b32.xlu0 %v7695, 114
  %v7852 = vpop.permute.xlu0 %7851
  %7853 = vrot.lane.b32.xlu0 %v7696, 114
  %v7854 = vpop.permute.xlu0 %7853
  %7855 = vrot.lane.b32.xlu0 %v7697, 114
  %v7856 = vpop.permute.xlu0 %7855
  %7857 = vrot.lane.b32.xlu0 %v7698, 114
  %v7858 = vpop.permute.xlu0 %7857
  %7859 = vrot.lane.b32.xlu0 %v7699, 114
  %v7860 = vpop.permute.xlu0 %7859
  %7861 = vrot.lane.b32.xlu0 %v7700, 114
  %v7862 = vpop.permute.xlu0 %7861
  %7863 = vrot.lane.b32.xlu0 %v7701, 114
  %v7864 = vpop.permute.xlu0 %7863
  %7865 = vrot.lane.b32.xlu0 %v7702, 114
  %v7866 = vpop.permute.xlu0 %7865
  %7867 = vrot.lane.b32.xlu0 %v7703, 114
  %v7868 = vpop.permute.xlu0 %7867
  %7869 = vrot.lane.b32.xlu0 %v7704, 114
  %v7870 = vpop.permute.xlu0 %7869
  %7871 = vrot.lane.b32.xlu0 %v7705, 114
  %v7872 = vpop.permute.xlu0 %7871
  %7873 = vrot.lane.b32.xlu0 %v7706, 114
  %v7874 = vpop.permute.xlu0 %7873
  %7875 = vrot.lane.b32.xlu0 %v7707, 114
  %v7876 = vpop.permute.xlu0 %7875
  %7877 = vrot.lane.b32.xlu0 %v7708, 114
  %v7878 = vpop.permute.xlu0 %7877
  %7879 = vrot.lane.b32.xlu0 %v7709, 114
  %v7880 = vpop.permute.xlu0 %7879
  %7881 = vrot.lane.b32.xlu0 %v7710, 114
  %v7882 = vpop.permute.xlu0 %7881
  %7883 = vrot.lane.b32.xlu0 %v7711, 114
  %v7884 = vpop.permute.xlu0 %7883
  %7885 = vrot.lane.b32.xlu0 %v7712, 114
  %v7886 = vpop.permute.xlu0 %7885
  %7887 = vrot.lane.b32.xlu0 %v7713, 114
  %v7888 = vpop.permute.xlu0 %7887
  %7889 = vrot.lane.b32.xlu0 %v7714, 114
  %v7890 = vpop.permute.xlu0 %7889
  %7891 = vrot.lane.b32.xlu0 %v7715, 114
  %v7892 = vpop.permute.xlu0 %7891
  %7893 = vrot.lane.b32.xlu0 %v7716, 114
  %v7894 = vpop.permute.xlu0 %7893
  %7895 = vrot.lane.b32.xlu0 %v7717, 114
  %v7896 = vpop.permute.xlu0 %7895
  %7897 = vrot.lane.b32.xlu0 %v7718, 114
  %v7898 = vpop.permute.xlu0 %7897
  %7899 = vrot.lane.b32.xlu0 %v7719, 114
  %v7900 = vpop.permute.xlu0 %7899
  %7901 = vrot.lane.b32.xlu0 %v7720, 114
  %v7902 = vpop.permute.xlu0 %7901
  %7903 = vrot.lane.b32.xlu0 %v7721, 114
  %v7904 = vpop.permute.xlu0 %7903
  %7905 = vrot.lane.b32.xlu0 %v7722, 114
  %v7906 = vpop.permute.xlu0 %7905
  %7907 = vrot.lane.b32.xlu0 %v7723, 114
  %v7908 = vpop.permute.xlu0 %7907
  %7909 = vrot.lane.b32.xlu0 %v7724, 114
  %v7910 = vpop.permute.xlu0 %7909
  %7911 = vrot.lane.b32.xlu0 %v7725, 114
  %v7912 = vpop.permute.xlu0 %7911
  %7913 = vrot.lane.b32.xlu0 %v7726, 114
  %v7914 = vpop.permute.xlu0 %7913
  %7915 = vrot.lane.b32.xlu0 %v7727, 114
  %v7916 = vpop.permute.xlu0 %7915
  %7917 = vrot.lane.b32.xlu0 %v7728, 114
  %v7918 = vpop.permute.xlu0 %7917
  %7919 = vrot.lane.b32.xlu0 %v7729, 114
  %v7920 = vpop.permute.xlu0 %7919
  %7921 = vrot.lane.b32.xlu0 %v7730, 114
  %v7922 = vpop.permute.xlu0 %7921
  %vm7923 = vcmask 932864
  %v7924 = vsel %vm7923, %v7796, %v7798
  %v7925 = vsel %vm7923, %v7800, %v7802
  %v7926 = vsel %vm7923, %v7804, %v7806
  %v7927 = vsel %vm7923, %v7808, %v7810
  %v7928 = vsel %vm7923, %v7812, %v7814
  %v7929 = vsel %vm7923, %v7816, %v7818
  %v7930 = vsel %vm7923, %v7820, %v7822
  %v7931 = vsel %vm7923, %v7824, %v7826
  %v7932 = vsel %vm7923, %v7828, %v7830
  %v7933 = vsel %vm7923, %v7832, %v7834
  %v7934 = vsel %vm7923, %v7836, %v7838
  %v7935 = vsel %vm7923, %v7840, %v7842
  %v7936 = vsel %vm7923, %v7844, %v7846
  %v7937 = vsel %vm7923, %v7848, %v7850
  %v7938 = vsel %vm7923, %v7852, %v7854
  %v7939 = vsel %vm7923, %v7856, %v7858
  %v7940 = vsel %vm7923, %v7860, %v7862
  %v7941 = vsel %vm7923, %v7864, %v7866
  %v7942 = vsel %vm7923, %v7868, %v7870
  %v7943 = vsel %vm7923, %v7872, %v7874
  %v7944 = vsel %vm7923, %v7876, %v7878
  %v7945 = vsel %vm7923, %v7880, %v7882
  %v7946 = vsel %vm7923, %v7884, %v7886
  %v7947 = vsel %vm7923, %v7888, %v7890
  %v7948 = vsel %vm7923, %v7892, %v7894
  %v7949 = vsel %vm7923, %v7896, %v7898
  %v7950 = vsel %vm7923, %v7900, %v7902
  %v7951 = vsel %vm7923, %v7904, %v7906
  %v7952 = vsel %vm7923, %v7908, %v7910
  %v7953 = vsel %vm7923, %v7912, %v7914
  %v7954 = vsel %vm7923, %v7916, %v7918
  %v7955 = vsel %vm7923, %v7920, %v7922
  %v8020 = vmax.f32 %v7667, %v7924
  %v8021 = vmax.f32 %v7668, %v7798
  %v8022 = vmax.f32 %v7669, %v7925
  %v8023 = vmax.f32 %v7670, %v7802
  %v8024 = vmax.f32 %v7671, %v7926
  %v8025 = vmax.f32 %v7672, %v7806
  %v8026 = vmax.f32 %v7673, %v7927
  %v8027 = vmax.f32 %v7674, %v7810
  %v8028 = vmax.f32 %v7675, %v7928
  %v8029 = vmax.f32 %v7676, %v7814
  %v8030 = vmax.f32 %v7677, %v7929
  %v8031 = vmax.f32 %v7678, %v7818
  %v8032 = vmax.f32 %v7679, %v7930
  %v8033 = vmax.f32 %v7680, %v7822
  %v8034 = vmax.f32 %v7681, %v7931
  %v8035 = vmax.f32 %v7682, %v7826
  %v8036 = vmax.f32 %v7683, %v7932
  %v8037 = vmax.f32 %v7684, %v7830
  %v8038 = vmax.f32 %v7685, %v7933
  %v8039 = vmax.f32 %v7686, %v7834
  %v8040 = vmax.f32 %v7687, %v7934
  %v8041 = vmax.f32 %v7688, %v7838
  %v8042 = vmax.f32 %v7689, %v7935
  %v8043 = vmax.f32 %v7690, %v7842
  %v8044 = vmax.f32 %v7691, %v7936
  %v8045 = vmax.f32 %v7692, %v7846
  %v8046 = vmax.f32 %v7693, %v7937
  %v8047 = vmax.f32 %v7694, %v7850
  %v8048 = vmax.f32 %v7695, %v7938
  %v8049 = vmax.f32 %v7696, %v7854
  %v8050 = vmax.f32 %v7697, %v7939
  %v8051 = vmax.f32 %v7698, %v7858
  %v8052 = vmax.f32 %v7699, %v7940
  %v8053 = vmax.f32 %v7700, %v7862
  %v8054 = vmax.f32 %v7701, %v7941
  %v8055 = vmax.f32 %v7702, %v7866
  %v8056 = vmax.f32 %v7703, %v7942
  %v8057 = vmax.f32 %v7704, %v7870
  %v8058 = vmax.f32 %v7705, %v7943
  %v8059 = vmax.f32 %v7706, %v7874
  %v8060 = vmax.f32 %v7707, %v7944
  %v8061 = vmax.f32 %v7708, %v7878
  %v8062 = vmax.f32 %v7709, %v7945
  %v8063 = vmax.f32 %v7710, %v7882
  %v8064 = vmax.f32 %v7711, %v7946
  %v8065 = vmax.f32 %v7712, %v7886
  %v8066 = vmax.f32 %v7713, %v7947
  %v8067 = vmax.f32 %v7714, %v7890
  %v8068 = vmax.f32 %v7715, %v7948
  %v8069 = vmax.f32 %v7716, %v7894
  %v8070 = vmax.f32 %v7717, %v7949
  %v8071 = vmax.f32 %v7718, %v7898
  %v8072 = vmax.f32 %v7719, %v7950
  %v8073 = vmax.f32 %v7720, %v7902
  %v8074 = vmax.f32 %v7721, %v7951
  %v8075 = vmax.f32 %v7722, %v7906
  %v8076 = vmax.f32 %v7723, %v7952
  %v8077 = vmax.f32 %v7724, %v7910
  %v8078 = vmax.f32 %v7725, %v7953
  %v8079 = vmax.f32 %v7726, %v7914
  %v8080 = vmax.f32 %v7727, %v7954
  %v8081 = vmax.f32 %v7728, %v7918
  %v8082 = vmax.f32 %v7729, %v7955
  %v8083 = vmax.f32 %v7730, %v7922
  %8148 = vrot.lane.b32.xlu0 %v8020, 127
  %v8149 = vpop.permute.xlu0 %8148
  %8150 = vrot.lane.b32.xlu0 %v8021, 127
  %v8151 = vpop.permute.xlu0 %8150
  %8152 = vrot.lane.b32.xlu0 %v8022, 127
  %v8153 = vpop.permute.xlu0 %8152
  %8154 = vrot.lane.b32.xlu0 %v8023, 127
  %v8155 = vpop.permute.xlu0 %8154
  %8156 = vrot.lane.b32.xlu0 %v8024, 127
  %v8157 = vpop.permute.xlu0 %8156
  %8158 = vrot.lane.b32.xlu0 %v8025, 127
  %v8159 = vpop.permute.xlu0 %8158
  %8160 = vrot.lane.b32.xlu0 %v8026, 127
  %v8161 = vpop.permute.xlu0 %8160
  %8162 = vrot.lane.b32.xlu0 %v8027, 127
  %v8163 = vpop.permute.xlu0 %8162
  %8164 = vrot.lane.b32.xlu0 %v8028, 127
  %v8165 = vpop.permute.xlu0 %8164
  %8166 = vrot.lane.b32.xlu0 %v8029, 127
  %v8167 = vpop.permute.xlu0 %8166
  %8168 = vrot.lane.b32.xlu0 %v8030, 127
  %v8169 = vpop.permute.xlu0 %8168
  %8170 = vrot.lane.b32.xlu0 %v8031, 127
  %v8171 = vpop.permute.xlu0 %8170
  %8172 = vrot.lane.b32.xlu0 %v8032, 127
  %v8173 = vpop.permute.xlu0 %8172
  %8174 = vrot.lane.b32.xlu0 %v8033, 127
  %v8175 = vpop.permute.xlu0 %8174
  %8176 = vrot.lane.b32.xlu0 %v8034, 127
  %v8177 = vpop.permute.xlu0 %8176
  %8178 = vrot.lane.b32.xlu0 %v8035, 127
  %v8179 = vpop.permute.xlu0 %8178
  %8180 = vrot.lane.b32.xlu0 %v8036, 127
  %v8181 = vpop.permute.xlu0 %8180
  %8182 = vrot.lane.b32.xlu0 %v8037, 127
  %v8183 = vpop.permute.xlu0 %8182
  %8184 = vrot.lane.b32.xlu0 %v8038, 127
  %v8185 = vpop.permute.xlu0 %8184
  %8186 = vrot.lane.b32.xlu0 %v8039, 127
  %v8187 = vpop.permute.xlu0 %8186
  %8188 = vrot.lane.b32.xlu0 %v8040, 127
  %v8189 = vpop.permute.xlu0 %8188
  %8190 = vrot.lane.b32.xlu0 %v8041, 127
  %v8191 = vpop.permute.xlu0 %8190
  %8192 = vrot.lane.b32.xlu0 %v8042, 127
  %v8193 = vpop.permute.xlu0 %8192
  %8194 = vrot.lane.b32.xlu0 %v8043, 127
  %v8195 = vpop.permute.xlu0 %8194
  %8196 = vrot.lane.b32.xlu0 %v8044, 127
  %v8197 = vpop.permute.xlu0 %8196
  %8198 = vrot.lane.b32.xlu0 %v8045, 127
  %v8199 = vpop.permute.xlu0 %8198
  %8200 = vrot.lane.b32.xlu0 %v8046, 127
  %v8201 = vpop.permute.xlu0 %8200
  %8202 = vrot.lane.b32.xlu0 %v8047, 127
  %v8203 = vpop.permute.xlu0 %8202
  %8204 = vrot.lane.b32.xlu0 %v8048, 127
  %v8205 = vpop.permute.xlu0 %8204
  %8206 = vrot.lane.b32.xlu0 %v8049, 127
  %v8207 = vpop.permute.xlu0 %8206
  %8208 = vrot.lane.b32.xlu0 %v8050, 127
  %v8209 = vpop.permute.xlu0 %8208
  %8210 = vrot.lane.b32.xlu0 %v8051, 127
  %v8211 = vpop.permute.xlu0 %8210
  %8212 = vrot.lane.b32.xlu0 %v8052, 127
  %v8213 = vpop.permute.xlu0 %8212
  %8214 = vrot.lane.b32.xlu0 %v8053, 127
  %v8215 = vpop.permute.xlu0 %8214
  %8216 = vrot.lane.b32.xlu0 %v8054, 127
  %v8217 = vpop.permute.xlu0 %8216
  %8218 = vrot.lane.b32.xlu0 %v8055, 127
  %v8219 = vpop.permute.xlu0 %8218
  %8220 = vrot.lane.b32.xlu0 %v8056, 127
  %v8221 = vpop.permute.xlu0 %8220
  %8222 = vrot.lane.b32.xlu0 %v8057, 127
  %v8223 = vpop.permute.xlu0 %8222
  %8224 = vrot.lane.b32.xlu0 %v8058, 127
  %v8225 = vpop.permute.xlu0 %8224
  %8226 = vrot.lane.b32.xlu0 %v8059, 127
  %v8227 = vpop.permute.xlu0 %8226
  %8228 = vrot.lane.b32.xlu0 %v8060, 127
  %v8229 = vpop.permute.xlu0 %8228
  %8230 = vrot.lane.b32.xlu0 %v8061, 127
  %v8231 = vpop.permute.xlu0 %8230
  %8232 = vrot.lane.b32.xlu0 %v8062, 127
  %v8233 = vpop.permute.xlu0 %8232
  %8234 = vrot.lane.b32.xlu0 %v8063, 127
  %v8235 = vpop.permute.xlu0 %8234
  %8236 = vrot.lane.b32.xlu0 %v8064, 127
  %v8237 = vpop.permute.xlu0 %8236
  %8238 = vrot.lane.b32.xlu0 %v8065, 127
  %v8239 = vpop.permute.xlu0 %8238
  %8240 = vrot.lane.b32.xlu0 %v8066, 127
  %v8241 = vpop.permute.xlu0 %8240
  %8242 = vrot.lane.b32.xlu0 %v8067, 127
  %v8243 = vpop.permute.xlu0 %8242
  %8244 = vrot.lane.b32.xlu0 %v8068, 127
  %v8245 = vpop.permute.xlu0 %8244
  %8246 = vrot.lane.b32.xlu0 %v8069, 127
  %v8247 = vpop.permute.xlu0 %8246
  %8248 = vrot.lane.b32.xlu0 %v8070, 127
  %v8249 = vpop.permute.xlu0 %8248
  %8250 = vrot.lane.b32.xlu0 %v8071, 127
  %v8251 = vpop.permute.xlu0 %8250
  %8252 = vrot.lane.b32.xlu0 %v8072, 127
  %v8253 = vpop.permute.xlu0 %8252
  %8254 = vrot.lane.b32.xlu0 %v8073, 127
  %v8255 = vpop.permute.xlu0 %8254
  %8256 = vrot.lane.b32.xlu0 %v8074, 127
  %v8257 = vpop.permute.xlu0 %8256
  %8258 = vrot.lane.b32.xlu0 %v8075, 127
  %v8259 = vpop.permute.xlu0 %8258
  %8260 = vrot.lane.b32.xlu0 %v8076, 127
  %v8261 = vpop.permute.xlu0 %8260
  %8262 = vrot.lane.b32.xlu0 %v8077, 127
  %v8263 = vpop.permute.xlu0 %8262
  %8264 = vrot.lane.b32.xlu0 %v8078, 127
  %v8265 = vpop.permute.xlu0 %8264
  %8266 = vrot.lane.b32.xlu0 %v8079, 127
  %v8267 = vpop.permute.xlu0 %8266
  %8268 = vrot.lane.b32.xlu0 %v8080, 127
  %v8269 = vpop.permute.xlu0 %8268
  %8270 = vrot.lane.b32.xlu0 %v8081, 127
  %v8271 = vpop.permute.xlu0 %8270
  %8272 = vrot.lane.b32.xlu0 %v8082, 127
  %v8273 = vpop.permute.xlu0 %8272
  %8274 = vrot.lane.b32.xlu0 %v8083, 127
  %v8275 = vpop.permute.xlu0 %8274
  %v8276 = vsel %vm338, %v8149, %v8151
  %v8277 = vsel %vm338, %v8153, %v8155
  %v8278 = vsel %vm338, %v8157, %v8159
  %v8279 = vsel %vm338, %v8161, %v8163
  %v8280 = vsel %vm338, %v8165, %v8167
  %v8281 = vsel %vm338, %v8169, %v8171
  %v8282 = vsel %vm338, %v8173, %v8175
  %v8283 = vsel %vm338, %v8177, %v8179
  %v8284 = vsel %vm338, %v8181, %v8183
  %v8285 = vsel %vm338, %v8185, %v8187
  %v8286 = vsel %vm338, %v8189, %v8191
  %v8287 = vsel %vm338, %v8193, %v8195
  %v8288 = vsel %vm338, %v8197, %v8199
  %v8289 = vsel %vm338, %v8201, %v8203
  %v8290 = vsel %vm338, %v8205, %v8207
  %v8291 = vsel %vm338, %v8209, %v8211
  %v8292 = vsel %vm338, %v8213, %v8215
  %v8293 = vsel %vm338, %v8217, %v8219
  %v8294 = vsel %vm338, %v8221, %v8223
  %v8295 = vsel %vm338, %v8225, %v8227
  %v8296 = vsel %vm338, %v8229, %v8231
  %v8297 = vsel %vm338, %v8233, %v8235
  %v8298 = vsel %vm338, %v8237, %v8239
  %v8299 = vsel %vm338, %v8241, %v8243
  %v8300 = vsel %vm338, %v8245, %v8247
  %v8301 = vsel %vm338, %v8249, %v8251
  %v8302 = vsel %vm338, %v8253, %v8255
  %v8303 = vsel %vm338, %v8257, %v8259
  %v8304 = vsel %vm338, %v8261, %v8263
  %v8305 = vsel %vm338, %v8265, %v8267
  %v8306 = vsel %vm338, %v8269, %v8271
  %v8307 = vsel %vm338, %v8273, %v8275
  %v8372 = vmax.f32 %v8020, %v8276
  %v8373 = vmax.f32 %v8021, %v8151
  %v8374 = vmax.f32 %v8022, %v8277
  %v8375 = vmax.f32 %v8023, %v8155
  %v8376 = vmax.f32 %v8024, %v8278
  %v8377 = vmax.f32 %v8025, %v8159
  %v8378 = vmax.f32 %v8026, %v8279
  %v8379 = vmax.f32 %v8027, %v8163
  %v8380 = vmax.f32 %v8028, %v8280
  %v8381 = vmax.f32 %v8029, %v8167
  %v8382 = vmax.f32 %v8030, %v8281
  %v8383 = vmax.f32 %v8031, %v8171
  %v8384 = vmax.f32 %v8032, %v8282
  %v8385 = vmax.f32 %v8033, %v8175
  %v8386 = vmax.f32 %v8034, %v8283
  %v8387 = vmax.f32 %v8035, %v8179
  %v8388 = vmax.f32 %v8036, %v8284
  %v8389 = vmax.f32 %v8037, %v8183
  %v8390 = vmax.f32 %v8038, %v8285
  %v8391 = vmax.f32 %v8039, %v8187
  %v8392 = vmax.f32 %v8040, %v8286
  %v8393 = vmax.f32 %v8041, %v8191
  %v8394 = vmax.f32 %v8042, %v8287
  %v8395 = vmax.f32 %v8043, %v8195
  %v8396 = vmax.f32 %v8044, %v8288
  %v8397 = vmax.f32 %v8045, %v8199
  %v8398 = vmax.f32 %v8046, %v8289
  %v8399 = vmax.f32 %v8047, %v8203
  %v8400 = vmax.f32 %v8048, %v8290
  %v8401 = vmax.f32 %v8049, %v8207
  %v8402 = vmax.f32 %v8050, %v8291
  %v8403 = vmax.f32 %v8051, %v8211
  %v8404 = vmax.f32 %v8052, %v8292
  %v8405 = vmax.f32 %v8053, %v8215
  %v8406 = vmax.f32 %v8054, %v8293
  %v8407 = vmax.f32 %v8055, %v8219
  %v8408 = vmax.f32 %v8056, %v8294
  %v8409 = vmax.f32 %v8057, %v8223
  %v8410 = vmax.f32 %v8058, %v8295
  %v8411 = vmax.f32 %v8059, %v8227
  %v8412 = vmax.f32 %v8060, %v8296
  %v8413 = vmax.f32 %v8061, %v8231
  %v8414 = vmax.f32 %v8062, %v8297
  %v8415 = vmax.f32 %v8063, %v8235
  %v8416 = vmax.f32 %v8064, %v8298
  %v8417 = vmax.f32 %v8065, %v8239
  %v8418 = vmax.f32 %v8066, %v8299
  %v8419 = vmax.f32 %v8067, %v8243
  %v8420 = vmax.f32 %v8068, %v8300
  %v8421 = vmax.f32 %v8069, %v8247
  %v8422 = vmax.f32 %v8070, %v8301
  %v8423 = vmax.f32 %v8071, %v8251
  %v8424 = vmax.f32 %v8072, %v8302
  %v8425 = vmax.f32 %v8073, %v8255
  %v8426 = vmax.f32 %v8074, %v8303
  %v8427 = vmax.f32 %v8075, %v8259
  %v8428 = vmax.f32 %v8076, %v8304
  %v8429 = vmax.f32 %v8077, %v8263
  %v8430 = vmax.f32 %v8078, %v8305
  %v8431 = vmax.f32 %v8079, %v8267
  %v8432 = vmax.f32 %v8080, %v8306
  %v8433 = vmax.f32 %v8081, %v8271
  %v8434 = vmax.f32 %v8082, %v8307
  %v8435 = vmax.f32 %v8083, %v8275
  %v8436 = vld [vmem:[%s8] sm:$0xff]
  %v8437 = vld [vmem:[%s8 + $0x8] sm:$0xff]
  %v8438 = vld [vmem:[%s8 + $0x10] sm:$0xff]
  %v8439 = vld [vmem:[%s8 + $0x18] sm:$0xff]
  %v8440 = vld [vmem:[%s8 + $0x20] sm:$0xff]
  %v8441 = vld [vmem:[%s8 + $0x28] sm:$0xff]
  %v8442 = vld [vmem:[%s8 + $0x30] sm:$0xff]
  %v8443 = vld [vmem:[%s8 + $0x38] sm:$0xff]
  %v8444 = vld [vmem:[%s8 + $0x40] sm:$0xff]
  %v8445 = vld [vmem:[%s8 + $0x48] sm:$0xff]
  %v8446 = vld [vmem:[%s8 + $0x50] sm:$0xff]
  %v8447 = vld [vmem:[%s8 + $0x58] sm:$0xff]
  %v8448 = vld [vmem:[%s8 + $0x60] sm:$0xff]
  %v8449 = vld [vmem:[%s8 + $0x68] sm:$0xff]
  %v8450 = vld [vmem:[%s8 + $0x70] sm:$0xff]
  %v8451 = vld [vmem:[%s8 + $0x78] sm:$0xff]
  %v8452 = vld [vmem:[%s8 + $0x80] sm:$0xff]
  %v8453 = vld [vmem:[%s8 + $0x88] sm:$0xff]
  %v8454 = vld [vmem:[%s8 + $0x90] sm:$0xff]
  %v8455 = vld [vmem:[%s8 + $0x98] sm:$0xff]
  %v8456 = vld [vmem:[%s8 + $0xa0] sm:$0xff]
  %v8457 = vld [vmem:[%s8 + $0xa8] sm:$0xff]
  %v8458 = vld [vmem:[%s8 + $0xb0] sm:$0x1f]
  %v8459 = vld [vmem:[%s8 + $0xb8] sm:$0xff]
  %v8460 = vld [vmem:[%s8 + $0xc0] sm:$0xff]
  %v8461 = vld [vmem:[%s8 + $0xc8] sm:$0xff]
  %v8462 = vld [vmem:[%s8 + $0xd0] sm:$0xff]
  %v8463 = vld [vmem:[%s8 + $0xd8] sm:$0xff]
  %v8464 = vld [vmem:[%s8 + $0xe0] sm:$0xff]
  %v8465 = vld [vmem:[%s8 + $0xe8] sm:$0xff]
  %v8466 = vld [vmem:[%s8 + $0xf0] sm:$0xff]
  %v8467 = vld [vmem:[%s8 + $0xf8] sm:$0xff]
  %v8468 = vld [vmem:[%s8 + $0x100] sm:$0xff]
  %v8469 = vld [vmem:[%s8 + $0x108] sm:$0xff]
  %v8470 = vld [vmem:[%s8 + $0x110] sm:$0xff]
  %v8471 = vld [vmem:[%s8 + $0x118] sm:$0xff]
  %v8472 = vld [vmem:[%s8 + $0x120] sm:$0xff]
  %v8473 = vld [vmem:[%s8 + $0x128] sm:$0xff]
  %v8474 = vld [vmem:[%s8 + $0x130] sm:$0xff]
  %v8475 = vld [vmem:[%s8 + $0x138] sm:$0xff]
  %v8476 = vld [vmem:[%s8 + $0x140] sm:$0xff]
  %v8477 = vld [vmem:[%s8 + $0x148] sm:$0xff]
  %v8478 = vld [vmem:[%s8 + $0x150] sm:$0xff]
  %v8479 = vld [vmem:[%s8 + $0x158] sm:$0xff]
  %v8480 = vld [vmem:[%s8 + $0x160] sm:$0xff]
  %v8481 = vld [vmem:[%s8 + $0x168] sm:$0x1f]
  %v8482 = vld [vmem:[%s8 + $0x170] sm:$0xff]
  %v8483 = vld [vmem:[%s8 + $0x178] sm:$0xff]
  %v8484 = vld [vmem:[%s8 + $0x180] sm:$0xff]
  %v8485 = vld [vmem:[%s8 + $0x188] sm:$0xff]
  %v8486 = vld [vmem:[%s8 + $0x190] sm:$0xff]
  %v8487 = vld [vmem:[%s8 + $0x198] sm:$0xff]
  %v8488 = vld [vmem:[%s8 + $0x1a0] sm:$0xff]
  %v8489 = vld [vmem:[%s8 + $0x1a8] sm:$0xff]
  %v8490 = vld [vmem:[%s8 + $0x1b0] sm:$0xff]
  %v8491 = vld [vmem:[%s8 + $0x1b8] sm:$0xff]
  %v8492 = vld [vmem:[%s8 + $0x1c0] sm:$0xff]
  %v8493 = vld [vmem:[%s8 + $0x1c8] sm:$0xff]
  %v8494 = vld [vmem:[%s8 + $0x1d0] sm:$0xff]
  %v8495 = vld [vmem:[%s8 + $0x1d8] sm:$0xff]
  %v8496 = vld [vmem:[%s8 + $0x1e0] sm:$0xff]
  %v8497 = vld [vmem:[%s8 + $0x1e8] sm:$0xff]
  %v8498 = vld [vmem:[%s8 + $0x1f0] sm:$0xff]
  %v8499 = vld [vmem:[%s8 + $0x1f8] sm:$0xff]
  %v8500 = vld [vmem:[%s8 + $0x200] sm:$0xff]
  %v8501 = vld [vmem:[%s8 + $0x208] sm:$0xff]
  %v8502 = vld [vmem:[%s8 + $0x210] sm:$0xff]
  %v8503 = vld [vmem:[%s8 + $0x218] sm:$0xff]
  %v8504 = vld [vmem:[%s8 + $0x220] sm:$0x1f]
  %v8505 = vld [vmem:[%s8 + $0x228] sm:$0xff]
  %v8506 = vld [vmem:[%s8 + $0x230] sm:$0xff]
  %v8507 = vld [vmem:[%s8 + $0x238] sm:$0xff]
  %v8508 = vld [vmem:[%s8 + $0x240] sm:$0xff]
  %v8509 = vld [vmem:[%s8 + $0x248] sm:$0xff]
  %v8510 = vld [vmem:[%s8 + $0x250] sm:$0xff]
  %v8511 = vld [vmem:[%s8 + $0x258] sm:$0xff]
  %v8512 = vld [vmem:[%s8 + $0x260] sm:$0xff]
  %v8513 = vld [vmem:[%s8 + $0x268] sm:$0xff]
  %v8514 = vld [vmem:[%s8 + $0x270] sm:$0xff]
  %v8515 = vld [vmem:[%s8 + $0x278] sm:$0xff]
  %v8516 = vld [vmem:[%s8 + $0x280] sm:$0xff]
  %v8517 = vld [vmem:[%s8 + $0x288] sm:$0xff]
  %v8518 = vld [vmem:[%s8 + $0x290] sm:$0xff]
  %v8519 = vld [vmem:[%s8 + $0x298] sm:$0xff]
  %v8520 = vld [vmem:[%s8 + $0x2a0] sm:$0xff]
  %v8521 = vld [vmem:[%s8 + $0x2a8] sm:$0xff]
  %v8522 = vld [vmem:[%s8 + $0x2b0] sm:$0xff]
  %v8523 = vld [vmem:[%s8 + $0x2b8] sm:$0xff]
  %v8524 = vld [vmem:[%s8 + $0x2c0] sm:$0xff]
  %v8525 = vld [vmem:[%s8 + $0x2c8] sm:$0xff]
  %v8526 = vld [vmem:[%s8 + $0x2d0] sm:$0xff]
  %v8527 = vld [vmem:[%s8 + $0x2d8] sm:$0x1f]
  %v8528 = vld [vmem:[%s8 + $0x2e0] sm:$0xff]
  %v8529 = vld [vmem:[%s8 + $0x2e8] sm:$0xff]
  %v8530 = vld [vmem:[%s8 + $0x2f0] sm:$0xff]
  %v8531 = vld [vmem:[%s8 + $0x2f8] sm:$0xff]
  %v8532 = vld [vmem:[%s8 + $0x300] sm:$0xff]
  %v8533 = vld [vmem:[%s8 + $0x308] sm:$0xff]
  %v8534 = vld [vmem:[%s8 + $0x310] sm:$0xff]
  %v8535 = vld [vmem:[%s8 + $0x318] sm:$0xff]
  %v8536 = vld [vmem:[%s8 + $0x320] sm:$0xff]
  %v8537 = vld [vmem:[%s8 + $0x328] sm:$0xff]
  %v8538 = vld [vmem:[%s8 + $0x330] sm:$0xff]
  %v8539 = vld [vmem:[%s8 + $0x338] sm:$0xff]
  %v8540 = vld [vmem:[%s8 + $0x340] sm:$0xff]
  %v8541 = vld [vmem:[%s8 + $0x348] sm:$0xff]
  %v8542 = vld [vmem:[%s8 + $0x350] sm:$0xff]
  %v8543 = vld [vmem:[%s8 + $0x358] sm:$0xff]
  %v8544 = vld [vmem:[%s8 + $0x360] sm:$0xff]
  %v8545 = vld [vmem:[%s8 + $0x368] sm:$0xff]
  %v8546 = vld [vmem:[%s8 + $0x370] sm:$0xff]
  %v8547 = vld [vmem:[%s8 + $0x378] sm:$0xff]
  %v8548 = vld [vmem:[%s8 + $0x380] sm:$0xff]
  %v8549 = vld [vmem:[%s8 + $0x388] sm:$0xff]
  %v8550 = vld [vmem:[%s8 + $0x390] sm:$0x1f]
  %v8551 = vld [vmem:[%s8 + $0x398] sm:$0xff]
  %v8552 = vld [vmem:[%s8 + $0x3a0] sm:$0xff]
  %v8553 = vld [vmem:[%s8 + $0x3a8] sm:$0xff]
  %v8554 = vld [vmem:[%s8 + $0x3b0] sm:$0xff]
  %v8555 = vld [vmem:[%s8 + $0x3b8] sm:$0xff]
  %v8556 = vld [vmem:[%s8 + $0x3c0] sm:$0xff]
  %v8557 = vld [vmem:[%s8 + $0x3c8] sm:$0xff]
  %v8558 = vld [vmem:[%s8 + $0x3d0] sm:$0xff]
  %v8559 = vld [vmem:[%s8 + $0x3d8] sm:$0xff]
  %v8560 = vld [vmem:[%s8 + $0x3e0] sm:$0xff]
  %v8561 = vld [vmem:[%s8 + $0x3e8] sm:$0xff]
  %v8562 = vld [vmem:[%s8 + $0x3f0] sm:$0xff]
  %v8563 = vld [vmem:[%s8 + $0x3f8] sm:$0xff]
  %v8564 = vld [vmem:[%s8 + $0x400] sm:$0xff]
  %v8565 = vld [vmem:[%s8 + $0x408] sm:$0xff]
  %v8566 = vld [vmem:[%s8 + $0x410] sm:$0xff]
  %v8567 = vld [vmem:[%s8 + $0x418] sm:$0xff]
  %v8568 = vld [vmem:[%s8 + $0x420] sm:$0xff]
  %v8569 = vld [vmem:[%s8 + $0x428] sm:$0xff]
  %v8570 = vld [vmem:[%s8 + $0x430] sm:$0xff]
  %v8571 = vld [vmem:[%s8 + $0x438] sm:$0xff]
  %v8572 = vld [vmem:[%s8 + $0x440] sm:$0xff]
  %v8573 = vld [vmem:[%s8 + $0x448] sm:$0x1f]
  %v8574 = vld [vmem:[%s8 + $0x450] sm:$0xff]
  %v8575 = vld [vmem:[%s8 + $0x458] sm:$0xff]
  %v8576 = vld [vmem:[%s8 + $0x460] sm:$0xff]
  %v8577 = vld [vmem:[%s8 + $0x468] sm:$0xff]
  %v8578 = vld [vmem:[%s8 + $0x470] sm:$0xff]
  %v8579 = vld [vmem:[%s8 + $0x478] sm:$0xff]
  %v8580 = vld [vmem:[%s8 + $0x480] sm:$0xff]
  %v8581 = vld [vmem:[%s8 + $0x488] sm:$0xff]
  %v8582 = vld [vmem:[%s8 + $0x490] sm:$0xff]
  %v8583 = vld [vmem:[%s8 + $0x498] sm:$0xff]
  %v8584 = vld [vmem:[%s8 + $0x4a0] sm:$0xff]
  %v8585 = vld [vmem:[%s8 + $0x4a8] sm:$0xff]
  %v8586 = vld [vmem:[%s8 + $0x4b0] sm:$0xff]
  %v8587 = vld [vmem:[%s8 + $0x4b8] sm:$0xff]
  %v8588 = vld [vmem:[%s8 + $0x4c0] sm:$0xff]
  %v8589 = vld [vmem:[%s8 + $0x4c8] sm:$0xff]
  %v8590 = vld [vmem:[%s8 + $0x4d0] sm:$0xff]
  %v8591 = vld [vmem:[%s8 + $0x4d8] sm:$0xff]
  %v8592 = vld [vmem:[%s8 + $0x4e0] sm:$0xff]
  %v8593 = vld [vmem:[%s8 + $0x4e8] sm:$0xff]
  %v8594 = vld [vmem:[%s8 + $0x4f0] sm:$0xff]
  %v8595 = vld [vmem:[%s8 + $0x4f8] sm:$0xff]
  %v8596 = vld [vmem:[%s8 + $0x500] sm:$0x1f]
  %v8597 = vld [vmem:[%s8 + $0x508] sm:$0xff]
  %v8598 = vld [vmem:[%s8 + $0x510] sm:$0xff]
  %v8599 = vld [vmem:[%s8 + $0x518] sm:$0xff]
  %v8600 = vld [vmem:[%s8 + $0x520] sm:$0xff]
  %v8601 = vld [vmem:[%s8 + $0x528] sm:$0xff]
  %v8602 = vld [vmem:[%s8 + $0x530] sm:$0xff]
  %v8603 = vld [vmem:[%s8 + $0x538] sm:$0xff]
  %v8604 = vld [vmem:[%s8 + $0x540] sm:$0xff]
  %v8605 = vld [vmem:[%s8 + $0x548] sm:$0xff]
  %v8606 = vld [vmem:[%s8 + $0x550] sm:$0xff]
  %v8607 = vld [vmem:[%s8 + $0x558] sm:$0xff]
  %v8608 = vld [vmem:[%s8 + $0x560] sm:$0xff]
  %v8609 = vld [vmem:[%s8 + $0x568] sm:$0xff]
  %v8610 = vld [vmem:[%s8 + $0x570] sm:$0xff]
  %v8611 = vld [vmem:[%s8 + $0x578] sm:$0xff]
  %v8612 = vld [vmem:[%s8 + $0x580] sm:$0xff]
  %v8613 = vld [vmem:[%s8 + $0x588] sm:$0xff]
  %v8614 = vld [vmem:[%s8 + $0x590] sm:$0xff]
  %v8615 = vld [vmem:[%s8 + $0x598] sm:$0xff]
  %v8616 = vld [vmem:[%s8 + $0x5a0] sm:$0xff]
  %v8617 = vld [vmem:[%s8 + $0x5a8] sm:$0xff]
  %v8618 = vld [vmem:[%s8 + $0x5b0] sm:$0xff]
  %v8619 = vld [vmem:[%s8 + $0x5b8] sm:$0x1f]
  %v8620 = vld [vmem:[%s8 + $0x5c0] sm:$0xff]
  %v8621 = vld [vmem:[%s8 + $0x5c8] sm:$0xff]
  %v8622 = vld [vmem:[%s8 + $0x5d0] sm:$0xff]
  %v8623 = vld [vmem:[%s8 + $0x5d8] sm:$0xff]
  %v8624 = vld [vmem:[%s8 + $0x5e0] sm:$0xff]
  %v8625 = vld [vmem:[%s8 + $0x5e8] sm:$0xff]
  %v8626 = vld [vmem:[%s8 + $0x5f0] sm:$0xff]
  %v8627 = vld [vmem:[%s8 + $0x5f8] sm:$0xff]
  %v8628 = vld [vmem:[%s8 + $0x600] sm:$0xff]
  %v8629 = vld [vmem:[%s8 + $0x608] sm:$0xff]
  %v8630 = vld [vmem:[%s8 + $0x610] sm:$0xff]
  %v8631 = vld [vmem:[%s8 + $0x618] sm:$0xff]
  %v8632 = vld [vmem:[%s8 + $0x620] sm:$0xff]
  %v8633 = vld [vmem:[%s8 + $0x628] sm:$0xff]
  %v8634 = vld [vmem:[%s8 + $0x630] sm:$0xff]
  %v8635 = vld [vmem:[%s8 + $0x638] sm:$0xff]
  %v8636 = vld [vmem:[%s8 + $0x640] sm:$0xff]
  %v8637 = vld [vmem:[%s8 + $0x648] sm:$0xff]
  %v8638 = vld [vmem:[%s8 + $0x650] sm:$0xff]
  %v8639 = vld [vmem:[%s8 + $0x658] sm:$0xff]
  %v8640 = vld [vmem:[%s8 + $0x660] sm:$0xff]
  %v8641 = vld [vmem:[%s8 + $0x668] sm:$0xff]
  %v8642 = vld [vmem:[%s8 + $0x670] sm:$0x1f]
  %v8643 = vld [vmem:[%s8 + $0x678] sm:$0xff]
  %v8644 = vld [vmem:[%s8 + $0x680] sm:$0xff]
  %v8645 = vld [vmem:[%s8 + $0x688] sm:$0xff]
  %v8646 = vld [vmem:[%s8 + $0x690] sm:$0xff]
  %v8647 = vld [vmem:[%s8 + $0x698] sm:$0xff]
  %v8648 = vld [vmem:[%s8 + $0x6a0] sm:$0xff]
  %v8649 = vld [vmem:[%s8 + $0x6a8] sm:$0xff]
  %v8650 = vld [vmem:[%s8 + $0x6b0] sm:$0xff]
  %v8651 = vld [vmem:[%s8 + $0x6b8] sm:$0xff]
  %v8652 = vld [vmem:[%s8 + $0x6c0] sm:$0xff]
  %v8653 = vld [vmem:[%s8 + $0x6c8] sm:$0xff]
  %v8654 = vld [vmem:[%s8 + $0x6d0] sm:$0xff]
  %v8655 = vld [vmem:[%s8 + $0x6d8] sm:$0xff]
  %v8656 = vld [vmem:[%s8 + $0x6e0] sm:$0xff]
  %v8657 = vld [vmem:[%s8 + $0x6e8] sm:$0xff]
  %v8658 = vld [vmem:[%s8 + $0x6f0] sm:$0xff]
  %v8659 = vld [vmem:[%s8 + $0x6f8] sm:$0xff]
  %v8660 = vld [vmem:[%s8 + $0x700] sm:$0xff]
  %v8661 = vld [vmem:[%s8 + $0x708] sm:$0xff]
  %v8662 = vld [vmem:[%s8 + $0x710] sm:$0xff]
  %v8663 = vld [vmem:[%s8 + $0x718] sm:$0xff]
  %v8664 = vld [vmem:[%s8 + $0x720] sm:$0xff]
  %v8665 = vld [vmem:[%s8 + $0x728] sm:$0x1f]
  %v8666 = vld [vmem:[%s8 + $0x730] sm:$0xff]
  %v8667 = vld [vmem:[%s8 + $0x738] sm:$0xff]
  %v8668 = vld [vmem:[%s8 + $0x740] sm:$0xff]
  %v8669 = vld [vmem:[%s8 + $0x748] sm:$0xff]
  %v8670 = vld [vmem:[%s8 + $0x750] sm:$0xff]
  %v8671 = vld [vmem:[%s8 + $0x758] sm:$0xff]
  %v8672 = vld [vmem:[%s8 + $0x760] sm:$0xff]
  %v8673 = vld [vmem:[%s8 + $0x768] sm:$0xff]
  %v8674 = vld [vmem:[%s8 + $0x770] sm:$0xff]
  %v8675 = vld [vmem:[%s8 + $0x778] sm:$0xff]
  %v8676 = vld [vmem:[%s8 + $0x780] sm:$0xff]
  %v8677 = vld [vmem:[%s8 + $0x788] sm:$0xff]
  %v8678 = vld [vmem:[%s8 + $0x790] sm:$0xff]
  %v8679 = vld [vmem:[%s8 + $0x798] sm:$0xff]
  %v8680 = vld [vmem:[%s8 + $0x7a0] sm:$0xff]
  %v8681 = vld [vmem:[%s8 + $0x7a8] sm:$0xff]
  %v8682 = vld [vmem:[%s8 + $0x7b0] sm:$0xff]
  %v8683 = vld [vmem:[%s8 + $0x7b8] sm:$0xff]
  %v8684 = vld [vmem:[%s8 + $0x7c0] sm:$0xff]
  %v8685 = vld [vmem:[%s8 + $0x7c8] sm:$0xff]
  %v8686 = vld [vmem:[%s8 + $0x7d0] sm:$0xff]
  %v8687 = vld [vmem:[%s8 + $0x7d8] sm:$0xff]
  %v8688 = vld [vmem:[%s8 + $0x7e0] sm:$0x1f]
  %v8689 = vld [vmem:[%s8 + $0x7e8] sm:$0xff]
  %v8690 = vld [vmem:[%s8 + $0x7f0] sm:$0xff]
  %v8691 = vld [vmem:[%s8 + $0x7f8] sm:$0xff]
  %v8692 = vld [vmem:[%s8 + $0x800] sm:$0xff]
  %v8693 = vld [vmem:[%s8 + $0x808] sm:$0xff]
  %v8694 = vld [vmem:[%s8 + $0x810] sm:$0xff]
  %v8695 = vld [vmem:[%s8 + $0x818] sm:$0xff]
  %v8696 = vld [vmem:[%s8 + $0x820] sm:$0xff]
  %v8697 = vld [vmem:[%s8 + $0x828] sm:$0xff]
  %v8698 = vld [vmem:[%s8 + $0x830] sm:$0xff]
  %v8699 = vld [vmem:[%s8 + $0x838] sm:$0xff]
  %v8700 = vld [vmem:[%s8 + $0x840] sm:$0xff]
  %v8701 = vld [vmem:[%s8 + $0x848] sm:$0xff]
  %v8702 = vld [vmem:[%s8 + $0x850] sm:$0xff]
  %v8703 = vld [vmem:[%s8 + $0x858] sm:$0xff]
  %v8704 = vld [vmem:[%s8 + $0x860] sm:$0xff]
  %v8705 = vld [vmem:[%s8 + $0x868] sm:$0xff]
  %v8706 = vld [vmem:[%s8 + $0x870] sm:$0xff]
  %v8707 = vld [vmem:[%s8 + $0x878] sm:$0xff]
  %v8708 = vld [vmem:[%s8 + $0x880] sm:$0xff]
  %v8709 = vld [vmem:[%s8 + $0x888] sm:$0xff]
  %v8710 = vld [vmem:[%s8 + $0x890] sm:$0xff]
  %v8711 = vld [vmem:[%s8 + $0x898] sm:$0x1f]
  %v8712 = vld [vmem:[%s8 + $0x8a0] sm:$0xff]
  %v8713 = vld [vmem:[%s8 + $0x8a8] sm:$0xff]
  %v8714 = vld [vmem:[%s8 + $0x8b0] sm:$0xff]
  %v8715 = vld [vmem:[%s8 + $0x8b8] sm:$0xff]
  %v8716 = vld [vmem:[%s8 + $0x8c0] sm:$0xff]
  %v8717 = vld [vmem:[%s8 + $0x8c8] sm:$0xff]
  %v8718 = vld [vmem:[%s8 + $0x8d0] sm:$0xff]
  %v8719 = vld [vmem:[%s8 + $0x8d8] sm:$0xff]
  %v8720 = vld [vmem:[%s8 + $0x8e0] sm:$0xff]
  %v8721 = vld [vmem:[%s8 + $0x8e8] sm:$0xff]
  %v8722 = vld [vmem:[%s8 + $0x8f0] sm:$0xff]
  %v8723 = vld [vmem:[%s8 + $0x8f8] sm:$0xff]
  %v8724 = vld [vmem:[%s8 + $0x900] sm:$0xff]
  %v8725 = vld [vmem:[%s8 + $0x908] sm:$0xff]
  %v8726 = vld [vmem:[%s8 + $0x910] sm:$0xff]
  %v8727 = vld [vmem:[%s8 + $0x918] sm:$0xff]
  %v8728 = vld [vmem:[%s8 + $0x920] sm:$0xff]
  %v8729 = vld [vmem:[%s8 + $0x928] sm:$0xff]
  %v8730 = vld [vmem:[%s8 + $0x930] sm:$0xff]
  %v8731 = vld [vmem:[%s8 + $0x938] sm:$0xff]
  %v8732 = vld [vmem:[%s8 + $0x940] sm:$0xff]
  %v8733 = vld [vmem:[%s8 + $0x948] sm:$0xff]
  %v8734 = vld [vmem:[%s8 + $0x950] sm:$0x1f]
  %v8735 = vld [vmem:[%s8 + $0x958] sm:$0xff]
  %v8736 = vld [vmem:[%s8 + $0x960] sm:$0xff]
  %v8737 = vld [vmem:[%s8 + $0x968] sm:$0xff]
  %v8738 = vld [vmem:[%s8 + $0x970] sm:$0xff]
  %v8739 = vld [vmem:[%s8 + $0x978] sm:$0xff]
  %v8740 = vld [vmem:[%s8 + $0x980] sm:$0xff]
  %v8741 = vld [vmem:[%s8 + $0x988] sm:$0xff]
  %v8742 = vld [vmem:[%s8 + $0x990] sm:$0xff]
  %v8743 = vld [vmem:[%s8 + $0x998] sm:$0xff]
  %v8744 = vld [vmem:[%s8 + $0x9a0] sm:$0xff]
  %v8745 = vld [vmem:[%s8 + $0x9a8] sm:$0xff]
  %v8746 = vld [vmem:[%s8 + $0x9b0] sm:$0xff]
  %v8747 = vld [vmem:[%s8 + $0x9b8] sm:$0xff]
  %v8748 = vld [vmem:[%s8 + $0x9c0] sm:$0xff]
  %v8749 = vld [vmem:[%s8 + $0x9c8] sm:$0xff]
  %v8750 = vld [vmem:[%s8 + $0x9d0] sm:$0xff]
  %v8751 = vld [vmem:[%s8 + $0x9d8] sm:$0xff]
  %v8752 = vld [vmem:[%s8 + $0x9e0] sm:$0xff]
  %v8753 = vld [vmem:[%s8 + $0x9e8] sm:$0xff]
  %v8754 = vld [vmem:[%s8 + $0x9f0] sm:$0xff]
  %v8755 = vld [vmem:[%s8 + $0x9f8] sm:$0xff]
  %v8756 = vld [vmem:[%s8 + $0xa00] sm:$0xff]
  %v8757 = vld [vmem:[%s8 + $0xa08] sm:$0x1f]
  %v8758 = vld [vmem:[%s8 + $0xa10] sm:$0xff]
  %v8759 = vld [vmem:[%s8 + $0xa18] sm:$0xff]
  %v8760 = vld [vmem:[%s8 + $0xa20] sm:$0xff]
  %v8761 = vld [vmem:[%s8 + $0xa28] sm:$0xff]
  %v8762 = vld [vmem:[%s8 + $0xa30] sm:$0xff]
  %v8763 = vld [vmem:[%s8 + $0xa38] sm:$0xff]
  %v8764 = vld [vmem:[%s8 + $0xa40] sm:$0xff]
  %v8765 = vld [vmem:[%s8 + $0xa48] sm:$0xff]
  %v8766 = vld [vmem:[%s8 + $0xa50] sm:$0xff]
  %v8767 = vld [vmem:[%s8 + $0xa58] sm:$0xff]
  %v8768 = vld [vmem:[%s8 + $0xa60] sm:$0xff]
  %v8769 = vld [vmem:[%s8 + $0xa68] sm:$0xff]
  %v8770 = vld [vmem:[%s8 + $0xa70] sm:$0xff]
  %v8771 = vld [vmem:[%s8 + $0xa78] sm:$0xff]
  %v8772 = vld [vmem:[%s8 + $0xa80] sm:$0xff]
  %v8773 = vld [vmem:[%s8 + $0xa88] sm:$0xff]
  %v8774 = vld [vmem:[%s8 + $0xa90] sm:$0xff]
  %v8775 = vld [vmem:[%s8 + $0xa98] sm:$0xff]
  %v8776 = vld [vmem:[%s8 + $0xaa0] sm:$0xff]
  %v8777 = vld [vmem:[%s8 + $0xaa8] sm:$0xff]
  %v8778 = vld [vmem:[%s8 + $0xab0] sm:$0xff]
  %v8779 = vld [vmem:[%s8 + $0xab8] sm:$0xff]
  %v8780 = vld [vmem:[%s8 + $0xac0] sm:$0x1f]
  %v8781 = vld [vmem:[%s8 + $0xac8] sm:$0xff]
  %v8782 = vld [vmem:[%s8 + $0xad0] sm:$0xff]
  %v8783 = vld [vmem:[%s8 + $0xad8] sm:$0xff]
  %v8784 = vld [vmem:[%s8 + $0xae0] sm:$0xff]
  %v8785 = vld [vmem:[%s8 + $0xae8] sm:$0xff]
  %v8786 = vld [vmem:[%s8 + $0xaf0] sm:$0xff]
  %v8787 = vld [vmem:[%s8 + $0xaf8] sm:$0xff]
  %v8788 = vld [vmem:[%s8 + $0xb00] sm:$0xff]
  %v8789 = vld [vmem:[%s8 + $0xb08] sm:$0xff]
  %v8790 = vld [vmem:[%s8 + $0xb10] sm:$0xff]
  %v8791 = vld [vmem:[%s8 + $0xb18] sm:$0xff]
  %v8792 = vld [vmem:[%s8 + $0xb20] sm:$0xff]
  %v8793 = vld [vmem:[%s8 + $0xb28] sm:$0xff]
  %v8794 = vld [vmem:[%s8 + $0xb30] sm:$0xff]
  %v8795 = vld [vmem:[%s8 + $0xb38] sm:$0xff]
  %v8796 = vld [vmem:[%s8 + $0xb40] sm:$0xff]
  %v8797 = vld [vmem:[%s8 + $0xb48] sm:$0xff]
  %v8798 = vld [vmem:[%s8 + $0xb50] sm:$0xff]
  %v8799 = vld [vmem:[%s8 + $0xb58] sm:$0xff]
  %v8800 = vld [vmem:[%s8 + $0xb60] sm:$0xff]
  %v8801 = vld [vmem:[%s8 + $0xb68] sm:$0xff]
  %v8802 = vld [vmem:[%s8 + $0xb70] sm:$0xff]
  %v8803 = vld [vmem:[%s8 + $0xb78] sm:$0x1f]
  %v8804 = vld [vmem:[%s8 + $0xb80] sm:$0xff]
  %v8805 = vld [vmem:[%s8 + $0xb88] sm:$0xff]
  %v8806 = vld [vmem:[%s8 + $0xb90] sm:$0xff]
  %v8807 = vld [vmem:[%s8 + $0xb98] sm:$0xff]
  %v8808 = vld [vmem:[%s8 + $0xba0] sm:$0xff]
  %v8809 = vld [vmem:[%s8 + $0xba8] sm:$0xff]
  %v8810 = vld [vmem:[%s8 + $0xbb0] sm:$0xff]
  %v8811 = vld [vmem:[%s8 + $0xbb8] sm:$0xff]
  %v8812 = vld [vmem:[%s8 + $0xbc0] sm:$0xff]
  %v8813 = vld [vmem:[%s8 + $0xbc8] sm:$0xff]
  %v8814 = vld [vmem:[%s8 + $0xbd0] sm:$0xff]
  %v8815 = vld [vmem:[%s8 + $0xbd8] sm:$0xff]
  %v8816 = vld [vmem:[%s8 + $0xbe0] sm:$0xff]
  %v8817 = vld [vmem:[%s8 + $0xbe8] sm:$0xff]
  %v8818 = vld [vmem:[%s8 + $0xbf0] sm:$0xff]
  %v8819 = vld [vmem:[%s8 + $0xbf8] sm:$0xff]
  %v8820 = vld [vmem:[%s8 + $0xc00] sm:$0xff]
  %v8821 = vld [vmem:[%s8 + $0xc08] sm:$0xff]
  %v8822 = vld [vmem:[%s8 + $0xc10] sm:$0xff]
  %v8823 = vld [vmem:[%s8 + $0xc18] sm:$0xff]
  %v8824 = vld [vmem:[%s8 + $0xc20] sm:$0xff]
  %v8825 = vld [vmem:[%s8 + $0xc28] sm:$0xff]
  %v8826 = vld [vmem:[%s8 + $0xc30] sm:$0x1f]
  %v8827 = vld [vmem:[%s8 + $0xc38] sm:$0xff]
  %v8828 = vld [vmem:[%s8 + $0xc40] sm:$0xff]
  %v8829 = vld [vmem:[%s8 + $0xc48] sm:$0xff]
  %v8830 = vld [vmem:[%s8 + $0xc50] sm:$0xff]
  %v8831 = vld [vmem:[%s8 + $0xc58] sm:$0xff]
  %v8832 = vld [vmem:[%s8 + $0xc60] sm:$0xff]
  %v8833 = vld [vmem:[%s8 + $0xc68] sm:$0xff]
  %v8834 = vld [vmem:[%s8 + $0xc70] sm:$0xff]
  %v8835 = vld [vmem:[%s8 + $0xc78] sm:$0xff]
  %v8836 = vld [vmem:[%s8 + $0xc80] sm:$0xff]
  %v8837 = vld [vmem:[%s8 + $0xc88] sm:$0xff]
  %v8838 = vld [vmem:[%s8 + $0xc90] sm:$0xff]
  %v8839 = vld [vmem:[%s8 + $0xc98] sm:$0xff]
  %v8840 = vld [vmem:[%s8 + $0xca0] sm:$0xff]
  %v8841 = vld [vmem:[%s8 + $0xca8] sm:$0xff]
  %v8842 = vld [vmem:[%s8 + $0xcb0] sm:$0xff]
  %v8843 = vld [vmem:[%s8 + $0xcb8] sm:$0xff]
  %v8844 = vld [vmem:[%s8 + $0xcc0] sm:$0xff]
  %v8845 = vld [vmem:[%s8 + $0xcc8] sm:$0xff]
  %v8846 = vld [vmem:[%s8 + $0xcd0] sm:$0xff]
  %v8847 = vld [vmem:[%s8 + $0xcd8] sm:$0xff]
  %v8848 = vld [vmem:[%s8 + $0xce0] sm:$0xff]
  %v8849 = vld [vmem:[%s8 + $0xce8] sm:$0x1f]
  %v8850 = vld [vmem:[%s8 + $0xcf0] sm:$0xff]
  %v8851 = vld [vmem:[%s8 + $0xcf8] sm:$0xff]
  %v8852 = vld [vmem:[%s8 + $0xd00] sm:$0xff]
  %v8853 = vld [vmem:[%s8 + $0xd08] sm:$0xff]
  %v8854 = vld [vmem:[%s8 + $0xd10] sm:$0xff]
  %v8855 = vld [vmem:[%s8 + $0xd18] sm:$0xff]
  %v8856 = vld [vmem:[%s8 + $0xd20] sm:$0xff]
  %v8857 = vld [vmem:[%s8 + $0xd28] sm:$0xff]
  %v8858 = vld [vmem:[%s8 + $0xd30] sm:$0xff]
  %v8859 = vld [vmem:[%s8 + $0xd38] sm:$0xff]
  %v8860 = vld [vmem:[%s8 + $0xd40] sm:$0xff]
  %v8861 = vld [vmem:[%s8 + $0xd48] sm:$0xff]
  %v8862 = vld [vmem:[%s8 + $0xd50] sm:$0xff]
  %v8863 = vld [vmem:[%s8 + $0xd58] sm:$0xff]
  %v8864 = vld [vmem:[%s8 + $0xd60] sm:$0xff]
  %v8865 = vld [vmem:[%s8 + $0xd68] sm:$0xff]
  %v8866 = vld [vmem:[%s8 + $0xd70] sm:$0xff]
  %v8867 = vld [vmem:[%s8 + $0xd78] sm:$0xff]
  %v8868 = vld [vmem:[%s8 + $0xd80] sm:$0xff]
  %v8869 = vld [vmem:[%s8 + $0xd88] sm:$0xff]
  %v8870 = vld [vmem:[%s8 + $0xd90] sm:$0xff]
  %v8871 = vld [vmem:[%s8 + $0xd98] sm:$0xff]
  %v8872 = vld [vmem:[%s8 + $0xda0] sm:$0x1f]
  %v8873 = vld [vmem:[%s8 + $0xda8] sm:$0xff]
  %v8874 = vld [vmem:[%s8 + $0xdb0] sm:$0xff]
  %v8875 = vld [vmem:[%s8 + $0xdb8] sm:$0xff]
  %v8876 = vld [vmem:[%s8 + $0xdc0] sm:$0xff]
  %v8877 = vld [vmem:[%s8 + $0xdc8] sm:$0xff]
  %v8878 = vld [vmem:[%s8 + $0xdd0] sm:$0xff]
  %v8879 = vld [vmem:[%s8 + $0xdd8] sm:$0xff]
  %v8880 = vld [vmem:[%s8 + $0xde0] sm:$0xff]
  %v8881 = vld [vmem:[%s8 + $0xde8] sm:$0xff]
  %v8882 = vld [vmem:[%s8 + $0xdf0] sm:$0xff]
  %v8883 = vld [vmem:[%s8 + $0xdf8] sm:$0xff]
  %v8884 = vld [vmem:[%s8 + $0xe00] sm:$0xff]
  %v8885 = vld [vmem:[%s8 + $0xe08] sm:$0xff]
  %v8886 = vld [vmem:[%s8 + $0xe10] sm:$0xff]
  %v8887 = vld [vmem:[%s8 + $0xe18] sm:$0xff]
  %v8888 = vld [vmem:[%s8 + $0xe20] sm:$0xff]
  %v8889 = vld [vmem:[%s8 + $0xe28] sm:$0xff]
  %v8890 = vld [vmem:[%s8 + $0xe30] sm:$0xff]
  %v8891 = vld [vmem:[%s8 + $0xe38] sm:$0xff]
  %v8892 = vld [vmem:[%s8 + $0xe40] sm:$0xff]
  %v8893 = vld [vmem:[%s8 + $0xe48] sm:$0xff]
  %v8894 = vld [vmem:[%s8 + $0xe50] sm:$0xff]
  %v8895 = vld [vmem:[%s8 + $0xe58] sm:$0x1f]
  %v8896 = vld [vmem:[%s8 + $0xe60] sm:$0xff]
  %v8897 = vld [vmem:[%s8 + $0xe68] sm:$0xff]
  %v8898 = vld [vmem:[%s8 + $0xe70] sm:$0xff]
  %v8899 = vld [vmem:[%s8 + $0xe78] sm:$0xff]
  %v8900 = vld [vmem:[%s8 + $0xe80] sm:$0xff]
  %v8901 = vld [vmem:[%s8 + $0xe88] sm:$0xff]
  %v8902 = vld [vmem:[%s8 + $0xe90] sm:$0xff]
  %v8903 = vld [vmem:[%s8 + $0xe98] sm:$0xff]
  %v8904 = vld [vmem:[%s8 + $0xea0] sm:$0xff]
  %v8905 = vld [vmem:[%s8 + $0xea8] sm:$0xff]
  %v8906 = vld [vmem:[%s8 + $0xeb0] sm:$0xff]
  %v8907 = vld [vmem:[%s8 + $0xeb8] sm:$0xff]
  %v8908 = vld [vmem:[%s8 + $0xec0] sm:$0xff]
  %v8909 = vld [vmem:[%s8 + $0xec8] sm:$0xff]
  %v8910 = vld [vmem:[%s8 + $0xed0] sm:$0xff]
  %v8911 = vld [vmem:[%s8 + $0xed8] sm:$0xff]
  %v8912 = vld [vmem:[%s8 + $0xee0] sm:$0xff]
  %v8913 = vld [vmem:[%s8 + $0xee8] sm:$0xff]
  %v8914 = vld [vmem:[%s8 + $0xef0] sm:$0xff]
  %v8915 = vld [vmem:[%s8 + $0xef8] sm:$0xff]
  %v8916 = vld [vmem:[%s8 + $0xf00] sm:$0xff]
  %v8917 = vld [vmem:[%s8 + $0xf08] sm:$0xff]
  %v8918 = vld [vmem:[%s8 + $0xf10] sm:$0x1f]
  %v8919 = vld [vmem:[%s8 + $0xf18] sm:$0xff]
  %v8920 = vld [vmem:[%s8 + $0xf20] sm:$0xff]
  %v8921 = vld [vmem:[%s8 + $0xf28] sm:$0xff]
  %v8922 = vld [vmem:[%s8 + $0xf30] sm:$0xff]
  %v8923 = vld [vmem:[%s8 + $0xf38] sm:$0xff]
  %v8924 = vld [vmem:[%s8 + $0xf40] sm:$0xff]
  %v8925 = vld [vmem:[%s8 + $0xf48] sm:$0xff]
  %v8926 = vld [vmem:[%s8 + $0xf50] sm:$0xff]
  %v8927 = vld [vmem:[%s8 + $0xf58] sm:$0xff]
  %v8928 = vld [vmem:[%s8 + $0xf60] sm:$0xff]
  %v8929 = vld [vmem:[%s8 + $0xf68] sm:$0xff]
  %v8930 = vld [vmem:[%s8 + $0xf70] sm:$0xff]
  %v8931 = vld [vmem:[%s8 + $0xf78] sm:$0xff]
  %v8932 = vld [vmem:[%s8 + $0xf80] sm:$0xff]
  %v8933 = vld [vmem:[%s8 + $0xf88] sm:$0xff]
  %v8934 = vld [vmem:[%s8 + $0xf90] sm:$0xff]
  %v8935 = vld [vmem:[%s8 + $0xf98] sm:$0xff]
  %v8936 = vld [vmem:[%s8 + $0xfa0] sm:$0xff]
  %v8937 = vld [vmem:[%s8 + $0xfa8] sm:$0xff]
  %v8938 = vld [vmem:[%s8 + $0xfb0] sm:$0xff]
  %v8939 = vld [vmem:[%s8 + $0xfb8] sm:$0xff]
  %v8940 = vld [vmem:[%s8 + $0xfc0] sm:$0xff]
  %v8941 = vld [vmem:[%s8 + $0xfc8] sm:$0x1f]
  %v8942 = vld [vmem:[%s8 + $0xfd0] sm:$0xff]
  %v8943 = vld [vmem:[%s8 + $0xfd8] sm:$0xff]
  %v8944 = vld [vmem:[%s8 + $0xfe0] sm:$0xff]
  %v8945 = vld [vmem:[%s8 + $0xfe8] sm:$0xff]
  %v8946 = vld [vmem:[%s8 + $0xff0] sm:$0xff]
  %v8947 = vld [vmem:[%s8 + $0xff8] sm:$0xff]
  %v8948 = vld [vmem:[%s8 + $0x1000] sm:$0xff]
  %v8949 = vld [vmem:[%s8 + $0x1008] sm:$0xff]
  %v8950 = vld [vmem:[%s8 + $0x1010] sm:$0xff]
  %v8951 = vld [vmem:[%s8 + $0x1018] sm:$0xff]
  %v8952 = vld [vmem:[%s8 + $0x1020] sm:$0xff]
  %v8953 = vld [vmem:[%s8 + $0x1028] sm:$0xff]
  %v8954 = vld [vmem:[%s8 + $0x1030] sm:$0xff]
  %v8955 = vld [vmem:[%s8 + $0x1038] sm:$0xff]
  %v8956 = vld [vmem:[%s8 + $0x1040] sm:$0xff]
  %v8957 = vld [vmem:[%s8 + $0x1048] sm:$0xff]
  %v8958 = vld [vmem:[%s8 + $0x1050] sm:$0xff]
  %v8959 = vld [vmem:[%s8 + $0x1058] sm:$0xff]
  %v8960 = vld [vmem:[%s8 + $0x1060] sm:$0xff]
  %v8961 = vld [vmem:[%s8 + $0x1068] sm:$0xff]
  %v8962 = vld [vmem:[%s8 + $0x1070] sm:$0xff]
  %v8963 = vld [vmem:[%s8 + $0x1078] sm:$0xff]
  %v8964 = vld [vmem:[%s8 + $0x1080] sm:$0x1f]
  %v8965 = vld [vmem:[%s8 + $0x1088] sm:$0xff]
  %v8966 = vld [vmem:[%s8 + $0x1090] sm:$0xff]
  %v8967 = vld [vmem:[%s8 + $0x1098] sm:$0xff]
  %v8968 = vld [vmem:[%s8 + $0x10a0] sm:$0xff]
  %v8969 = vld [vmem:[%s8 + $0x10a8] sm:$0xff]
  %v8970 = vld [vmem:[%s8 + $0x10b0] sm:$0xff]
  %v8971 = vld [vmem:[%s8 + $0x10b8] sm:$0xff]
  %v8972 = vld [vmem:[%s8 + $0x10c0] sm:$0xff]
  %v8973 = vld [vmem:[%s8 + $0x10c8] sm:$0xff]
  %v8974 = vld [vmem:[%s8 + $0x10d0] sm:$0xff]
  %v8975 = vld [vmem:[%s8 + $0x10d8] sm:$0xff]
  %v8976 = vld [vmem:[%s8 + $0x10e0] sm:$0xff]
  %v8977 = vld [vmem:[%s8 + $0x10e8] sm:$0xff]
  %v8978 = vld [vmem:[%s8 + $0x10f0] sm:$0xff]
  %v8979 = vld [vmem:[%s8 + $0x10f8] sm:$0xff]
  %v8980 = vld [vmem:[%s8 + $0x1100] sm:$0xff]
  %v8981 = vld [vmem:[%s8 + $0x1108] sm:$0xff]
  %v8982 = vld [vmem:[%s8 + $0x1110] sm:$0xff]
  %v8983 = vld [vmem:[%s8 + $0x1118] sm:$0xff]
  %v8984 = vld [vmem:[%s8 + $0x1120] sm:$0xff]
  %v8985 = vld [vmem:[%s8 + $0x1128] sm:$0xff]
  %v8986 = vld [vmem:[%s8 + $0x1130] sm:$0xff]
  %v8987 = vld [vmem:[%s8 + $0x1138] sm:$0x1f]
  %v8988 = vld [vmem:[%s8 + $0x1140] sm:$0xff]
  %v8989 = vld [vmem:[%s8 + $0x1148] sm:$0xff]
  %v8990 = vld [vmem:[%s8 + $0x1150] sm:$0xff]
  %v8991 = vld [vmem:[%s8 + $0x1158] sm:$0xff]
  %v8992 = vld [vmem:[%s8 + $0x1160] sm:$0xff]
  %v8993 = vld [vmem:[%s8 + $0x1168] sm:$0xff]
  %v8994 = vld [vmem:[%s8 + $0x1170] sm:$0xff]
  %v8995 = vld [vmem:[%s8 + $0x1178] sm:$0xff]
  %v8996 = vld [vmem:[%s8 + $0x1180] sm:$0xff]
  %v8997 = vld [vmem:[%s8 + $0x1188] sm:$0xff]
  %v8998 = vld [vmem:[%s8 + $0x1190] sm:$0xff]
  %v8999 = vld [vmem:[%s8 + $0x1198] sm:$0xff]
  %v9000 = vld [vmem:[%s8 + $0x11a0] sm:$0xff]
  %v9001 = vld [vmem:[%s8 + $0x11a8] sm:$0xff]
  %v9002 = vld [vmem:[%s8 + $0x11b0] sm:$0xff]
  %v9003 = vld [vmem:[%s8 + $0x11b8] sm:$0xff]
  %v9004 = vld [vmem:[%s8 + $0x11c0] sm:$0xff]
  %v9005 = vld [vmem:[%s8 + $0x11c8] sm:$0xff]
  %v9006 = vld [vmem:[%s8 + $0x11d0] sm:$0xff]
  %v9007 = vld [vmem:[%s8 + $0x11d8] sm:$0xff]
  %v9008 = vld [vmem:[%s8 + $0x11e0] sm:$0xff]
  %v9009 = vld [vmem:[%s8 + $0x11e8] sm:$0xff]
  %v9010 = vld [vmem:[%s8 + $0x11f0] sm:$0x1f]
  %v9011 = vld [vmem:[%s8 + $0x11f8] sm:$0xff]
  %v9012 = vld [vmem:[%s8 + $0x1200] sm:$0xff]
  %v9013 = vld [vmem:[%s8 + $0x1208] sm:$0xff]
  %v9014 = vld [vmem:[%s8 + $0x1210] sm:$0xff]
  %v9015 = vld [vmem:[%s8 + $0x1218] sm:$0xff]
  %v9016 = vld [vmem:[%s8 + $0x1220] sm:$0xff]
  %v9017 = vld [vmem:[%s8 + $0x1228] sm:$0xff]
  %v9018 = vld [vmem:[%s8 + $0x1230] sm:$0xff]
  %v9019 = vld [vmem:[%s8 + $0x1238] sm:$0xff]
  %v9020 = vld [vmem:[%s8 + $0x1240] sm:$0xff]
  %v9021 = vld [vmem:[%s8 + $0x1248] sm:$0xff]
  %v9022 = vld [vmem:[%s8 + $0x1250] sm:$0xff]
  %v9023 = vld [vmem:[%s8 + $0x1258] sm:$0xff]
  %v9024 = vld [vmem:[%s8 + $0x1260] sm:$0xff]
  %v9025 = vld [vmem:[%s8 + $0x1268] sm:$0xff]
  %v9026 = vld [vmem:[%s8 + $0x1270] sm:$0xff]
  %v9027 = vld [vmem:[%s8 + $0x1278] sm:$0xff]
  %v9028 = vld [vmem:[%s8 + $0x1280] sm:$0xff]
  %v9029 = vld [vmem:[%s8 + $0x1288] sm:$0xff]
  %v9030 = vld [vmem:[%s8 + $0x1290] sm:$0xff]
  %v9031 = vld [vmem:[%s8 + $0x1298] sm:$0xff]
  %v9032 = vld [vmem:[%s8 + $0x12a0] sm:$0xff]
  %v9033 = vld [vmem:[%s8 + $0x12a8] sm:$0x1f]
  %v9034 = vld [vmem:[%s8 + $0x12b0] sm:$0xff]
  %v9035 = vld [vmem:[%s8 + $0x12b8] sm:$0xff]
  %v9036 = vld [vmem:[%s8 + $0x12c0] sm:$0xff]
  %v9037 = vld [vmem:[%s8 + $0x12c8] sm:$0xff]
  %v9038 = vld [vmem:[%s8 + $0x12d0] sm:$0xff]
  %v9039 = vld [vmem:[%s8 + $0x12d8] sm:$0xff]
  %v9040 = vld [vmem:[%s8 + $0x12e0] sm:$0xff]
  %v9041 = vld [vmem:[%s8 + $0x12e8] sm:$0xff]
  %v9042 = vld [vmem:[%s8 + $0x12f0] sm:$0xff]
  %v9043 = vld [vmem:[%s8 + $0x12f8] sm:$0xff]
  %v9044 = vld [vmem:[%s8 + $0x1300] sm:$0xff]
  %v9045 = vld [vmem:[%s8 + $0x1308] sm:$0xff]
  %v9046 = vld [vmem:[%s8 + $0x1310] sm:$0xff]
  %v9047 = vld [vmem:[%s8 + $0x1318] sm:$0xff]
  %v9048 = vld [vmem:[%s8 + $0x1320] sm:$0xff]
  %v9049 = vld [vmem:[%s8 + $0x1328] sm:$0xff]
  %v9050 = vld [vmem:[%s8 + $0x1330] sm:$0xff]
  %v9051 = vld [vmem:[%s8 + $0x1338] sm:$0xff]
  %v9052 = vld [vmem:[%s8 + $0x1340] sm:$0xff]
  %v9053 = vld [vmem:[%s8 + $0x1348] sm:$0xff]
  %v9054 = vld [vmem:[%s8 + $0x1350] sm:$0xff]
  %v9055 = vld [vmem:[%s8 + $0x1358] sm:$0xff]
  %v9056 = vld [vmem:[%s8 + $0x1360] sm:$0x1f]
  %v9057 = vld [vmem:[%s8 + $0x1368] sm:$0xff]
  %v9058 = vld [vmem:[%s8 + $0x1370] sm:$0xff]
  %v9059 = vld [vmem:[%s8 + $0x1378] sm:$0xff]
  %v9060 = vld [vmem:[%s8 + $0x1380] sm:$0xff]
  %v9061 = vld [vmem:[%s8 + $0x1388] sm:$0xff]
  %v9062 = vld [vmem:[%s8 + $0x1390] sm:$0xff]
  %v9063 = vld [vmem:[%s8 + $0x1398] sm:$0xff]
  %v9064 = vld [vmem:[%s8 + $0x13a0] sm:$0xff]
  %v9065 = vld [vmem:[%s8 + $0x13a8] sm:$0xff]
  %v9066 = vld [vmem:[%s8 + $0x13b0] sm:$0xff]
  %v9067 = vld [vmem:[%s8 + $0x13b8] sm:$0xff]
  %v9068 = vld [vmem:[%s8 + $0x13c0] sm:$0xff]
  %v9069 = vld [vmem:[%s8 + $0x13c8] sm:$0xff]
  %v9070 = vld [vmem:[%s8 + $0x13d0] sm:$0xff]
  %v9071 = vld [vmem:[%s8 + $0x13d8] sm:$0xff]
  %v9072 = vld [vmem:[%s8 + $0x13e0] sm:$0xff]
  %v9073 = vld [vmem:[%s8 + $0x13e8] sm:$0xff]
  %v9074 = vld [vmem:[%s8 + $0x13f0] sm:$0xff]
  %v9075 = vld [vmem:[%s8 + $0x13f8] sm:$0xff]
  %v9076 = vld [vmem:[%s8 + $0x1400] sm:$0xff]
  %v9077 = vld [vmem:[%s8 + $0x1408] sm:$0xff]
  %v9078 = vld [vmem:[%s8 + $0x1410] sm:$0xff]
  %v9079 = vld [vmem:[%s8 + $0x1418] sm:$0x1f]
  %v9080 = vld [vmem:[%s8 + $0x1420] sm:$0xff]
  %v9081 = vld [vmem:[%s8 + $0x1428] sm:$0xff]
  %v9082 = vld [vmem:[%s8 + $0x1430] sm:$0xff]
  %v9083 = vld [vmem:[%s8 + $0x1438] sm:$0xff]
  %v9084 = vld [vmem:[%s8 + $0x1440] sm:$0xff]
  %v9085 = vld [vmem:[%s8 + $0x1448] sm:$0xff]
  %v9086 = vld [vmem:[%s8 + $0x1450] sm:$0xff]
  %v9087 = vld [vmem:[%s8 + $0x1458] sm:$0xff]
  %v9088 = vld [vmem:[%s8 + $0x1460] sm:$0xff]
  %v9089 = vld [vmem:[%s8 + $0x1468] sm:$0xff]
  %v9090 = vld [vmem:[%s8 + $0x1470] sm:$0xff]
  %v9091 = vld [vmem:[%s8 + $0x1478] sm:$0xff]
  %v9092 = vld [vmem:[%s8 + $0x1480] sm:$0xff]
  %v9093 = vld [vmem:[%s8 + $0x1488] sm:$0xff]
  %v9094 = vld [vmem:[%s8 + $0x1490] sm:$0xff]
  %v9095 = vld [vmem:[%s8 + $0x1498] sm:$0xff]
  %v9096 = vld [vmem:[%s8 + $0x14a0] sm:$0xff]
  %v9097 = vld [vmem:[%s8 + $0x14a8] sm:$0xff]
  %v9098 = vld [vmem:[%s8 + $0x14b0] sm:$0xff]
  %v9099 = vld [vmem:[%s8 + $0x14b8] sm:$0xff]
  %v9100 = vld [vmem:[%s8 + $0x14c0] sm:$0xff]
  %v9101 = vld [vmem:[%s8 + $0x14c8] sm:$0xff]
  %v9102 = vld [vmem:[%s8 + $0x14d0] sm:$0x1f]
  %v9103 = vld [vmem:[%s8 + $0x14d8] sm:$0xff]
  %v9104 = vld [vmem:[%s8 + $0x14e0] sm:$0xff]
  %v9105 = vld [vmem:[%s8 + $0x14e8] sm:$0xff]
  %v9106 = vld [vmem:[%s8 + $0x14f0] sm:$0xff]
  %v9107 = vld [vmem:[%s8 + $0x14f8] sm:$0xff]
  %v9108 = vld [vmem:[%s8 + $0x1500] sm:$0xff]
  %v9109 = vld [vmem:[%s8 + $0x1508] sm:$0xff]
  %v9110 = vld [vmem:[%s8 + $0x1510] sm:$0xff]
  %v9111 = vld [vmem:[%s8 + $0x1518] sm:$0xff]
  %v9112 = vld [vmem:[%s8 + $0x1520] sm:$0xff]
  %v9113 = vld [vmem:[%s8 + $0x1528] sm:$0xff]
  %v9114 = vld [vmem:[%s8 + $0x1530] sm:$0xff]
  %v9115 = vld [vmem:[%s8 + $0x1538] sm:$0xff]
  %v9116 = vld [vmem:[%s8 + $0x1540] sm:$0xff]
  %v9117 = vld [vmem:[%s8 + $0x1548] sm:$0xff]
  %v9118 = vld [vmem:[%s8 + $0x1550] sm:$0xff]
  %v9119 = vld [vmem:[%s8 + $0x1558] sm:$0xff]
  %v9120 = vld [vmem:[%s8 + $0x1560] sm:$0xff]
  %v9121 = vld [vmem:[%s8 + $0x1568] sm:$0xff]
  %v9122 = vld [vmem:[%s8 + $0x1570] sm:$0xff]
  %v9123 = vld [vmem:[%s8 + $0x1578] sm:$0xff]
  %v9124 = vld [vmem:[%s8 + $0x1580] sm:$0xff]
  %v9125 = vld [vmem:[%s8 + $0x1588] sm:$0x1f]
  %v9126 = vld [vmem:[%s8 + $0x1590] sm:$0xff]
  %v9127 = vld [vmem:[%s8 + $0x1598] sm:$0xff]
  %v9128 = vld [vmem:[%s8 + $0x15a0] sm:$0xff]
  %v9129 = vld [vmem:[%s8 + $0x15a8] sm:$0xff]
  %v9130 = vld [vmem:[%s8 + $0x15b0] sm:$0xff]
  %v9131 = vld [vmem:[%s8 + $0x15b8] sm:$0xff]
  %v9132 = vld [vmem:[%s8 + $0x15c0] sm:$0xff]
  %v9133 = vld [vmem:[%s8 + $0x15c8] sm:$0xff]
  %v9134 = vld [vmem:[%s8 + $0x15d0] sm:$0xff]
  %v9135 = vld [vmem:[%s8 + $0x15d8] sm:$0xff]
  %v9136 = vld [vmem:[%s8 + $0x15e0] sm:$0xff]
  %v9137 = vld [vmem:[%s8 + $0x15e8] sm:$0xff]
  %v9138 = vld [vmem:[%s8 + $0x15f0] sm:$0xff]
  %v9139 = vld [vmem:[%s8 + $0x15f8] sm:$0xff]
  %v9140 = vld [vmem:[%s8 + $0x1600] sm:$0xff]
  %v9141 = vld [vmem:[%s8 + $0x1608] sm:$0xff]
  %v9142 = vld [vmem:[%s8 + $0x1610] sm:$0xff]
  %v9143 = vld [vmem:[%s8 + $0x1618] sm:$0xff]
  %v9144 = vld [vmem:[%s8 + $0x1620] sm:$0xff]
  %v9145 = vld [vmem:[%s8 + $0x1628] sm:$0xff]
  %v9146 = vld [vmem:[%s8 + $0x1630] sm:$0xff]
  %v9147 = vld [vmem:[%s8 + $0x1638] sm:$0xff]
  %v9148 = vld [vmem:[%s8 + $0x1640] sm:$0x1f]
  %v9149 = vld [vmem:[%s8 + $0x1648] sm:$0xff]
  %v9150 = vld [vmem:[%s8 + $0x1650] sm:$0xff]
  %v9151 = vld [vmem:[%s8 + $0x1658] sm:$0xff]
  %v9152 = vld [vmem:[%s8 + $0x1660] sm:$0xff]
  %v9153 = vld [vmem:[%s8 + $0x1668] sm:$0xff]
  %v9154 = vld [vmem:[%s8 + $0x1670] sm:$0xff]
  %v9155 = vld [vmem:[%s8 + $0x1678] sm:$0xff]
  %v9156 = vld [vmem:[%s8 + $0x1680] sm:$0xff]
  %v9157 = vld [vmem:[%s8 + $0x1688] sm:$0xff]
  %v9158 = vld [vmem:[%s8 + $0x1690] sm:$0xff]
  %v9159 = vld [vmem:[%s8 + $0x1698] sm:$0xff]
  %v9160 = vld [vmem:[%s8 + $0x16a0] sm:$0xff]
  %v9161 = vld [vmem:[%s8 + $0x16a8] sm:$0xff]
  %v9162 = vld [vmem:[%s8 + $0x16b0] sm:$0xff]
  %v9163 = vld [vmem:[%s8 + $0x16b8] sm:$0xff]
  %v9164 = vld [vmem:[%s8 + $0x16c0] sm:$0xff]
  %v9165 = vld [vmem:[%s8 + $0x16c8] sm:$0xff]
  %v9166 = vld [vmem:[%s8 + $0x16d0] sm:$0xff]
  %v9167 = vld [vmem:[%s8 + $0x16d8] sm:$0xff]
  %v9168 = vld [vmem:[%s8 + $0x16e0] sm:$0xff]
  %v9169 = vld [vmem:[%s8 + $0x16e8] sm:$0xff]
  %v9170 = vld [vmem:[%s8 + $0x16f0] sm:$0xff]
  %v9171 = vld [vmem:[%s8 + $0x16f8] sm:$0x1f]
  %vm9172 = vcmask 433152
  %v9174 = vsel %vm9172, %v8373, 0
  %vm9176 = vcmask 1044480
  %v9178 = vsel %vm9176, %v8458, 0
  %9180 = vmatpush.msra.mxu0 %v8451
  %9181 = vmatpush.msra.mxu0 %v8450
  %9182 = vmatpush.msra.mxu0 %v8449
  %9183 = vmatpush.msra.mxu0 %v8448
  %9184 = vmatpush.msra.mxu0 %v8447
  %9185 = vmatpush.msra.mxu0 %v8446
  %9186 = vmatpush.msra.mxu0 %v8445
  %9187 = vmatpush.msra.mxu0 %v8444
  %9188 = vmatpush.msra.mxu0 %v8443
  %9189 = vmatpush.msra.mxu0 %v8442
  %9190 = vmatpush.msra.mxu0 %v8441
  %9191 = vmatpush.msra.mxu0 %v8440
  %9192 = vmatpush.msra.mxu0 %v8439
  %9193 = vmatpush.msra.mxu0 %v8438
  %9194 = vmatpush.msra.mxu0 %v8437
  %9195 = vmatpush.msra.mxu0 %v8436
  %9196 = vmatmul.f32.gmra.mxu0 %v8372
  %v9197 = vpop.f32.mrf.mxu0
  %v9198 = vadd.f32 0.0, %v9197
  %9199 = vdwg.mxu0
  %9200 = vmatpush.msra.mxu0 0.0
  %9201 = vmatpush.msra.mxu0 0.0
  %9202 = vmatpush.msra.mxu0 0.0
  %9203 = vmatpush.msra.mxu0 0.0
  %9204 = vmatpush.msra.mxu0 0.0
  %9205 = vmatpush.msra.mxu0 0.0
  %9206 = vmatpush.msra.mxu0 0.0
  %9207 = vmatpush.msra.mxu0 0.0
  %9208 = vmatpush.msra.mxu0 0.0
  %9209 = vmatpush.msra.mxu0 %v9178
  %9210 = vmatpush.msra.mxu0 %v8457
  %9211 = vmatpush.msra.mxu0 %v8456
  %9212 = vmatpush.msra.mxu0 %v8455
  %9213 = vmatpush.msra.mxu0 %v8454
  %9214 = vmatpush.msra.mxu0 %v8453
  %9215 = vmatpush.msra.mxu0 %v8452
  %9216 = vmatmul.f32.gmra.mxu0 %v9174
  %v9217 = vpop.f32.mrf.mxu0
  %v9218 = vadd.f32 %v9198, %v9217
  %9219 = vdwg.mxu0
  %v9221 = vsel %vm9172, %v8375, 0
  %v9224 = vsel %vm9176, %v8481, 0
  %9226 = vmatpush.msra.mxu0 %v8474
  %9227 = vmatpush.msra.mxu0 %v8473
  %9228 = vmatpush.msra.mxu0 %v8472
  %9229 = vmatpush.msra.mxu0 %v8471
  %9230 = vmatpush.msra.mxu0 %v8470
  %9231 = vmatpush.msra.mxu0 %v8469
  %9232 = vmatpush.msra.mxu0 %v8468
  %9233 = vmatpush.msra.mxu0 %v8467
  %9234 = vmatpush.msra.mxu0 %v8466
  %9235 = vmatpush.msra.mxu0 %v8465
  %9236 = vmatpush.msra.mxu0 %v8464
  %9237 = vmatpush.msra.mxu0 %v8463
  %9238 = vmatpush.msra.mxu0 %v8462
  %9239 = vmatpush.msra.mxu0 %v8461
  %9240 = vmatpush.msra.mxu0 %v8460
  %9241 = vmatpush.msra.mxu0 %v8459
  %9242 = vmatmul.f32.gmra.mxu0 %v8374
  %v9243 = vpop.f32.mrf.mxu0
  %v9244 = vadd.f32 0.0, %v9243
  %9245 = vdwg.mxu0
  %9246 = vmatpush.msra.mxu0 0.0
  %9247 = vmatpush.msra.mxu0 0.0
  %9248 = vmatpush.msra.mxu0 0.0
  %9249 = vmatpush.msra.mxu0 0.0
  %9250 = vmatpush.msra.mxu0 0.0
  %9251 = vmatpush.msra.mxu0 0.0
  %9252 = vmatpush.msra.mxu0 0.0
  %9253 = vmatpush.msra.mxu0 0.0
  %9254 = vmatpush.msra.mxu0 0.0
  %9255 = vmatpush.msra.mxu0 %v9224
  %9256 = vmatpush.msra.mxu0 %v8480
  %9257 = vmatpush.msra.mxu0 %v8479
  %9258 = vmatpush.msra.mxu0 %v8478
  %9259 = vmatpush.msra.mxu0 %v8477
  %9260 = vmatpush.msra.mxu0 %v8476
  %9261 = vmatpush.msra.mxu0 %v8475
  %9262 = vmatmul.f32.gmra.mxu0 %v9221
  %v9263 = vpop.f32.mrf.mxu0
  %v9264 = vadd.f32 %v9244, %v9263
  %9265 = vdwg.mxu0
  %v9267 = vsel %vm9172, %v8377, 0
  %v9270 = vsel %vm9176, %v8504, 0
  %9272 = vmatpush.msra.mxu0 %v8497
  %9273 = vmatpush.msra.mxu0 %v8496
  %9274 = vmatpush.msra.mxu0 %v8495
  %9275 = vmatpush.msra.mxu0 %v8494
  %9276 = vmatpush.msra.mxu0 %v8493
  %9277 = vmatpush.msra.mxu0 %v8492
  %9278 = vmatpush.msra.mxu0 %v8491
  %9279 = vmatpush.msra.mxu0 %v8490
  %9280 = vmatpush.msra.mxu0 %v8489
  %9281 = vmatpush.msra.mxu0 %v8488
  %9282 = vmatpush.msra.mxu0 %v8487
  %9283 = vmatpush.msra.mxu0 %v8486
  %9284 = vmatpush.msra.mxu0 %v8485
  %9285 = vmatpush.msra.mxu0 %v8484
  %9286 = vmatpush.msra.mxu0 %v8483
  %9287 = vmatpush.msra.mxu0 %v8482
  %9288 = vmatmul.f32.gmra.mxu0 %v8376
  %v9289 = vpop.f32.mrf.mxu0
  %v9290 = vadd.f32 0.0, %v9289
  %9291 = vdwg.mxu0
  %9292 = vmatpush.msra.mxu0 0.0
  %9293 = vmatpush.msra.mxu0 0.0
  %9294 = vmatpush.msra.mxu0 0.0
  %9295 = vmatpush.msra.mxu0 0.0
  %9296 = vmatpush.msra.mxu0 0.0
  %9297 = vmatpush.msra.mxu0 0.0
  %9298 = vmatpush.msra.mxu0 0.0
  %9299 = vmatpush.msra.mxu0 0.0
  %9300 = vmatpush.msra.mxu0 0.0
  %9301 = vmatpush.msra.mxu0 %v9270
  %9302 = vmatpush.msra.mxu0 %v8503
  %9303 = vmatpush.msra.mxu0 %v8502
  %9304 = vmatpush.msra.mxu0 %v8501
  %9305 = vmatpush.msra.mxu0 %v8500
  %9306 = vmatpush.msra.mxu0 %v8499
  %9307 = vmatpush.msra.mxu0 %v8498
  %9308 = vmatmul.f32.gmra.mxu0 %v9267
  %v9309 = vpop.f32.mrf.mxu0
  %v9310 = vadd.f32 %v9290, %v9309
  %9311 = vdwg.mxu0
  %v9313 = vsel %vm9172, %v8379, 0
  %v9316 = vsel %vm9176, %v8527, 0
  %9318 = vmatpush.msra.mxu0 %v8520
  %9319 = vmatpush.msra.mxu0 %v8519
  %9320 = vmatpush.msra.mxu0 %v8518
  %9321 = vmatpush.msra.mxu0 %v8517
  %9322 = vmatpush.msra.mxu0 %v8516
  %9323 = vmatpush.msra.mxu0 %v8515
  %9324 = vmatpush.msra.mxu0 %v8514
  %9325 = vmatpush.msra.mxu0 %v8513
  %9326 = vmatpush.msra.mxu0 %v8512
  %9327 = vmatpush.msra.mxu0 %v8511
  %9328 = vmatpush.msra.mxu0 %v8510
  %9329 = vmatpush.msra.mxu0 %v8509
  %9330 = vmatpush.msra.mxu0 %v8508
  %9331 = vmatpush.msra.mxu0 %v8507
  %9332 = vmatpush.msra.mxu0 %v8506
  %9333 = vmatpush.msra.mxu0 %v8505
  %9334 = vmatmul.f32.gmra.mxu0 %v8378
  %v9335 = vpop.f32.mrf.mxu0
  %v9336 = vadd.f32 0.0, %v9335
  %9337 = vdwg.mxu0
  %9338 = vmatpush.msra.mxu0 0.0
  %9339 = vmatpush.msra.mxu0 0.0
  %9340 = vmatpush.msra.mxu0 0.0
  %9341 = vmatpush.msra.mxu0 0.0
  %9342 = vmatpush.msra.mxu0 0.0
  %9343 = vmatpush.msra.mxu0 0.0
  %9344 = vmatpush.msra.mxu0 0.0
  %9345 = vmatpush.msra.mxu0 0.0
  %9346 = vmatpush.msra.mxu0 0.0
  %9347 = vmatpush.msra.mxu0 %v9316
  %9348 = vmatpush.msra.mxu0 %v8526
  %9349 = vmatpush.msra.mxu0 %v8525
  %9350 = vmatpush.msra.mxu0 %v8524
  %9351 = vmatpush.msra.mxu0 %v8523
  %9352 = vmatpush.msra.mxu0 %v8522
  %9353 = vmatpush.msra.mxu0 %v8521
  %9354 = vmatmul.f32.gmra.mxu0 %v9313
  %v9355 = vpop.f32.mrf.mxu0
  %v9356 = vadd.f32 %v9336, %v9355
  %9357 = vdwg.mxu0
  %v9359 = vsel %vm9172, %v8381, 0
  %v9362 = vsel %vm9176, %v8550, 0
  %9364 = vmatpush.msra.mxu0 %v8543
  %9365 = vmatpush.msra.mxu0 %v8542
  %9366 = vmatpush.msra.mxu0 %v8541
  %9367 = vmatpush.msra.mxu0 %v8540
  %9368 = vmatpush.msra.mxu0 %v8539
  %9369 = vmatpush.msra.mxu0 %v8538
  %9370 = vmatpush.msra.mxu0 %v8537
  %9371 = vmatpush.msra.mxu0 %v8536
  %9372 = vmatpush.msra.mxu0 %v8535
  %9373 = vmatpush.msra.mxu0 %v8534
  %9374 = vmatpush.msra.mxu0 %v8533
  %9375 = vmatpush.msra.mxu0 %v8532
  %9376 = vmatpush.msra.mxu0 %v8531
  %9377 = vmatpush.msra.mxu0 %v8530
  %9378 = vmatpush.msra.mxu0 %v8529
  %9379 = vmatpush.msra.mxu0 %v8528
  %9380 = vmatmul.f32.gmra.mxu0 %v8380
  %v9381 = vpop.f32.mrf.mxu0
  %v9382 = vadd.f32 0.0, %v9381
  %9383 = vdwg.mxu0
  %9384 = vmatpush.msra.mxu0 0.0
  %9385 = vmatpush.msra.mxu0 0.0
  %9386 = vmatpush.msra.mxu0 0.0
  %9387 = vmatpush.msra.mxu0 0.0
  %9388 = vmatpush.msra.mxu0 0.0
  %9389 = vmatpush.msra.mxu0 0.0
  %9390 = vmatpush.msra.mxu0 0.0
  %9391 = vmatpush.msra.mxu0 0.0
  %9392 = vmatpush.msra.mxu0 0.0
  %9393 = vmatpush.msra.mxu0 %v9362
  %9394 = vmatpush.msra.mxu0 %v8549
  %9395 = vmatpush.msra.mxu0 %v8548
  %9396 = vmatpush.msra.mxu0 %v8547
  %9397 = vmatpush.msra.mxu0 %v8546
  %9398 = vmatpush.msra.mxu0 %v8545
  %9399 = vmatpush.msra.mxu0 %v8544
  %9400 = vmatmul.f32.gmra.mxu0 %v9359
  %v9401 = vpop.f32.mrf.mxu0
  %v9402 = vadd.f32 %v9382, %v9401
  %9403 = vdwg.mxu0
  %v9405 = vsel %vm9172, %v8383, 0
  %v9408 = vsel %vm9176, %v8573, 0
  %9410 = vmatpush.msra.mxu0 %v8566
  %9411 = vmatpush.msra.mxu0 %v8565
  %9412 = vmatpush.msra.mxu0 %v8564
  %9413 = vmatpush.msra.mxu0 %v8563
  %9414 = vmatpush.msra.mxu0 %v8562
  %9415 = vmatpush.msra.mxu0 %v8561
  %9416 = vmatpush.msra.mxu0 %v8560
  %9417 = vmatpush.msra.mxu0 %v8559
  %9418 = vmatpush.msra.mxu0 %v8558
  %9419 = vmatpush.msra.mxu0 %v8557
  %9420 = vmatpush.msra.mxu0 %v8556
  %9421 = vmatpush.msra.mxu0 %v8555
  %9422 = vmatpush.msra.mxu0 %v8554
  %9423 = vmatpush.msra.mxu0 %v8553
  %9424 = vmatpush.msra.mxu0 %v8552
  %9425 = vmatpush.msra.mxu0 %v8551
  %9426 = vmatmul.f32.gmra.mxu0 %v8382
  %v9427 = vpop.f32.mrf.mxu0
  %v9428 = vadd.f32 0.0, %v9427
  %9429 = vdwg.mxu0
  %9430 = vmatpush.msra.mxu0 0.0
  %9431 = vmatpush.msra.mxu0 0.0
  %9432 = vmatpush.msra.mxu0 0.0
  %9433 = vmatpush.msra.mxu0 0.0
  %9434 = vmatpush.msra.mxu0 0.0
  %9435 = vmatpush.msra.mxu0 0.0
  %9436 = vmatpush.msra.mxu0 0.0
  %9437 = vmatpush.msra.mxu0 0.0
  %9438 = vmatpush.msra.mxu0 0.0
  %9439 = vmatpush.msra.mxu0 %v9408
  %9440 = vmatpush.msra.mxu0 %v8572
  %9441 = vmatpush.msra.mxu0 %v8571
  %9442 = vmatpush.msra.mxu0 %v8570
  %9443 = vmatpush.msra.mxu0 %v8569
  %9444 = vmatpush.msra.mxu0 %v8568
  %9445 = vmatpush.msra.mxu0 %v8567
  %9446 = vmatmul.f32.gmra.mxu0 %v9405
  %v9447 = vpop.f32.mrf.mxu0
  %v9448 = vadd.f32 %v9428, %v9447
  %9449 = vdwg.mxu0
  %v9451 = vsel %vm9172, %v8385, 0
  %v9454 = vsel %vm9176, %v8596, 0
  %9456 = vmatpush.msra.mxu0 %v8589
  %9457 = vmatpush.msra.mxu0 %v8588
  %9458 = vmatpush.msra.mxu0 %v8587
  %9459 = vmatpush.msra.mxu0 %v8586
  %9460 = vmatpush.msra.mxu0 %v8585
  %9461 = vmatpush.msra.mxu0 %v8584
  %9462 = vmatpush.msra.mxu0 %v8583
  %9463 = vmatpush.msra.mxu0 %v8582
  %9464 = vmatpush.msra.mxu0 %v8581
  %9465 = vmatpush.msra.mxu0 %v8580
  %9466 = vmatpush.msra.mxu0 %v8579
  %9467 = vmatpush.msra.mxu0 %v8578
  %9468 = vmatpush.msra.mxu0 %v8577
  %9469 = vmatpush.msra.mxu0 %v8576
  %9470 = vmatpush.msra.mxu0 %v8575
  %9471 = vmatpush.msra.mxu0 %v8574
  %9472 = vmatmul.f32.gmra.mxu0 %v8384
  %v9473 = vpop.f32.mrf.mxu0
  %v9474 = vadd.f32 0.0, %v9473
  %9475 = vdwg.mxu0
  %9476 = vmatpush.msra.mxu0 0.0
  %9477 = vmatpush.msra.mxu0 0.0
  %9478 = vmatpush.msra.mxu0 0.0
  %9479 = vmatpush.msra.mxu0 0.0
  %9480 = vmatpush.msra.mxu0 0.0
  %9481 = vmatpush.msra.mxu0 0.0
  %9482 = vmatpush.msra.mxu0 0.0
  %9483 = vmatpush.msra.mxu0 0.0
  %9484 = vmatpush.msra.mxu0 0.0
  %9485 = vmatpush.msra.mxu0 %v9454
  %9486 = vmatpush.msra.mxu0 %v8595
  %9487 = vmatpush.msra.mxu0 %v8594
  %9488 = vmatpush.msra.mxu0 %v8593
  %9489 = vmatpush.msra.mxu0 %v8592
  %9490 = vmatpush.msra.mxu0 %v8591
  %9491 = vmatpush.msra.mxu0 %v8590
  %9492 = vmatmul.f32.gmra.mxu0 %v9451
  %v9493 = vpop.f32.mrf.mxu0
  %v9494 = vadd.f32 %v9474, %v9493
  %9495 = vdwg.mxu0
  %v9497 = vsel %vm9172, %v8387, 0
  %v9500 = vsel %vm9176, %v8619, 0
  %9502 = vmatpush.msra.mxu0 %v8612
  %9503 = vmatpush.msra.mxu0 %v8611
  %9504 = vmatpush.msra.mxu0 %v8610
  %9505 = vmatpush.msra.mxu0 %v8609
  %9506 = vmatpush.msra.mxu0 %v8608
  %9507 = vmatpush.msra.mxu0 %v8607
  %9508 = vmatpush.msra.mxu0 %v8606
  %9509 = vmatpush.msra.mxu0 %v8605
  %9510 = vmatpush.msra.mxu0 %v8604
  %9511 = vmatpush.msra.mxu0 %v8603
  %9512 = vmatpush.msra.mxu0 %v8602
  %9513 = vmatpush.msra.mxu0 %v8601
  %9514 = vmatpush.msra.mxu0 %v8600
  %9515 = vmatpush.msra.mxu0 %v8599
  %9516 = vmatpush.msra.mxu0 %v8598
  %9517 = vmatpush.msra.mxu0 %v8597
  %9518 = vmatmul.f32.gmra.mxu0 %v8386
  %v9519 = vpop.f32.mrf.mxu0
  %v9520 = vadd.f32 0.0, %v9519
  %9521 = vdwg.mxu0
  %9522 = vmatpush.msra.mxu0 0.0
  %9523 = vmatpush.msra.mxu0 0.0
  %9524 = vmatpush.msra.mxu0 0.0
  %9525 = vmatpush.msra.mxu0 0.0
  %9526 = vmatpush.msra.mxu0 0.0
  %9527 = vmatpush.msra.mxu0 0.0
  %9528 = vmatpush.msra.mxu0 0.0
  %9529 = vmatpush.msra.mxu0 0.0
  %9530 = vmatpush.msra.mxu0 0.0
  %9531 = vmatpush.msra.mxu0 %v9500
  %9532 = vmatpush.msra.mxu0 %v8618
  %9533 = vmatpush.msra.mxu0 %v8617
  %9534 = vmatpush.msra.mxu0 %v8616
  %9535 = vmatpush.msra.mxu0 %v8615
  %9536 = vmatpush.msra.mxu0 %v8614
  %9537 = vmatpush.msra.mxu0 %v8613
  %9538 = vmatmul.f32.gmra.mxu0 %v9497
  %v9539 = vpop.f32.mrf.mxu0
  %v9540 = vadd.f32 %v9520, %v9539
  %9541 = vdwg.mxu0
  %v9543 = vsel %vm9172, %v8389, 0
  %v9546 = vsel %vm9176, %v8642, 0
  %9548 = vmatpush.msra.mxu0 %v8635
  %9549 = vmatpush.msra.mxu0 %v8634
  %9550 = vmatpush.msra.mxu0 %v8633
  %9551 = vmatpush.msra.mxu0 %v8632
  %9552 = vmatpush.msra.mxu0 %v8631
  %9553 = vmatpush.msra.mxu0 %v8630
  %9554 = vmatpush.msra.mxu0 %v8629
  %9555 = vmatpush.msra.mxu0 %v8628
  %9556 = vmatpush.msra.mxu0 %v8627
  %9557 = vmatpush.msra.mxu0 %v8626
  %9558 = vmatpush.msra.mxu0 %v8625
  %9559 = vmatpush.msra.mxu0 %v8624
  %9560 = vmatpush.msra.mxu0 %v8623
  %9561 = vmatpush.msra.mxu0 %v8622
  %9562 = vmatpush.msra.mxu0 %v8621
  %9563 = vmatpush.msra.mxu0 %v8620
  %9564 = vmatmul.f32.gmra.mxu0 %v8388
  %v9565 = vpop.f32.mrf.mxu0
  %v9566 = vadd.f32 0.0, %v9565
  %9567 = vdwg.mxu0
  %9568 = vmatpush.msra.mxu0 0.0
  %9569 = vmatpush.msra.mxu0 0.0
  %9570 = vmatpush.msra.mxu0 0.0
  %9571 = vmatpush.msra.mxu0 0.0
  %9572 = vmatpush.msra.mxu0 0.0
  %9573 = vmatpush.msra.mxu0 0.0
  %9574 = vmatpush.msra.mxu0 0.0
  %9575 = vmatpush.msra.mxu0 0.0
  %9576 = vmatpush.msra.mxu0 0.0
  %9577 = vmatpush.msra.mxu0 %v9546
  %9578 = vmatpush.msra.mxu0 %v8641
  %9579 = vmatpush.msra.mxu0 %v8640
  %9580 = vmatpush.msra.mxu0 %v8639
  %9581 = vmatpush.msra.mxu0 %v8638
  %9582 = vmatpush.msra.mxu0 %v8637
  %9583 = vmatpush.msra.mxu0 %v8636
  %9584 = vmatmul.f32.gmra.mxu0 %v9543
  %v9585 = vpop.f32.mrf.mxu0
  %v9586 = vadd.f32 %v9566, %v9585
  %9587 = vdwg.mxu0
  %v9589 = vsel %vm9172, %v8391, 0
  %v9592 = vsel %vm9176, %v8665, 0
  %9594 = vmatpush.msra.mxu0 %v8658
  %9595 = vmatpush.msra.mxu0 %v8657
  %9596 = vmatpush.msra.mxu0 %v8656
  %9597 = vmatpush.msra.mxu0 %v8655
  %9598 = vmatpush.msra.mxu0 %v8654
  %9599 = vmatpush.msra.mxu0 %v8653
  %9600 = vmatpush.msra.mxu0 %v8652
  %9601 = vmatpush.msra.mxu0 %v8651
  %9602 = vmatpush.msra.mxu0 %v8650
  %9603 = vmatpush.msra.mxu0 %v8649
  %9604 = vmatpush.msra.mxu0 %v8648
  %9605 = vmatpush.msra.mxu0 %v8647
  %9606 = vmatpush.msra.mxu0 %v8646
  %9607 = vmatpush.msra.mxu0 %v8645
  %9608 = vmatpush.msra.mxu0 %v8644
  %9609 = vmatpush.msra.mxu0 %v8643
  %9610 = vmatmul.f32.gmra.mxu0 %v8390
  %v9611 = vpop.f32.mrf.mxu0
  %v9612 = vadd.f32 0.0, %v9611
  %9613 = vdwg.mxu0
  %9614 = vmatpush.msra.mxu0 0.0
  %9615 = vmatpush.msra.mxu0 0.0
  %9616 = vmatpush.msra.mxu0 0.0
  %9617 = vmatpush.msra.mxu0 0.0
  %9618 = vmatpush.msra.mxu0 0.0
  %9619 = vmatpush.msra.mxu0 0.0
  %9620 = vmatpush.msra.mxu0 0.0
  %9621 = vmatpush.msra.mxu0 0.0
  %9622 = vmatpush.msra.mxu0 0.0
  %9623 = vmatpush.msra.mxu0 %v9592
  %9624 = vmatpush.msra.mxu0 %v8664
  %9625 = vmatpush.msra.mxu0 %v8663
  %9626 = vmatpush.msra.mxu0 %v8662
  %9627 = vmatpush.msra.mxu0 %v8661
  %9628 = vmatpush.msra.mxu0 %v8660
  %9629 = vmatpush.msra.mxu0 %v8659
  %9630 = vmatmul.f32.gmra.mxu0 %v9589
  %v9631 = vpop.f32.mrf.mxu0
  %v9632 = vadd.f32 %v9612, %v9631
  %9633 = vdwg.mxu0
  %v9635 = vsel %vm9172, %v8393, 0
  %v9638 = vsel %vm9176, %v8688, 0
  %9640 = vmatpush.msra.mxu0 %v8681
  %9641 = vmatpush.msra.mxu0 %v8680
  %9642 = vmatpush.msra.mxu0 %v8679
  %9643 = vmatpush.msra.mxu0 %v8678
  %9644 = vmatpush.msra.mxu0 %v8677
  %9645 = vmatpush.msra.mxu0 %v8676
  %9646 = vmatpush.msra.mxu0 %v8675
  %9647 = vmatpush.msra.mxu0 %v8674
  %9648 = vmatpush.msra.mxu0 %v8673
  %9649 = vmatpush.msra.mxu0 %v8672
  %9650 = vmatpush.msra.mxu0 %v8671
  %9651 = vmatpush.msra.mxu0 %v8670
  %9652 = vmatpush.msra.mxu0 %v8669
  %9653 = vmatpush.msra.mxu0 %v8668
  %9654 = vmatpush.msra.mxu0 %v8667
  %9655 = vmatpush.msra.mxu0 %v8666
  %9656 = vmatmul.f32.gmra.mxu0 %v8392
  %v9657 = vpop.f32.mrf.mxu0
  %v9658 = vadd.f32 0.0, %v9657
  %9659 = vdwg.mxu0
  %9660 = vmatpush.msra.mxu0 0.0
  %9661 = vmatpush.msra.mxu0 0.0
  %9662 = vmatpush.msra.mxu0 0.0
  %9663 = vmatpush.msra.mxu0 0.0
  %9664 = vmatpush.msra.mxu0 0.0
  %9665 = vmatpush.msra.mxu0 0.0
  %9666 = vmatpush.msra.mxu0 0.0
  %9667 = vmatpush.msra.mxu0 0.0
  %9668 = vmatpush.msra.mxu0 0.0
  %9669 = vmatpush.msra.mxu0 %v9638
  %9670 = vmatpush.msra.mxu0 %v8687
  %9671 = vmatpush.msra.mxu0 %v8686
  %9672 = vmatpush.msra.mxu0 %v8685
  %9673 = vmatpush.msra.mxu0 %v8684
  %9674 = vmatpush.msra.mxu0 %v8683
  %9675 = vmatpush.msra.mxu0 %v8682
  %9676 = vmatmul.f32.gmra.mxu0 %v9635
  %v9677 = vpop.f32.mrf.mxu0
  %v9678 = vadd.f32 %v9658, %v9677
  %9679 = vdwg.mxu0
  %v9681 = vsel %vm9172, %v8395, 0
  %v9684 = vsel %vm9176, %v8711, 0
  %9686 = vmatpush.msra.mxu0 %v8704
  %9687 = vmatpush.msra.mxu0 %v8703
  %9688 = vmatpush.msra.mxu0 %v8702
  %9689 = vmatpush.msra.mxu0 %v8701
  %9690 = vmatpush.msra.mxu0 %v8700
  %9691 = vmatpush.msra.mxu0 %v8699
  %9692 = vmatpush.msra.mxu0 %v8698
  %9693 = vmatpush.msra.mxu0 %v8697
  %9694 = vmatpush.msra.mxu0 %v8696
  %9695 = vmatpush.msra.mxu0 %v8695
  %9696 = vmatpush.msra.mxu0 %v8694
  %9697 = vmatpush.msra.mxu0 %v8693
  %9698 = vmatpush.msra.mxu0 %v8692
  %9699 = vmatpush.msra.mxu0 %v8691
  %9700 = vmatpush.msra.mxu0 %v8690
  %9701 = vmatpush.msra.mxu0 %v8689
  %9702 = vmatmul.f32.gmra.mxu0 %v8394
  %v9703 = vpop.f32.mrf.mxu0
  %v9704 = vadd.f32 0.0, %v9703
  %9705 = vdwg.mxu0
  %9706 = vmatpush.msra.mxu0 0.0
  %9707 = vmatpush.msra.mxu0 0.0
  %9708 = vmatpush.msra.mxu0 0.0
  %9709 = vmatpush.msra.mxu0 0.0
  %9710 = vmatpush.msra.mxu0 0.0
  %9711 = vmatpush.msra.mxu0 0.0
  %9712 = vmatpush.msra.mxu0 0.0
  %9713 = vmatpush.msra.mxu0 0.0
  %9714 = vmatpush.msra.mxu0 0.0
  %9715 = vmatpush.msra.mxu0 %v9684
  %9716 = vmatpush.msra.mxu0 %v8710
  %9717 = vmatpush.msra.mxu0 %v8709
  %9718 = vmatpush.msra.mxu0 %v8708
  %9719 = vmatpush.msra.mxu0 %v8707
  %9720 = vmatpush.msra.mxu0 %v8706
  %9721 = vmatpush.msra.mxu0 %v8705
  %9722 = vmatmul.f32.gmra.mxu0 %v9681
  %v9723 = vpop.f32.mrf.mxu0
  %v9724 = vadd.f32 %v9704, %v9723
  %9725 = vdwg.mxu0
  %v9727 = vsel %vm9172, %v8397, 0
  %v9730 = vsel %vm9176, %v8734, 0
  %9732 = vmatpush.msra.mxu0 %v8727
  %9733 = vmatpush.msra.mxu0 %v8726
  %9734 = vmatpush.msra.mxu0 %v8725
  %9735 = vmatpush.msra.mxu0 %v8724
  %9736 = vmatpush.msra.mxu0 %v8723
  %9737 = vmatpush.msra.mxu0 %v8722
  %9738 = vmatpush.msra.mxu0 %v8721
  %9739 = vmatpush.msra.mxu0 %v8720
  %9740 = vmatpush.msra.mxu0 %v8719
  %9741 = vmatpush.msra.mxu0 %v8718
  %9742 = vmatpush.msra.mxu0 %v8717
  %9743 = vmatpush.msra.mxu0 %v8716
  %9744 = vmatpush.msra.mxu0 %v8715
  %9745 = vmatpush.msra.mxu0 %v8714
  %9746 = vmatpush.msra.mxu0 %v8713
  %9747 = vmatpush.msra.mxu0 %v8712
  %9748 = vmatmul.f32.gmra.mxu0 %v8396
  %v9749 = vpop.f32.mrf.mxu0
  %v9750 = vadd.f32 0.0, %v9749
  %9751 = vdwg.mxu0
  %9752 = vmatpush.msra.mxu0 0.0
  %9753 = vmatpush.msra.mxu0 0.0
  %9754 = vmatpush.msra.mxu0 0.0
  %9755 = vmatpush.msra.mxu0 0.0
  %9756 = vmatpush.msra.mxu0 0.0
  %9757 = vmatpush.msra.mxu0 0.0
  %9758 = vmatpush.msra.mxu0 0.0
  %9759 = vmatpush.msra.mxu0 0.0
  %9760 = vmatpush.msra.mxu0 0.0
  %9761 = vmatpush.msra.mxu0 %v9730
  %9762 = vmatpush.msra.mxu0 %v8733
  %9763 = vmatpush.msra.mxu0 %v8732
  %9764 = vmatpush.msra.mxu0 %v8731
  %9765 = vmatpush.msra.mxu0 %v8730
  %9766 = vmatpush.msra.mxu0 %v8729
  %9767 = vmatpush.msra.mxu0 %v8728
  %9768 = vmatmul.f32.gmra.mxu0 %v9727
  %v9769 = vpop.f32.mrf.mxu0
  %v9770 = vadd.f32 %v9750, %v9769
  %9771 = vdwg.mxu0
  %v9773 = vsel %vm9172, %v8399, 0
  %v9776 = vsel %vm9176, %v8757, 0
  %9778 = vmatpush.msra.mxu0 %v8750
  %9779 = vmatpush.msra.mxu0 %v8749
  %9780 = vmatpush.msra.mxu0 %v8748
  %9781 = vmatpush.msra.mxu0 %v8747
  %9782 = vmatpush.msra.mxu0 %v8746
  %9783 = vmatpush.msra.mxu0 %v8745
  %9784 = vmatpush.msra.mxu0 %v8744
  %9785 = vmatpush.msra.mxu0 %v8743
  %9786 = vmatpush.msra.mxu0 %v8742
  %9787 = vmatpush.msra.mxu0 %v8741
  %9788 = vmatpush.msra.mxu0 %v8740
  %9789 = vmatpush.msra.mxu0 %v8739
  %9790 = vmatpush.msra.mxu0 %v8738
  %9791 = vmatpush.msra.mxu0 %v8737
  %9792 = vmatpush.msra.mxu0 %v8736
  %9793 = vmatpush.msra.mxu0 %v8735
  %9794 = vmatmul.f32.gmra.mxu0 %v8398
  %v9795 = vpop.f32.mrf.mxu0
  %v9796 = vadd.f32 0.0, %v9795
  %9797 = vdwg.mxu0
  %9798 = vmatpush.msra.mxu0 0.0
  %9799 = vmatpush.msra.mxu0 0.0
  %9800 = vmatpush.msra.mxu0 0.0
  %9801 = vmatpush.msra.mxu0 0.0
  %9802 = vmatpush.msra.mxu0 0.0
  %9803 = vmatpush.msra.mxu0 0.0
  %9804 = vmatpush.msra.mxu0 0.0
  %9805 = vmatpush.msra.mxu0 0.0
  %9806 = vmatpush.msra.mxu0 0.0
  %9807 = vmatpush.msra.mxu0 %v9776
  %9808 = vmatpush.msra.mxu0 %v8756
  %9809 = vmatpush.msra.mxu0 %v8755
  %9810 = vmatpush.msra.mxu0 %v8754
  %9811 = vmatpush.msra.mxu0 %v8753
  %9812 = vmatpush.msra.mxu0 %v8752
  %9813 = vmatpush.msra.mxu0 %v8751
  %9814 = vmatmul.f32.gmra.mxu0 %v9773
  %v9815 = vpop.f32.mrf.mxu0
  %v9816 = vadd.f32 %v9796, %v9815
  %9817 = vdwg.mxu0
  %v9819 = vsel %vm9172, %v8401, 0
  %v9822 = vsel %vm9176, %v8780, 0
  %9824 = vmatpush.msra.mxu0 %v8773
  %9825 = vmatpush.msra.mxu0 %v8772
  %9826 = vmatpush.msra.mxu0 %v8771
  %9827 = vmatpush.msra.mxu0 %v8770
  %9828 = vmatpush.msra.mxu0 %v8769
  %9829 = vmatpush.msra.mxu0 %v8768
  %9830 = vmatpush.msra.mxu0 %v8767
  %9831 = vmatpush.msra.mxu0 %v8766
  %9832 = vmatpush.msra.mxu0 %v8765
  %9833 = vmatpush.msra.mxu0 %v8764
  %9834 = vmatpush.msra.mxu0 %v8763
  %9835 = vmatpush.msra.mxu0 %v8762
  %9836 = vmatpush.msra.mxu0 %v8761
  %9837 = vmatpush.msra.mxu0 %v8760
  %9838 = vmatpush.msra.mxu0 %v8759
  %9839 = vmatpush.msra.mxu0 %v8758
  %9840 = vmatmul.f32.gmra.mxu0 %v8400
  %v9841 = vpop.f32.mrf.mxu0
  %v9842 = vadd.f32 0.0, %v9841
  %9843 = vdwg.mxu0
  %9844 = vmatpush.msra.mxu0 0.0
  %9845 = vmatpush.msra.mxu0 0.0
  %9846 = vmatpush.msra.mxu0 0.0
  %9847 = vmatpush.msra.mxu0 0.0
  %9848 = vmatpush.msra.mxu0 0.0
  %9849 = vmatpush.msra.mxu0 0.0
  %9850 = vmatpush.msra.mxu0 0.0
  %9851 = vmatpush.msra.mxu0 0.0
  %9852 = vmatpush.msra.mxu0 0.0
  %9853 = vmatpush.msra.mxu0 %v9822
  %9854 = vmatpush.msra.mxu0 %v8779
  %9855 = vmatpush.msra.mxu0 %v8778
  %9856 = vmatpush.msra.mxu0 %v8777
  %9857 = vmatpush.msra.mxu0 %v8776
  %9858 = vmatpush.msra.mxu0 %v8775
  %9859 = vmatpush.msra.mxu0 %v8774
  %9860 = vmatmul.f32.gmra.mxu0 %v9819
  %v9861 = vpop.f32.mrf.mxu0
  %v9862 = vadd.f32 %v9842, %v9861
  %9863 = vdwg.mxu0
  %v9865 = vsel %vm9172, %v8403, 0
  %v9868 = vsel %vm9176, %v8803, 0
  %9870 = vmatpush.msra.mxu0 %v8796
  %9871 = vmatpush.msra.mxu0 %v8795
  %9872 = vmatpush.msra.mxu0 %v8794
  %9873 = vmatpush.msra.mxu0 %v8793
  %9874 = vmatpush.msra.mxu0 %v8792
  %9875 = vmatpush.msra.mxu0 %v8791
  %9876 = vmatpush.msra.mxu0 %v8790
  %9877 = vmatpush.msra.mxu0 %v8789
  %9878 = vmatpush.msra.mxu0 %v8788
  %9879 = vmatpush.msra.mxu0 %v8787
  %9880 = vmatpush.msra.mxu0 %v8786
  %9881 = vmatpush.msra.mxu0 %v8785
  %9882 = vmatpush.msra.mxu0 %v8784
  %9883 = vmatpush.msra.mxu0 %v8783
  %9884 = vmatpush.msra.mxu0 %v8782
  %9885 = vmatpush.msra.mxu0 %v8781
  %9886 = vmatmul.f32.gmra.mxu0 %v8402
  %v9887 = vpop.f32.mrf.mxu0
  %v9888 = vadd.f32 0.0, %v9887
  %9889 = vdwg.mxu0
  %9890 = vmatpush.msra.mxu0 0.0
  %9891 = vmatpush.msra.mxu0 0.0
  %9892 = vmatpush.msra.mxu0 0.0
  %9893 = vmatpush.msra.mxu0 0.0
  %9894 = vmatpush.msra.mxu0 0.0
  %9895 = vmatpush.msra.mxu0 0.0
  %9896 = vmatpush.msra.mxu0 0.0
  %9897 = vmatpush.msra.mxu0 0.0
  %9898 = vmatpush.msra.mxu0 0.0
  %9899 = vmatpush.msra.mxu0 %v9868
  %9900 = vmatpush.msra.mxu0 %v8802
  %9901 = vmatpush.msra.mxu0 %v8801
  %9902 = vmatpush.msra.mxu0 %v8800
  %9903 = vmatpush.msra.mxu0 %v8799
  %9904 = vmatpush.msra.mxu0 %v8798
  %9905 = vmatpush.msra.mxu0 %v8797
  %9906 = vmatmul.f32.gmra.mxu0 %v9865
  %v9907 = vpop.f32.mrf.mxu0
  %v9908 = vadd.f32 %v9888, %v9907
  %9909 = vdwg.mxu0
  %v9911 = vsel %vm9172, %v8405, 0
  %v9914 = vsel %vm9176, %v8826, 0
  %9916 = vmatpush.msra.mxu0 %v8819
  %9917 = vmatpush.msra.mxu0 %v8818
  %9918 = vmatpush.msra.mxu0 %v8817
  %9919 = vmatpush.msra.mxu0 %v8816
  %9920 = vmatpush.msra.mxu0 %v8815
  %9921 = vmatpush.msra.mxu0 %v8814
  %9922 = vmatpush.msra.mxu0 %v8813
  %9923 = vmatpush.msra.mxu0 %v8812
  %9924 = vmatpush.msra.mxu0 %v8811
  %9925 = vmatpush.msra.mxu0 %v8810
  %9926 = vmatpush.msra.mxu0 %v8809
  %9927 = vmatpush.msra.mxu0 %v8808
  %9928 = vmatpush.msra.mxu0 %v8807
  %9929 = vmatpush.msra.mxu0 %v8806
  %9930 = vmatpush.msra.mxu0 %v8805
  %9931 = vmatpush.msra.mxu0 %v8804
  %9932 = vmatmul.f32.gmra.mxu0 %v8404
  %v9933 = vpop.f32.mrf.mxu0
  %v9934 = vadd.f32 0.0, %v9933
  %9935 = vdwg.mxu0
  %9936 = vmatpush.msra.mxu0 0.0
  %9937 = vmatpush.msra.mxu0 0.0
  %9938 = vmatpush.msra.mxu0 0.0
  %9939 = vmatpush.msra.mxu0 0.0
  %9940 = vmatpush.msra.mxu0 0.0
  %9941 = vmatpush.msra.mxu0 0.0
  %9942 = vmatpush.msra.mxu0 0.0
  %9943 = vmatpush.msra.mxu0 0.0
  %9944 = vmatpush.msra.mxu0 0.0
  %9945 = vmatpush.msra.mxu0 %v9914
  %9946 = vmatpush.msra.mxu0 %v8825
  %9947 = vmatpush.msra.mxu0 %v8824
  %9948 = vmatpush.msra.mxu0 %v8823
  %9949 = vmatpush.msra.mxu0 %v8822
  %9950 = vmatpush.msra.mxu0 %v8821
  %9951 = vmatpush.msra.mxu0 %v8820
  %9952 = vmatmul.f32.gmra.mxu0 %v9911
  %v9953 = vpop.f32.mrf.mxu0
  %v9954 = vadd.f32 %v9934, %v9953
  %9955 = vdwg.mxu0
  %v9957 = vsel %vm9172, %v8407, 0
  %v9960 = vsel %vm9176, %v8849, 0
  %9962 = vmatpush.msra.mxu0 %v8842
  %9963 = vmatpush.msra.mxu0 %v8841
  %9964 = vmatpush.msra.mxu0 %v8840
  %9965 = vmatpush.msra.mxu0 %v8839
  %9966 = vmatpush.msra.mxu0 %v8838
  %9967 = vmatpush.msra.mxu0 %v8837
  %9968 = vmatpush.msra.mxu0 %v8836
  %9969 = vmatpush.msra.mxu0 %v8835
  %9970 = vmatpush.msra.mxu0 %v8834
  %9971 = vmatpush.msra.mxu0 %v8833
  %9972 = vmatpush.msra.mxu0 %v8832
  %9973 = vmatpush.msra.mxu0 %v8831
  %9974 = vmatpush.msra.mxu0 %v8830
  %9975 = vmatpush.msra.mxu0 %v8829
  %9976 = vmatpush.msra.mxu0 %v8828
  %9977 = vmatpush.msra.mxu0 %v8827
  %9978 = vmatmul.f32.gmra.mxu0 %v8406
  %v9979 = vpop.f32.mrf.mxu0
  %v9980 = vadd.f32 0.0, %v9979
  %9981 = vdwg.mxu0
  %9982 = vmatpush.msra.mxu0 0.0
  %9983 = vmatpush.msra.mxu0 0.0
  %9984 = vmatpush.msra.mxu0 0.0
  %9985 = vmatpush.msra.mxu0 0.0
  %9986 = vmatpush.msra.mxu0 0.0
  %9987 = vmatpush.msra.mxu0 0.0
  %9988 = vmatpush.msra.mxu0 0.0
  %9989 = vmatpush.msra.mxu0 0.0
  %9990 = vmatpush.msra.mxu0 0.0
  %9991 = vmatpush.msra.mxu0 %v9960
  %9992 = vmatpush.msra.mxu0 %v8848
  %9993 = vmatpush.msra.mxu0 %v8847
  %9994 = vmatpush.msra.mxu0 %v8846
  %9995 = vmatpush.msra.mxu0 %v8845
  %9996 = vmatpush.msra.mxu0 %v8844
  %9997 = vmatpush.msra.mxu0 %v8843
  %9998 = vmatmul.f32.gmra.mxu0 %v9957
  %v9999 = vpop.f32.mrf.mxu0
  %v10000 = vadd.f32 %v9980, %v9999
  %10001 = vdwg.mxu0
  %v10003 = vsel %vm9172, %v8409, 0
  %v10006 = vsel %vm9176, %v8872, 0
  %10008 = vmatpush.msra.mxu0 %v8865
  %10009 = vmatpush.msra.mxu0 %v8864
  %10010 = vmatpush.msra.mxu0 %v8863
  %10011 = vmatpush.msra.mxu0 %v8862
  %10012 = vmatpush.msra.mxu0 %v8861
  %10013 = vmatpush.msra.mxu0 %v8860
  %10014 = vmatpush.msra.mxu0 %v8859
  %10015 = vmatpush.msra.mxu0 %v8858
  %10016 = vmatpush.msra.mxu0 %v8857
  %10017 = vmatpush.msra.mxu0 %v8856
  %10018 = vmatpush.msra.mxu0 %v8855
  %10019 = vmatpush.msra.mxu0 %v8854
  %10020 = vmatpush.msra.mxu0 %v8853
  %10021 = vmatpush.msra.mxu0 %v8852
  %10022 = vmatpush.msra.mxu0 %v8851
  %10023 = vmatpush.msra.mxu0 %v8850
  %10024 = vmatmul.f32.gmra.mxu0 %v8408
  %v10025 = vpop.f32.mrf.mxu0
  %v10026 = vadd.f32 0.0, %v10025
  %10027 = vdwg.mxu0
  %10028 = vmatpush.msra.mxu0 0.0
  %10029 = vmatpush.msra.mxu0 0.0
  %10030 = vmatpush.msra.mxu0 0.0
  %10031 = vmatpush.msra.mxu0 0.0
  %10032 = vmatpush.msra.mxu0 0.0
  %10033 = vmatpush.msra.mxu0 0.0
  %10034 = vmatpush.msra.mxu0 0.0
  %10035 = vmatpush.msra.mxu0 0.0
  %10036 = vmatpush.msra.mxu0 0.0
  %10037 = vmatpush.msra.mxu0 %v10006
  %10038 = vmatpush.msra.mxu0 %v8871
  %10039 = vmatpush.msra.mxu0 %v8870
  %10040 = vmatpush.msra.mxu0 %v8869
  %10041 = vmatpush.msra.mxu0 %v8868
  %10042 = vmatpush.msra.mxu0 %v8867
  %10043 = vmatpush.msra.mxu0 %v8866
  %10044 = vmatmul.f32.gmra.mxu0 %v10003
  %v10045 = vpop.f32.mrf.mxu0
  %v10046 = vadd.f32 %v10026, %v10045
  %10047 = vdwg.mxu0
  %v10049 = vsel %vm9172, %v8411, 0
  %v10052 = vsel %vm9176, %v8895, 0
  %10054 = vmatpush.msra.mxu0 %v8888
  %10055 = vmatpush.msra.mxu0 %v8887
  %10056 = vmatpush.msra.mxu0 %v8886
  %10057 = vmatpush.msra.mxu0 %v8885
  %10058 = vmatpush.msra.mxu0 %v8884
  %10059 = vmatpush.msra.mxu0 %v8883
  %10060 = vmatpush.msra.mxu0 %v8882
  %10061 = vmatpush.msra.mxu0 %v8881
  %10062 = vmatpush.msra.mxu0 %v8880
  %10063 = vmatpush.msra.mxu0 %v8879
  %10064 = vmatpush.msra.mxu0 %v8878
  %10065 = vmatpush.msra.mxu0 %v8877
  %10066 = vmatpush.msra.mxu0 %v8876
  %10067 = vmatpush.msra.mxu0 %v8875
  %10068 = vmatpush.msra.mxu0 %v8874
  %10069 = vmatpush.msra.mxu0 %v8873
  %10070 = vmatmul.f32.gmra.mxu0 %v8410
  %v10071 = vpop.f32.mrf.mxu0
  %v10072 = vadd.f32 0.0, %v10071
  %10073 = vdwg.mxu0
  %10074 = vmatpush.msra.mxu0 0.0
  %10075 = vmatpush.msra.mxu0 0.0
  %10076 = vmatpush.msra.mxu0 0.0
  %10077 = vmatpush.msra.mxu0 0.0
  %10078 = vmatpush.msra.mxu0 0.0
  %10079 = vmatpush.msra.mxu0 0.0
  %10080 = vmatpush.msra.mxu0 0.0
  %10081 = vmatpush.msra.mxu0 0.0
  %10082 = vmatpush.msra.mxu0 0.0
  %10083 = vmatpush.msra.mxu0 %v10052
  %10084 = vmatpush.msra.mxu0 %v8894
  %10085 = vmatpush.msra.mxu0 %v8893
  %10086 = vmatpush.msra.mxu0 %v8892
  %10087 = vmatpush.msra.mxu0 %v8891
  %10088 = vmatpush.msra.mxu0 %v8890
  %10089 = vmatpush.msra.mxu0 %v8889
  %10090 = vmatmul.f32.gmra.mxu0 %v10049
  %v10091 = vpop.f32.mrf.mxu0
  %v10092 = vadd.f32 %v10072, %v10091
  %10093 = vdwg.mxu0
  %v10095 = vsel %vm9172, %v8413, 0
  %v10098 = vsel %vm9176, %v8918, 0
  %10100 = vmatpush.msra.mxu0 %v8911
  %10101 = vmatpush.msra.mxu0 %v8910
  %10102 = vmatpush.msra.mxu0 %v8909
  %10103 = vmatpush.msra.mxu0 %v8908
  %10104 = vmatpush.msra.mxu0 %v8907
  %10105 = vmatpush.msra.mxu0 %v8906
  %10106 = vmatpush.msra.mxu0 %v8905
  %10107 = vmatpush.msra.mxu0 %v8904
  %10108 = vmatpush.msra.mxu0 %v8903
  %10109 = vmatpush.msra.mxu0 %v8902
  %10110 = vmatpush.msra.mxu0 %v8901
  %10111 = vmatpush.msra.mxu0 %v8900
  %10112 = vmatpush.msra.mxu0 %v8899
  %10113 = vmatpush.msra.mxu0 %v8898
  %10114 = vmatpush.msra.mxu0 %v8897
  %10115 = vmatpush.msra.mxu0 %v8896
  %10116 = vmatmul.f32.gmra.mxu0 %v8412
  %v10117 = vpop.f32.mrf.mxu0
  %v10118 = vadd.f32 0.0, %v10117
  %10119 = vdwg.mxu0
  %10120 = vmatpush.msra.mxu0 0.0
  %10121 = vmatpush.msra.mxu0 0.0
  %10122 = vmatpush.msra.mxu0 0.0
  %10123 = vmatpush.msra.mxu0 0.0
  %10124 = vmatpush.msra.mxu0 0.0
  %10125 = vmatpush.msra.mxu0 0.0
  %10126 = vmatpush.msra.mxu0 0.0
  %10127 = vmatpush.msra.mxu0 0.0
  %10128 = vmatpush.msra.mxu0 0.0
  %10129 = vmatpush.msra.mxu0 %v10098
  %10130 = vmatpush.msra.mxu0 %v8917
  %10131 = vmatpush.msra.mxu0 %v8916
  %10132 = vmatpush.msra.mxu0 %v8915
  %10133 = vmatpush.msra.mxu0 %v8914
  %10134 = vmatpush.msra.mxu0 %v8913
  %10135 = vmatpush.msra.mxu0 %v8912
  %10136 = vmatmul.f32.gmra.mxu0 %v10095
  %v10137 = vpop.f32.mrf.mxu0
  %v10138 = vadd.f32 %v10118, %v10137
  %10139 = vdwg.mxu0
  %v10141 = vsel %vm9172, %v8415, 0
  %v10144 = vsel %vm9176, %v8941, 0
  %10146 = vmatpush.msra.mxu0 %v8934
  %10147 = vmatpush.msra.mxu0 %v8933
  %10148 = vmatpush.msra.mxu0 %v8932
  %10149 = vmatpush.msra.mxu0 %v8931
  %10150 = vmatpush.msra.mxu0 %v8930
  %10151 = vmatpush.msra.mxu0 %v8929
  %10152 = vmatpush.msra.mxu0 %v8928
  %10153 = vmatpush.msra.mxu0 %v8927
  %10154 = vmatpush.msra.mxu0 %v8926
  %10155 = vmatpush.msra.mxu0 %v8925
  %10156 = vmatpush.msra.mxu0 %v8924
  %10157 = vmatpush.msra.mxu0 %v8923
  %10158 = vmatpush.msra.mxu0 %v8922
  %10159 = vmatpush.msra.mxu0 %v8921
  %10160 = vmatpush.msra.mxu0 %v8920
  %10161 = vmatpush.msra.mxu0 %v8919
  %10162 = vmatmul.f32.gmra.mxu0 %v8414
  %v10163 = vpop.f32.mrf.mxu0
  %v10164 = vadd.f32 0.0, %v10163
  %10165 = vdwg.mxu0
  %10166 = vmatpush.msra.mxu0 0.0
  %10167 = vmatpush.msra.mxu0 0.0
  %10168 = vmatpush.msra.mxu0 0.0
  %10169 = vmatpush.msra.mxu0 0.0
  %10170 = vmatpush.msra.mxu0 0.0
  %10171 = vmatpush.msra.mxu0 0.0
  %10172 = vmatpush.msra.mxu0 0.0
  %10173 = vmatpush.msra.mxu0 0.0
  %10174 = vmatpush.msra.mxu0 0.0
  %10175 = vmatpush.msra.mxu0 %v10144
  %10176 = vmatpush.msra.mxu0 %v8940
  %10177 = vmatpush.msra.mxu0 %v8939
  %10178 = vmatpush.msra.mxu0 %v8938
  %10179 = vmatpush.msra.mxu0 %v8937
  %10180 = vmatpush.msra.mxu0 %v8936
  %10181 = vmatpush.msra.mxu0 %v8935
  %10182 = vmatmul.f32.gmra.mxu0 %v10141
  %v10183 = vpop.f32.mrf.mxu0
  %v10184 = vadd.f32 %v10164, %v10183
  %10185 = vdwg.mxu0
  %v10187 = vsel %vm9172, %v8417, 0
  %v10190 = vsel %vm9176, %v8964, 0
  %10192 = vmatpush.msra.mxu0 %v8957
  %10193 = vmatpush.msra.mxu0 %v8956
  %10194 = vmatpush.msra.mxu0 %v8955
  %10195 = vmatpush.msra.mxu0 %v8954
  %10196 = vmatpush.msra.mxu0 %v8953
  %10197 = vmatpush.msra.mxu0 %v8952
  %10198 = vmatpush.msra.mxu0 %v8951
  %10199 = vmatpush.msra.mxu0 %v8950
  %10200 = vmatpush.msra.mxu0 %v8949
  %10201 = vmatpush.msra.mxu0 %v8948
  %10202 = vmatpush.msra.mxu0 %v8947
  %10203 = vmatpush.msra.mxu0 %v8946
  %10204 = vmatpush.msra.mxu0 %v8945
  %10205 = vmatpush.msra.mxu0 %v8944
  %10206 = vmatpush.msra.mxu0 %v8943
  %10207 = vmatpush.msra.mxu0 %v8942
  %10208 = vmatmul.f32.gmra.mxu0 %v8416
  %v10209 = vpop.f32.mrf.mxu0
  %v10210 = vadd.f32 0.0, %v10209
  %10211 = vdwg.mxu0
  %10212 = vmatpush.msra.mxu0 0.0
  %10213 = vmatpush.msra.mxu0 0.0
  %10214 = vmatpush.msra.mxu0 0.0
  %10215 = vmatpush.msra.mxu0 0.0
  %10216 = vmatpush.msra.mxu0 0.0
  %10217 = vmatpush.msra.mxu0 0.0
  %10218 = vmatpush.msra.mxu0 0.0
  %10219 = vmatpush.msra.mxu0 0.0
  %10220 = vmatpush.msra.mxu0 0.0
  %10221 = vmatpush.msra.mxu0 %v10190
  %10222 = vmatpush.msra.mxu0 %v8963
  %10223 = vmatpush.msra.mxu0 %v8962
  %10224 = vmatpush.msra.mxu0 %v8961
  %10225 = vmatpush.msra.mxu0 %v8960
  %10226 = vmatpush.msra.mxu0 %v8959
  %10227 = vmatpush.msra.mxu0 %v8958
  %10228 = vmatmul.f32.gmra.mxu0 %v10187
  %v10229 = vpop.f32.mrf.mxu0
  %v10230 = vadd.f32 %v10210, %v10229
  %10231 = vdwg.mxu0
  %v10233 = vsel %vm9172, %v8419, 0
  %v10236 = vsel %vm9176, %v8987, 0
  %10238 = vmatpush.msra.mxu0 %v8980
  %10239 = vmatpush.msra.mxu0 %v8979
  %10240 = vmatpush.msra.mxu0 %v8978
  %10241 = vmatpush.msra.mxu0 %v8977
  %10242 = vmatpush.msra.mxu0 %v8976
  %10243 = vmatpush.msra.mxu0 %v8975
  %10244 = vmatpush.msra.mxu0 %v8974
  %10245 = vmatpush.msra.mxu0 %v8973
  %10246 = vmatpush.msra.mxu0 %v8972
  %10247 = vmatpush.msra.mxu0 %v8971
  %10248 = vmatpush.msra.mxu0 %v8970
  %10249 = vmatpush.msra.mxu0 %v8969
  %10250 = vmatpush.msra.mxu0 %v8968
  %10251 = vmatpush.msra.mxu0 %v8967
  %10252 = vmatpush.msra.mxu0 %v8966
  %10253 = vmatpush.msra.mxu0 %v8965
  %10254 = vmatmul.f32.gmra.mxu0 %v8418
  %v10255 = vpop.f32.mrf.mxu0
  %v10256 = vadd.f32 0.0, %v10255
  %10257 = vdwg.mxu0
  %10258 = vmatpush.msra.mxu0 0.0
  %10259 = vmatpush.msra.mxu0 0.0
  %10260 = vmatpush.msra.mxu0 0.0
  %10261 = vmatpush.msra.mxu0 0.0
  %10262 = vmatpush.msra.mxu0 0.0
  %10263 = vmatpush.msra.mxu0 0.0
  %10264 = vmatpush.msra.mxu0 0.0
  %10265 = vmatpush.msra.mxu0 0.0
  %10266 = vmatpush.msra.mxu0 0.0
  %10267 = vmatpush.msra.mxu0 %v10236
  %10268 = vmatpush.msra.mxu0 %v8986
  %10269 = vmatpush.msra.mxu0 %v8985
  %10270 = vmatpush.msra.mxu0 %v8984
  %10271 = vmatpush.msra.mxu0 %v8983
  %10272 = vmatpush.msra.mxu0 %v8982
  %10273 = vmatpush.msra.mxu0 %v8981
  %10274 = vmatmul.f32.gmra.mxu0 %v10233
  %v10275 = vpop.f32.mrf.mxu0
  %v10276 = vadd.f32 %v10256, %v10275
  %10277 = vdwg.mxu0
  %v10279 = vsel %vm9172, %v8421, 0
  %v10282 = vsel %vm9176, %v9010, 0
  %10284 = vmatpush.msra.mxu0 %v9003
  %10285 = vmatpush.msra.mxu0 %v9002
  %10286 = vmatpush.msra.mxu0 %v9001
  %10287 = vmatpush.msra.mxu0 %v9000
  %10288 = vmatpush.msra.mxu0 %v8999
  %10289 = vmatpush.msra.mxu0 %v8998
  %10290 = vmatpush.msra.mxu0 %v8997
  %10291 = vmatpush.msra.mxu0 %v8996
  %10292 = vmatpush.msra.mxu0 %v8995
  %10293 = vmatpush.msra.mxu0 %v8994
  %10294 = vmatpush.msra.mxu0 %v8993
  %10295 = vmatpush.msra.mxu0 %v8992
  %10296 = vmatpush.msra.mxu0 %v8991
  %10297 = vmatpush.msra.mxu0 %v8990
  %10298 = vmatpush.msra.mxu0 %v8989
  %10299 = vmatpush.msra.mxu0 %v8988
  %10300 = vmatmul.f32.gmra.mxu0 %v8420
  %v10301 = vpop.f32.mrf.mxu0
  %v10302 = vadd.f32 0.0, %v10301
  %10303 = vdwg.mxu0
  %10304 = vmatpush.msra.mxu0 0.0
  %10305 = vmatpush.msra.mxu0 0.0
  %10306 = vmatpush.msra.mxu0 0.0
  %10307 = vmatpush.msra.mxu0 0.0
  %10308 = vmatpush.msra.mxu0 0.0
  %10309 = vmatpush.msra.mxu0 0.0
  %10310 = vmatpush.msra.mxu0 0.0
  %10311 = vmatpush.msra.mxu0 0.0
  %10312 = vmatpush.msra.mxu0 0.0
  %10313 = vmatpush.msra.mxu0 %v10282
  %10314 = vmatpush.msra.mxu0 %v9009
  %10315 = vmatpush.msra.mxu0 %v9008
  %10316 = vmatpush.msra.mxu0 %v9007
  %10317 = vmatpush.msra.mxu0 %v9006
  %10318 = vmatpush.msra.mxu0 %v9005
  %10319 = vmatpush.msra.mxu0 %v9004
  %10320 = vmatmul.f32.gmra.mxu0 %v10279
  %v10321 = vpop.f32.mrf.mxu0
  %v10322 = vadd.f32 %v10302, %v10321
  %10323 = vdwg.mxu0
  %v10325 = vsel %vm9172, %v8423, 0
  %v10328 = vsel %vm9176, %v9033, 0
  %10330 = vmatpush.msra.mxu0 %v9026
  %10331 = vmatpush.msra.mxu0 %v9025
  %10332 = vmatpush.msra.mxu0 %v9024
  %10333 = vmatpush.msra.mxu0 %v9023
  %10334 = vmatpush.msra.mxu0 %v9022
  %10335 = vmatpush.msra.mxu0 %v9021
  %10336 = vmatpush.msra.mxu0 %v9020
  %10337 = vmatpush.msra.mxu0 %v9019
  %10338 = vmatpush.msra.mxu0 %v9018
  %10339 = vmatpush.msra.mxu0 %v9017
  %10340 = vmatpush.msra.mxu0 %v9016
  %10341 = vmatpush.msra.mxu0 %v9015
  %10342 = vmatpush.msra.mxu0 %v9014
  %10343 = vmatpush.msra.mxu0 %v9013
  %10344 = vmatpush.msra.mxu0 %v9012
  %10345 = vmatpush.msra.mxu0 %v9011
  %10346 = vmatmul.f32.gmra.mxu0 %v8422
  %v10347 = vpop.f32.mrf.mxu0
  %v10348 = vadd.f32 0.0, %v10347
  %10349 = vdwg.mxu0
  %10350 = vmatpush.msra.mxu0 0.0
  %10351 = vmatpush.msra.mxu0 0.0
  %10352 = vmatpush.msra.mxu0 0.0
  %10353 = vmatpush.msra.mxu0 0.0
  %10354 = vmatpush.msra.mxu0 0.0
  %10355 = vmatpush.msra.mxu0 0.0
  %10356 = vmatpush.msra.mxu0 0.0
  %10357 = vmatpush.msra.mxu0 0.0
  %10358 = vmatpush.msra.mxu0 0.0
  %10359 = vmatpush.msra.mxu0 %v10328
  %10360 = vmatpush.msra.mxu0 %v9032
  %10361 = vmatpush.msra.mxu0 %v9031
  %10362 = vmatpush.msra.mxu0 %v9030
  %10363 = vmatpush.msra.mxu0 %v9029
  %10364 = vmatpush.msra.mxu0 %v9028
  %10365 = vmatpush.msra.mxu0 %v9027
  %10366 = vmatmul.f32.gmra.mxu0 %v10325
  %v10367 = vpop.f32.mrf.mxu0
  %v10368 = vadd.f32 %v10348, %v10367
  %10369 = vdwg.mxu0
  %v10371 = vsel %vm9172, %v8425, 0
  %v10374 = vsel %vm9176, %v9056, 0
  %10376 = vmatpush.msra.mxu0 %v9049
  %10377 = vmatpush.msra.mxu0 %v9048
  %10378 = vmatpush.msra.mxu0 %v9047
  %10379 = vmatpush.msra.mxu0 %v9046
  %10380 = vmatpush.msra.mxu0 %v9045
  %10381 = vmatpush.msra.mxu0 %v9044
  %10382 = vmatpush.msra.mxu0 %v9043
  %10383 = vmatpush.msra.mxu0 %v9042
  %10384 = vmatpush.msra.mxu0 %v9041
  %10385 = vmatpush.msra.mxu0 %v9040
  %10386 = vmatpush.msra.mxu0 %v9039
  %10387 = vmatpush.msra.mxu0 %v9038
  %10388 = vmatpush.msra.mxu0 %v9037
  %10389 = vmatpush.msra.mxu0 %v9036
  %10390 = vmatpush.msra.mxu0 %v9035
  %10391 = vmatpush.msra.mxu0 %v9034
  %10392 = vmatmul.f32.gmra.mxu0 %v8424
  %v10393 = vpop.f32.mrf.mxu0
  %v10394 = vadd.f32 0.0, %v10393
  %10395 = vdwg.mxu0
  %10396 = vmatpush.msra.mxu0 0.0
  %10397 = vmatpush.msra.mxu0 0.0
  %10398 = vmatpush.msra.mxu0 0.0
  %10399 = vmatpush.msra.mxu0 0.0
  %10400 = vmatpush.msra.mxu0 0.0
  %10401 = vmatpush.msra.mxu0 0.0
  %10402 = vmatpush.msra.mxu0 0.0
  %10403 = vmatpush.msra.mxu0 0.0
  %10404 = vmatpush.msra.mxu0 0.0
  %10405 = vmatpush.msra.mxu0 %v10374
  %10406 = vmatpush.msra.mxu0 %v9055
  %10407 = vmatpush.msra.mxu0 %v9054
  %10408 = vmatpush.msra.mxu0 %v9053
  %10409 = vmatpush.msra.mxu0 %v9052
  %10410 = vmatpush.msra.mxu0 %v9051
  %10411 = vmatpush.msra.mxu0 %v9050
  %10412 = vmatmul.f32.gmra.mxu0 %v10371
  %v10413 = vpop.f32.mrf.mxu0
  %v10414 = vadd.f32 %v10394, %v10413
  %10415 = vdwg.mxu0
  %v10417 = vsel %vm9172, %v8427, 0
  %v10420 = vsel %vm9176, %v9079, 0
  %10422 = vmatpush.msra.mxu0 %v9072
  %10423 = vmatpush.msra.mxu0 %v9071
  %10424 = vmatpush.msra.mxu0 %v9070
  %10425 = vmatpush.msra.mxu0 %v9069
  %10426 = vmatpush.msra.mxu0 %v9068
  %10427 = vmatpush.msra.mxu0 %v9067
  %10428 = vmatpush.msra.mxu0 %v9066
  %10429 = vmatpush.msra.mxu0 %v9065
  %10430 = vmatpush.msra.mxu0 %v9064
  %10431 = vmatpush.msra.mxu0 %v9063
  %10432 = vmatpush.msra.mxu0 %v9062
  %10433 = vmatpush.msra.mxu0 %v9061
  %10434 = vmatpush.msra.mxu0 %v9060
  %10435 = vmatpush.msra.mxu0 %v9059
  %10436 = vmatpush.msra.mxu0 %v9058
  %10437 = vmatpush.msra.mxu0 %v9057
  %10438 = vmatmul.f32.gmra.mxu0 %v8426
  %v10439 = vpop.f32.mrf.mxu0
  %v10440 = vadd.f32 0.0, %v10439
  %10441 = vdwg.mxu0
  %10442 = vmatpush.msra.mxu0 0.0
  %10443 = vmatpush.msra.mxu0 0.0
  %10444 = vmatpush.msra.mxu0 0.0
  %10445 = vmatpush.msra.mxu0 0.0
  %10446 = vmatpush.msra.mxu0 0.0
  %10447 = vmatpush.msra.mxu0 0.0
  %10448 = vmatpush.msra.mxu0 0.0
  %10449 = vmatpush.msra.mxu0 0.0
  %10450 = vmatpush.msra.mxu0 0.0
  %10451 = vmatpush.msra.mxu0 %v10420
  %10452 = vmatpush.msra.mxu0 %v9078
  %10453 = vmatpush.msra.mxu0 %v9077
  %10454 = vmatpush.msra.mxu0 %v9076
  %10455 = vmatpush.msra.mxu0 %v9075
  %10456 = vmatpush.msra.mxu0 %v9074
  %10457 = vmatpush.msra.mxu0 %v9073
  %10458 = vmatmul.f32.gmra.mxu0 %v10417
  %v10459 = vpop.f32.mrf.mxu0
  %v10460 = vadd.f32 %v10440, %v10459
  %10461 = vdwg.mxu0
  %v10463 = vsel %vm9172, %v8429, 0
  %v10466 = vsel %vm9176, %v9102, 0
  %10468 = vmatpush.msra.mxu0 %v9095
  %10469 = vmatpush.msra.mxu0 %v9094
  %10470 = vmatpush.msra.mxu0 %v9093
  %10471 = vmatpush.msra.mxu0 %v9092
  %10472 = vmatpush.msra.mxu0 %v9091
  %10473 = vmatpush.msra.mxu0 %v9090
  %10474 = vmatpush.msra.mxu0 %v9089
  %10475 = vmatpush.msra.mxu0 %v9088
  %10476 = vmatpush.msra.mxu0 %v9087
  %10477 = vmatpush.msra.mxu0 %v9086
  %10478 = vmatpush.msra.mxu0 %v9085
  %10479 = vmatpush.msra.mxu0 %v9084
  %10480 = vmatpush.msra.mxu0 %v9083
  %10481 = vmatpush.msra.mxu0 %v9082
  %10482 = vmatpush.msra.mxu0 %v9081
  %10483 = vmatpush.msra.mxu0 %v9080
  %10484 = vmatmul.f32.gmra.mxu0 %v8428
  %v10485 = vpop.f32.mrf.mxu0
  %v10486 = vadd.f32 0.0, %v10485
  %10487 = vdwg.mxu0
  %10488 = vmatpush.msra.mxu0 0.0
  %10489 = vmatpush.msra.mxu0 0.0
  %10490 = vmatpush.msra.mxu0 0.0
  %10491 = vmatpush.msra.mxu0 0.0
  %10492 = vmatpush.msra.mxu0 0.0
  %10493 = vmatpush.msra.mxu0 0.0
  %10494 = vmatpush.msra.mxu0 0.0
  %10495 = vmatpush.msra.mxu0 0.0
  %10496 = vmatpush.msra.mxu0 0.0
  %10497 = vmatpush.msra.mxu0 %v10466
  %10498 = vmatpush.msra.mxu0 %v9101
  %10499 = vmatpush.msra.mxu0 %v9100
  %10500 = vmatpush.msra.mxu0 %v9099
  %10501 = vmatpush.msra.mxu0 %v9098
  %10502 = vmatpush.msra.mxu0 %v9097
  %10503 = vmatpush.msra.mxu0 %v9096
  %10504 = vmatmul.f32.gmra.mxu0 %v10463
  %v10505 = vpop.f32.mrf.mxu0
  %v10506 = vadd.f32 %v10486, %v10505
  %10507 = vdwg.mxu0
  %v10509 = vsel %vm9172, %v8431, 0
  %v10512 = vsel %vm9176, %v9125, 0
  %10514 = vmatpush.msra.mxu0 %v9118
  %10515 = vmatpush.msra.mxu0 %v9117
  %10516 = vmatpush.msra.mxu0 %v9116
  %10517 = vmatpush.msra.mxu0 %v9115
  %10518 = vmatpush.msra.mxu0 %v9114
  %10519 = vmatpush.msra.mxu0 %v9113
  %10520 = vmatpush.msra.mxu0 %v9112
  %10521 = vmatpush.msra.mxu0 %v9111
  %10522 = vmatpush.msra.mxu0 %v9110
  %10523 = vmatpush.msra.mxu0 %v9109
  %10524 = vmatpush.msra.mxu0 %v9108
  %10525 = vmatpush.msra.mxu0 %v9107
  %10526 = vmatpush.msra.mxu0 %v9106
  %10527 = vmatpush.msra.mxu0 %v9105
  %10528 = vmatpush.msra.mxu0 %v9104
  %10529 = vmatpush.msra.mxu0 %v9103
  %10530 = vmatmul.f32.gmra.mxu0 %v8430
  %v10531 = vpop.f32.mrf.mxu0
  %v10532 = vadd.f32 0.0, %v10531
  %10533 = vdwg.mxu0
  %10534 = vmatpush.msra.mxu0 0.0
  %10535 = vmatpush.msra.mxu0 0.0
  %10536 = vmatpush.msra.mxu0 0.0
  %10537 = vmatpush.msra.mxu0 0.0
  %10538 = vmatpush.msra.mxu0 0.0
  %10539 = vmatpush.msra.mxu0 0.0
  %10540 = vmatpush.msra.mxu0 0.0
  %10541 = vmatpush.msra.mxu0 0.0
  %10542 = vmatpush.msra.mxu0 0.0
  %10543 = vmatpush.msra.mxu0 %v10512
  %10544 = vmatpush.msra.mxu0 %v9124
  %10545 = vmatpush.msra.mxu0 %v9123
  %10546 = vmatpush.msra.mxu0 %v9122
  %10547 = vmatpush.msra.mxu0 %v9121
  %10548 = vmatpush.msra.mxu0 %v9120
  %10549 = vmatpush.msra.mxu0 %v9119
  %10550 = vmatmul.f32.gmra.mxu0 %v10509
  %v10551 = vpop.f32.mrf.mxu0
  %v10552 = vadd.f32 %v10532, %v10551
  %10553 = vdwg.mxu0
  %v10555 = vsel %vm9172, %v8433, 0
  %v10558 = vsel %vm9176, %v9148, 0
  %10560 = vmatpush.msra.mxu0 %v9141
  %10561 = vmatpush.msra.mxu0 %v9140
  %10562 = vmatpush.msra.mxu0 %v9139
  %10563 = vmatpush.msra.mxu0 %v9138
  %10564 = vmatpush.msra.mxu0 %v9137
  %10565 = vmatpush.msra.mxu0 %v9136
  %10566 = vmatpush.msra.mxu0 %v9135
  %10567 = vmatpush.msra.mxu0 %v9134
  %10568 = vmatpush.msra.mxu0 %v9133
  %10569 = vmatpush.msra.mxu0 %v9132
  %10570 = vmatpush.msra.mxu0 %v9131
  %10571 = vmatpush.msra.mxu0 %v9130
  %10572 = vmatpush.msra.mxu0 %v9129
  %10573 = vmatpush.msra.mxu0 %v9128
  %10574 = vmatpush.msra.mxu0 %v9127
  %10575 = vmatpush.msra.mxu0 %v9126
  %10576 = vmatmul.f32.gmra.mxu0 %v8432
  %v10577 = vpop.f32.mrf.mxu0
  %v10578 = vadd.f32 0.0, %v10577
  %10579 = vdwg.mxu0
  %10580 = vmatpush.msra.mxu0 0.0
  %10581 = vmatpush.msra.mxu0 0.0
  %10582 = vmatpush.msra.mxu0 0.0
  %10583 = vmatpush.msra.mxu0 0.0
  %10584 = vmatpush.msra.mxu0 0.0
  %10585 = vmatpush.msra.mxu0 0.0
  %10586 = vmatpush.msra.mxu0 0.0
  %10587 = vmatpush.msra.mxu0 0.0
  %10588 = vmatpush.msra.mxu0 0.0
  %10589 = vmatpush.msra.mxu0 %v10558
  %10590 = vmatpush.msra.mxu0 %v9147
  %10591 = vmatpush.msra.mxu0 %v9146
  %10592 = vmatpush.msra.mxu0 %v9145
  %10593 = vmatpush.msra.mxu0 %v9144
  %10594 = vmatpush.msra.mxu0 %v9143
  %10595 = vmatpush.msra.mxu0 %v9142
  %10596 = vmatmul.f32.gmra.mxu0 %v10555
  %v10597 = vpop.f32.mrf.mxu0
  %v10598 = vadd.f32 %v10578, %v10597
  %10599 = vdwg.mxu0
  %v10601 = vsel %vm9172, %v8435, 0
  %v10604 = vsel %vm9176, %v9171, 0
  %10606 = vmatpush.msra.mxu0 %v9164
  %10607 = vmatpush.msra.mxu0 %v9163
  %10608 = vmatpush.msra.mxu0 %v9162
  %10609 = vmatpush.msra.mxu0 %v9161
  %10610 = vmatpush.msra.mxu0 %v9160
  %10611 = vmatpush.msra.mxu0 %v9159
  %10612 = vmatpush.msra.mxu0 %v9158
  %10613 = vmatpush.msra.mxu0 %v9157
  %10614 = vmatpush.msra.mxu0 %v9156
  %10615 = vmatpush.msra.mxu0 %v9155
  %10616 = vmatpush.msra.mxu0 %v9154
  %10617 = vmatpush.msra.mxu0 %v9153
  %10618 = vmatpush.msra.mxu0 %v9152
  %10619 = vmatpush.msra.mxu0 %v9151
  %10620 = vmatpush.msra.mxu0 %v9150
  %10621 = vmatpush.msra.mxu0 %v9149
  %10622 = vmatmul.f32.gmra.mxu0 %v8434
  %v10623 = vpop.f32.mrf.mxu0
  %v10624 = vadd.f32 0.0, %v10623
  %10625 = vdwg.mxu0
  %10626 = vmatpush.msra.mxu0 0.0
  %10627 = vmatpush.msra.mxu0 0.0
  %10628 = vmatpush.msra.mxu0 0.0
  %10629 = vmatpush.msra.mxu0 0.0
  %10630 = vmatpush.msra.mxu0 0.0
  %10631 = vmatpush.msra.mxu0 0.0
  %10632 = vmatpush.msra.mxu0 0.0
  %10633 = vmatpush.msra.mxu0 0.0
  %10634 = vmatpush.msra.mxu0 0.0
  %10635 = vmatpush.msra.mxu0 %v10604
  %10636 = vmatpush.msra.mxu0 %v9170
  %10637 = vmatpush.msra.mxu0 %v9169
  %10638 = vmatpush.msra.mxu0 %v9168
  %10639 = vmatpush.msra.mxu0 %v9167
  %10640 = vmatpush.msra.mxu0 %v9166
  %10641 = vmatpush.msra.mxu0 %v9165
  %10642 = vmatmul.f32.gmra.mxu0 %v10601
  %v10643 = vpop.f32.mrf.mxu0
  %v10644 = vadd.f32 %v10624, %v10643
  %10645 = vdwg.mxu0
  %v10646 = vadd.f32 %v9218, %v9264
  %v10647 = vadd.f32 %v10646, %v9310
  %v10648 = vadd.f32 %v10647, %v9356
  %v10649 = vadd.f32 %v10648, %v9402
  %v10650 = vadd.f32 %v10649, %v9448
  %v10651 = vadd.f32 %v10650, %v9494
  %v10652 = vadd.f32 %v10651, %v9540
  %v10653 = vadd.f32 %v10652, %v9586
  %v10654 = vadd.f32 %v10653, %v9632
  %v10655 = vadd.f32 %v10654, %v9678
  %v10656 = vadd.f32 %v10655, %v9724
  %v10657 = vadd.f32 %v10656, %v9770
  %v10658 = vadd.f32 %v10657, %v9816
  %v10659 = vadd.f32 %v10658, %v9862
  %v10660 = vadd.f32 %v10659, %v9908
  %v10661 = vadd.f32 %v10660, %v9954
  %v10662 = vadd.f32 %v10661, %v10000
  %v10663 = vadd.f32 %v10662, %v10046
  %v10664 = vadd.f32 %v10663, %v10092
  %v10665 = vadd.f32 %v10664, %v10138
  %v10666 = vadd.f32 %v10665, %v10184
  %v10667 = vadd.f32 %v10666, %v10230
  %v10668 = vadd.f32 %v10667, %v10276
  %v10669 = vadd.f32 %v10668, %v10322
  %v10670 = vadd.f32 %v10669, %v10368
  %v10671 = vadd.f32 %v10670, %v10414
  %v10672 = vadd.f32 %v10671, %v10460
  %v10673 = vadd.f32 %v10672, %v10506
  %v10674 = vadd.f32 %v10673, %v10552
  %v10675 = vadd.f32 %v10674, %v10598
  %v10676 = vadd.f32 %v10675, %v10644
  %v10677 = vld [vmem:[%s9] sm:$0x1]
  %v10679 = vperm.slane %v10677, 0
  %v10681 = vadd.f32 %v10676, %v10679
  %10682 = vst [vmem:[%s10] sm:$0xff] %v10681
  // Predicated region
  $region42: #{cnn_forward_pallas.1} parent=0 // pred_check
    _
  $region43: #{cnn_forward_pallas.1} parent=0 // pred_check_branch
    %10684 = sbr.rel (0) target = $region45
  $region44: #{cnn_forward_pallas.1} parent=0 // pred_region
    _
  $region45: #{cnn_forward_pallas.1} parent=0 // pred_fallthru
    _
  // Predicated region
  $region46: #{cnn_forward_pallas.1} parent=0 // pred_check
    _
  $region47: #{cnn_forward_pallas.1} parent=0 // pred_check_branch
    %10686 = sbr.rel (0) target = $region49
  $region48: #{cnn_forward_pallas.1} parent=0 // pred_region
    _
  $region49: #{cnn_forward_pallas.1} parent=0 // pred_fallthru
    _

</llo_original>
